<compile_context>
chip_gen: v7x
topology: tpu7x:2x2x1
jax: 0.10.0
libtpu: 0.0.40
codegen_flags: <defaults>
</compile_context>

<pallas_src>
import functools

import jax
import jax.numpy as jnp
from jax.experimental import pallas as pl
from jax.experimental.pallas import tpu as pltpu


_VMEM_LIMIT = 32 * 1024 * 1024   # explicit scoped-VMEM budget (fits v5e/v6e/v7x)
_HW_BLOCK = 2048                 # lane-axis tile for the channel-major kernels
_ROW_BLOCK = 2048                # sublane-axis tile for the token-major mask head


# --------------------------------------------------------------------------- #
# Kernels
# --------------------------------------------------------------------------- #
def _feat_offsets_kernel(x_ref, w_in_ref, b_in_ref, w_o1_ref, b_o1_ref,
                         w_o2_ref, b_o2_ref, feat_ref, off_ref):
    """Fused in_conv (1x1 conv + folded BN + ReLU) and out_offsets
    (1x1 conv -> ReLU -> 1x1 conv -> tanh*8), channel-major (C, HW_tile)."""
    x = x_ref[...].astype(jnp.float32)                                        # (C, hwb)
    feat = jnp.dot(w_in_ref[...], x, preferred_element_type=jnp.float32) + b_in_ref[...]
    feat = jnp.maximum(feat, 0.0)                                             # (c4, hwb)
    feat_ref[...] = feat.astype(feat_ref.dtype)

    h = jnp.dot(w_o1_ref[...], feat, preferred_element_type=jnp.float32) + b_o1_ref[...]
    h = jnp.maximum(h, 0.0)                                                   # (c8, hwb)
    off = jnp.dot(w_o2_ref[...], h, preferred_element_type=jnp.float32) + b_o2_ref[...]
    off_ref[...] = (jnp.tanh(off) * 8.0).astype(off_ref.dtype)                # (2, hwb)


def _mask_kernel(x_ref, g_ref, w1_ref, b1_ref, w2d_ref, b2d_ref, o_ref):
    """out_mask head on the raw (B*H*W, C/4) view: Linear -> ReLU -> Linear ->
    Softmax, gumbel noise added to the *probabilities* (faithful to the PyTorch
    gumbel_softmax(Softmax(...)) call), hard argmax, class 0 selected.
    Uses the 2-class identity p0 - p1 = tanh((z0 - z1)/2), so no softmax/exp and
    only the gumbel difference g1 - g0 is needed."""
    x = x_ref[...].astype(jnp.float32)                                        # (rb, c4)
    h = jnp.dot(x, w1_ref[...], preferred_element_type=jnp.float32) + b1_ref[...]
    h = jnp.maximum(h, 0.0)                                                   # (rb, c8)
    d = jnp.dot(h, w2d_ref[...], preferred_element_type=jnp.float32) + b2d_ref[...]  # (rb, 1)
    # mask = 1  iff  p0 + g0 >= p1 + g1  iff  tanh(d/2) >= g1 - g0
    o_ref[...] = (jnp.tanh(0.5 * d) >= g_ref[...]).astype(o_ref.dtype)


def _coordatt_kernel(H, W, x_ref, pool_ref, w1_ref, b1_ref, wh_ref, bh_ref,
                     ww_ref, bw_ref, o_ref):
    """CoordAtt for one image, fully channel-major and transpose-free:
    H/W average pools via one matmul with a precomputed pooling matrix, shared
    conv1 (folded BN) + fused h_swish on the concatenated (C, H+W) block,
    per-axis 1x1 conv + sigmoid gates, rank-1 product in (C, H*W) layout."""
    x = x_ref[...].astype(jnp.float32)                                        # (C, HW)
    pooled = jnp.dot(x, pool_ref[...], preferred_element_type=jnp.float32)    # (C, H+W)
    z = jnp.dot(w1_ref[...], pooled, preferred_element_type=jnp.float32) + b1_ref[...]
    # h_swish(v) = v * relu6(v + 3) / 6  (h_sigmoid fused in-kernel)
    z = z * (jnp.clip(z + 3.0, 0.0, 6.0) * (1.0 / 6.0))                       # (mip, H+W)

    a_h = jax.nn.sigmoid(
        jnp.dot(wh_ref[...], z[:, :H], preferred_element_type=jnp.float32) + bh_ref[...])  # (C, H)
    a_w = jax.nn.sigmoid(
        jnp.dot(ww_ref[...], z[:, H:], preferred_element_type=jnp.float32) + bw_ref[...])  # (C, W)

    # out[c, h*W + w] = a_h[c, h] * a_w[c, w], built lane-dense as (C, H*W).
    out = jnp.concatenate([a_h[:, h:h + 1] * a_w for h in range(H)], axis=1)
    o_ref[...] = out.astype(o_ref.dtype)


# --------------------------------------------------------------------------- #
# pallas_call wrappers
# --------------------------------------------------------------------------- #
def _const_spec(a):
    nd = a.ndim
    return pl.BlockSpec(a.shape, lambda *idx, _nd=nd: (0,) * _nd)


def _feat_offsets_call(x_cm, w_in, b_in, w_o1, b_o1, w_o2, b_o2):
    B, C, HW = x_cm.shape
    c4 = w_in.shape[0]
    hwb = HW if HW <= _HW_BLOCK else _HW_BLOCK            # full dim or multiple of 128
    grid = (B, pl.cdiv(HW, hwb))

    def tile_spec(ch):
        return pl.BlockSpec((None, ch, hwb), lambda b, t: (b, 0, t))

    consts = (w_in, b_in, w_o1, b_o1, w_o2, b_o2)
    return pl.pallas_call(
        _feat_offsets_kernel,
        out_shape=(jax.ShapeDtypeStruct((B, c4, HW), x_cm.dtype),
                   jax.ShapeDtypeStruct((B, 2, HW), x_cm.dtype)),
        grid=grid,
        in_specs=[tile_spec(C)] + [_const_spec(a) for a in consts],
        out_specs=(tile_spec(c4), tile_spec(2)),
        compiler_params=pltpu.CompilerParams(
            dimension_semantics=("parallel", "parallel"),
            vmem_limit_bytes=_VMEM_LIMIT),
    )(x_cm, *consts)


def _mask_call(x_rows, g_rows, w1, b1, w2d, b2d):
    rows, c4 = x_rows.shape
    if rows > 8:                                           # >= 2 grid steps (v7x dual TC)
        half = -(-rows // 2)
        blk = min(_ROW_BLOCK, ((half + 7) // 8) * 8)       # multiple of 8
    else:
        blk = rows
    grid = (pl.cdiv(rows, blk),)

    def row_spec(cols):
        return pl.BlockSpec((blk, cols), lambda i: (i, 0))

    consts = (w1, b1, w2d, b2d)
    return pl.pallas_call(
        _mask_kernel,
        out_shape=jax.ShapeDtypeStruct((rows, 1), x_rows.dtype),
        grid=grid,
        in_specs=[row_spec(c4), row_spec(1)] + [_const_spec(a) for a in consts],
        out_specs=row_spec(1),
        compiler_params=pltpu.CompilerParams(
            dimension_semantics=("parallel",),
            vmem_limit_bytes=_VMEM_LIMIT),
    )(x_rows, g_rows, *consts)


def _coordatt_call(x_cm, H, W, w1, b1, wh, bh, ww, bw):
    B, C, HW = x_cm.shape
    # Pooling matrix: first H columns average over W within each row h; last W
    # columns average over H for each column w.  Built once in the wrapper.
    pos = jnp.arange(HW, dtype=jnp.int32)
    ph = (pos[:, None] // W == jnp.arange(H, dtype=jnp.int32)[None, :]).astype(jnp.float32) / W
    pw = (pos[:, None] % W == jnp.arange(W, dtype=jnp.int32)[None, :]).astype(jnp.float32) / H
    pool = jnp.concatenate([ph, pw], axis=1)               # (HW, H+W)

    consts = (pool, w1, b1, wh, bh, ww, bw)
    batch_spec = pl.BlockSpec((None, C, HW), lambda b: (b, 0, 0))
    return pl.pallas_call(
        functools.partial(_coordatt_kernel, H, W),
        out_shape=jax.ShapeDtypeStruct((B, C, HW), x_cm.dtype),
        grid=(B,),
        in_specs=[batch_spec] + [_const_spec(a) for a in consts],
        out_specs=batch_spec,
        compiler_params=pltpu.CompilerParams(
            dimension_semantics=("parallel",),
            vmem_limit_bytes=_VMEM_LIMIT),
    )(x_cm, *consts)


# --------------------------------------------------------------------------- #
# Parameters (inference-mode; BatchNorm folded into the 1x1 convs)
# --------------------------------------------------------------------------- #
def _fold_bn(w, b, gamma, beta, mean, var, eps=1e-5):
    """Fold an eval-mode BatchNorm into a preceding (out, in) 1x1 conv."""
    scale = gamma / jnp.sqrt(var + eps)
    return w * scale[:, None], (b - mean) * scale + beta


def init_params(key, dim, dtype=jnp.float32):
    c4, c8 = dim // 4, dim // 8
    mip = max(8, dim // 32)
    ki = iter(jax.random.split(key, 32))

    def nrm(shape, scale=0.3):
        return jax.random.normal(next(ki), shape, dtype) * scale

    def bn_params(n):
        gamma = 1.0 + nrm((n,), 0.1)
        beta = nrm((n,), 0.1)
        mean = nrm((n,), 0.1)
        var = 1.0 + jnp.abs(nrm((n,), 0.1))
        return gamma, beta, mean, var

    p = {}
    # in_conv: Conv2d(dim, c4, 1) + BatchNorm2d(c4) (eval, folded) + ReLU
    w_in, b_in = nrm((c4, dim)), nrm((c4,), 0.1)
    w_in, b_in = _fold_bn(w_in, b_in, *bn_params(c4))
    p['w_in'], p['b_in'] = w_in, b_in.reshape(c4, 1)

    # out_offsets: Conv2d(c4, c8, 1) -> ReLU -> Conv2d(c8, 2, 1)
    p['w_o1'], p['b_o1'] = nrm((c8, c4)), nrm((c8,), 0.1).reshape(c8, 1)
    p['w_o2'], p['b_o2'] = nrm((2, c8)), nrm((2,), 0.1).reshape(2, 1)

    # out_mask: Linear(c4, c8) -> ReLU -> Linear(c8, 2) -> Softmax
    p['w_m1'], p['b_m1'] = nrm((c4, c8)), nrm((c8,), 0.1).reshape(1, c8)
    p['w_m2'], p['b_m2'] = nrm((c8, 2)), nrm((2,), 0.1).reshape(1, 2)

    # CoordAtt: conv1 (dim->mip) + BN (folded) + h_swish; conv_h / conv_w (mip->dim)
    w_c1, b_c1 = nrm((mip, dim)), nrm((mip,), 0.1)
    w_c1, b_c1 = _fold_bn(w_c1, b_c1, *bn_params(mip))
    p['w_c1'], p['b_c1'] = w_c1, b_c1.reshape(mip, 1)
    p['w_ch'], p['b_ch'] = nrm((dim, mip)), nrm((dim,), 0.1).reshape(dim, 1)
    p['w_cw'], p['b_cw'] = nrm((dim, mip)), nrm((dim,), 0.1).reshape(dim, 1)
    return p


# --------------------------------------------------------------------------- #
# Mask.forward
# --------------------------------------------------------------------------- #
def mask_forward(params, x, gumbel_noise):
    """x: (B, C, H, W) NCHW; gumbel_noise: (B, H*W, 2). Returns (mask, offsets, ca)."""
    B, C, H, W = x.shape
    HW = H * W
    c4 = C // 4

    # Channel-major (NCHW-native) view: 1x1 convs are (Cout, Cin) @ (Cin, HW) with
    # H*W on the lane axis -> no wrapper transposes, lane-dense kernel outputs.
    x_cm = x.reshape(B, C, HW)

    feat_cm, off_cm = _feat_offsets_call(
        x_cm, params['w_in'], params['b_in'],
        params['w_o1'], params['b_o1'], params['w_o2'], params['b_o2'])
    offsets = off_cm.reshape(B, 2, H, W)

    # PyTorch's raw `feat.view(B, H*W, -1)` on the NCHW feature map is a plain
    # row-major reshape of the channel-major feat (no transpose needed).
    mask_in = feat_cm.reshape(B * HW, c4)
    gdiff = (gumbel_noise[..., 1] - gumbel_noise[..., 0]).reshape(B * HW, 1)
    w_m2d = params['w_m2'][:, 0:1] - params['w_m2'][:, 1:2]      # (c8, 1)
    b_m2d = params['b_m2'][:, 0:1] - params['b_m2'][:, 1:2]      # (1, 1)
    mask_rows = _mask_call(mask_in, gdiff, params['w_m1'], params['b_m1'], w_m2d, b_m2d)
    mask = mask_rows.reshape(B, HW, 1)

    ca_cm = _coordatt_call(x_cm, H, W,
                           params['w_c1'], params['b_c1'],
                           params['w_ch'], params['b_ch'],
                           params['w_cw'], params['b_cw'])
    ca = ca_cm.reshape(B, C, H, W)
    return mask, offsets, ca


# --------------------------------------------------------------------------- #
# Pure-JAX reference (same folded weights, same gumbel noise)
# --------------------------------------------------------------------------- #
def mask_forward_ref(params, x, gumbel_noise):
    B, C, H, W = x.shape
    c4 = C // 4

    def conv1x1(v, w, b):                                   # w: (out, in), b: (out, 1)
        return jnp.einsum('oc,bchw->bohw', w, v) + b.reshape(1, -1, 1, 1)

    feat = jax.nn.relu(conv1x1(x, params['w_in'], params['b_in']))
    h1 = jax.nn.relu(conv1x1(feat, params['w_o1'], params['b_o1']))
    offsets = jnp.tanh(conv1x1(h1, params['w_o2'], params['b_o2'])) * 8.0

    v = feat.reshape(B, H * W, c4)                           # raw view, as in PyTorch
    h2 = jax.nn.relu(v @ params['w_m1'] + params['b_m1'])
    logits = h2 @ params['w_m2'] + params['b_m2']
    probs = jax.nn.softmax(logits, axis=-1)
    z = probs + gumbel_noise                                 # gumbel added to probs (as in torch code)
    mask = (z[..., 0:1] >= z[..., 1:2]).astype(x.dtype)

    xh = jnp.mean(x, axis=3)                                 # (B, C, H)
    xw = jnp.mean(x, axis=2)                                 # (B, C, W)
    y = jnp.concatenate([xh, xw], axis=2)                    # (B, C, H+W)
    hsw = lambda t: t * (jnp.clip(t + 3.0, 0.0, 6.0) / 6.0)
    z1 = hsw(jnp.einsum('mc,bcl->bml', params['w_c1'], y) + params['b_c1'].reshape(1, -1, 1))
    a_h = jax.nn.sigmoid(jnp.einsum('cm,bml->bcl', params['w_ch'], z1[:, :, :H])
                         + params['b_ch'].reshape(1, -1, 1))
    a_w = jax.nn.sigmoid(jnp.einsum('cm,bml->bcl', params['w_cw'], z1[:, :, H:])
                         + params['b_cw'].reshape(1, -1, 1))
    ca = a_h[:, :, :, None] * a_w[:, :, None, :]
    return mask, offsets, ca


if __name__ == "__main__":
    jax.config.update("jax_default_matmul_precision", "highest")
    key = jax.random.PRNGKey(0)
    B, C, H, W = 2, 32, 16, 16                               # dim = 32
    k_x, k_p, k_g = jax.random.split(key, 3)
    x = jax.random.normal(k_x, (B, C, H, W), dtype=jnp.float32)
    params = init_params(k_p, C)
    # TODO(synk): F.gumbel_softmax randomness is sampled here with jax.random
    # (deterministic key) and passed into the kernel instead of in-kernel PRNG.
    g = jax.random.gumbel(k_g, (B, H * W, 2), dtype=jnp.float32)

    fwd = jax.jit(mask_forward)
    mask, offsets, ca = fwd(params, x, g)
    jax.block_until_ready((mask, offsets, ca))

    mask_r, offsets_r, ca_r = mask_forward_ref(params, x, g)
    assert mask.shape == (B, H * W, 1)
    assert offsets.shape == (B, 2, H, W)
    assert ca.shape == (B, C, H, W)
    assert jnp.allclose(offsets, offsets_r, atol=1e-3, rtol=1e-3)
    assert jnp.allclose(ca, ca_r, atol=1e-3, rtol=1e-3)
    assert float(jnp.mean((mask == mask_r).astype(jnp.float32))) >= 0.998

    print("KERNEL_OK")
</pallas_src>

<mosaic_0001>
module attributes {stable_mosaic.version = 11 : i64} {
  func.func @_feat_offsets_kernel(%arg0: i32, %arg1: i32, %arg2: memref<1x32x256xf32, #tpu.memory_space<vmem>>, %arg3: memref<8x32xf32, #tpu.memory_space<vmem>>, %arg4: memref<8x1xf32, #tpu.memory_space<vmem>>, %arg5: memref<4x8xf32, #tpu.memory_space<vmem>>, %arg6: memref<4x1xf32, #tpu.memory_space<vmem>>, %arg7: memref<2x4xf32, #tpu.memory_space<vmem>>, %arg8: memref<2x1xf32, #tpu.memory_space<vmem>>, %arg9: memref<1x8x256xf32, #tpu.memory_space<vmem>>, %arg10: memref<1x2x256xf32, #tpu.memory_space<vmem>>) attributes {dimension_semantics = [#tpu.dimension_semantics<parallel>, #tpu.dimension_semantics<parallel>], iteration_bounds = array<i64: 2, 1>, scalar_prefetch = 0 : i64, scratch_operands = 0 : i64, tpu.core_type = #tpu.core_type<tc>, window_params = [{transform_indices = @transform_0, window_bounds = array<i64: 1, 32, 256>}, {pipeline_mode = #tpu.pipeline_mode<synchronous>, transform_indices = @transform_1, window_bounds = array<i64: 8, 32>}, {pipeline_mode = #tpu.pipeline_mode<synchronous>, transform_indices = @transform_2, window_bounds = array<i64: 8, 1>}, {pipeline_mode = #tpu.pipeline_mode<synchronous>, transform_indices = @transform_3, window_bounds = array<i64: 4, 8>}, {pipeline_mode = #tpu.pipeline_mode<synchronous>, transform_indices = @transform_4, window_bounds = array<i64: 4, 1>}, {pipeline_mode = #tpu.pipeline_mode<synchronous>, transform_indices = @transform_5, window_bounds = array<i64: 2, 4>}, {pipeline_mode = #tpu.pipeline_mode<synchronous>, transform_indices = @transform_6, window_bounds = array<i64: 2, 1>}, {transform_indices = @transform_7, window_bounds = array<i64: 1, 8, 256>}, {transform_indices = @transform_8, window_bounds = array<i64: 1, 2, 256>}]} {
    %c0 = arith.constant 0 : index
    %c0_0 = arith.constant 0 : index
    %c0_1 = arith.constant 0 : index
    %0 = vector.load %arg2[%c0, %c0_0, %c0_1] : memref<1x32x256xf32, #tpu.memory_space<vmem>>, vector<1x32x256xf32>
    %1 = vector.shape_cast %0 : vector<1x32x256xf32> to vector<32x256xf32>
    %c0_2 = arith.constant 0 : index
    %c0_3 = arith.constant 0 : index
    %2 = vector.load %arg3[%c0_2, %c0_3] : memref<8x32xf32, #tpu.memory_space<vmem>>, vector<8x32xf32>
    %cst = arith.constant dense<0.000000e+00> : vector<8x256xf32>
    %3 = tpu.matmul %2, %1, %cst {dimension_numbers = #tpu.dot_dimension_numbers<[1], [0], [0], [1], [0, 0, 1, 1], [], []>, precision = #tpu.contract_precision<fp32>} : vector<8x32xf32>, vector<32x256xf32>, vector<8x256xf32> -> vector<8x256xf32>
    %c0_4 = arith.constant 0 : index
    %c0_5 = arith.constant 0 : index
    %4 = vector.load %arg4[%c0_4, %c0_5] : memref<8x1xf32, #tpu.memory_space<vmem>>, vector<8x1xf32>
    %5 = vector.broadcast %4 : vector<8x1xf32> to vector<8x256xf32>
    %6 = arith.addf %3, %5 : vector<8x256xf32>
    %cst_6 = arith.constant 0.000000e+00 : f32
    %7 = vector.broadcast %cst_6 : f32 to vector<8x256xf32>
    %8 = arith.maximumf %6, %7 : vector<8x256xf32>
    %c0_7 = arith.constant 0 : index
    %c0_8 = arith.constant 0 : index
    %c0_9 = arith.constant 0 : index
    %9 = vector.load %arg9[%c0_7, %c0_8, %c0_9] : memref<1x8x256xf32, #tpu.memory_space<vmem>>, vector<1x8x256xf32>
    %10 = vector.shape_cast %9 : vector<1x8x256xf32> to vector<8x256xf32>
    %11 = vector.shape_cast %8 : vector<8x256xf32> to vector<1x8x256xf32>
    tpu.vector_store %arg9[%c0_7, %c0_8, %c0_9], %11 {strides = array<i32>} : memref<1x8x256xf32, #tpu.memory_space<vmem>>, vector<1x8x256xf32>,
    %c0_10 = arith.constant 0 : index
    %c0_11 = arith.constant 0 : index
    %12 = vector.load %arg5[%c0_10, %c0_11] : memref<4x8xf32, #tpu.memory_space<vmem>>, vector<4x8xf32>
    %cst_12 = arith.constant dense<0.000000e+00> : vector<4x256xf32>
    %13 = tpu.matmul %12, %8, %cst_12 {dimension_numbers = #tpu.dot_dimension_numbers<[1], [0], [0], [1], [0, 0, 1, 1], [], []>, precision = #tpu.contract_precision<fp32>} : vector<4x8xf32>, vector<8x256xf32>, vector<4x256xf32> -> vector<4x256xf32>
    %c0_13 = arith.constant 0 : index
    %c0_14 = arith.constant 0 : index
    %14 = vector.load %arg6[%c0_13, %c0_14] : memref<4x1xf32, #tpu.memory_space<vmem>>, vector<4x1xf32>
    %15 = vector.broadcast %14 : vector<4x1xf32> to vector<4x256xf32>
    %16 = arith.addf %13, %15 : vector<4x256xf32>
    %cst_15 = arith.constant 0.000000e+00 : f32
    %17 = vector.broadcast %cst_15 : f32 to vector<4x256xf32>
    %18 = arith.maximumf %16, %17 : vector<4x256xf32>
    %c0_16 = arith.constant 0 : index
    %c0_17 = arith.constant 0 : index
    %19 = vector.load %arg7[%c0_16, %c0_17] : memref<2x4xf32, #tpu.memory_space<vmem>>, vector<2x4xf32>
    %cst_18 = arith.constant dense<0.000000e+00> : vector<2x256xf32>
    %20 = tpu.matmul %19, %18, %cst_18 {dimension_numbers = #tpu.dot_dimension_numbers<[1], [0], [0], [1], [0, 0, 1, 1], [], []>, precision = #tpu.contract_precision<fp32>} : vector<2x4xf32>, vector<4x256xf32>, vector<2x256xf32> -> vector<2x256xf32>
    %c0_19 = arith.constant 0 : index
    %c0_20 = arith.constant 0 : index
    %21 = vector.load %arg8[%c0_19, %c0_20] : memref<2x1xf32, #tpu.memory_space<vmem>>, vector<2x1xf32>
    %22 = vector.broadcast %21 : vector<2x1xf32> to vector<2x256xf32>
    %23 = arith.addf %20, %22 : vector<2x256xf32>
    %24 = math.tanh %23 : vector<2x256xf32>
    %cst_21 = arith.constant 8.000000e+00 : f32
    %25 = vector.broadcast %cst_21 : f32 to vector<2x256xf32>
    %26 = arith.mulf %24, %25 : vector<2x256xf32>
    %c0_22 = arith.constant 0 : index
    %c0_23 = arith.constant 0 : index
    %c0_24 = arith.constant 0 : index
    %27 = vector.load %arg10[%c0_22, %c0_23, %c0_24] : memref<1x2x256xf32, #tpu.memory_space<vmem>>, vector<1x2x256xf32>
    %28 = vector.shape_cast %27 : vector<1x2x256xf32> to vector<2x256xf32>
    %29 = vector.shape_cast %26 : vector<2x256xf32> to vector<1x2x256xf32>
    tpu.vector_store %arg10[%c0_22, %c0_23, %c0_24], %29 {strides = array<i32>} : memref<1x2x256xf32, #tpu.memory_space<vmem>>, vector<1x2x256xf32>,
    return
  }
  func.func @transform_0(%arg0: i32, %arg1: i32) -> (i32, i32, i32) {
    %c0_i32 = arith.constant 0 : i32
    %c0_i32_0 = arith.constant 0 : i32
    return %arg0, %c0_i32, %arg1 : i32, i32, i32
  }
  func.func @transform_1(%arg0: i32, %arg1: i32) -> (i32, i32) {
    %c0_i32 = arith.constant 0 : i32
    %c0_i32_0 = arith.constant 0 : i32
    %c0_i32_1 = arith.constant 0 : i32
    return %c0_i32, %c0_i32_0 : i32, i32
  }
  func.func @transform_2(%arg0: i32, %arg1: i32) -> (i32, i32) {
    %c0_i32 = arith.constant 0 : i32
    %c0_i32_0 = arith.constant 0 : i32
    %c0_i32_1 = arith.constant 0 : i32
    return %c0_i32, %c0_i32_0 : i32, i32
  }
  func.func @transform_3(%arg0: i32, %arg1: i32) -> (i32, i32) {
    %c0_i32 = arith.constant 0 : i32
    %c0_i32_0 = arith.constant 0 : i32
    %c0_i32_1 = arith.constant 0 : i32
    return %c0_i32, %c0_i32_0 : i32, i32
  }
  func.func @transform_4(%arg0: i32, %arg1: i32) -> (i32, i32) {
    %c0_i32 = arith.constant 0 : i32
    %c0_i32_0 = arith.constant 0 : i32
    %c0_i32_1 = arith.constant 0 : i32
    return %c0_i32, %c0_i32_0 : i32, i32
  }
  func.func @transform_5(%arg0: i32, %arg1: i32) -> (i32, i32) {
    %c0_i32 = arith.constant 0 : i32
    %c0_i32_0 = arith.constant 0 : i32
    %c0_i32_1 = arith.constant 0 : i32
    return %c0_i32, %c0_i32_0 : i32, i32
  }
  func.func @transform_6(%arg0: i32, %arg1: i32) -> (i32, i32) {
    %c0_i32 = arith.constant 0 : i32
    %c0_i32_0 = arith.constant 0 : i32
    %c0_i32_1 = arith.constant 0 : i32
    return %c0_i32, %c0_i32_0 : i32, i32
  }
  func.func @transform_7(%arg0: i32, %arg1: i32) -> (i32, i32, i32) {
    %c0_i32 = arith.constant 0 : i32
    %c0_i32_0 = arith.constant 0 : i32
    return %arg0, %c0_i32, %arg1 : i32, i32, i32
  }
  func.func @transform_8(%arg0: i32, %arg1: i32) -> (i32, i32, i32) {
    %c0_i32 = arith.constant 0 : i32
    %c0_i32_0 = arith.constant 0 : i32
    return %arg0, %c0_i32, %arg1 : i32, i32, i32
  }
}

module attributes {stable_mosaic.version = 11 : i64} {
  func.func @_mask_kernel(%arg0: i32, %arg1: memref<256x8xf32, #tpu.memory_space<vmem>>, %arg2: memref<256x1xf32, #tpu.memory_space<vmem>>, %arg3: memref<8x4xf32, #tpu.memory_space<vmem>>, %arg4: memref<1x4xf32, #tpu.memory_space<vmem>>, %arg5: memref<4x1xf32, #tpu.memory_space<vmem>>, %arg6: memref<1x1xf32, #tpu.memory_space<vmem>>, %arg7: memref<256x1xf32, #tpu.memory_space<vmem>>) attributes {dimension_semantics = [#tpu.dimension_semantics<parallel>], iteration_bounds = array<i64: 2>, scalar_prefetch = 0 : i64, scratch_operands = 0 : i64, tpu.core_type = #tpu.core_type<tc>, window_params = [{transform_indices = @transform_0, window_bounds = array<i64: 256, 8>}, {transform_indices = @transform_1, window_bounds = array<i64: 256, 1>}, {pipeline_mode = #tpu.pipeline_mode<synchronous>, transform_indices = @transform_2, window_bounds = array<i64: 8, 4>}, {pipeline_mode = #tpu.pipeline_mode<synchronous>, transform_indices = @transform_3, window_bounds = array<i64: 1, 4>}, {pipeline_mode = #tpu.pipeline_mode<synchronous>, transform_indices = @transform_4, window_bounds = array<i64: 4, 1>}, {pipeline_mode = #tpu.pipeline_mode<synchronous>, transform_indices = @transform_5, window_bounds = array<i64: 1, 1>}, {transform_indices = @transform_6, window_bounds = array<i64: 256, 1>}]} {
    %c0 = arith.constant 0 : index
    %c0_0 = arith.constant 0 : index
    %0 = vector.load %arg1[%c0, %c0_0] : memref<256x8xf32, #tpu.memory_space<vmem>>, vector<256x8xf32>
    %c0_1 = arith.constant 0 : index
    %c0_2 = arith.constant 0 : index
    %1 = vector.load %arg3[%c0_1, %c0_2] : memref<8x4xf32, #tpu.memory_space<vmem>>, vector<8x4xf32>
    %cst = arith.constant dense<0.000000e+00> : vector<256x4xf32>
    %2 = tpu.matmul %0, %1, %cst {dimension_numbers = #tpu.dot_dimension_numbers<[1], [0], [0], [1], [0, 0, 1, 1], [], []>, precision = #tpu.contract_precision<fp32>} : vector<256x8xf32>, vector<8x4xf32>, vector<256x4xf32> -> vector<256x4xf32>
    %c0_3 = arith.constant 0 : index
    %c0_4 = arith.constant 0 : index
    %3 = vector.load %arg4[%c0_3, %c0_4] : memref<1x4xf32, #tpu.memory_space<vmem>>, vector<1x4xf32>
    %4 = vector.broadcast %3 : vector<1x4xf32> to vector<256x4xf32>
    %5 = arith.addf %2, %4 : vector<256x4xf32>
    %cst_5 = arith.constant 0.000000e+00 : f32
    %6 = vector.broadcast %cst_5 : f32 to vector<256x4xf32>
    %7 = arith.maximumf %5, %6 : vector<256x4xf32>
    %c0_6 = arith.constant 0 : index
    %c0_7 = arith.constant 0 : index
    %8 = vector.load %arg5[%c0_6, %c0_7] : memref<4x1xf32, #tpu.memory_space<vmem>>, vector<4x1xf32>
    %cst_8 = arith.constant dense<0.000000e+00> : vector<256x1xf32>
    %9 = tpu.matmul %7, %8, %cst_8 {dimension_numbers = #tpu.dot_dimension_numbers<[1], [0], [0], [1], [0, 0, 1, 1], [], []>, precision = #tpu.contract_precision<fp32>} : vector<256x4xf32>, vector<4x1xf32>, vector<256x1xf32> -> vector<256x1xf32>
    %c0_9 = arith.constant 0 : index
    %c0_10 = arith.constant 0 : index
    %10 = vector.load %arg6[%c0_9, %c0_10] : memref<1x1xf32, #tpu.memory_space<vmem>>, vector<1x1xf32>
    %11 = vector.broadcast %10 : vector<1x1xf32> to vector<256x1xf32>
    %12 = arith.addf %9, %11 : vector<256x1xf32>
    %cst_11 = arith.constant 5.000000e-01 : f32
    %13 = vector.broadcast %cst_11 : f32 to vector<256x1xf32>
    %14 = arith.mulf %13, %12 : vector<256x1xf32>
    %15 = math.tanh %14 : vector<256x1xf32>
    %c0_12 = arith.constant 0 : index
    %c0_13 = arith.constant 0 : index
    %16 = vector.load %arg2[%c0_12, %c0_13] : memref<256x1xf32, #tpu.memory_space<vmem>>, vector<256x1xf32>
    %17 = arith.cmpf oge, %15, %16 : vector<256x1xf32>
    %18 = arith.extui %17 : vector<256x1xi1> to vector<256x1xi32>
    %19 = arith.sitofp %18 : vector<256x1xi32> to vector<256x1xf32>
    %c0_14 = arith.constant 0 : index
    %c0_15 = arith.constant 0 : index
    %20 = vector.load %arg7[%c0_14, %c0_15] : memref<256x1xf32, #tpu.memory_space<vmem>>, vector<256x1xf32>
    tpu.vector_store %arg7[%c0_14, %c0_15], %19 {strides = array<i32>} : memref<256x1xf32, #tpu.memory_space<vmem>>, vector<256x1xf32>,
    return
  }
  func.func @transform_0(%arg0: i32) -> (i32, i32) {
    %c0_i32 = arith.constant 0 : i32
    %c0_i32_0 = arith.constant 0 : i32
    return %arg0, %c0_i32 : i32, i32
  }
  func.func @transform_1(%arg0: i32) -> (i32, i32) {
    %c0_i32 = arith.constant 0 : i32
    %c0_i32_0 = arith.constant 0 : i32
    return %arg0, %c0_i32 : i32, i32
  }
  func.func @transform_2(%arg0: i32) -> (i32, i32) {
    %c0_i32 = arith.constant 0 : i32
    %c0_i32_0 = arith.constant 0 : i32
    %c0_i32_1 = arith.constant 0 : i32
    return %c0_i32, %c0_i32_0 : i32, i32
  }
  func.func @transform_3(%arg0: i32) -> (i32, i32) {
    %c0_i32 = arith.constant 0 : i32
    %c0_i32_0 = arith.constant 0 : i32
    %c0_i32_1 = arith.constant 0 : i32
    return %c0_i32, %c0_i32_0 : i32, i32
  }
  func.func @transform_4(%arg0: i32) -> (i32, i32) {
    %c0_i32 = arith.constant 0 : i32
    %c0_i32_0 = arith.constant 0 : i32
    %c0_i32_1 = arith.constant 0 : i32
    return %c0_i32, %c0_i32_0 : i32, i32
  }
  func.func @transform_5(%arg0: i32) -> (i32, i32) {
    %c0_i32 = arith.constant 0 : i32
    %c0_i32_0 = arith.constant 0 : i32
    %c0_i32_1 = arith.constant 0 : i32
    return %c0_i32, %c0_i32_0 : i32, i32
  }
  func.func @transform_6(%arg0: i32) -> (i32, i32) {
    %c0_i32 = arith.constant 0 : i32
    %c0_i32_0 = arith.constant 0 : i32
    return %arg0, %c0_i32 : i32, i32
  }
}

module attributes {stable_mosaic.version = 11 : i64} {
  func.func @_coordatt_kernel(%arg0: i32, %arg1: memref<1x32x256xf32, #tpu.memory_space<vmem>>, %arg2: memref<256x32xf32, #tpu.memory_space<vmem>>, %arg3: memref<8x32xf32, #tpu.memory_space<vmem>>, %arg4: memref<8x1xf32, #tpu.memory_space<vmem>>, %arg5: memref<32x8xf32, #tpu.memory_space<vmem>>, %arg6: memref<32x1xf32, #tpu.memory_space<vmem>>, %arg7: memref<32x8xf32, #tpu.memory_space<vmem>>, %arg8: memref<32x1xf32, #tpu.memory_space<vmem>>, %arg9: memref<1x32x256xf32, #tpu.memory_space<vmem>>) attributes {dimension_semantics = [#tpu.dimension_semantics<parallel>], iteration_bounds = array<i64: 2>, scalar_prefetch = 0 : i64, scratch_operands = 0 : i64, tpu.core_type = #tpu.core_type<tc>, window_params = [{transform_indices = @transform_0, window_bounds = array<i64: 1, 32, 256>}, {pipeline_mode = #tpu.pipeline_mode<synchronous>, transform_indices = @transform_1, window_bounds = array<i64: 256, 32>}, {pipeline_mode = #tpu.pipeline_mode<synchronous>, transform_indices = @transform_2, window_bounds = array<i64: 8, 32>}, {pipeline_mode = #tpu.pipeline_mode<synchronous>, transform_indices = @transform_3, window_bounds = array<i64: 8, 1>}, {pipeline_mode = #tpu.pipeline_mode<synchronous>, transform_indices = @transform_4, window_bounds = array<i64: 32, 8>}, {pipeline_mode = #tpu.pipeline_mode<synchronous>, transform_indices = @transform_5, window_bounds = array<i64: 32, 1>}, {pipeline_mode = #tpu.pipeline_mode<synchronous>, transform_indices = @transform_6, window_bounds = array<i64: 32, 8>}, {pipeline_mode = #tpu.pipeline_mode<synchronous>, transform_indices = @transform_7, window_bounds = array<i64: 32, 1>}, {transform_indices = @transform_8, window_bounds = array<i64: 1, 32, 256>}]} {
    %c0 = arith.constant 0 : index
    %c0_0 = arith.constant 0 : index
    %c0_1 = arith.constant 0 : index
    %0 = vector.load %arg1[%c0, %c0_0, %c0_1] : memref<1x32x256xf32, #tpu.memory_space<vmem>>, vector<1x32x256xf32>
    %1 = vector.shape_cast %0 : vector<1x32x256xf32> to vector<32x256xf32>
    %c0_2 = arith.constant 0 : index
    %c0_3 = arith.constant 0 : index
    %2 = vector.load %arg2[%c0_2, %c0_3] : memref<256x32xf32, #tpu.memory_space<vmem>>, vector<256x32xf32>
    %cst = arith.constant dense<0.000000e+00> : vector<32x32xf32>
    %3 = tpu.matmul %1, %2, %cst {dimension_numbers = #tpu.dot_dimension_numbers<[1], [0], [0], [1], [0, 0, 1, 1], [], []>, precision = #tpu.contract_precision<fp32>} : vector<32x256xf32>, vector<256x32xf32>, vector<32x32xf32> -> vector<32x32xf32>
    %c0_4 = arith.constant 0 : index
    %c0_5 = arith.constant 0 : index
    %4 = vector.load %arg3[%c0_4, %c0_5] : memref<8x32xf32, #tpu.memory_space<vmem>>, vector<8x32xf32>
    %cst_6 = arith.constant dense<0.000000e+00> : vector<8x32xf32>
    %5 = tpu.matmul %4, %3, %cst_6 {dimension_numbers = #tpu.dot_dimension_numbers<[1], [0], [0], [1], [0, 0, 1, 1], [], []>, precision = #tpu.contract_precision<fp32>} : vector<8x32xf32>, vector<32x32xf32>, vector<8x32xf32> -> vector<8x32xf32>
    %c0_7 = arith.constant 0 : index
    %c0_8 = arith.constant 0 : index
    %6 = vector.load %arg4[%c0_7, %c0_8] : memref<8x1xf32, #tpu.memory_space<vmem>>, vector<8x1xf32>
    %7 = vector.broadcast %6 : vector<8x1xf32> to vector<8x32xf32>
    %8 = arith.addf %5, %7 : vector<8x32xf32>
    %cst_9 = arith.constant 3.000000e+00 : f32
    %9 = vector.broadcast %cst_9 : f32 to vector<8x32xf32>
    %10 = arith.addf %8, %9 : vector<8x32xf32>
    %cst_10 = arith.constant 0.000000e+00 : f32
    %cst_11 = arith.constant 6.000000e+00 : f32
    %11 = vector.broadcast %cst_10 : f32 to vector<8x32xf32>
    %12 = arith.maximumf %11, %10 : vector<8x32xf32>
    %13 = vector.broadcast %cst_11 : f32 to vector<8x32xf32>
    %14 = arith.minimumf %13, %12 : vector<8x32xf32>
    %cst_12 = arith.constant 0.166666672 : f32
    %15 = vector.broadcast %cst_12 : f32 to vector<8x32xf32>
    %16 = arith.mulf %14, %15 : vector<8x32xf32>
    %17 = arith.mulf %8, %16 : vector<8x32xf32>
    %c0_13 = arith.constant 0 : index
    %c0_14 = arith.constant 0 : index
    %18 = vector.load %arg5[%c0_13, %c0_14] : memref<32x8xf32, #tpu.memory_space<vmem>>, vector<32x8xf32>
    %19 = vector.extract_strided_slice %17 {offsets = [0, 0], sizes = [8, 16], strides = [1, 1]} : vector<8x32xf32> to vector<8x16xf32>
    %cst_15 = arith.constant dense<0.000000e+00> : vector<32x16xf32>
    %20 = tpu.matmul %18, %19, %cst_15 {dimension_numbers = #tpu.dot_dimension_numbers<[1], [0], [0], [1], [0, 0, 1, 1], [], []>, precision = #tpu.contract_precision<fp32>} : vector<32x8xf32>, vector<8x16xf32>, vector<32x16xf32> -> vector<32x16xf32>
    %c0_16 = arith.constant 0 : index
    %c0_17 = arith.constant 0 : index
    %21 = vector.load %arg6[%c0_16, %c0_17] : memref<32x1xf32, #tpu.memory_space<vmem>>, vector<32x1xf32>
    %22 = vector.broadcast %21 : vector<32x1xf32> to vector<32x16xf32>
    %23 = arith.addf %20, %22 : vector<32x16xf32>
    %24 = arith.negf %23 : vector<32x16xf32>
    %25 = math.exp %24 : vector<32x16xf32>
    %cst_18 = arith.constant 1.000000e+00 : f32
    %26 = vector.broadcast %cst_18 : f32 to vector<32x16xf32>
    %27 = arith.addf %26, %25 : vector<32x16xf32>
    %28 = arith.divf %26, %27 : vector<32x16xf32>
    %c0_19 = arith.constant 0 : index
    %c0_20 = arith.constant 0 : index
    %29 = vector.load %arg7[%c0_19, %c0_20] : memref<32x8xf32, #tpu.memory_space<vmem>>, vector<32x8xf32>
    %30 = vector.extract_strided_slice %17 {offsets = [0, 16], sizes = [8, 16], strides = [1, 1]} : vector<8x32xf32> to vector<8x16xf32>
    %cst_21 = arith.constant dense<0.000000e+00> : vector<32x16xf32>
    %31 = tpu.matmul %29, %30, %cst_21 {dimension_numbers = #tpu.dot_dimension_numbers<[1], [0], [0], [1], [0, 0, 1, 1], [], []>, precision = #tpu.contract_precision<fp32>} : vector<32x8xf32>, vector<8x16xf32>, vector<32x16xf32> -> vector<32x16xf32>
    %c0_22 = arith.constant 0 : index
    %c0_23 = arith.constant 0 : index
    %32 = vector.load %arg8[%c0_22, %c0_23] : memref<32x1xf32, #tpu.memory_space<vmem>>, vector<32x1xf32>
    %33 = vector.broadcast %32 : vector<32x1xf32> to vector<32x16xf32>
    %34 = arith.addf %31, %33 : vector<32x16xf32>
    %35 = arith.negf %34 : vector<32x16xf32>
    %36 = math.exp %35 : vector<32x16xf32>
    %cst_24 = arith.constant 1.000000e+00 : f32
    %37 = vector.broadcast %cst_24 : f32 to vector<32x16xf32>
    %38 = arith.addf %37, %36 : vector<32x16xf32>
    %39 = arith.divf %37, %38 : vector<32x16xf32>
    %40 = vector.extract_strided_slice %28 {offsets = [0, 0], sizes = [32, 1], strides = [1, 1]} : vector<32x16xf32> to vector<32x1xf32>
    %41 = vector.broadcast %40 : vector<32x1xf32> to vector<32x16xf32>
    %42 = arith.mulf %41, %39 : vector<32x16xf32>
    %43 = vector.extract_strided_slice %28 {offsets = [0, 1], sizes = [32, 1], strides = [1, 1]} : vector<32x16xf32> to vector<32x1xf32>
    %44 = vector.broadcast %43 : vector<32x1xf32> to vector<32x16xf32>
    %45 = arith.mulf %44, %39 : vector<32x16xf32>
    %46 = vector.extract_strided_slice %28 {offsets = [0, 2], sizes = [32, 1], strides = [1, 1]} : vector<32x16xf32> to vector<32x1xf32>
    %47 = vector.broadcast %46 : vector<32x1xf32> to vector<32x16xf32>
    %48 = arith.mulf %47, %39 : vector<32x16xf32>
    %49 = vector.extract_strided_slice %28 {offsets = [0, 3], sizes = [32, 1], strides = [1, 1]} : vector<32x16xf32> to vector<32x1xf32>
    %50 = vector.broadcast %49 : vector<32x1xf32> to vector<32x16xf32>
    %51 = arith.mulf %50, %39 : vector<32x16xf32>
    %52 = vector.extract_strided_slice %28 {offsets = [0, 4], sizes = [32, 1], strides = [1, 1]} : vector<32x16xf32> to vector<32x1xf32>
    %53 = vector.broadcast %52 : vector<32x1xf32> to vector<32x16xf32>
    %54 = arith.mulf %53, %39 : vector<32x16xf32>
    %55 = vector.extract_strided_slice %28 {offsets = [0, 5], sizes = [32, 1], strides = [1, 1]} : vector<32x16xf32> to vector<32x1xf32>
    %56 = vector.broadcast %55 : vector<32x1xf32> to vector<32x16xf32>
    %57 = arith.mulf %56, %39 : vector<32x16xf32>
    %58 = vector.extract_strided_slice %28 {offsets = [0, 6], sizes = [32, 1], strides = [1, 1]} : vector<32x16xf32> to vector<32x1xf32>
    %59 = vector.broadcast %58 : vector<32x1xf32> to vector<32x16xf32>
    %60 = arith.mulf %59, %39 : vector<32x16xf32>
    %61 = vector.extract_strided_slice %28 {offsets = [0, 7], sizes = [32, 1], strides = [1, 1]} : vector<32x16xf32> to vector<32x1xf32>
    %62 = vector.broadcast %61 : vector<32x1xf32> to vector<32x16xf32>
    %63 = arith.mulf %62, %39 : vector<32x16xf32>
    %64 = vector.extract_strided_slice %28 {offsets = [0, 8], sizes = [32, 1], strides = [1, 1]} : vector<32x16xf32> to vector<32x1xf32>
    %65 = vector.broadcast %64 : vector<32x1xf32> to vector<32x16xf32>
    %66 = arith.mulf %65, %39 : vector<32x16xf32>
    %67 = vector.extract_strided_slice %28 {offsets = [0, 9], sizes = [32, 1], strides = [1, 1]} : vector<32x16xf32> to vector<32x1xf32>
    %68 = vector.broadcast %67 : vector<32x1xf32> to vector<32x16xf32>
    %69 = arith.mulf %68, %39 : vector<32x16xf32>
    %70 = vector.extract_strided_slice %28 {offsets = [0, 10], sizes = [32, 1], strides = [1, 1]} : vector<32x16xf32> to vector<32x1xf32>
    %71 = vector.broadcast %70 : vector<32x1xf32> to vector<32x16xf32>
    %72 = arith.mulf %71, %39 : vector<32x16xf32>
    %73 = vector.extract_strided_slice %28 {offsets = [0, 11], sizes = [32, 1], strides = [1, 1]} : vector<32x16xf32> to vector<32x1xf32>
    %74 = vector.broadcast %73 : vector<32x1xf32> to vector<32x16xf32>
    %75 = arith.mulf %74, %39 : vector<32x16xf32>
    %76 = vector.extract_strided_slice %28 {offsets = [0, 12], sizes = [32, 1], strides = [1, 1]} : vector<32x16xf32> to vector<32x1xf32>
    %77 = vector.broadcast %76 : vector<32x1xf32> to vector<32x16xf32>
    %78 = arith.mulf %77, %39 : vector<32x16xf32>
    %79 = vector.extract_strided_slice %28 {offsets = [0, 13], sizes = [32, 1], strides = [1, 1]} : vector<32x16xf32> to vector<32x1xf32>
    %80 = vector.broadcast %79 : vector<32x1xf32> to vector<32x16xf32>
    %81 = arith.mulf %80, %39 : vector<32x16xf32>
    %82 = vector.extract_strided_slice %28 {offsets = [0, 14], sizes = [32, 1], strides = [1, 1]} : vector<32x16xf32> to vector<32x1xf32>
    %83 = vector.broadcast %82 : vector<32x1xf32> to vector<32x16xf32>
    %84 = arith.mulf %83, %39 : vector<32x16xf32>
    %85 = vector.extract_strided_slice %28 {offsets = [0, 15], sizes = [32, 1], strides = [1, 1]} : vector<32x16xf32> to vector<32x1xf32>
    %86 = vector.broadcast %85 : vector<32x1xf32> to vector<32x16xf32>
    %87 = arith.mulf %86, %39 : vector<32x16xf32>
    %88 = tpu.concatenate %42, %45, %48, %51, %54, %57, %60, %63, %66, %69, %72, %75, %78, %81, %84, %87 in 1 : vector<32x16xf32>, vector<32x16xf32>, vector<32x16xf32>, vector<32x16xf32>, vector<32x16xf32>, vector<32x16xf32>, vector<32x16xf32>, vector<32x16xf32>, vector<32x16xf32>, vector<32x16xf32>, vector<32x16xf32>, vector<32x16xf32>, vector<32x16xf32>, vector<32x16xf32>, vector<32x16xf32>, vector<32x16xf32> -> vector<32x256xf32>
    %c0_25 = arith.constant 0 : index
    %c0_26 = arith.constant 0 : index
    %c0_27 = arith.constant 0 : index
    %89 = vector.load %arg9[%c0_25, %c0_26, %c0_27] : memref<1x32x256xf32, #tpu.memory_space<vmem>>, vector<1x32x256xf32>
    %90 = vector.shape_cast %89 : vector<1x32x256xf32> to vector<32x256xf32>
    %91 = vector.shape_cast %88 : vector<32x256xf32> to vector<1x32x256xf32>
    tpu.vector_store %arg9[%c0_25, %c0_26, %c0_27], %91 {strides = array<i32>} : memref<1x32x256xf32, #tpu.memory_space<vmem>>, vector<1x32x256xf32>,
    return
  }
  func.func @transform_0(%arg0: i32) -> (i32, i32, i32) {
    %c0_i32 = arith.constant 0 : i32
    %c0_i32_0 = arith.constant 0 : i32
    %c0_i32_1 = arith.constant 0 : i32
    return %arg0, %c0_i32, %c0_i32_0 : i32, i32, i32
  }
  func.func @transform_1(%arg0: i32) -> (i32, i32) {
    %c0_i32 = arith.constant 0 : i32
    %c0_i32_0 = arith.constant 0 : i32
    %c0_i32_1 = arith.constant 0 : i32
    return %c0_i32, %c0_i32_0 : i32, i32
  }
  func.func @transform_2(%arg0: i32) -> (i32, i32) {
    %c0_i32 = arith.constant 0 : i32
    %c0_i32_0 = arith.constant 0 : i32
    %c0_i32_1 = arith.constant 0 : i32
    return %c0_i32, %c0_i32_0 : i32, i32
  }
  func.func @transform_3(%arg0: i32) -> (i32, i32) {
    %c0_i32 = arith.constant 0 : i32
    %c0_i32_0 = arith.constant 0 : i32
    %c0_i32_1 = arith.constant 0 : i32
    return %c0_i32, %c0_i32_0 : i32, i32
  }
  func.func @transform_4(%arg0: i32) -> (i32, i32) {
    %c0_i32 = arith.constant 0 : i32
    %c0_i32_0 = arith.constant 0 : i32
    %c0_i32_1 = arith.constant 0 : i32
    return %c0_i32, %c0_i32_0 : i32, i32
  }
  func.func @transform_5(%arg0: i32) -> (i32, i32) {
    %c0_i32 = arith.constant 0 : i32
    %c0_i32_0 = arith.constant 0 : i32
    %c0_i32_1 = arith.constant 0 : i32
    return %c0_i32, %c0_i32_0 : i32, i32
  }
  func.func @transform_6(%arg0: i32) -> (i32, i32) {
    %c0_i32 = arith.constant 0 : i32
    %c0_i32_0 = arith.constant 0 : i32
    %c0_i32_1 = arith.constant 0 : i32
    return %c0_i32, %c0_i32_0 : i32, i32
  }
  func.func @transform_7(%arg0: i32) -> (i32, i32) {
    %c0_i32 = arith.constant 0 : i32
    %c0_i32_0 = arith.constant 0 : i32
    %c0_i32_1 = arith.constant 0 : i32
    return %c0_i32, %c0_i32_0 : i32, i32
  }
  func.func @transform_8(%arg0: i32) -> (i32, i32, i32) {
    %c0_i32 = arith.constant 0 : i32
    %c0_i32_0 = arith.constant 0 : i32
    %c0_i32_1 = arith.constant 0 : i32
    return %arg0, %c0_i32, %c0_i32_0 : i32, i32, i32
  }
}

</mosaic_0001>

<llo_original>
// kernel: sub.8
$region0: #{sub.8}
  #allocation0 [shape = 's32[1]{0}', space=sflag, size = 0x4, scoped, tag = 'scoped memory for sub.8']
  %s0 = inlined_call_operand.vmem [shape: f32[4,1], index: 0, kind: input, shape index: {}]
  %s1 = inlined_call_operand.vmem [shape: f32[4,1], index: 1, kind: input, shape index: {}]
  %s2 = inlined_call_operand.vmem [shape: f32[4,1], index: 2, kind: output, shape index: {}]
  %v3 = vld [vmem:[%s0] sm:$0xf]
  %v4 = vld [vmem:[%s1] sm:$0xf]
  %5 = xla_tuple %v3, %v4
  %6 = xla_tuple %5
  %v7 = vsub.f32 %v3, %v4
  %8 = xla_tuple %v7
  %9 = vst [vmem:[%s2] sm:$0xf] %v7

// kernel: mask_forward.3
$region0: #{mask_forward.3}
  #allocation0 [shape = 'u32[]', space=smem, size = 0x4, offset = 0x4, fixed_abs, tag = 'smem constant byte address 0x4 - core index']
  #allocation1 [shape = 'u32[144,128]{1,0:T(1,128)}', space=vmem, size = 0x12000, scoped, tag = 'internal scratch']
  %s0 = inlined_call_operand.vmem [shape: f32[2,32,256], index: 0, kind: input, shape index: {}]
  %s1 = inlined_call_operand.vmem [shape: f32[8,32], index: 1, kind: input, shape index: {}]
  %s2 = inlined_call_operand.vmem [shape: f32[8,1], index: 2, kind: input, shape index: {}]
  %s3 = inlined_call_operand.vmem [shape: f32[4,8], index: 3, kind: input, shape index: {}]
  %s4 = inlined_call_operand.vmem [shape: f32[4,1], index: 4, kind: input, shape index: {}]
  %s5 = inlined_call_operand.vmem [shape: f32[2,4], index: 5, kind: input, shape index: {}]
  %s6 = inlined_call_operand.vmem [shape: f32[2,1], index: 6, kind: input, shape index: {}]
  %s7 = inlined_call_operand.vmem [shape: f32[2,8,256], index: 7, kind: output, shape index: {0}]
  %s8 = inlined_call_operand.vmem [shape: f32[2,2,256], index: 8, kind: output, shape index: {1}]
  %9 = xla_tuple %s7, %s8
  %s10 = sld [smem:[#allocation0]]
  $region69: #{mask_forward.3} parent=0
    _
  %s12 = ssub.s32 1, %s10
  %s13 = scalar_select 0, %s12, %s10
  loop: start=0, step=1, limit=4
  $region2: #{mask_forward.3} parent=0 // loop_pre_header
    _
  $region3: #{mask_forward.3} parent=0 // loop_header
    %s15 = sphi 0, %s19
    %p16 = scmp.ge.s32.totalorder %s15, 4
    %s22 = sphi 0, %s34
    %s23 = sphi 0, %s30
    %s24 = sphi 0, %s22
    %s25 = sphi 0, %s23
    %s26 = sphi 0, %s24
    %s27 = sphi 0, %s25
    %s39 = sphi 0, %s41
    %s42 = sphi 0, %s39
    %s43 = sphi 0, %s42
    %s59 = sphi 0, %s43
    %s63 = sphi 0, %s63
    %s65 = sphi 0, %s63
    %s66 = sphi 0, %s65
    %s80 = sphi 0, %s66
    %s84 = sphi 0, %s84
    %s86 = sphi 0, %s84
    %s87 = sphi 0, %s86
    %s101 = sphi 0, %s87
    %s105 = sphi 0, %s105
    %s107 = sphi 0, %s105
    %s108 = sphi 0, %s107
    %s122 = sphi 0, %s108
    %s126 = sphi 0, %s126
    %s128 = sphi 0, %s126
    %s129 = sphi 0, %s128
    %s143 = sphi 0, %s129
    %s147 = sphi 0, %s147
    %s149 = sphi 0, %s147
    %s150 = sphi 0, %s149
    %s164 = sphi 0, %s150
    %s168 = sphi 0, %s168
    %s170 = sphi 0, %s168
    %s171 = sphi 0, %s170
    %s185 = sphi 0, %s171
    %s193 = sphi 0, %s195
    %s196 = sphi 0, %s193
    %s197 = sphi 0, %s196
    %s213 = sphi 0, %s197
    %s221 = sphi 0, %s223
    %s224 = sphi 0, %s221
    %s225 = sphi 0, %s224
    %s241 = sphi 0, %s225
  $region4: #{mask_forward.3} parent=0 // loop_header_branch
    %18 = sbr.rel (%p16) target = $region8
  $region5: #{mask_forward.3} parent=0 // loop_body
    %s20 = ssub.s32 %s15, 1
    %s21 = ssub.s32 %s15, 2
    %s28 = sadd.s32 1, %s23
    %p29 = scmp.ge.s32.totalorder %s28, 1
    %s30 = scalar_select %p29, 0, %s28
    %s31 = sadd.s32 1, %s22
    %s32 = scalar_select %p29, %s31, %s22
    %p33 = scmp.ge.s32.totalorder %s32, 2
    %s34 = scalar_select %p33, 0, %s32
    %s35 = ssub.s32 %s22, %s34
    %s36 = ssub.s32 %s23, %s30
    %s37 = sor.u32 %s35, %s36
    %p38 = scmp.eq.s32.totalorder %s37, 0
    %s40 = sadd.s32 %s39, 1
    %s41 = scalar_select %p38, %s39, %s40
    %p44 = pneg %p38
    %p45 = scmp.eq.s32.totalorder %s15, 1
    %p46 = por %p44, %p45
    %p47 = scmp.ne.s32.totalorder %s39, %s42
    %p48 = scmp.eq.s32.totalorder %s15, 0
    %p49 = por %p47, %p48
    %p50 = scmp.ne.s32.totalorder %s39, %s42
    %p51 = scmp.eq.s32.totalorder %s20, 1
    %p52 = por %p50, %p51
    %p53 = scmp.ne.s32.totalorder %s42, %s43
    %p54 = scmp.eq.s32.totalorder %s20, 0
    %p55 = por %p53, %p54
    %p56 = scmp.ne.s32.totalorder %s42, %s43
    %p57 = scmp.eq.s32.totalorder %s21, 1
    %p58 = por %p56, %p57
    %p60 = scmp.ne.s32.totalorder %s43, %s59
    %p61 = scmp.eq.s32.totalorder %s21, 0
    %p62 = por %p60, %p61
    %s64 = sadd.s32 %s63, 1
    %p67 = scmp.eq.s32.totalorder %s15, 1
    %p68 = scmp.ne.s32.totalorder %s63, %s65
    %p69 = scmp.eq.s32.totalorder %s15, 0
    %p70 = por %p68, %p69
    %p71 = scmp.ne.s32.totalorder %s63, %s65
    %p72 = scmp.eq.s32.totalorder %s20, 1
    %p73 = por %p71, %p72
    %p74 = scmp.ne.s32.totalorder %s65, %s66
    %p75 = scmp.eq.s32.totalorder %s20, 0
    %p76 = por %p74, %p75
    %p77 = scmp.ne.s32.totalorder %s65, %s66
    %p78 = scmp.eq.s32.totalorder %s21, 1
    %p79 = por %p77, %p78
    %p81 = scmp.ne.s32.totalorder %s66, %s80
    %p82 = scmp.eq.s32.totalorder %s21, 0
    %p83 = por %p81, %p82
    %s85 = sadd.s32 %s84, 1
    %p88 = scmp.eq.s32.totalorder %s15, 1
    %p89 = scmp.ne.s32.totalorder %s84, %s86
    %p90 = scmp.eq.s32.totalorder %s15, 0
    %p91 = por %p89, %p90
    %p92 = scmp.ne.s32.totalorder %s84, %s86
    %p93 = scmp.eq.s32.totalorder %s20, 1
    %p94 = por %p92, %p93
    %p95 = scmp.ne.s32.totalorder %s86, %s87
    %p96 = scmp.eq.s32.totalorder %s20, 0
    %p97 = por %p95, %p96
    %p98 = scmp.ne.s32.totalorder %s86, %s87
    %p99 = scmp.eq.s32.totalorder %s21, 1
    %p100 = por %p98, %p99
    %p102 = scmp.ne.s32.totalorder %s87, %s101
    %p103 = scmp.eq.s32.totalorder %s21, 0
    %p104 = por %p102, %p103
    %s106 = sadd.s32 %s105, 1
    %p109 = scmp.eq.s32.totalorder %s15, 1
    %p110 = scmp.ne.s32.totalorder %s105, %s107
    %p111 = scmp.eq.s32.totalorder %s15, 0
    %p112 = por %p110, %p111
    %p113 = scmp.ne.s32.totalorder %s105, %s107
    %p114 = scmp.eq.s32.totalorder %s20, 1
    %p115 = por %p113, %p114
    %p116 = scmp.ne.s32.totalorder %s107, %s108
    %p117 = scmp.eq.s32.totalorder %s20, 0
    %p118 = por %p116, %p117
    %p119 = scmp.ne.s32.totalorder %s107, %s108
    %p120 = scmp.eq.s32.totalorder %s21, 1
    %p121 = por %p119, %p120
    %p123 = scmp.ne.s32.totalorder %s108, %s122
    %p124 = scmp.eq.s32.totalorder %s21, 0
    %p125 = por %p123, %p124
    %s127 = sadd.s32 %s126, 1
    %p130 = scmp.eq.s32.totalorder %s15, 1
    %p131 = scmp.ne.s32.totalorder %s126, %s128
    %p132 = scmp.eq.s32.totalorder %s15, 0
    %p133 = por %p131, %p132
    %p134 = scmp.ne.s32.totalorder %s126, %s128
    %p135 = scmp.eq.s32.totalorder %s20, 1
    %p136 = por %p134, %p135
    %p137 = scmp.ne.s32.totalorder %s128, %s129
    %p138 = scmp.eq.s32.totalorder %s20, 0
    %p139 = por %p137, %p138
    %p140 = scmp.ne.s32.totalorder %s128, %s129
    %p141 = scmp.eq.s32.totalorder %s21, 1
    %p142 = por %p140, %p141
    %p144 = scmp.ne.s32.totalorder %s129, %s143
    %p145 = scmp.eq.s32.totalorder %s21, 0
    %p146 = por %p144, %p145
    %s148 = sadd.s32 %s147, 1
    %p151 = scmp.eq.s32.totalorder %s15, 1
    %p152 = scmp.ne.s32.totalorder %s147, %s149
    %p153 = scmp.eq.s32.totalorder %s15, 0
    %p154 = por %p152, %p153
    %p155 = scmp.ne.s32.totalorder %s147, %s149
    %p156 = scmp.eq.s32.totalorder %s20, 1
    %p157 = por %p155, %p156
    %p158 = scmp.ne.s32.totalorder %s149, %s150
    %p159 = scmp.eq.s32.totalorder %s20, 0
    %p160 = por %p158, %p159
    %p161 = scmp.ne.s32.totalorder %s149, %s150
    %p162 = scmp.eq.s32.totalorder %s21, 1
    %p163 = por %p161, %p162
    %p165 = scmp.ne.s32.totalorder %s150, %s164
    %p166 = scmp.eq.s32.totalorder %s21, 0
    %p167 = por %p165, %p166
    %s169 = sadd.s32 %s168, 1
    %p172 = scmp.eq.s32.totalorder %s15, 1
    %p173 = scmp.ne.s32.totalorder %s168, %s170
    %p174 = scmp.eq.s32.totalorder %s15, 0
    %p175 = por %p173, %p174
    %p176 = scmp.ne.s32.totalorder %s168, %s170
    %p177 = scmp.eq.s32.totalorder %s20, 1
    %p178 = por %p176, %p177
    %p179 = scmp.ne.s32.totalorder %s170, %s171
    %p180 = scmp.eq.s32.totalorder %s20, 0
    %p181 = por %p179, %p180
    %p182 = scmp.ne.s32.totalorder %s170, %s171
    %p183 = scmp.eq.s32.totalorder %s21, 1
    %p184 = por %p182, %p183
    %p186 = scmp.ne.s32.totalorder %s171, %s185
    %p187 = scmp.eq.s32.totalorder %s21, 0
    %p188 = por %p186, %p187
    %s189 = ssub.s32 %s22, %s34
    %s190 = ssub.s32 %s23, %s30
    %s191 = sor.u32 %s189, %s190
    %p192 = scmp.eq.s32.totalorder %s191, 0
    %s194 = sadd.s32 %s193, 1
    %s195 = scalar_select %p192, %s193, %s194
    %p198 = pneg %p192
    %p199 = scmp.eq.s32.totalorder %s15, 1
    %p200 = por %p198, %p199
    %p201 = scmp.ne.s32.totalorder %s193, %s196
    %p202 = scmp.eq.s32.totalorder %s15, 0
    %p203 = por %p201, %p202
    %p204 = scmp.ne.s32.totalorder %s193, %s196
    %p205 = scmp.eq.s32.totalorder %s20, 1
    %p206 = por %p204, %p205
    %p207 = scmp.ne.s32.totalorder %s196, %s197
    %p208 = scmp.eq.s32.totalorder %s20, 0
    %p209 = por %p207, %p208
    %p210 = scmp.ne.s32.totalorder %s196, %s197
    %p211 = scmp.eq.s32.totalorder %s21, 1
    %p212 = por %p210, %p211
    %p214 = scmp.ne.s32.totalorder %s197, %s213
    %p215 = scmp.eq.s32.totalorder %s21, 0
    %p216 = por %p214, %p215
    %s217 = ssub.s32 %s22, %s34
    %s218 = ssub.s32 %s23, %s30
    %s219 = sor.u32 %s217, %s218
    %p220 = scmp.eq.s32.totalorder %s219, 0
    %s222 = sadd.s32 %s221, 1
    %s223 = scalar_select %p220, %s221, %s222
    %p226 = pneg %p220
    %p227 = scmp.eq.s32.totalorder %s15, 1
    %p228 = por %p226, %p227
    %p229 = scmp.ne.s32.totalorder %s221, %s224
    %p230 = scmp.eq.s32.totalorder %s15, 0
    %p231 = por %p229, %p230
    %p232 = scmp.ne.s32.totalorder %s221, %s224
    %p233 = scmp.eq.s32.totalorder %s20, 1
    %p234 = por %p232, %p233
    %p235 = scmp.ne.s32.totalorder %s224, %s225
    %p236 = scmp.eq.s32.totalorder %s20, 0
    %p237 = por %p235, %p236
    %p238 = scmp.ne.s32.totalorder %s224, %s225
    %p239 = scmp.eq.s32.totalorder %s21, 1
    %p240 = por %p238, %p239
    %p242 = scmp.ne.s32.totalorder %s225, %s241
    %p243 = scmp.eq.s32.totalorder %s21, 0
    %p244 = por %p242, %p243
    %p245 = scmp.le.s32.totalorder 1, %s15
    %p246 = scmp.lt.s32.totalorder %s15, 3
    %p247 = pnand %p245, %p246
    %p248 = pneg %p247
    // Predicated region
    $region9: #{mask_forward.3} parent=5 // pred_check
      _
    $region10: #{mask_forward.3} parent=5 // pred_check_branch
      %250 = sbr.rel (%p247) target = $region12
    $region11: #{mask_forward.3} parent=5 // pred_region
      %s251 = ssub.s32 %s15, 1
      // Predicated region
      $region13: #{mask_forward.3} parent=11 // pred_check
        %p252 = pneg %p76
      $region14: #{mask_forward.3} parent=11 // pred_check_branch
        %254 = sbr.rel (%p252) target = $region16
      $region15: #{mask_forward.3} parent=11 // pred_region
        _
      $region16: #{mask_forward.3} parent=11 // pred_fallthru
        _
      // Predicated region
      $region17: #{mask_forward.3} parent=11 // pred_check
        %p255 = pneg %p97
      $region18: #{mask_forward.3} parent=11 // pred_check_branch
        %257 = sbr.rel (%p255) target = $region20
      $region19: #{mask_forward.3} parent=11 // pred_region
        _
      $region20: #{mask_forward.3} parent=11 // pred_fallthru
        _
      // Predicated region
      $region21: #{mask_forward.3} parent=11 // pred_check
        %p258 = pneg %p118
      $region22: #{mask_forward.3} parent=11 // pred_check_branch
        %260 = sbr.rel (%p258) target = $region24
      $region23: #{mask_forward.3} parent=11 // pred_region
        _
      $region24: #{mask_forward.3} parent=11 // pred_fallthru
        _
      // Predicated region
      $region25: #{mask_forward.3} parent=11 // pred_check
        %p261 = pneg %p139
      $region26: #{mask_forward.3} parent=11 // pred_check_branch
        %263 = sbr.rel (%p261) target = $region28
      $region27: #{mask_forward.3} parent=11 // pred_region
        _
      $region28: #{mask_forward.3} parent=11 // pred_fallthru
        _
      // Predicated region
      $region29: #{mask_forward.3} parent=11 // pred_check
        %p264 = pneg %p160
      $region30: #{mask_forward.3} parent=11 // pred_check_branch
        %266 = sbr.rel (%p264) target = $region32
      $region31: #{mask_forward.3} parent=11 // pred_region
        _
      $region32: #{mask_forward.3} parent=11 // pred_fallthru
        _
      // Predicated region
      $region33: #{mask_forward.3} parent=11 // pred_check
        %p267 = pneg %p181
      $region34: #{mask_forward.3} parent=11 // pred_check_branch
        %269 = sbr.rel (%p267) target = $region36
      $region35: #{mask_forward.3} parent=11 // pred_region
        _
      $region36: #{mask_forward.3} parent=11 // pred_fallthru
        _
    $region12: #{mask_forward.3} parent=5 // pred_fallthru
      _
    %p270 = scmp.lt.s32.totalorder %s15, 2
    // Predicated region
    $region37: #{mask_forward.3} parent=5 // pred_check
      %p271 = pneg %p270
    $region38: #{mask_forward.3} parent=5 // pred_check_branch
      %273 = sbr.rel (%p271) target = $region40
    $region39: #{mask_forward.3} parent=5 // pred_region
      // Predicated region
      $region41: #{mask_forward.3} parent=39 // pred_check
        %p274 = pneg %p49
      $region42: #{mask_forward.3} parent=39 // pred_check_branch
        %276 = sbr.rel (%p274) target = $region44
      $region43: #{mask_forward.3} parent=39 // pred_region
        %s277 = smul.u32 2, %s23
        %p278 = scmp.lt.s32.totalorder %s22, 1
        %s279 = scalar_select %p278, %s22, 1
        %p280 = scmp.lt.s32.totalorder %s277, 1
        %s281 = scalar_select %p280, %s277, 1
        %s282 = smul.addr %s279, 8
        %s283 = sadd.s32 %s281, %s282
        %s284 = smul.addr %s283, 8
        %s285 = scalar_lea.vmem %s0, %s284
        %s286 = smul.u32 2, %s23
      $region44: #{mask_forward.3} parent=39 // pred_fallthru
        _
    $region40: #{mask_forward.3} parent=5 // pred_fallthru
      _
    %p287 = scmp.le.s32.totalorder 1, %s15
    %p288 = scmp.lt.s32.totalorder %s15, 3
    %p289 = pnand %p287, %p288
    %p290 = pneg %p289
    // Predicated region
    $region45: #{mask_forward.3} parent=5 // pred_check
      _
    $region46: #{mask_forward.3} parent=5 // pred_check_branch
      %292 = sbr.rel (%p289) target = $region48
    $region47: #{mask_forward.3} parent=5 // pred_region
      %s293 = ssub.s32 %s15, 1
      %s294 = smul.u32 2, %s25
      %p295 = scmp.lt.s32.totalorder %s24, 1
      %s296 = scalar_select %p295, %s24, 1
      %p297 = scmp.lt.s32.totalorder %s294, 1
      %s298 = scalar_select %p297, %s294, 1
      %s299 = smul.addr %s296, 8
      %s300 = sadd.s32 %s298, %s299
      %s301 = smul.addr %s300, 8
      %s302 = scalar_lea.vmem %s0, %s301
      %p303 = pneg %p55
      %p304 = pneg %p52
      %p305 = pneg %p76
      %p306 = pneg %p73
      %p307 = pneg %p97
      %p308 = pneg %p94
      %p309 = pneg %p118
      %p310 = pneg %p115
      %p311 = pneg %p139
      %p312 = pneg %p136
      %p313 = pneg %p160
      %p314 = pneg %p157
      %p315 = pneg %p181
      %p316 = pneg %p178
      %p317 = pneg %p209
      %p318 = pneg %p206
      %s319 = smul.u32 2, %s25
      %p320 = scmp.lt.s32.totalorder %s24, 1
      %s321 = scalar_select %p320, %s24, 1
      %p322 = scmp.lt.s32.totalorder %s319, 1
      %s323 = scalar_select %p322, %s319, 1
      %s324 = smul.addr %s321, 2
      %s325 = sadd.s32 %s323, %s324
      %s326 = smul.addr %s325, 8
      %s327 = scalar_lea.vmem %s7, %s326
      %p328 = pneg %p237
      %p329 = pneg %p234
      %s330 = smul.u32 2, %s25
      %p331 = scmp.lt.s32.totalorder %s24, 1
      %s332 = scalar_select %p331, %s24, 1
      %p333 = scmp.lt.s32.totalorder %s330, 1
      %s334 = scalar_select %p333, %s330, 1
      %s335 = smul.addr %s332, 2
      %s336 = sadd.s32 %s334, %s335
      %s337 = smul.addr %s336, 2
      %s338 = scalar_lea.vmem %s8, %s337
      %s339 = smul.u32 2, %s25
      %p340 = scmp.lt.s32.totalorder %s24, 1
      %s341 = scalar_select %p340, %s24, 1
      %p342 = scmp.lt.s32.totalorder %s339, 1
      %s343 = scalar_select %p342, %s339, 1
      %s344 = smul.addr %s341, 8
      %s345 = sadd.s32 %s343, %s344
      %s346 = smul.addr %s345, 8
      %s347 = scalar_lea.vmem %s0, %s346
      %s348 = smul.u32 2, %s25
      %s349 = smul.u32 2, %s25
      %p350 = scmp.lt.s32.totalorder %s24, 1
      %s351 = scalar_select %p350, %s24, 1
      %p352 = scmp.lt.s32.totalorder %s349, 1
      %s353 = scalar_select %p352, %s349, 1
      %s354 = smul.addr %s351, 2
      %s355 = sadd.s32 %s353, %s354
      %s356 = smul.addr %s355, 8
      %s357 = scalar_lea.vmem %s7, %s356
      %s358 = smul.u32 2, %s25
      %s359 = smul.u32 2, %s25
      %p360 = scmp.lt.s32.totalorder %s24, 1
      %s361 = scalar_select %p360, %s24, 1
      %p362 = scmp.lt.s32.totalorder %s359, 1
      %s363 = scalar_select %p362, %s359, 1
      %s364 = smul.addr %s361, 2
      %s365 = sadd.s32 %s363, %s364
      %s366 = smul.addr %s365, 2
      %s367 = scalar_lea.vmem %s8, %s366
      %s368 = smul.u32 2, %s25
      %v369 = vld [vmem:[%s347] sm:$0xff]
      %v370 = vld [vmem:[%s347 + $0x8] sm:$0xff]
      %v371 = vld [vmem:[%s347 + $0x10] sm:$0xff]
      %v372 = vld [vmem:[%s347 + $0x18] sm:$0xff]
      %v373 = vld [vmem:[%s347 + $0x20] sm:$0xff]
      %v374 = vld [vmem:[%s347 + $0x28] sm:$0xff]
      %v375 = vld [vmem:[%s347 + $0x30] sm:$0xff]
      %v376 = vld [vmem:[%s347 + $0x38] sm:$0xff]
      %v377 = vld [vmem:[%s1] sm:$0xff]
      %v378 = vld [vmem:[%s2] sm:$0xff]
      %380 = vset.pattern.permute.xlu0 0
      %381 = vperm.xlu0 %380, %v378
      %v382 = vpop.permute.xlu0 %381
      %vm384 = vcmask 261120
      %v386 = vsel %vm384, %v377, 0
      %v388 = vand.u32 %v370, 4294901760
      %389 = vmatprep.subr.mxu0 %v388
      %v390 = vand.u32 %v369, 4294901760
      %391 = vmatpush1.msra.mxu0 %v390
      %v392 = vand.u32 %v372, 4294901760
      %393 = vmatprep.subr.mxu0 %v392
      %v394 = vand.u32 %v371, 4294901760
      %395 = vmatpush1.msra.mxu0 %v394
      %v396 = vand.u32 %v374, 4294901760
      %397 = vmatprep.subr.mxu0 %v396
      %v398 = vand.u32 %v373, 4294901760
      %399 = vmatpush1.msra.mxu0 %v398
      %v400 = vand.u32 %v376, 4294901760
      %401 = vmatprep.subr.mxu0 %v400
      %v402 = vand.u32 %v375, 4294901760
      %403 = vmatpush1.msra.mxu0 %v402
      %404 = vmatprep.subr.mxu0 0.0
      %405 = vmatpush1.msra.mxu0 0.0
      %406 = vmatprep.subr.mxu0 0.0
      %407 = vmatpush1.msra.mxu0 0.0
      %408 = vmatprep.subr.mxu0 0.0
      %409 = vmatpush1.msra.mxu0 0.0
      %410 = vmatprep.subr.mxu0 0.0
      %411 = vmatpush1.msra.mxu0 0.0
      %412 = vmatprep.subr.mxu0 0.0
      %413 = vmatpush1.msra.mxu0 0.0
      %414 = vmatprep.subr.mxu0 0.0
      %415 = vmatpush1.msra.mxu0 0.0
      %416 = vmatprep.subr.mxu0 0.0
      %417 = vmatpush1.msra.mxu0 0.0
      %418 = vmatprep.subr.mxu0 0.0
      %419 = vmatpush1.msra.mxu0 0.0
      %420 = vmatprep.subr.mxu0 0.0
      %421 = vmatpush1.msra.mxu0 0.0
      %422 = vmatprep.subr.mxu0 0.0
      %423 = vmatpush1.msra.mxu0 0.0
      %424 = vmatprep.subr.mxu0 0.0
      %425 = vmatpush1.msra.mxu0 0.0
      %426 = vmatprep.subr.mxu0 0.0
      %427 = vmatpush1.msra.mxu0 0.0
      %428 = vmatprep.subr.mxu0 0.0
      %429 = vmatpush1.msra.mxu0 0.0
      %430 = vmatprep.subr.mxu0 0.0
      %431 = vmatpush1.msra.mxu0 0.0
      %432 = vmatprep.subr.mxu0 0.0
      %433 = vmatpush1.msra.mxu0 0.0
      %434 = vmatprep.subr.mxu0 0.0
      %435 = vmatpush1.msra.mxu0 0.0
      %436 = vmatprep.subr.mxu0 0.0
      %437 = vmatpush1.msra.mxu0 0.0
      %438 = vmatprep.subr.mxu0 0.0
      %439 = vmatpush1.msra.mxu0 0.0
      %440 = vmatprep.subr.mxu0 0.0
      %441 = vmatpush1.msra.mxu0 0.0
      %442 = vmatprep.subr.mxu0 0.0
      %443 = vmatpush1.msra.mxu0 0.0
      %444 = vmatprep.subr.mxu0 0.0
      %445 = vmatpush1.msra.mxu0 0.0
      %446 = vmatprep.subr.mxu0 0.0
      %447 = vmatpush1.msra.mxu0 0.0
      %448 = vmatprep.subr.mxu0 0.0
      %449 = vmatpush1.msra.mxu0 0.0
      %450 = vmatprep.subr.mxu0 0.0
      %451 = vmatpush1.msra.mxu0 0.0
      %452 = vmatprep.subr.mxu0 0.0
      %453 = vmatpush1.msra.mxu0 0.0
      %454 = vmatprep.subr.mxu0 0.0
      %455 = vmatpush1.msra.mxu0 0.0
      %456 = vmatprep.subr.mxu0 0.0
      %457 = vmatpush1.msra.mxu0 0.0
      %458 = vmatprep.subr.mxu0 0.0
      %459 = vmatpush1.msra.mxu0 0.0
      %460 = vmatprep.mubr.f32.mxu0 0.0
      %v461 = vand.u32 %v386, 4294901760
      %v462 = vsub.f32 %v386, %v461
      %v463 = vand.u32 %v462, 4294901760
      %v464 = vsub.f32 %v462, %v463
      %v465 = vand.u32 %v464, 4294901760
      %466 = vmatmul.mubr.f32.gmra.mrb[0].mxu0 %v465
      %v467 = vpop.f32.mrb[0].mxu0
      %v468 = vadd.f32 %v382, %v467
      %v469 = vpop.f32.mrb[0].mxu0
      %v470 = vadd.f32 %v382, %v469
      %471 = vdwg.mxu0
      %v472 = vand.u32 %v370, 4294901760
      %v473 = vsub.f32 %v370, %v472
      %v474 = vand.u32 %v473, 4294901760
      %v475 = vsub.f32 %v473, %v474
      %v476 = vand.u32 %v475, 4294901760
      %477 = vmatprep.subr.mxu0 %v476
      %v478 = vand.u32 %v369, 4294901760
      %v479 = vsub.f32 %v369, %v478
      %v480 = vand.u32 %v479, 4294901760
      %v481 = vsub.f32 %v479, %v480
      %v482 = vand.u32 %v481, 4294901760
      %483 = vmatpush1.msra.mxu0 %v482
      %v484 = vand.u32 %v372, 4294901760
      %v485 = vsub.f32 %v372, %v484
      %v486 = vand.u32 %v485, 4294901760
      %v487 = vsub.f32 %v485, %v486
      %v488 = vand.u32 %v487, 4294901760
      %489 = vmatprep.subr.mxu0 %v488
      %v490 = vand.u32 %v371, 4294901760
      %v491 = vsub.f32 %v371, %v490
      %v492 = vand.u32 %v491, 4294901760
      %v493 = vsub.f32 %v491, %v492
      %v494 = vand.u32 %v493, 4294901760
      %495 = vmatpush1.msra.mxu0 %v494
      %v496 = vand.u32 %v374, 4294901760
      %v497 = vsub.f32 %v374, %v496
      %v498 = vand.u32 %v497, 4294901760
      %v499 = vsub.f32 %v497, %v498
      %v500 = vand.u32 %v499, 4294901760
      %501 = vmatprep.subr.mxu0 %v500
      %v502 = vand.u32 %v373, 4294901760
      %v503 = vsub.f32 %v373, %v502
      %v504 = vand.u32 %v503, 4294901760
      %v505 = vsub.f32 %v503, %v504
      %v506 = vand.u32 %v505, 4294901760
      %507 = vmatpush1.msra.mxu0 %v506
      %v508 = vand.u32 %v376, 4294901760
      %v509 = vsub.f32 %v376, %v508
      %v510 = vand.u32 %v509, 4294901760
      %v511 = vsub.f32 %v509, %v510
      %v512 = vand.u32 %v511, 4294901760
      %513 = vmatprep.subr.mxu0 %v512
      %v514 = vand.u32 %v375, 4294901760
      %v515 = vsub.f32 %v375, %v514
      %v516 = vand.u32 %v515, 4294901760
      %v517 = vsub.f32 %v515, %v516
      %v518 = vand.u32 %v517, 4294901760
      %519 = vmatpush1.msra.mxu0 %v518
      %520 = vmatprep.subr.mxu0 0.0
      %521 = vmatpush1.msra.mxu0 0.0
      %522 = vmatprep.subr.mxu0 0.0
      %523 = vmatpush1.msra.mxu0 0.0
      %524 = vmatprep.subr.mxu0 0.0
      %525 = vmatpush1.msra.mxu0 0.0
      %526 = vmatprep.subr.mxu0 0.0
      %527 = vmatpush1.msra.mxu0 0.0
      %528 = vmatprep.subr.mxu0 0.0
      %529 = vmatpush1.msra.mxu0 0.0
      %530 = vmatprep.subr.mxu0 0.0
      %531 = vmatpush1.msra.mxu0 0.0
      %532 = vmatprep.subr.mxu0 0.0
      %533 = vmatpush1.msra.mxu0 0.0
      %534 = vmatprep.subr.mxu0 0.0
      %535 = vmatpush1.msra.mxu0 0.0
      %536 = vmatprep.subr.mxu0 0.0
      %537 = vmatpush1.msra.mxu0 0.0
      %538 = vmatprep.subr.mxu0 0.0
      %539 = vmatpush1.msra.mxu0 0.0
      %540 = vmatprep.subr.mxu0 0.0
      %541 = vmatpush1.msra.mxu0 0.0
      %542 = vmatprep.subr.mxu0 0.0
      %543 = vmatpush1.msra.mxu0 0.0
      %544 = vmatprep.subr.mxu0 0.0
      %545 = vmatpush1.msra.mxu0 0.0
      %546 = vmatprep.subr.mxu0 0.0
      %547 = vmatpush1.msra.mxu0 0.0
      %548 = vmatprep.subr.mxu0 0.0
      %549 = vmatpush1.msra.mxu0 0.0
      %550 = vmatprep.subr.mxu0 0.0
      %551 = vmatpush1.msra.mxu0 0.0
      %552 = vmatprep.subr.mxu0 0.0
      %553 = vmatpush1.msra.mxu0 0.0
      %554 = vmatprep.subr.mxu0 0.0
      %555 = vmatpush1.msra.mxu0 0.0
      %556 = vmatprep.subr.mxu0 0.0
      %557 = vmatpush1.msra.mxu0 0.0
      %558 = vmatprep.subr.mxu0 0.0
      %559 = vmatpush1.msra.mxu0 0.0
      %560 = vmatprep.subr.mxu0 0.0
      %561 = vmatpush1.msra.mxu0 0.0
      %562 = vmatprep.subr.mxu0 0.0
      %563 = vmatpush1.msra.mxu0 0.0
      %564 = vmatprep.subr.mxu0 0.0
      %565 = vmatpush1.msra.mxu0 0.0
      %566 = vmatprep.subr.mxu0 0.0
      %567 = vmatpush1.msra.mxu0 0.0
      %568 = vmatprep.subr.mxu0 0.0
      %569 = vmatpush1.msra.mxu0 0.0
      %570 = vmatprep.subr.mxu0 0.0
      %571 = vmatpush1.msra.mxu0 0.0
      %572 = vmatprep.subr.mxu0 0.0
      %573 = vmatpush1.msra.mxu0 0.0
      %574 = vmatprep.subr.mxu0 0.0
      %575 = vmatpush1.msra.mxu0 0.0
      %576 = vmatprep.mubr.f32.mxu0 0.0
      %v577 = vand.u32 %v386, 4294901760
      %578 = vmatmul.mubr.f32.gmra.mrb[0].mxu0 %v577
      %v579 = vpop.f32.mrb[0].mxu0
      %v580 = vadd.f32 %v468, %v579
      %v581 = vpop.f32.mrb[0].mxu0
      %v582 = vadd.f32 %v470, %v581
      %583 = vdwg.mxu0
      %v584 = vand.u32 %v370, 4294901760
      %v585 = vsub.f32 %v370, %v584
      %586 = vmatprep.subr.mxu0 %v585
      %v587 = vand.u32 %v369, 4294901760
      %v588 = vsub.f32 %v369, %v587
      %589 = vmatpush1.msra.mxu0 %v588
      %v590 = vand.u32 %v372, 4294901760
      %v591 = vsub.f32 %v372, %v590
      %592 = vmatprep.subr.mxu0 %v591
      %v593 = vand.u32 %v371, 4294901760
      %v594 = vsub.f32 %v371, %v593
      %595 = vmatpush1.msra.mxu0 %v594
      %v596 = vand.u32 %v374, 4294901760
      %v597 = vsub.f32 %v374, %v596
      %598 = vmatprep.subr.mxu0 %v597
      %v599 = vand.u32 %v373, 4294901760
      %v600 = vsub.f32 %v373, %v599
      %601 = vmatpush1.msra.mxu0 %v600
      %v602 = vand.u32 %v376, 4294901760
      %v603 = vsub.f32 %v376, %v602
      %604 = vmatprep.subr.mxu0 %v603
      %v605 = vand.u32 %v375, 4294901760
      %v606 = vsub.f32 %v375, %v605
      %607 = vmatpush1.msra.mxu0 %v606
      %608 = vmatprep.subr.mxu0 0.0
      %609 = vmatpush1.msra.mxu0 0.0
      %610 = vmatprep.subr.mxu0 0.0
      %611 = vmatpush1.msra.mxu0 0.0
      %612 = vmatprep.subr.mxu0 0.0
      %613 = vmatpush1.msra.mxu0 0.0
      %614 = vmatprep.subr.mxu0 0.0
      %615 = vmatpush1.msra.mxu0 0.0
      %616 = vmatprep.subr.mxu0 0.0
      %617 = vmatpush1.msra.mxu0 0.0
      %618 = vmatprep.subr.mxu0 0.0
      %619 = vmatpush1.msra.mxu0 0.0
      %620 = vmatprep.subr.mxu0 0.0
      %621 = vmatpush1.msra.mxu0 0.0
      %622 = vmatprep.subr.mxu0 0.0
      %623 = vmatpush1.msra.mxu0 0.0
      %624 = vmatprep.subr.mxu0 0.0
      %625 = vmatpush1.msra.mxu0 0.0
      %626 = vmatprep.subr.mxu0 0.0
      %627 = vmatpush1.msra.mxu0 0.0
      %628 = vmatprep.subr.mxu0 0.0
      %629 = vmatpush1.msra.mxu0 0.0
      %630 = vmatprep.subr.mxu0 0.0
      %631 = vmatpush1.msra.mxu0 0.0
      %632 = vmatprep.subr.mxu0 0.0
      %633 = vmatpush1.msra.mxu0 0.0
      %634 = vmatprep.subr.mxu0 0.0
      %635 = vmatpush1.msra.mxu0 0.0
      %636 = vmatprep.subr.mxu0 0.0
      %637 = vmatpush1.msra.mxu0 0.0
      %638 = vmatprep.subr.mxu0 0.0
      %639 = vmatpush1.msra.mxu0 0.0
      %640 = vmatprep.subr.mxu0 0.0
      %641 = vmatpush1.msra.mxu0 0.0
      %642 = vmatprep.subr.mxu0 0.0
      %643 = vmatpush1.msra.mxu0 0.0
      %644 = vmatprep.subr.mxu0 0.0
      %645 = vmatpush1.msra.mxu0 0.0
      %646 = vmatprep.subr.mxu0 0.0
      %647 = vmatpush1.msra.mxu0 0.0
      %648 = vmatprep.subr.mxu0 0.0
      %649 = vmatpush1.msra.mxu0 0.0
      %650 = vmatprep.subr.mxu0 0.0
      %651 = vmatpush1.msra.mxu0 0.0
      %652 = vmatprep.subr.mxu0 0.0
      %653 = vmatpush1.msra.mxu0 0.0
      %654 = vmatprep.subr.mxu0 0.0
      %655 = vmatpush1.msra.mxu0 0.0
      %656 = vmatprep.subr.mxu0 0.0
      %657 = vmatpush1.msra.mxu0 0.0
      %658 = vmatprep.subr.mxu0 0.0
      %659 = vmatpush1.msra.mxu0 0.0
      %660 = vmatprep.subr.mxu0 0.0
      %661 = vmatpush1.msra.mxu0 0.0
      %662 = vmatprep.subr.mxu0 0.0
      %663 = vmatpush1.msra.mxu0 0.0
      %664 = vmatprep.mubr.f32.mxu0 0.0
      %v665 = vand.u32 %v386, 4294901760
      %v666 = vsub.f32 %v386, %v665
      %667 = vmatmul.mubr.f32.gmra.mrb[0].mxu0 %v666
      %v668 = vpop.f32.mrb[0].mxu0
      %v669 = vadd.f32 %v580, %v668
      %v670 = vpop.f32.mrb[0].mxu0
      %v671 = vadd.f32 %v582, %v670
      %672 = vdwg.mxu0
      %v673 = vand.u32 %v370, 4294901760
      %674 = vmatprep.subr.mxu0 %v673
      %v675 = vand.u32 %v369, 4294901760
      %676 = vmatpush1.msra.mxu0 %v675
      %v677 = vand.u32 %v372, 4294901760
      %678 = vmatprep.subr.mxu0 %v677
      %v679 = vand.u32 %v371, 4294901760
      %680 = vmatpush1.msra.mxu0 %v679
      %v681 = vand.u32 %v374, 4294901760
      %682 = vmatprep.subr.mxu0 %v681
      %v683 = vand.u32 %v373, 4294901760
      %684 = vmatpush1.msra.mxu0 %v683
      %v685 = vand.u32 %v376, 4294901760
      %686 = vmatprep.subr.mxu0 %v685
      %v687 = vand.u32 %v375, 4294901760
      %688 = vmatpush1.msra.mxu0 %v687
      %689 = vmatprep.subr.mxu0 0.0
      %690 = vmatpush1.msra.mxu0 0.0
      %691 = vmatprep.subr.mxu0 0.0
      %692 = vmatpush1.msra.mxu0 0.0
      %693 = vmatprep.subr.mxu0 0.0
      %694 = vmatpush1.msra.mxu0 0.0
      %695 = vmatprep.subr.mxu0 0.0
      %696 = vmatpush1.msra.mxu0 0.0
      %697 = vmatprep.subr.mxu0 0.0
      %698 = vmatpush1.msra.mxu0 0.0
      %699 = vmatprep.subr.mxu0 0.0
      %700 = vmatpush1.msra.mxu0 0.0
      %701 = vmatprep.subr.mxu0 0.0
      %702 = vmatpush1.msra.mxu0 0.0
      %703 = vmatprep.subr.mxu0 0.0
      %704 = vmatpush1.msra.mxu0 0.0
      %705 = vmatprep.subr.mxu0 0.0
      %706 = vmatpush1.msra.mxu0 0.0
      %707 = vmatprep.subr.mxu0 0.0
      %708 = vmatpush1.msra.mxu0 0.0
      %709 = vmatprep.subr.mxu0 0.0
      %710 = vmatpush1.msra.mxu0 0.0
      %711 = vmatprep.subr.mxu0 0.0
      %712 = vmatpush1.msra.mxu0 0.0
      %713 = vmatprep.subr.mxu0 0.0
      %714 = vmatpush1.msra.mxu0 0.0
      %715 = vmatprep.subr.mxu0 0.0
      %716 = vmatpush1.msra.mxu0 0.0
      %717 = vmatprep.subr.mxu0 0.0
      %718 = vmatpush1.msra.mxu0 0.0
      %719 = vmatprep.subr.mxu0 0.0
      %720 = vmatpush1.msra.mxu0 0.0
      %721 = vmatprep.subr.mxu0 0.0
      %722 = vmatpush1.msra.mxu0 0.0
      %723 = vmatprep.subr.mxu0 0.0
      %724 = vmatpush1.msra.mxu0 0.0
      %725 = vmatprep.subr.mxu0 0.0
      %726 = vmatpush1.msra.mxu0 0.0
      %727 = vmatprep.subr.mxu0 0.0
      %728 = vmatpush1.msra.mxu0 0.0
      %729 = vmatprep.subr.mxu0 0.0
      %730 = vmatpush1.msra.mxu0 0.0
      %731 = vmatprep.subr.mxu0 0.0
      %732 = vmatpush1.msra.mxu0 0.0
      %733 = vmatprep.subr.mxu0 0.0
      %734 = vmatpush1.msra.mxu0 0.0
      %735 = vmatprep.subr.mxu0 0.0
      %736 = vmatpush1.msra.mxu0 0.0
      %737 = vmatprep.subr.mxu0 0.0
      %738 = vmatpush1.msra.mxu0 0.0
      %739 = vmatprep.subr.mxu0 0.0
      %740 = vmatpush1.msra.mxu0 0.0
      %741 = vmatprep.subr.mxu0 0.0
      %742 = vmatpush1.msra.mxu0 0.0
      %743 = vmatprep.subr.mxu0 0.0
      %744 = vmatpush1.msra.mxu0 0.0
      %745 = vmatprep.mubr.f32.mxu0 0.0
      %v746 = vand.u32 %v386, 4294901760
      %v747 = vsub.f32 %v386, %v746
      %v748 = vand.u32 %v747, 4294901760
      %749 = vmatmul.mubr.f32.gmra.mrb[0].mxu0 %v748
      %v750 = vpop.f32.mrb[0].mxu0
      %v751 = vadd.f32 %v669, %v750
      %v752 = vpop.f32.mrb[0].mxu0
      %v753 = vadd.f32 %v671, %v752
      %754 = vdwg.mxu0
      %v755 = vand.u32 %v370, 4294901760
      %v756 = vsub.f32 %v370, %v755
      %v757 = vand.u32 %v756, 4294901760
      %758 = vmatprep.subr.mxu0 %v757
      %v759 = vand.u32 %v369, 4294901760
      %v760 = vsub.f32 %v369, %v759
      %v761 = vand.u32 %v760, 4294901760
      %762 = vmatpush1.msra.mxu0 %v761
      %v763 = vand.u32 %v372, 4294901760
      %v764 = vsub.f32 %v372, %v763
      %v765 = vand.u32 %v764, 4294901760
      %766 = vmatprep.subr.mxu0 %v765
      %v767 = vand.u32 %v371, 4294901760
      %v768 = vsub.f32 %v371, %v767
      %v769 = vand.u32 %v768, 4294901760
      %770 = vmatpush1.msra.mxu0 %v769
      %v771 = vand.u32 %v374, 4294901760
      %v772 = vsub.f32 %v374, %v771
      %v773 = vand.u32 %v772, 4294901760
      %774 = vmatprep.subr.mxu0 %v773
      %v775 = vand.u32 %v373, 4294901760
      %v776 = vsub.f32 %v373, %v775
      %v777 = vand.u32 %v776, 4294901760
      %778 = vmatpush1.msra.mxu0 %v777
      %v779 = vand.u32 %v376, 4294901760
      %v780 = vsub.f32 %v376, %v779
      %v781 = vand.u32 %v780, 4294901760
      %782 = vmatprep.subr.mxu0 %v781
      %v783 = vand.u32 %v375, 4294901760
      %v784 = vsub.f32 %v375, %v783
      %v785 = vand.u32 %v784, 4294901760
      %786 = vmatpush1.msra.mxu0 %v785
      %787 = vmatprep.subr.mxu0 0.0
      %788 = vmatpush1.msra.mxu0 0.0
      %789 = vmatprep.subr.mxu0 0.0
      %790 = vmatpush1.msra.mxu0 0.0
      %791 = vmatprep.subr.mxu0 0.0
      %792 = vmatpush1.msra.mxu0 0.0
      %793 = vmatprep.subr.mxu0 0.0
      %794 = vmatpush1.msra.mxu0 0.0
      %795 = vmatprep.subr.mxu0 0.0
      %796 = vmatpush1.msra.mxu0 0.0
      %797 = vmatprep.subr.mxu0 0.0
      %798 = vmatpush1.msra.mxu0 0.0
      %799 = vmatprep.subr.mxu0 0.0
      %800 = vmatpush1.msra.mxu0 0.0
      %801 = vmatprep.subr.mxu0 0.0
      %802 = vmatpush1.msra.mxu0 0.0
      %803 = vmatprep.subr.mxu0 0.0
      %804 = vmatpush1.msra.mxu0 0.0
      %805 = vmatprep.subr.mxu0 0.0
      %806 = vmatpush1.msra.mxu0 0.0
      %807 = vmatprep.subr.mxu0 0.0
      %808 = vmatpush1.msra.mxu0 0.0
      %809 = vmatprep.subr.mxu0 0.0
      %810 = vmatpush1.msra.mxu0 0.0
      %811 = vmatprep.subr.mxu0 0.0
      %812 = vmatpush1.msra.mxu0 0.0
      %813 = vmatprep.subr.mxu0 0.0
      %814 = vmatpush1.msra.mxu0 0.0
      %815 = vmatprep.subr.mxu0 0.0
      %816 = vmatpush1.msra.mxu0 0.0
      %817 = vmatprep.subr.mxu0 0.0
      %818 = vmatpush1.msra.mxu0 0.0
      %819 = vmatprep.subr.mxu0 0.0
      %820 = vmatpush1.msra.mxu0 0.0
      %821 = vmatprep.subr.mxu0 0.0
      %822 = vmatpush1.msra.mxu0 0.0
      %823 = vmatprep.subr.mxu0 0.0
      %824 = vmatpush1.msra.mxu0 0.0
      %825 = vmatprep.subr.mxu0 0.0
      %826 = vmatpush1.msra.mxu0 0.0
      %827 = vmatprep.subr.mxu0 0.0
      %828 = vmatpush1.msra.mxu0 0.0
      %829 = vmatprep.subr.mxu0 0.0
      %830 = vmatpush1.msra.mxu0 0.0
      %831 = vmatprep.subr.mxu0 0.0
      %832 = vmatpush1.msra.mxu0 0.0
      %833 = vmatprep.subr.mxu0 0.0
      %834 = vmatpush1.msra.mxu0 0.0
      %835 = vmatprep.subr.mxu0 0.0
      %836 = vmatpush1.msra.mxu0 0.0
      %837 = vmatprep.subr.mxu0 0.0
      %838 = vmatpush1.msra.mxu0 0.0
      %839 = vmatprep.subr.mxu0 0.0
      %840 = vmatpush1.msra.mxu0 0.0
      %841 = vmatprep.subr.mxu0 0.0
      %842 = vmatpush1.msra.mxu0 0.0
      %843 = vmatprep.mubr.f32.mxu0 0.0
      %v844 = vand.u32 %v386, 4294901760
      %845 = vmatmul.mubr.f32.gmra.mrb[0].mxu0 %v844
      %v846 = vpop.f32.mrb[0].mxu0
      %v847 = vadd.f32 %v751, %v846
      %v848 = vpop.f32.mrb[0].mxu0
      %v849 = vadd.f32 %v753, %v848
      %850 = vdwg.mxu0
      %v851 = vand.u32 %v370, 4294901760
      %852 = vmatprep.subr.mxu0 %v851
      %v853 = vand.u32 %v369, 4294901760
      %854 = vmatpush1.msra.mxu0 %v853
      %v855 = vand.u32 %v372, 4294901760
      %856 = vmatprep.subr.mxu0 %v855
      %v857 = vand.u32 %v371, 4294901760
      %858 = vmatpush1.msra.mxu0 %v857
      %v859 = vand.u32 %v374, 4294901760
      %860 = vmatprep.subr.mxu0 %v859
      %v861 = vand.u32 %v373, 4294901760
      %862 = vmatpush1.msra.mxu0 %v861
      %v863 = vand.u32 %v376, 4294901760
      %864 = vmatprep.subr.mxu0 %v863
      %v865 = vand.u32 %v375, 4294901760
      %866 = vmatpush1.msra.mxu0 %v865
      %867 = vmatprep.subr.mxu0 0.0
      %868 = vmatpush1.msra.mxu0 0.0
      %869 = vmatprep.subr.mxu0 0.0
      %870 = vmatpush1.msra.mxu0 0.0
      %871 = vmatprep.subr.mxu0 0.0
      %872 = vmatpush1.msra.mxu0 0.0
      %873 = vmatprep.subr.mxu0 0.0
      %874 = vmatpush1.msra.mxu0 0.0
      %875 = vmatprep.subr.mxu0 0.0
      %876 = vmatpush1.msra.mxu0 0.0
      %877 = vmatprep.subr.mxu0 0.0
      %878 = vmatpush1.msra.mxu0 0.0
      %879 = vmatprep.subr.mxu0 0.0
      %880 = vmatpush1.msra.mxu0 0.0
      %881 = vmatprep.subr.mxu0 0.0
      %882 = vmatpush1.msra.mxu0 0.0
      %883 = vmatprep.subr.mxu0 0.0
      %884 = vmatpush1.msra.mxu0 0.0
      %885 = vmatprep.subr.mxu0 0.0
      %886 = vmatpush1.msra.mxu0 0.0
      %887 = vmatprep.subr.mxu0 0.0
      %888 = vmatpush1.msra.mxu0 0.0
      %889 = vmatprep.subr.mxu0 0.0
      %890 = vmatpush1.msra.mxu0 0.0
      %891 = vmatprep.subr.mxu0 0.0
      %892 = vmatpush1.msra.mxu0 0.0
      %893 = vmatprep.subr.mxu0 0.0
      %894 = vmatpush1.msra.mxu0 0.0
      %895 = vmatprep.subr.mxu0 0.0
      %896 = vmatpush1.msra.mxu0 0.0
      %897 = vmatprep.subr.mxu0 0.0
      %898 = vmatpush1.msra.mxu0 0.0
      %899 = vmatprep.subr.mxu0 0.0
      %900 = vmatpush1.msra.mxu0 0.0
      %901 = vmatprep.subr.mxu0 0.0
      %902 = vmatpush1.msra.mxu0 0.0
      %903 = vmatprep.subr.mxu0 0.0
      %904 = vmatpush1.msra.mxu0 0.0
      %905 = vmatprep.subr.mxu0 0.0
      %906 = vmatpush1.msra.mxu0 0.0
      %907 = vmatprep.subr.mxu0 0.0
      %908 = vmatpush1.msra.mxu0 0.0
      %909 = vmatprep.subr.mxu0 0.0
      %910 = vmatpush1.msra.mxu0 0.0
      %911 = vmatprep.subr.mxu0 0.0
      %912 = vmatpush1.msra.mxu0 0.0
      %913 = vmatprep.subr.mxu0 0.0
      %914 = vmatpush1.msra.mxu0 0.0
      %915 = vmatprep.subr.mxu0 0.0
      %916 = vmatpush1.msra.mxu0 0.0
      %917 = vmatprep.subr.mxu0 0.0
      %918 = vmatpush1.msra.mxu0 0.0
      %919 = vmatprep.subr.mxu0 0.0
      %920 = vmatpush1.msra.mxu0 0.0
      %921 = vmatprep.subr.mxu0 0.0
      %922 = vmatpush1.msra.mxu0 0.0
      %923 = vmatprep.mubr.f32.mxu0 0.0
      %v924 = vand.u32 %v386, 4294901760
      %925 = vmatmul.mubr.f32.gmra.mrb[0].mxu0 %v924
      %v926 = vpop.f32.mrb[0].mxu0
      %v927 = vadd.f32 %v847, %v926
      %v928 = vpop.f32.mrb[0].mxu0
      %v929 = vadd.f32 %v849, %v928
      %930 = vdwg.mxu0
      %v931 = vmax.f32 %v927, 0.0
      %v932 = vmax.f32 %v929, 0.0
      %933 = vst [vmem:[%s357] sm:$0xff] %v931
      %934 = vst [vmem:[%s357 + $0x8] sm:$0xff] %v932
      %v935 = vld [vmem:[%s3] sm:$0xf]
      %v936 = vld [vmem:[%s4] sm:$0xf]
      %938 = vset.pattern.permute.xlu0 0
      %939 = vperm.xlu0 %938, %v936
      %v940 = vpop.permute.xlu0 %939
      %vm942 = vcmask 64512
      %v944 = vsel %vm942, %v935, 0
      %v946 = vand.u32 %v932, 4294901760
      %947 = vmatprep.subr.mxu0 %v946
      %v948 = vand.u32 %v931, 4294901760
      %949 = vmatpush1.msra.mxu0 %v948
      %950 = vmatprep.subr.mxu0 0.0
      %951 = vmatpush1.msra.mxu0 0.0
      %952 = vmatprep.subr.mxu0 0.0
      %953 = vmatpush1.msra.mxu0 0.0
      %954 = vmatprep.subr.mxu0 0.0
      %955 = vmatpush1.msra.mxu0 0.0
      %956 = vmatprep.subr.mxu0 0.0
      %957 = vmatpush1.msra.mxu0 0.0
      %958 = vmatprep.subr.mxu0 0.0
      %959 = vmatpush1.msra.mxu0 0.0
      %960 = vmatprep.subr.mxu0 0.0
      %961 = vmatpush1.msra.mxu0 0.0
      %962 = vmatprep.subr.mxu0 0.0
      %963 = vmatpush1.msra.mxu0 0.0
      %964 = vmatprep.subr.mxu0 0.0
      %965 = vmatpush1.msra.mxu0 0.0
      %966 = vmatprep.subr.mxu0 0.0
      %967 = vmatpush1.msra.mxu0 0.0
      %968 = vmatprep.subr.mxu0 0.0
      %969 = vmatpush1.msra.mxu0 0.0
      %970 = vmatprep.subr.mxu0 0.0
      %971 = vmatpush1.msra.mxu0 0.0
      %972 = vmatprep.subr.mxu0 0.0
      %973 = vmatpush1.msra.mxu0 0.0
      %974 = vmatprep.subr.mxu0 0.0
      %975 = vmatpush1.msra.mxu0 0.0
      %976 = vmatprep.subr.mxu0 0.0
      %977 = vmatpush1.msra.mxu0 0.0
      %978 = vmatprep.subr.mxu0 0.0
      %979 = vmatpush1.msra.mxu0 0.0
      %980 = vmatprep.subr.mxu0 0.0
      %981 = vmatpush1.msra.mxu0 0.0
      %982 = vmatprep.subr.mxu0 0.0
      %983 = vmatpush1.msra.mxu0 0.0
      %984 = vmatprep.subr.mxu0 0.0
      %985 = vmatpush1.msra.mxu0 0.0
      %986 = vmatprep.subr.mxu0 0.0
      %987 = vmatpush1.msra.mxu0 0.0
      %988 = vmatprep.subr.mxu0 0.0
      %989 = vmatpush1.msra.mxu0 0.0
      %990 = vmatprep.subr.mxu0 0.0
      %991 = vmatpush1.msra.mxu0 0.0
      %992 = vmatprep.subr.mxu0 0.0
      %993 = vmatpush1.msra.mxu0 0.0
      %994 = vmatprep.subr.mxu0 0.0
      %995 = vmatpush1.msra.mxu0 0.0
      %996 = vmatprep.subr.mxu0 0.0
      %997 = vmatpush1.msra.mxu0 0.0
      %998 = vmatprep.subr.mxu0 0.0
      %999 = vmatpush1.msra.mxu0 0.0
      %1000 = vmatprep.subr.mxu0 0.0
      %1001 = vmatpush1.msra.mxu0 0.0
      %1002 = vmatprep.subr.mxu0 0.0
      %1003 = vmatpush1.msra.mxu0 0.0
      %1004 = vmatprep.subr.mxu0 0.0
      %1005 = vmatpush1.msra.mxu0 0.0
      %1006 = vmatprep.subr.mxu0 0.0
      %1007 = vmatpush1.msra.mxu0 0.0
      %1008 = vmatprep.subr.mxu0 0.0
      %1009 = vmatpush1.msra.mxu0 0.0
      %1010 = vmatprep.subr.mxu0 0.0
      %1011 = vmatpush1.msra.mxu0 0.0
      %1012 = vmatprep.mubr.f32.mxu0 0.0
      %v1013 = vand.u32 %v944, 4294901760
      %v1014 = vsub.f32 %v944, %v1013
      %v1015 = vand.u32 %v1014, 4294901760
      %v1016 = vsub.f32 %v1014, %v1015
      %v1017 = vand.u32 %v1016, 4294901760
      %1018 = vmatmul.mubr.f32.gmra.mrb[0].mxu0 %v1017
      %v1019 = vpop.f32.mrb[0].mxu0
      %v1020 = vadd.f32 %v940, %v1019
      %v1021 = vpop.f32.mrb[0].mxu0
      %v1022 = vadd.f32 %v940, %v1021
      %1023 = vdwg.mxu0
      %v1024 = vand.u32 %v932, 4294901760
      %v1025 = vsub.f32 %v932, %v1024
      %v1026 = vand.u32 %v1025, 4294901760
      %v1027 = vsub.f32 %v1025, %v1026
      %v1028 = vand.u32 %v1027, 4294901760
      %1029 = vmatprep.subr.mxu0 %v1028
      %v1030 = vand.u32 %v931, 4294901760
      %v1031 = vsub.f32 %v931, %v1030
      %v1032 = vand.u32 %v1031, 4294901760
      %v1033 = vsub.f32 %v1031, %v1032
      %v1034 = vand.u32 %v1033, 4294901760
      %1035 = vmatpush1.msra.mxu0 %v1034
      %1036 = vmatprep.subr.mxu0 0.0
      %1037 = vmatpush1.msra.mxu0 0.0
      %1038 = vmatprep.subr.mxu0 0.0
      %1039 = vmatpush1.msra.mxu0 0.0
      %1040 = vmatprep.subr.mxu0 0.0
      %1041 = vmatpush1.msra.mxu0 0.0
      %1042 = vmatprep.subr.mxu0 0.0
      %1043 = vmatpush1.msra.mxu0 0.0
      %1044 = vmatprep.subr.mxu0 0.0
      %1045 = vmatpush1.msra.mxu0 0.0
      %1046 = vmatprep.subr.mxu0 0.0
      %1047 = vmatpush1.msra.mxu0 0.0
      %1048 = vmatprep.subr.mxu0 0.0
      %1049 = vmatpush1.msra.mxu0 0.0
      %1050 = vmatprep.subr.mxu0 0.0
      %1051 = vmatpush1.msra.mxu0 0.0
      %1052 = vmatprep.subr.mxu0 0.0
      %1053 = vmatpush1.msra.mxu0 0.0
      %1054 = vmatprep.subr.mxu0 0.0
      %1055 = vmatpush1.msra.mxu0 0.0
      %1056 = vmatprep.subr.mxu0 0.0
      %1057 = vmatpush1.msra.mxu0 0.0
      %1058 = vmatprep.subr.mxu0 0.0
      %1059 = vmatpush1.msra.mxu0 0.0
      %1060 = vmatprep.subr.mxu0 0.0
      %1061 = vmatpush1.msra.mxu0 0.0
      %1062 = vmatprep.subr.mxu0 0.0
      %1063 = vmatpush1.msra.mxu0 0.0
      %1064 = vmatprep.subr.mxu0 0.0
      %1065 = vmatpush1.msra.mxu0 0.0
      %1066 = vmatprep.subr.mxu0 0.0
      %1067 = vmatpush1.msra.mxu0 0.0
      %1068 = vmatprep.subr.mxu0 0.0
      %1069 = vmatpush1.msra.mxu0 0.0
      %1070 = vmatprep.subr.mxu0 0.0
      %1071 = vmatpush1.msra.mxu0 0.0
      %1072 = vmatprep.subr.mxu0 0.0
      %1073 = vmatpush1.msra.mxu0 0.0
      %1074 = vmatprep.subr.mxu0 0.0
      %1075 = vmatpush1.msra.mxu0 0.0
      %1076 = vmatprep.subr.mxu0 0.0
      %1077 = vmatpush1.msra.mxu0 0.0
      %1078 = vmatprep.subr.mxu0 0.0
      %1079 = vmatpush1.msra.mxu0 0.0
      %1080 = vmatprep.subr.mxu0 0.0
      %1081 = vmatpush1.msra.mxu0 0.0
      %1082 = vmatprep.subr.mxu0 0.0
      %1083 = vmatpush1.msra.mxu0 0.0
      %1084 = vmatprep.subr.mxu0 0.0
      %1085 = vmatpush1.msra.mxu0 0.0
      %1086 = vmatprep.subr.mxu0 0.0
      %1087 = vmatpush1.msra.mxu0 0.0
      %1088 = vmatprep.subr.mxu0 0.0
      %1089 = vmatpush1.msra.mxu0 0.0
      %1090 = vmatprep.subr.mxu0 0.0
      %1091 = vmatpush1.msra.mxu0 0.0
      %1092 = vmatprep.subr.mxu0 0.0
      %1093 = vmatpush1.msra.mxu0 0.0
      %1094 = vmatprep.subr.mxu0 0.0
      %1095 = vmatpush1.msra.mxu0 0.0
      %1096 = vmatprep.subr.mxu0 0.0
      %1097 = vmatpush1.msra.mxu0 0.0
      %1098 = vmatprep.mubr.f32.mxu0 0.0
      %v1099 = vand.u32 %v944, 4294901760
      %1100 = vmatmul.mubr.f32.gmra.mrb[0].mxu0 %v1099
      %v1101 = vpop.f32.mrb[0].mxu0
      %v1102 = vadd.f32 %v1020, %v1101
      %v1103 = vpop.f32.mrb[0].mxu0
      %v1104 = vadd.f32 %v1022, %v1103
      %1105 = vdwg.mxu0
      %v1106 = vand.u32 %v932, 4294901760
      %v1107 = vsub.f32 %v932, %v1106
      %1108 = vmatprep.subr.mxu0 %v1107
      %v1109 = vand.u32 %v931, 4294901760
      %v1110 = vsub.f32 %v931, %v1109
      %1111 = vmatpush1.msra.mxu0 %v1110
      %1112 = vmatprep.subr.mxu0 0.0
      %1113 = vmatpush1.msra.mxu0 0.0
      %1114 = vmatprep.subr.mxu0 0.0
      %1115 = vmatpush1.msra.mxu0 0.0
      %1116 = vmatprep.subr.mxu0 0.0
      %1117 = vmatpush1.msra.mxu0 0.0
      %1118 = vmatprep.subr.mxu0 0.0
      %1119 = vmatpush1.msra.mxu0 0.0
      %1120 = vmatprep.subr.mxu0 0.0
      %1121 = vmatpush1.msra.mxu0 0.0
      %1122 = vmatprep.subr.mxu0 0.0
      %1123 = vmatpush1.msra.mxu0 0.0
      %1124 = vmatprep.subr.mxu0 0.0
      %1125 = vmatpush1.msra.mxu0 0.0
      %1126 = vmatprep.subr.mxu0 0.0
      %1127 = vmatpush1.msra.mxu0 0.0
      %1128 = vmatprep.subr.mxu0 0.0
      %1129 = vmatpush1.msra.mxu0 0.0
      %1130 = vmatprep.subr.mxu0 0.0
      %1131 = vmatpush1.msra.mxu0 0.0
      %1132 = vmatprep.subr.mxu0 0.0
      %1133 = vmatpush1.msra.mxu0 0.0
      %1134 = vmatprep.subr.mxu0 0.0
      %1135 = vmatpush1.msra.mxu0 0.0
      %1136 = vmatprep.subr.mxu0 0.0
      %1137 = vmatpush1.msra.mxu0 0.0
      %1138 = vmatprep.subr.mxu0 0.0
      %1139 = vmatpush1.msra.mxu0 0.0
      %1140 = vmatprep.subr.mxu0 0.0
      %1141 = vmatpush1.msra.mxu0 0.0
      %1142 = vmatprep.subr.mxu0 0.0
      %1143 = vmatpush1.msra.mxu0 0.0
      %1144 = vmatprep.subr.mxu0 0.0
      %1145 = vmatpush1.msra.mxu0 0.0
      %1146 = vmatprep.subr.mxu0 0.0
      %1147 = vmatpush1.msra.mxu0 0.0
      %1148 = vmatprep.subr.mxu0 0.0
      %1149 = vmatpush1.msra.mxu0 0.0
      %1150 = vmatprep.subr.mxu0 0.0
      %1151 = vmatpush1.msra.mxu0 0.0
      %1152 = vmatprep.subr.mxu0 0.0
      %1153 = vmatpush1.msra.mxu0 0.0
      %1154 = vmatprep.subr.mxu0 0.0
      %1155 = vmatpush1.msra.mxu0 0.0
      %1156 = vmatprep.subr.mxu0 0.0
      %1157 = vmatpush1.msra.mxu0 0.0
      %1158 = vmatprep.subr.mxu0 0.0
      %1159 = vmatpush1.msra.mxu0 0.0
      %1160 = vmatprep.subr.mxu0 0.0
      %1161 = vmatpush1.msra.mxu0 0.0
      %1162 = vmatprep.subr.mxu0 0.0
      %1163 = vmatpush1.msra.mxu0 0.0
      %1164 = vmatprep.subr.mxu0 0.0
      %1165 = vmatpush1.msra.mxu0 0.0
      %1166 = vmatprep.subr.mxu0 0.0
      %1167 = vmatpush1.msra.mxu0 0.0
      %1168 = vmatprep.subr.mxu0 0.0
      %1169 = vmatpush1.msra.mxu0 0.0
      %1170 = vmatprep.subr.mxu0 0.0
      %1171 = vmatpush1.msra.mxu0 0.0
      %1172 = vmatprep.subr.mxu0 0.0
      %1173 = vmatpush1.msra.mxu0 0.0
      %1174 = vmatprep.mubr.f32.mxu0 0.0
      %v1175 = vand.u32 %v944, 4294901760
      %v1176 = vsub.f32 %v944, %v1175
      %1177 = vmatmul.mubr.f32.gmra.mrb[0].mxu0 %v1176
      %v1178 = vpop.f32.mrb[0].mxu0
      %v1179 = vadd.f32 %v1102, %v1178
      %v1180 = vpop.f32.mrb[0].mxu0
      %v1181 = vadd.f32 %v1104, %v1180
      %1182 = vdwg.mxu0
      %v1183 = vand.u32 %v932, 4294901760
      %1184 = vmatprep.subr.mxu0 %v1183
      %v1185 = vand.u32 %v931, 4294901760
      %1186 = vmatpush1.msra.mxu0 %v1185
      %1187 = vmatprep.subr.mxu0 0.0
      %1188 = vmatpush1.msra.mxu0 0.0
      %1189 = vmatprep.subr.mxu0 0.0
      %1190 = vmatpush1.msra.mxu0 0.0
      %1191 = vmatprep.subr.mxu0 0.0
      %1192 = vmatpush1.msra.mxu0 0.0
      %1193 = vmatprep.subr.mxu0 0.0
      %1194 = vmatpush1.msra.mxu0 0.0
      %1195 = vmatprep.subr.mxu0 0.0
      %1196 = vmatpush1.msra.mxu0 0.0
      %1197 = vmatprep.subr.mxu0 0.0
      %1198 = vmatpush1.msra.mxu0 0.0
      %1199 = vmatprep.subr.mxu0 0.0
      %1200 = vmatpush1.msra.mxu0 0.0
      %1201 = vmatprep.subr.mxu0 0.0
      %1202 = vmatpush1.msra.mxu0 0.0
      %1203 = vmatprep.subr.mxu0 0.0
      %1204 = vmatpush1.msra.mxu0 0.0
      %1205 = vmatprep.subr.mxu0 0.0
      %1206 = vmatpush1.msra.mxu0 0.0
      %1207 = vmatprep.subr.mxu0 0.0
      %1208 = vmatpush1.msra.mxu0 0.0
      %1209 = vmatprep.subr.mxu0 0.0
      %1210 = vmatpush1.msra.mxu0 0.0
      %1211 = vmatprep.subr.mxu0 0.0
      %1212 = vmatpush1.msra.mxu0 0.0
      %1213 = vmatprep.subr.mxu0 0.0
      %1214 = vmatpush1.msra.mxu0 0.0
      %1215 = vmatprep.subr.mxu0 0.0
      %1216 = vmatpush1.msra.mxu0 0.0
      %1217 = vmatprep.subr.mxu0 0.0
      %1218 = vmatpush1.msra.mxu0 0.0
      %1219 = vmatprep.subr.mxu0 0.0
      %1220 = vmatpush1.msra.mxu0 0.0
      %1221 = vmatprep.subr.mxu0 0.0
      %1222 = vmatpush1.msra.mxu0 0.0
      %1223 = vmatprep.subr.mxu0 0.0
      %1224 = vmatpush1.msra.mxu0 0.0
      %1225 = vmatprep.subr.mxu0 0.0
      %1226 = vmatpush1.msra.mxu0 0.0
      %1227 = vmatprep.subr.mxu0 0.0
      %1228 = vmatpush1.msra.mxu0 0.0
      %1229 = vmatprep.subr.mxu0 0.0
      %1230 = vmatpush1.msra.mxu0 0.0
      %1231 = vmatprep.subr.mxu0 0.0
      %1232 = vmatpush1.msra.mxu0 0.0
      %1233 = vmatprep.subr.mxu0 0.0
      %1234 = vmatpush1.msra.mxu0 0.0
      %1235 = vmatprep.subr.mxu0 0.0
      %1236 = vmatpush1.msra.mxu0 0.0
      %1237 = vmatprep.subr.mxu0 0.0
      %1238 = vmatpush1.msra.mxu0 0.0
      %1239 = vmatprep.subr.mxu0 0.0
      %1240 = vmatpush1.msra.mxu0 0.0
      %1241 = vmatprep.subr.mxu0 0.0
      %1242 = vmatpush1.msra.mxu0 0.0
      %1243 = vmatprep.subr.mxu0 0.0
      %1244 = vmatpush1.msra.mxu0 0.0
      %1245 = vmatprep.subr.mxu0 0.0
      %1246 = vmatpush1.msra.mxu0 0.0
      %1247 = vmatprep.subr.mxu0 0.0
      %1248 = vmatpush1.msra.mxu0 0.0
      %1249 = vmatprep.mubr.f32.mxu0 0.0
      %v1250 = vand.u32 %v944, 4294901760
      %v1251 = vsub.f32 %v944, %v1250
      %v1252 = vand.u32 %v1251, 4294901760
      %1253 = vmatmul.mubr.f32.gmra.mrb[0].mxu0 %v1252
      %v1254 = vpop.f32.mrb[0].mxu0
      %v1255 = vadd.f32 %v1179, %v1254
      %v1256 = vpop.f32.mrb[0].mxu0
      %v1257 = vadd.f32 %v1181, %v1256
      %1258 = vdwg.mxu0
      %v1259 = vand.u32 %v932, 4294901760
      %v1260 = vsub.f32 %v932, %v1259
      %v1261 = vand.u32 %v1260, 4294901760
      %1262 = vmatprep.subr.mxu0 %v1261
      %v1263 = vand.u32 %v931, 4294901760
      %v1264 = vsub.f32 %v931, %v1263
      %v1265 = vand.u32 %v1264, 4294901760
      %1266 = vmatpush1.msra.mxu0 %v1265
      %1267 = vmatprep.subr.mxu0 0.0
      %1268 = vmatpush1.msra.mxu0 0.0
      %1269 = vmatprep.subr.mxu0 0.0
      %1270 = vmatpush1.msra.mxu0 0.0
      %1271 = vmatprep.subr.mxu0 0.0
      %1272 = vmatpush1.msra.mxu0 0.0
      %1273 = vmatprep.subr.mxu0 0.0
      %1274 = vmatpush1.msra.mxu0 0.0
      %1275 = vmatprep.subr.mxu0 0.0
      %1276 = vmatpush1.msra.mxu0 0.0
      %1277 = vmatprep.subr.mxu0 0.0
      %1278 = vmatpush1.msra.mxu0 0.0
      %1279 = vmatprep.subr.mxu0 0.0
      %1280 = vmatpush1.msra.mxu0 0.0
      %1281 = vmatprep.subr.mxu0 0.0
      %1282 = vmatpush1.msra.mxu0 0.0
      %1283 = vmatprep.subr.mxu0 0.0
      %1284 = vmatpush1.msra.mxu0 0.0
      %1285 = vmatprep.subr.mxu0 0.0
      %1286 = vmatpush1.msra.mxu0 0.0
      %1287 = vmatprep.subr.mxu0 0.0
      %1288 = vmatpush1.msra.mxu0 0.0
      %1289 = vmatprep.subr.mxu0 0.0
      %1290 = vmatpush1.msra.mxu0 0.0
      %1291 = vmatprep.subr.mxu0 0.0
      %1292 = vmatpush1.msra.mxu0 0.0
      %1293 = vmatprep.subr.mxu0 0.0
      %1294 = vmatpush1.msra.mxu0 0.0
      %1295 = vmatprep.subr.mxu0 0.0
      %1296 = vmatpush1.msra.mxu0 0.0
      %1297 = vmatprep.subr.mxu0 0.0
      %1298 = vmatpush1.msra.mxu0 0.0
      %1299 = vmatprep.subr.mxu0 0.0
      %1300 = vmatpush1.msra.mxu0 0.0
      %1301 = vmatprep.subr.mxu0 0.0
      %1302 = vmatpush1.msra.mxu0 0.0
      %1303 = vmatprep.subr.mxu0 0.0
      %1304 = vmatpush1.msra.mxu0 0.0
      %1305 = vmatprep.subr.mxu0 0.0
      %1306 = vmatpush1.msra.mxu0 0.0
      %1307 = vmatprep.subr.mxu0 0.0
      %1308 = vmatpush1.msra.mxu0 0.0
      %1309 = vmatprep.subr.mxu0 0.0
      %1310 = vmatpush1.msra.mxu0 0.0
      %1311 = vmatprep.subr.mxu0 0.0
      %1312 = vmatpush1.msra.mxu0 0.0
      %1313 = vmatprep.subr.mxu0 0.0
      %1314 = vmatpush1.msra.mxu0 0.0
      %1315 = vmatprep.subr.mxu0 0.0
      %1316 = vmatpush1.msra.mxu0 0.0
      %1317 = vmatprep.subr.mxu0 0.0
      %1318 = vmatpush1.msra.mxu0 0.0
      %1319 = vmatprep.subr.mxu0 0.0
      %1320 = vmatpush1.msra.mxu0 0.0
      %1321 = vmatprep.subr.mxu0 0.0
      %1322 = vmatpush1.msra.mxu0 0.0
      %1323 = vmatprep.subr.mxu0 0.0
      %1324 = vmatpush1.msra.mxu0 0.0
      %1325 = vmatprep.subr.mxu0 0.0
      %1326 = vmatpush1.msra.mxu0 0.0
      %1327 = vmatprep.subr.mxu0 0.0
      %1328 = vmatpush1.msra.mxu0 0.0
      %1329 = vmatprep.mubr.f32.mxu0 0.0
      %v1330 = vand.u32 %v944, 4294901760
      %1331 = vmatmul.mubr.f32.gmra.mrb[0].mxu0 %v1330
      %v1332 = vpop.f32.mrb[0].mxu0
      %v1333 = vadd.f32 %v1255, %v1332
      %v1334 = vpop.f32.mrb[0].mxu0
      %v1335 = vadd.f32 %v1257, %v1334
      %1336 = vdwg.mxu0
      %v1337 = vand.u32 %v932, 4294901760
      %1338 = vmatprep.subr.mxu0 %v1337
      %v1339 = vand.u32 %v931, 4294901760
      %1340 = vmatpush1.msra.mxu0 %v1339
      %1341 = vmatprep.subr.mxu0 0.0
      %1342 = vmatpush1.msra.mxu0 0.0
      %1343 = vmatprep.subr.mxu0 0.0
      %1344 = vmatpush1.msra.mxu0 0.0
      %1345 = vmatprep.subr.mxu0 0.0
      %1346 = vmatpush1.msra.mxu0 0.0
      %1347 = vmatprep.subr.mxu0 0.0
      %1348 = vmatpush1.msra.mxu0 0.0
      %1349 = vmatprep.subr.mxu0 0.0
      %1350 = vmatpush1.msra.mxu0 0.0
      %1351 = vmatprep.subr.mxu0 0.0
      %1352 = vmatpush1.msra.mxu0 0.0
      %1353 = vmatprep.subr.mxu0 0.0
      %1354 = vmatpush1.msra.mxu0 0.0
      %1355 = vmatprep.subr.mxu0 0.0
      %1356 = vmatpush1.msra.mxu0 0.0
      %1357 = vmatprep.subr.mxu0 0.0
      %1358 = vmatpush1.msra.mxu0 0.0
      %1359 = vmatprep.subr.mxu0 0.0
      %1360 = vmatpush1.msra.mxu0 0.0
      %1361 = vmatprep.subr.mxu0 0.0
      %1362 = vmatpush1.msra.mxu0 0.0
      %1363 = vmatprep.subr.mxu0 0.0
      %1364 = vmatpush1.msra.mxu0 0.0
      %1365 = vmatprep.subr.mxu0 0.0
      %1366 = vmatpush1.msra.mxu0 0.0
      %1367 = vmatprep.subr.mxu0 0.0
      %1368 = vmatpush1.msra.mxu0 0.0
      %1369 = vmatprep.subr.mxu0 0.0
      %1370 = vmatpush1.msra.mxu0 0.0
      %1371 = vmatprep.subr.mxu0 0.0
      %1372 = vmatpush1.msra.mxu0 0.0
      %1373 = vmatprep.subr.mxu0 0.0
      %1374 = vmatpush1.msra.mxu0 0.0
      %1375 = vmatprep.subr.mxu0 0.0
      %1376 = vmatpush1.msra.mxu0 0.0
      %1377 = vmatprep.subr.mxu0 0.0
      %1378 = vmatpush1.msra.mxu0 0.0
      %1379 = vmatprep.subr.mxu0 0.0
      %1380 = vmatpush1.msra.mxu0 0.0
      %1381 = vmatprep.subr.mxu0 0.0
      %1382 = vmatpush1.msra.mxu0 0.0
      %1383 = vmatprep.subr.mxu0 0.0
      %1384 = vmatpush1.msra.mxu0 0.0
      %1385 = vmatprep.subr.mxu0 0.0
      %1386 = vmatpush1.msra.mxu0 0.0
      %1387 = vmatprep.subr.mxu0 0.0
      %1388 = vmatpush1.msra.mxu0 0.0
      %1389 = vmatprep.subr.mxu0 0.0
      %1390 = vmatpush1.msra.mxu0 0.0
      %1391 = vmatprep.subr.mxu0 0.0
      %1392 = vmatpush1.msra.mxu0 0.0
      %1393 = vmatprep.subr.mxu0 0.0
      %1394 = vmatpush1.msra.mxu0 0.0
      %1395 = vmatprep.subr.mxu0 0.0
      %1396 = vmatpush1.msra.mxu0 0.0
      %1397 = vmatprep.subr.mxu0 0.0
      %1398 = vmatpush1.msra.mxu0 0.0
      %1399 = vmatprep.subr.mxu0 0.0
      %1400 = vmatpush1.msra.mxu0 0.0
      %1401 = vmatprep.subr.mxu0 0.0
      %1402 = vmatpush1.msra.mxu0 0.0
      %1403 = vmatprep.mubr.f32.mxu0 0.0
      %v1404 = vand.u32 %v944, 4294901760
      %1405 = vmatmul.mubr.f32.gmra.mrb[0].mxu0 %v1404
      %v1406 = vpop.f32.mrb[0].mxu0
      %v1407 = vadd.f32 %v1333, %v1406
      %v1408 = vpop.f32.mrb[0].mxu0
      %v1409 = vadd.f32 %v1335, %v1408
      %1410 = vdwg.mxu0
      %v1411 = vmax.f32 %v1407, 0.0
      %v1412 = vmax.f32 %v1409, 0.0
      %v1413 = vld [vmem:[%s5] sm:$0x3]
      %v1414 = vld [vmem:[%s6] sm:$0x3]
      %1416 = vset.pattern.permute.xlu0 0
      %1417 = vperm.xlu0 %1416, %v1414
      %v1418 = vpop.permute.xlu0 %1417
      %vm1420 = vcmask 31744
      %v1422 = vsel %vm1420, %v1413, 0
      %vm1424 = vcmask 1043456
      %v1426 = vsel %vm1424, %v1411, 0
      %v1429 = vsel %vm1424, %v1412, 0
      %v1431 = vand.u32 %v1429, 4294901760
      %1432 = vmatprep.subr.mxu0 %v1431
      %v1433 = vand.u32 %v1426, 4294901760
      %1434 = vmatpush1.msra.mxu0 %v1433
      %1435 = vmatprep.subr.mxu0 0.0
      %1436 = vmatpush1.msra.mxu0 0.0
      %1437 = vmatprep.subr.mxu0 0.0
      %1438 = vmatpush1.msra.mxu0 0.0
      %1439 = vmatprep.subr.mxu0 0.0
      %1440 = vmatpush1.msra.mxu0 0.0
      %1441 = vmatprep.subr.mxu0 0.0
      %1442 = vmatpush1.msra.mxu0 0.0
      %1443 = vmatprep.subr.mxu0 0.0
      %1444 = vmatpush1.msra.mxu0 0.0
      %1445 = vmatprep.subr.mxu0 0.0
      %1446 = vmatpush1.msra.mxu0 0.0
      %1447 = vmatprep.subr.mxu0 0.0
      %1448 = vmatpush1.msra.mxu0 0.0
      %1449 = vmatprep.subr.mxu0 0.0
      %1450 = vmatpush1.msra.mxu0 0.0
      %1451 = vmatprep.subr.mxu0 0.0
      %1452 = vmatpush1.msra.mxu0 0.0
      %1453 = vmatprep.subr.mxu0 0.0
      %1454 = vmatpush1.msra.mxu0 0.0
      %1455 = vmatprep.subr.mxu0 0.0
      %1456 = vmatpush1.msra.mxu0 0.0
      %1457 = vmatprep.subr.mxu0 0.0
      %1458 = vmatpush1.msra.mxu0 0.0
      %1459 = vmatprep.subr.mxu0 0.0
      %1460 = vmatpush1.msra.mxu0 0.0
      %1461 = vmatprep.subr.mxu0 0.0
      %1462 = vmatpush1.msra.mxu0 0.0
      %1463 = vmatprep.subr.mxu0 0.0
      %1464 = vmatpush1.msra.mxu0 0.0
      %1465 = vmatprep.subr.mxu0 0.0
      %1466 = vmatpush1.msra.mxu0 0.0
      %1467 = vmatprep.subr.mxu0 0.0
      %1468 = vmatpush1.msra.mxu0 0.0
      %1469 = vmatprep.subr.mxu0 0.0
      %1470 = vmatpush1.msra.mxu0 0.0
      %1471 = vmatprep.subr.mxu0 0.0
      %1472 = vmatpush1.msra.mxu0 0.0
      %1473 = vmatprep.subr.mxu0 0.0
      %1474 = vmatpush1.msra.mxu0 0.0
      %1475 = vmatprep.subr.mxu0 0.0
      %1476 = vmatpush1.msra.mxu0 0.0
      %1477 = vmatprep.subr.mxu0 0.0
      %1478 = vmatpush1.msra.mxu0 0.0
      %1479 = vmatprep.subr.mxu0 0.0
      %1480 = vmatpush1.msra.mxu0 0.0
      %1481 = vmatprep.subr.mxu0 0.0
      %1482 = vmatpush1.msra.mxu0 0.0
      %1483 = vmatprep.subr.mxu0 0.0
      %1484 = vmatpush1.msra.mxu0 0.0
      %1485 = vmatprep.subr.mxu0 0.0
      %1486 = vmatpush1.msra.mxu0 0.0
      %1487 = vmatprep.subr.mxu0 0.0
      %1488 = vmatpush1.msra.mxu0 0.0
      %1489 = vmatprep.subr.mxu0 0.0
      %1490 = vmatpush1.msra.mxu0 0.0
      %1491 = vmatprep.subr.mxu0 0.0
      %1492 = vmatpush1.msra.mxu0 0.0
      %1493 = vmatprep.subr.mxu0 0.0
      %1494 = vmatpush1.msra.mxu0 0.0
      %1495 = vmatprep.subr.mxu0 0.0
      %1496 = vmatpush1.msra.mxu0 0.0
      %1497 = vmatprep.mubr.f32.mxu0 0.0
      %v1498 = vand.u32 %v1422, 4294901760
      %v1499 = vsub.f32 %v1422, %v1498
      %v1500 = vand.u32 %v1499, 4294901760
      %v1501 = vsub.f32 %v1499, %v1500
      %v1502 = vand.u32 %v1501, 4294901760
      %1503 = vmatmul.mubr.f32.gmra.mrb[0].mxu0 %v1502
      %v1504 = vpop.f32.mrb[0].mxu0
      %v1505 = vadd.f32 %v1418, %v1504
      %v1506 = vpop.f32.mrb[0].mxu0
      %v1507 = vadd.f32 %v1418, %v1506
      %1508 = vdwg.mxu0
      %v1509 = vand.u32 %v1429, 4294901760
      %v1510 = vsub.f32 %v1429, %v1509
      %v1511 = vand.u32 %v1510, 4294901760
      %v1512 = vsub.f32 %v1510, %v1511
      %v1513 = vand.u32 %v1512, 4294901760
      %1514 = vmatprep.subr.mxu0 %v1513
      %v1515 = vand.u32 %v1426, 4294901760
      %v1516 = vsub.f32 %v1426, %v1515
      %v1517 = vand.u32 %v1516, 4294901760
      %v1518 = vsub.f32 %v1516, %v1517
      %v1519 = vand.u32 %v1518, 4294901760
      %1520 = vmatpush1.msra.mxu0 %v1519
      %1521 = vmatprep.subr.mxu0 0.0
      %1522 = vmatpush1.msra.mxu0 0.0
      %1523 = vmatprep.subr.mxu0 0.0
      %1524 = vmatpush1.msra.mxu0 0.0
      %1525 = vmatprep.subr.mxu0 0.0
      %1526 = vmatpush1.msra.mxu0 0.0
      %1527 = vmatprep.subr.mxu0 0.0
      %1528 = vmatpush1.msra.mxu0 0.0
      %1529 = vmatprep.subr.mxu0 0.0
      %1530 = vmatpush1.msra.mxu0 0.0
      %1531 = vmatprep.subr.mxu0 0.0
      %1532 = vmatpush1.msra.mxu0 0.0
      %1533 = vmatprep.subr.mxu0 0.0
      %1534 = vmatpush1.msra.mxu0 0.0
      %1535 = vmatprep.subr.mxu0 0.0
      %1536 = vmatpush1.msra.mxu0 0.0
      %1537 = vmatprep.subr.mxu0 0.0
      %1538 = vmatpush1.msra.mxu0 0.0
      %1539 = vmatprep.subr.mxu0 0.0
      %1540 = vmatpush1.msra.mxu0 0.0
      %1541 = vmatprep.subr.mxu0 0.0
      %1542 = vmatpush1.msra.mxu0 0.0
      %1543 = vmatprep.subr.mxu0 0.0
      %1544 = vmatpush1.msra.mxu0 0.0
      %1545 = vmatprep.subr.mxu0 0.0
      %1546 = vmatpush1.msra.mxu0 0.0
      %1547 = vmatprep.subr.mxu0 0.0
      %1548 = vmatpush1.msra.mxu0 0.0
      %1549 = vmatprep.subr.mxu0 0.0
      %1550 = vmatpush1.msra.mxu0 0.0
      %1551 = vmatprep.subr.mxu0 0.0
      %1552 = vmatpush1.msra.mxu0 0.0
      %1553 = vmatprep.subr.mxu0 0.0
      %1554 = vmatpush1.msra.mxu0 0.0
      %1555 = vmatprep.subr.mxu0 0.0
      %1556 = vmatpush1.msra.mxu0 0.0
      %1557 = vmatprep.subr.mxu0 0.0
      %1558 = vmatpush1.msra.mxu0 0.0
      %1559 = vmatprep.subr.mxu0 0.0
      %1560 = vmatpush1.msra.mxu0 0.0
      %1561 = vmatprep.subr.mxu0 0.0
      %1562 = vmatpush1.msra.mxu0 0.0
      %1563 = vmatprep.subr.mxu0 0.0
      %1564 = vmatpush1.msra.mxu0 0.0
      %1565 = vmatprep.subr.mxu0 0.0
      %1566 = vmatpush1.msra.mxu0 0.0
      %1567 = vmatprep.subr.mxu0 0.0
      %1568 = vmatpush1.msra.mxu0 0.0
      %1569 = vmatprep.subr.mxu0 0.0
      %1570 = vmatpush1.msra.mxu0 0.0
      %1571 = vmatprep.subr.mxu0 0.0
      %1572 = vmatpush1.msra.mxu0 0.0
      %1573 = vmatprep.subr.mxu0 0.0
      %1574 = vmatpush1.msra.mxu0 0.0
      %1575 = vmatprep.subr.mxu0 0.0
      %1576 = vmatpush1.msra.mxu0 0.0
      %1577 = vmatprep.subr.mxu0 0.0
      %1578 = vmatpush1.msra.mxu0 0.0
      %1579 = vmatprep.subr.mxu0 0.0
      %1580 = vmatpush1.msra.mxu0 0.0
      %1581 = vmatprep.subr.mxu0 0.0
      %1582 = vmatpush1.msra.mxu0 0.0
      %1583 = vmatprep.mubr.f32.mxu0 0.0
      %v1584 = vand.u32 %v1422, 4294901760
      %1585 = vmatmul.mubr.f32.gmra.mrb[0].mxu0 %v1584
      %v1586 = vpop.f32.mrb[0].mxu0
      %v1587 = vadd.f32 %v1505, %v1586
      %v1588 = vpop.f32.mrb[0].mxu0
      %v1589 = vadd.f32 %v1507, %v1588
      %1590 = vdwg.mxu0
      %v1591 = vand.u32 %v1429, 4294901760
      %v1592 = vsub.f32 %v1429, %v1591
      %1593 = vmatprep.subr.mxu0 %v1592
      %v1594 = vand.u32 %v1426, 4294901760
      %v1595 = vsub.f32 %v1426, %v1594
      %1596 = vmatpush1.msra.mxu0 %v1595
      %1597 = vmatprep.subr.mxu0 0.0
      %1598 = vmatpush1.msra.mxu0 0.0
      %1599 = vmatprep.subr.mxu0 0.0
      %1600 = vmatpush1.msra.mxu0 0.0
      %1601 = vmatprep.subr.mxu0 0.0
      %1602 = vmatpush1.msra.mxu0 0.0
      %1603 = vmatprep.subr.mxu0 0.0
      %1604 = vmatpush1.msra.mxu0 0.0
      %1605 = vmatprep.subr.mxu0 0.0
      %1606 = vmatpush1.msra.mxu0 0.0
      %1607 = vmatprep.subr.mxu0 0.0
      %1608 = vmatpush1.msra.mxu0 0.0
      %1609 = vmatprep.subr.mxu0 0.0
      %1610 = vmatpush1.msra.mxu0 0.0
      %1611 = vmatprep.subr.mxu0 0.0
      %1612 = vmatpush1.msra.mxu0 0.0
      %1613 = vmatprep.subr.mxu0 0.0
      %1614 = vmatpush1.msra.mxu0 0.0
      %1615 = vmatprep.subr.mxu0 0.0
      %1616 = vmatpush1.msra.mxu0 0.0
      %1617 = vmatprep.subr.mxu0 0.0
      %1618 = vmatpush1.msra.mxu0 0.0
      %1619 = vmatprep.subr.mxu0 0.0
      %1620 = vmatpush1.msra.mxu0 0.0
      %1621 = vmatprep.subr.mxu0 0.0
      %1622 = vmatpush1.msra.mxu0 0.0
      %1623 = vmatprep.subr.mxu0 0.0
      %1624 = vmatpush1.msra.mxu0 0.0
      %1625 = vmatprep.subr.mxu0 0.0
      %1626 = vmatpush1.msra.mxu0 0.0
      %1627 = vmatprep.subr.mxu0 0.0
      %1628 = vmatpush1.msra.mxu0 0.0
      %1629 = vmatprep.subr.mxu0 0.0
      %1630 = vmatpush1.msra.mxu0 0.0
      %1631 = vmatprep.subr.mxu0 0.0
      %1632 = vmatpush1.msra.mxu0 0.0
      %1633 = vmatprep.subr.mxu0 0.0
      %1634 = vmatpush1.msra.mxu0 0.0
      %1635 = vmatprep.subr.mxu0 0.0
      %1636 = vmatpush1.msra.mxu0 0.0
      %1637 = vmatprep.subr.mxu0 0.0
      %1638 = vmatpush1.msra.mxu0 0.0
      %1639 = vmatprep.subr.mxu0 0.0
      %1640 = vmatpush1.msra.mxu0 0.0
      %1641 = vmatprep.subr.mxu0 0.0
      %1642 = vmatpush1.msra.mxu0 0.0
      %1643 = vmatprep.subr.mxu0 0.0
      %1644 = vmatpush1.msra.mxu0 0.0
      %1645 = vmatprep.subr.mxu0 0.0
      %1646 = vmatpush1.msra.mxu0 0.0
      %1647 = vmatprep.subr.mxu0 0.0
      %1648 = vmatpush1.msra.mxu0 0.0
      %1649 = vmatprep.subr.mxu0 0.0
      %1650 = vmatpush1.msra.mxu0 0.0
      %1651 = vmatprep.subr.mxu0 0.0
      %1652 = vmatpush1.msra.mxu0 0.0
      %1653 = vmatprep.subr.mxu0 0.0
      %1654 = vmatpush1.msra.mxu0 0.0
      %1655 = vmatprep.subr.mxu0 0.0
      %1656 = vmatpush1.msra.mxu0 0.0
      %1657 = vmatprep.subr.mxu0 0.0
      %1658 = vmatpush1.msra.mxu0 0.0
      %1659 = vmatprep.mubr.f32.mxu0 0.0
      %v1660 = vand.u32 %v1422, 4294901760
      %v1661 = vsub.f32 %v1422, %v1660
      %1662 = vmatmul.mubr.f32.gmra.mrb[0].mxu0 %v1661
      %v1663 = vpop.f32.mrb[0].mxu0
      %v1664 = vadd.f32 %v1587, %v1663
      %v1665 = vpop.f32.mrb[0].mxu0
      %v1666 = vadd.f32 %v1589, %v1665
      %1667 = vdwg.mxu0
      %v1668 = vand.u32 %v1429, 4294901760
      %1669 = vmatprep.subr.mxu0 %v1668
      %v1670 = vand.u32 %v1426, 4294901760
      %1671 = vmatpush1.msra.mxu0 %v1670
      %1672 = vmatprep.subr.mxu0 0.0
      %1673 = vmatpush1.msra.mxu0 0.0
      %1674 = vmatprep.subr.mxu0 0.0
      %1675 = vmatpush1.msra.mxu0 0.0
      %1676 = vmatprep.subr.mxu0 0.0
      %1677 = vmatpush1.msra.mxu0 0.0
      %1678 = vmatprep.subr.mxu0 0.0
      %1679 = vmatpush1.msra.mxu0 0.0
      %1680 = vmatprep.subr.mxu0 0.0
      %1681 = vmatpush1.msra.mxu0 0.0
      %1682 = vmatprep.subr.mxu0 0.0
      %1683 = vmatpush1.msra.mxu0 0.0
      %1684 = vmatprep.subr.mxu0 0.0
      %1685 = vmatpush1.msra.mxu0 0.0
      %1686 = vmatprep.subr.mxu0 0.0
      %1687 = vmatpush1.msra.mxu0 0.0
      %1688 = vmatprep.subr.mxu0 0.0
      %1689 = vmatpush1.msra.mxu0 0.0
      %1690 = vmatprep.subr.mxu0 0.0
      %1691 = vmatpush1.msra.mxu0 0.0
      %1692 = vmatprep.subr.mxu0 0.0
      %1693 = vmatpush1.msra.mxu0 0.0
      %1694 = vmatprep.subr.mxu0 0.0
      %1695 = vmatpush1.msra.mxu0 0.0
      %1696 = vmatprep.subr.mxu0 0.0
      %1697 = vmatpush1.msra.mxu0 0.0
      %1698 = vmatprep.subr.mxu0 0.0
      %1699 = vmatpush1.msra.mxu0 0.0
      %1700 = vmatprep.subr.mxu0 0.0
      %1701 = vmatpush1.msra.mxu0 0.0
      %1702 = vmatprep.subr.mxu0 0.0
      %1703 = vmatpush1.msra.mxu0 0.0
      %1704 = vmatprep.subr.mxu0 0.0
      %1705 = vmatpush1.msra.mxu0 0.0
      %1706 = vmatprep.subr.mxu0 0.0
      %1707 = vmatpush1.msra.mxu0 0.0
      %1708 = vmatprep.subr.mxu0 0.0
      %1709 = vmatpush1.msra.mxu0 0.0
      %1710 = vmatprep.subr.mxu0 0.0
      %1711 = vmatpush1.msra.mxu0 0.0
      %1712 = vmatprep.subr.mxu0 0.0
      %1713 = vmatpush1.msra.mxu0 0.0
      %1714 = vmatprep.subr.mxu0 0.0
      %1715 = vmatpush1.msra.mxu0 0.0
      %1716 = vmatprep.subr.mxu0 0.0
      %1717 = vmatpush1.msra.mxu0 0.0
      %1718 = vmatprep.subr.mxu0 0.0
      %1719 = vmatpush1.msra.mxu0 0.0
      %1720 = vmatprep.subr.mxu0 0.0
      %1721 = vmatpush1.msra.mxu0 0.0
      %1722 = vmatprep.subr.mxu0 0.0
      %1723 = vmatpush1.msra.mxu0 0.0
      %1724 = vmatprep.subr.mxu0 0.0
      %1725 = vmatpush1.msra.mxu0 0.0
      %1726 = vmatprep.subr.mxu0 0.0
      %1727 = vmatpush1.msra.mxu0 0.0
      %1728 = vmatprep.subr.mxu0 0.0
      %1729 = vmatpush1.msra.mxu0 0.0
      %1730 = vmatprep.subr.mxu0 0.0
      %1731 = vmatpush1.msra.mxu0 0.0
      %1732 = vmatprep.subr.mxu0 0.0
      %1733 = vmatpush1.msra.mxu0 0.0
      %1734 = vmatprep.mubr.f32.mxu0 0.0
      %v1735 = vand.u32 %v1422, 4294901760
      %v1736 = vsub.f32 %v1422, %v1735
      %v1737 = vand.u32 %v1736, 4294901760
      %1738 = vmatmul.mubr.f32.gmra.mrb[0].mxu0 %v1737
      %v1739 = vpop.f32.mrb[0].mxu0
      %v1740 = vadd.f32 %v1664, %v1739
      %v1741 = vpop.f32.mrb[0].mxu0
      %v1742 = vadd.f32 %v1666, %v1741
      %1743 = vdwg.mxu0
      %v1744 = vand.u32 %v1429, 4294901760
      %v1745 = vsub.f32 %v1429, %v1744
      %v1746 = vand.u32 %v1745, 4294901760
      %1747 = vmatprep.subr.mxu0 %v1746
      %v1748 = vand.u32 %v1426, 4294901760
      %v1749 = vsub.f32 %v1426, %v1748
      %v1750 = vand.u32 %v1749, 4294901760
      %1751 = vmatpush1.msra.mxu0 %v1750
      %1752 = vmatprep.subr.mxu0 0.0
      %1753 = vmatpush1.msra.mxu0 0.0
      %1754 = vmatprep.subr.mxu0 0.0
      %1755 = vmatpush1.msra.mxu0 0.0
      %1756 = vmatprep.subr.mxu0 0.0
      %1757 = vmatpush1.msra.mxu0 0.0
      %1758 = vmatprep.subr.mxu0 0.0
      %1759 = vmatpush1.msra.mxu0 0.0
      %1760 = vmatprep.subr.mxu0 0.0
      %1761 = vmatpush1.msra.mxu0 0.0
      %1762 = vmatprep.subr.mxu0 0.0
      %1763 = vmatpush1.msra.mxu0 0.0
      %1764 = vmatprep.subr.mxu0 0.0
      %1765 = vmatpush1.msra.mxu0 0.0
      %1766 = vmatprep.subr.mxu0 0.0
      %1767 = vmatpush1.msra.mxu0 0.0
      %1768 = vmatprep.subr.mxu0 0.0
      %1769 = vmatpush1.msra.mxu0 0.0
      %1770 = vmatprep.subr.mxu0 0.0
      %1771 = vmatpush1.msra.mxu0 0.0
      %1772 = vmatprep.subr.mxu0 0.0
      %1773 = vmatpush1.msra.mxu0 0.0
      %1774 = vmatprep.subr.mxu0 0.0
      %1775 = vmatpush1.msra.mxu0 0.0
      %1776 = vmatprep.subr.mxu0 0.0
      %1777 = vmatpush1.msra.mxu0 0.0
      %1778 = vmatprep.subr.mxu0 0.0
      %1779 = vmatpush1.msra.mxu0 0.0
      %1780 = vmatprep.subr.mxu0 0.0
      %1781 = vmatpush1.msra.mxu0 0.0
      %1782 = vmatprep.subr.mxu0 0.0
      %1783 = vmatpush1.msra.mxu0 0.0
      %1784 = vmatprep.subr.mxu0 0.0
      %1785 = vmatpush1.msra.mxu0 0.0
      %1786 = vmatprep.subr.mxu0 0.0
      %1787 = vmatpush1.msra.mxu0 0.0
      %1788 = vmatprep.subr.mxu0 0.0
      %1789 = vmatpush1.msra.mxu0 0.0
      %1790 = vmatprep.subr.mxu0 0.0
      %1791 = vmatpush1.msra.mxu0 0.0
      %1792 = vmatprep.subr.mxu0 0.0
      %1793 = vmatpush1.msra.mxu0 0.0
      %1794 = vmatprep.subr.mxu0 0.0
      %1795 = vmatpush1.msra.mxu0 0.0
      %1796 = vmatprep.subr.mxu0 0.0
      %1797 = vmatpush1.msra.mxu0 0.0
      %1798 = vmatprep.subr.mxu0 0.0
      %1799 = vmatpush1.msra.mxu0 0.0
      %1800 = vmatprep.subr.mxu0 0.0
      %1801 = vmatpush1.msra.mxu0 0.0
      %1802 = vmatprep.subr.mxu0 0.0
      %1803 = vmatpush1.msra.mxu0 0.0
      %1804 = vmatprep.subr.mxu0 0.0
      %1805 = vmatpush1.msra.mxu0 0.0
      %1806 = vmatprep.subr.mxu0 0.0
      %1807 = vmatpush1.msra.mxu0 0.0
      %1808 = vmatprep.subr.mxu0 0.0
      %1809 = vmatpush1.msra.mxu0 0.0
      %1810 = vmatprep.subr.mxu0 0.0
      %1811 = vmatpush1.msra.mxu0 0.0
      %1812 = vmatprep.subr.mxu0 0.0
      %1813 = vmatpush1.msra.mxu0 0.0
      %1814 = vmatprep.mubr.f32.mxu0 0.0
      %v1815 = vand.u32 %v1422, 4294901760
      %1816 = vmatmul.mubr.f32.gmra.mrb[0].mxu0 %v1815
      %v1817 = vpop.f32.mrb[0].mxu0
      %v1818 = vadd.f32 %v1740, %v1817
      %v1819 = vpop.f32.mrb[0].mxu0
      %v1820 = vadd.f32 %v1742, %v1819
      %1821 = vdwg.mxu0
      %v1822 = vand.u32 %v1429, 4294901760
      %1823 = vmatprep.subr.mxu0 %v1822
      %v1824 = vand.u32 %v1426, 4294901760
      %1825 = vmatpush1.msra.mxu0 %v1824
      %1826 = vmatprep.subr.mxu0 0.0
      %1827 = vmatpush1.msra.mxu0 0.0
      %1828 = vmatprep.subr.mxu0 0.0
      %1829 = vmatpush1.msra.mxu0 0.0
      %1830 = vmatprep.subr.mxu0 0.0
      %1831 = vmatpush1.msra.mxu0 0.0
      %1832 = vmatprep.subr.mxu0 0.0
      %1833 = vmatpush1.msra.mxu0 0.0
      %1834 = vmatprep.subr.mxu0 0.0
      %1835 = vmatpush1.msra.mxu0 0.0
      %1836 = vmatprep.subr.mxu0 0.0
      %1837 = vmatpush1.msra.mxu0 0.0
      %1838 = vmatprep.subr.mxu0 0.0
      %1839 = vmatpush1.msra.mxu0 0.0
      %1840 = vmatprep.subr.mxu0 0.0
      %1841 = vmatpush1.msra.mxu0 0.0
      %1842 = vmatprep.subr.mxu0 0.0
      %1843 = vmatpush1.msra.mxu0 0.0
      %1844 = vmatprep.subr.mxu0 0.0
      %1845 = vmatpush1.msra.mxu0 0.0
      %1846 = vmatprep.subr.mxu0 0.0
      %1847 = vmatpush1.msra.mxu0 0.0
      %1848 = vmatprep.subr.mxu0 0.0
      %1849 = vmatpush1.msra.mxu0 0.0
      %1850 = vmatprep.subr.mxu0 0.0
      %1851 = vmatpush1.msra.mxu0 0.0
      %1852 = vmatprep.subr.mxu0 0.0
      %1853 = vmatpush1.msra.mxu0 0.0
      %1854 = vmatprep.subr.mxu0 0.0
      %1855 = vmatpush1.msra.mxu0 0.0
      %1856 = vmatprep.subr.mxu0 0.0
      %1857 = vmatpush1.msra.mxu0 0.0
      %1858 = vmatprep.subr.mxu0 0.0
      %1859 = vmatpush1.msra.mxu0 0.0
      %1860 = vmatprep.subr.mxu0 0.0
      %1861 = vmatpush1.msra.mxu0 0.0
      %1862 = vmatprep.subr.mxu0 0.0
      %1863 = vmatpush1.msra.mxu0 0.0
      %1864 = vmatprep.subr.mxu0 0.0
      %1865 = vmatpush1.msra.mxu0 0.0
      %1866 = vmatprep.subr.mxu0 0.0
      %1867 = vmatpush1.msra.mxu0 0.0
      %1868 = vmatprep.subr.mxu0 0.0
      %1869 = vmatpush1.msra.mxu0 0.0
      %1870 = vmatprep.subr.mxu0 0.0
      %1871 = vmatpush1.msra.mxu0 0.0
      %1872 = vmatprep.subr.mxu0 0.0
      %1873 = vmatpush1.msra.mxu0 0.0
      %1874 = vmatprep.subr.mxu0 0.0
      %1875 = vmatpush1.msra.mxu0 0.0
      %1876 = vmatprep.subr.mxu0 0.0
      %1877 = vmatpush1.msra.mxu0 0.0
      %1878 = vmatprep.subr.mxu0 0.0
      %1879 = vmatpush1.msra.mxu0 0.0
      %1880 = vmatprep.subr.mxu0 0.0
      %1881 = vmatpush1.msra.mxu0 0.0
      %1882 = vmatprep.subr.mxu0 0.0
      %1883 = vmatpush1.msra.mxu0 0.0
      %1884 = vmatprep.subr.mxu0 0.0
      %1885 = vmatpush1.msra.mxu0 0.0
      %1886 = vmatprep.subr.mxu0 0.0
      %1887 = vmatpush1.msra.mxu0 0.0
      %1888 = vmatprep.mubr.f32.mxu0 0.0
      %v1889 = vand.u32 %v1422, 4294901760
      %1890 = vmatmul.mubr.f32.gmra.mrb[0].mxu0 %v1889
      %v1891 = vpop.f32.mrb[0].mxu0
      %v1892 = vadd.f32 %v1818, %v1891
      %v1893 = vpop.f32.mrb[0].mxu0
      %v1894 = vadd.f32 %v1820, %v1893
      %1895 = vdwg.mxu0
      %v1896 = vtanh.pop %v1892
      %v1897 = vtanh.pop %v1894
      %v1898 = vmul.f32 %v1896, 8.0
      %v1899 = vmul.f32 %v1897, 8.0
      %v1902 = vcombine.low %v1898, %v1899
      %v1904 = vunpack.c.l.s4 1983009808
      %v1905 = vunpack.c.0.s8 %v1904
      %v1906 = vlaneseq
      %v1907 = vshrl.u32 %v1906, 7
      %v1908 = vsub.s32 %v1905, %v1907
      %v1909 = vrot.slane %v1902, %v1908
      %1911 = vst [vmem:[%s367] sm:$0xf] %v1909
      %s1912 = smul.u32 2, %s25
      %p1913 = scmp.lt.s32.totalorder %s24, 1
      %s1914 = scalar_select %p1913, %s24, 1
      %p1915 = scmp.lt.s32.totalorder %s1912, 1
      %s1916 = scalar_select %p1915, %s1912, 1
      %s1917 = smul.addr %s1914, 2
      %s1918 = sadd.s32 %s1916, %s1917
      %s1919 = smul.addr %s1918, 8
      %s1920 = scalar_lea.vmem %s7, %s1919
      %s1921 = smul.u32 2, %s25
      %p1922 = scmp.lt.s32.totalorder %s24, 1
      %s1923 = scalar_select %p1922, %s24, 1
      %p1924 = scmp.lt.s32.totalorder %s1921, 1
      %s1925 = scalar_select %p1924, %s1921, 1
      %s1926 = smul.addr %s1923, 2
      %s1927 = sadd.s32 %s1925, %s1926
      %s1928 = smul.addr %s1927, 2
      %s1929 = scalar_lea.vmem %s8, %s1928
      // Predicated region
      $region49: #{mask_forward.3} parent=47 // pred_check
        %p1930 = pneg %p206
      $region50: #{mask_forward.3} parent=47 // pred_check_branch
        %1932 = sbr.rel (%p1930) target = $region52
      $region51: #{mask_forward.3} parent=47 // pred_region
        %s1933 = smul.u32 2, %s25
      $region52: #{mask_forward.3} parent=47 // pred_fallthru
        _
      // Predicated region
      $region53: #{mask_forward.3} parent=47 // pred_check
        %p1934 = pneg %p234
      $region54: #{mask_forward.3} parent=47 // pred_check_branch
        %1936 = sbr.rel (%p1934) target = $region56
      $region55: #{mask_forward.3} parent=47 // pred_region
        %s1937 = smul.u32 2, %s25
      $region56: #{mask_forward.3} parent=47 // pred_fallthru
        _
    $region48: #{mask_forward.3} parent=5 // pred_fallthru
      _
    %p1938 = scmp.le.s32.totalorder 2, %s15
    // Predicated region
    $region57: #{mask_forward.3} parent=5 // pred_check
      %p1939 = pneg %p1938
    $region58: #{mask_forward.3} parent=5 // pred_check_branch
      %1941 = sbr.rel (%p1939) target = $region60
    $region59: #{mask_forward.3} parent=5 // pred_region
      %s1942 = ssub.s32 %s15, 2
      // Predicated region
      $region61: #{mask_forward.3} parent=59 // pred_check
        %p1943 = pneg %p212
      $region62: #{mask_forward.3} parent=59 // pred_check_branch
        %1945 = sbr.rel (%p1943) target = $region64
      $region63: #{mask_forward.3} parent=59 // pred_region
        %s1946 = smul.u32 2, %s27
        %p1947 = scmp.lt.s32.totalorder %s26, 1
        %s1948 = scalar_select %p1947, %s26, 1
        %p1949 = scmp.lt.s32.totalorder %s1946, 1
        %s1950 = scalar_select %p1949, %s1946, 1
        %s1951 = smul.addr %s1948, 2
        %s1952 = sadd.s32 %s1950, %s1951
        %s1953 = smul.addr %s1952, 8
        %s1954 = scalar_lea.vmem %s7, %s1953
      $region64: #{mask_forward.3} parent=59 // pred_fallthru
        _
      // Predicated region
      $region65: #{mask_forward.3} parent=59 // pred_check
        %p1955 = pneg %p240
      $region66: #{mask_forward.3} parent=59 // pred_check_branch
        %1957 = sbr.rel (%p1955) target = $region68
      $region67: #{mask_forward.3} parent=59 // pred_region
        %s1958 = smul.u32 2, %s27
        %p1959 = scmp.lt.s32.totalorder %s26, 1
        %s1960 = scalar_select %p1959, %s26, 1
        %p1961 = scmp.lt.s32.totalorder %s1958, 1
        %s1962 = scalar_select %p1961, %s1958, 1
        %s1963 = smul.addr %s1960, 2
        %s1964 = sadd.s32 %s1962, %s1963
        %s1965 = smul.addr %s1964, 2
        %s1966 = scalar_lea.vmem %s8, %s1965
      $region68: #{mask_forward.3} parent=59 // pred_fallthru
        _
    $region60: #{mask_forward.3} parent=5 // pred_fallthru
      _
  $region6: #{mask_forward.3} parent=0 // loop_footer
    %s19 = sadd.s32 1, %s15
  $region7: #{mask_forward.3} parent=0 // loop_footer_branch
    %14 = sbr.rel target = $region3
  $region8: #{mask_forward.3} parent=0 // loop_exit
    _

// kernel: mask_forward.4
$region0: #{mask_forward.4}
  #allocation0 [shape = 'u32[]', space=smem, size = 0x4, offset = 0x4, fixed_abs, tag = 'smem constant byte address 0x4 - core index']
  #allocation1 [shape = 'u32[144,128]{1,0:T(1,128)}', space=vmem, size = 0x12000, scoped, tag = 'internal scratch']
  #allocation2 [shape = 'f32[1,1]{1,0:T(1,128)S(1)}', space=vmem, size = 0x200, scoped, tag = 'scoped memory for mask_forward.4']
  %s0 = inlined_call_operand.vmem [shape: f32[512,8], index: 0, kind: input, shape index: {}]
  %s1 = inlined_call_operand.vmem [shape: f32[512,1], index: 1, kind: input, shape index: {}]
  %s2 = inlined_call_operand.vmem [shape: f32[8,4], index: 2, kind: input, shape index: {}]
  %s3 = inlined_call_operand.vmem [shape: f32[1,4], index: 3, kind: input, shape index: {}]
  %s4 = inlined_call_operand.vmem [shape: f32[4,1], index: 4, kind: input, shape index: {}]
  %s5 = inlined_call_operand.<no memory space> [shape: f32[1,1], index: 5, kind: input, shape index: {}]
  %s6 = inlined_call_operand.vmem [shape: f32[512,1], index: 6, kind: output, shape index: {}]
  %s7 = sld [smem:[#allocation0]]
  $region57: #{mask_forward.4} parent=0
    _
  %s9 = ssub.s32 1, %s7
  %s10 = scalar_select 0, %s9, %s7
  %v11 = vstv %s5
  %12 = vst [vmem:[#allocation2] sm:$0x1] %v11
  loop: start=0, step=1, limit=4
  $region2: #{mask_forward.4} parent=0 // loop_pre_header
    _
  $region3: #{mask_forward.4} parent=0 // loop_header
    %s14 = sphi 0, %s18
    %p15 = scmp.ge.s32.totalorder %s14, 4
    %s24 = sphi 0, %s26
    %s27 = sphi 0, %s24
    %s28 = sphi 0, %s27
    %s44 = sphi 0, %s28
    %s50 = sphi 0, %s52
    %s53 = sphi 0, %s50
    %s54 = sphi 0, %s53
    %s70 = sphi 0, %s54
    %s74 = sphi 0, %s74
    %s76 = sphi 0, %s74
    %s77 = sphi 0, %s76
    %s91 = sphi 0, %s77
    %s95 = sphi 0, %s95
    %s97 = sphi 0, %s95
    %s98 = sphi 0, %s97
    %s112 = sphi 0, %s98
    %s116 = sphi 0, %s116
    %s118 = sphi 0, %s116
    %s119 = sphi 0, %s118
    %s133 = sphi 0, %s119
    %s137 = sphi 0, %s137
    %s139 = sphi 0, %s137
    %s140 = sphi 0, %s139
    %s154 = sphi 0, %s140
    %s160 = sphi 0, %s162
    %s163 = sphi 0, %s160
    %s164 = sphi 0, %s163
    %s180 = sphi 0, %s164
  $region4: #{mask_forward.4} parent=0 // loop_header_branch
    %17 = sbr.rel (%p15) target = $region8
  $region5: #{mask_forward.4} parent=0 // loop_body
    %s19 = ssub.s32 %s14, 1
    %s20 = ssub.s32 %s14, 2
    %s21 = sadd.s32 %s14, 1
    %s22 = ssub.s32 %s14, %s21
    %p23 = scmp.eq.s32.totalorder %s22, 0
    %s25 = sadd.s32 %s24, 1
    %s26 = scalar_select %p23, %s24, %s25
    %p29 = pneg %p23
    %p30 = scmp.eq.s32.totalorder %s14, 1
    %p31 = por %p29, %p30
    %p32 = scmp.ne.s32.totalorder %s24, %s27
    %p33 = scmp.eq.s32.totalorder %s14, 0
    %p34 = por %p32, %p33
    %p35 = scmp.ne.s32.totalorder %s24, %s27
    %p36 = scmp.eq.s32.totalorder %s19, 1
    %p37 = por %p35, %p36
    %p38 = scmp.ne.s32.totalorder %s27, %s28
    %p39 = scmp.eq.s32.totalorder %s19, 0
    %p40 = por %p38, %p39
    %p41 = scmp.ne.s32.totalorder %s27, %s28
    %p42 = scmp.eq.s32.totalorder %s20, 1
    %p43 = por %p41, %p42
    %p45 = scmp.ne.s32.totalorder %s28, %s44
    %p46 = scmp.eq.s32.totalorder %s20, 0
    %p47 = por %p45, %p46
    %s48 = ssub.s32 %s14, %s21
    %p49 = scmp.eq.s32.totalorder %s48, 0
    %s51 = sadd.s32 %s50, 1
    %s52 = scalar_select %p49, %s50, %s51
    %p55 = pneg %p49
    %p56 = scmp.eq.s32.totalorder %s14, 1
    %p57 = por %p55, %p56
    %p58 = scmp.ne.s32.totalorder %s50, %s53
    %p59 = scmp.eq.s32.totalorder %s14, 0
    %p60 = por %p58, %p59
    %p61 = scmp.ne.s32.totalorder %s50, %s53
    %p62 = scmp.eq.s32.totalorder %s19, 1
    %p63 = por %p61, %p62
    %p64 = scmp.ne.s32.totalorder %s53, %s54
    %p65 = scmp.eq.s32.totalorder %s19, 0
    %p66 = por %p64, %p65
    %p67 = scmp.ne.s32.totalorder %s53, %s54
    %p68 = scmp.eq.s32.totalorder %s20, 1
    %p69 = por %p67, %p68
    %p71 = scmp.ne.s32.totalorder %s54, %s70
    %p72 = scmp.eq.s32.totalorder %s20, 0
    %p73 = por %p71, %p72
    %s75 = sadd.s32 %s74, 1
    %p78 = scmp.eq.s32.totalorder %s14, 1
    %p79 = scmp.ne.s32.totalorder %s74, %s76
    %p80 = scmp.eq.s32.totalorder %s14, 0
    %p81 = por %p79, %p80
    %p82 = scmp.ne.s32.totalorder %s74, %s76
    %p83 = scmp.eq.s32.totalorder %s19, 1
    %p84 = por %p82, %p83
    %p85 = scmp.ne.s32.totalorder %s76, %s77
    %p86 = scmp.eq.s32.totalorder %s19, 0
    %p87 = por %p85, %p86
    %p88 = scmp.ne.s32.totalorder %s76, %s77
    %p89 = scmp.eq.s32.totalorder %s20, 1
    %p90 = por %p88, %p89
    %p92 = scmp.ne.s32.totalorder %s77, %s91
    %p93 = scmp.eq.s32.totalorder %s20, 0
    %p94 = por %p92, %p93
    %s96 = sadd.s32 %s95, 1
    %p99 = scmp.eq.s32.totalorder %s14, 1
    %p100 = scmp.ne.s32.totalorder %s95, %s97
    %p101 = scmp.eq.s32.totalorder %s14, 0
    %p102 = por %p100, %p101
    %p103 = scmp.ne.s32.totalorder %s95, %s97
    %p104 = scmp.eq.s32.totalorder %s19, 1
    %p105 = por %p103, %p104
    %p106 = scmp.ne.s32.totalorder %s97, %s98
    %p107 = scmp.eq.s32.totalorder %s19, 0
    %p108 = por %p106, %p107
    %p109 = scmp.ne.s32.totalorder %s97, %s98
    %p110 = scmp.eq.s32.totalorder %s20, 1
    %p111 = por %p109, %p110
    %p113 = scmp.ne.s32.totalorder %s98, %s112
    %p114 = scmp.eq.s32.totalorder %s20, 0
    %p115 = por %p113, %p114
    %s117 = sadd.s32 %s116, 1
    %p120 = scmp.eq.s32.totalorder %s14, 1
    %p121 = scmp.ne.s32.totalorder %s116, %s118
    %p122 = scmp.eq.s32.totalorder %s14, 0
    %p123 = por %p121, %p122
    %p124 = scmp.ne.s32.totalorder %s116, %s118
    %p125 = scmp.eq.s32.totalorder %s19, 1
    %p126 = por %p124, %p125
    %p127 = scmp.ne.s32.totalorder %s118, %s119
    %p128 = scmp.eq.s32.totalorder %s19, 0
    %p129 = por %p127, %p128
    %p130 = scmp.ne.s32.totalorder %s118, %s119
    %p131 = scmp.eq.s32.totalorder %s20, 1
    %p132 = por %p130, %p131
    %p134 = scmp.ne.s32.totalorder %s119, %s133
    %p135 = scmp.eq.s32.totalorder %s20, 0
    %p136 = por %p134, %p135
    %s138 = sadd.s32 %s137, 1
    %p141 = scmp.eq.s32.totalorder %s14, 1
    %p142 = scmp.ne.s32.totalorder %s137, %s139
    %p143 = scmp.eq.s32.totalorder %s14, 0
    %p144 = por %p142, %p143
    %p145 = scmp.ne.s32.totalorder %s137, %s139
    %p146 = scmp.eq.s32.totalorder %s19, 1
    %p147 = por %p145, %p146
    %p148 = scmp.ne.s32.totalorder %s139, %s140
    %p149 = scmp.eq.s32.totalorder %s19, 0
    %p150 = por %p148, %p149
    %p151 = scmp.ne.s32.totalorder %s139, %s140
    %p152 = scmp.eq.s32.totalorder %s20, 1
    %p153 = por %p151, %p152
    %p155 = scmp.ne.s32.totalorder %s140, %s154
    %p156 = scmp.eq.s32.totalorder %s20, 0
    %p157 = por %p155, %p156
    %s158 = ssub.s32 %s14, %s21
    %p159 = scmp.eq.s32.totalorder %s158, 0
    %s161 = sadd.s32 %s160, 1
    %s162 = scalar_select %p159, %s160, %s161
    %p165 = pneg %p159
    %p166 = scmp.eq.s32.totalorder %s14, 1
    %p167 = por %p165, %p166
    %p168 = scmp.ne.s32.totalorder %s160, %s163
    %p169 = scmp.eq.s32.totalorder %s14, 0
    %p170 = por %p168, %p169
    %p171 = scmp.ne.s32.totalorder %s160, %s163
    %p172 = scmp.eq.s32.totalorder %s19, 1
    %p173 = por %p171, %p172
    %p174 = scmp.ne.s32.totalorder %s163, %s164
    %p175 = scmp.eq.s32.totalorder %s19, 0
    %p176 = por %p174, %p175
    %p177 = scmp.ne.s32.totalorder %s163, %s164
    %p178 = scmp.eq.s32.totalorder %s20, 1
    %p179 = por %p177, %p178
    %p181 = scmp.ne.s32.totalorder %s164, %s180
    %p182 = scmp.eq.s32.totalorder %s20, 0
    %p183 = por %p181, %p182
    %p184 = scmp.le.s32.totalorder 1, %s14
    %p185 = scmp.lt.s32.totalorder %s14, 3
    %p186 = pnand %p184, %p185
    %p187 = pneg %p186
    // Predicated region
    $region9: #{mask_forward.4} parent=5 // pred_check
      _
    $region10: #{mask_forward.4} parent=5 // pred_check_branch
      %189 = sbr.rel (%p186) target = $region12
    $region11: #{mask_forward.4} parent=5 // pred_region
      %s190 = ssub.s32 %s14, 1
      // Predicated region
      $region13: #{mask_forward.4} parent=11 // pred_check
        %p191 = pneg %p87
      $region14: #{mask_forward.4} parent=11 // pred_check_branch
        %193 = sbr.rel (%p191) target = $region16
      $region15: #{mask_forward.4} parent=11 // pred_region
        _
      $region16: #{mask_forward.4} parent=11 // pred_fallthru
        _
      // Predicated region
      $region17: #{mask_forward.4} parent=11 // pred_check
        %p194 = pneg %p108
      $region18: #{mask_forward.4} parent=11 // pred_check_branch
        %196 = sbr.rel (%p194) target = $region20
      $region19: #{mask_forward.4} parent=11 // pred_region
        _
      $region20: #{mask_forward.4} parent=11 // pred_fallthru
        _
      // Predicated region
      $region21: #{mask_forward.4} parent=11 // pred_check
        %p197 = pneg %p129
      $region22: #{mask_forward.4} parent=11 // pred_check_branch
        %199 = sbr.rel (%p197) target = $region24
      $region23: #{mask_forward.4} parent=11 // pred_region
        _
      $region24: #{mask_forward.4} parent=11 // pred_fallthru
        _
      // Predicated region
      $region25: #{mask_forward.4} parent=11 // pred_check
        %p200 = pneg %p150
      $region26: #{mask_forward.4} parent=11 // pred_check_branch
        %202 = sbr.rel (%p200) target = $region28
      $region27: #{mask_forward.4} parent=11 // pred_region
        _
      $region28: #{mask_forward.4} parent=11 // pred_fallthru
        _
    $region12: #{mask_forward.4} parent=5 // pred_fallthru
      _
    %p203 = scmp.lt.s32.totalorder %s14, 2
    // Predicated region
    $region29: #{mask_forward.4} parent=5 // pred_check
      %p204 = pneg %p203
    $region30: #{mask_forward.4} parent=5 // pred_check_branch
      %206 = sbr.rel (%p204) target = $region32
    $region31: #{mask_forward.4} parent=5 // pred_region
      // Predicated region
      $region33: #{mask_forward.4} parent=31 // pred_check
        %p207 = pneg %p34
      $region34: #{mask_forward.4} parent=31 // pred_check_branch
        %209 = sbr.rel (%p207) target = $region36
      $region35: #{mask_forward.4} parent=31 // pred_region
        %s210 = smul.u32 32, %s14
        %p211 = scmp.lt.s32.totalorder %s210, 63
        %s212 = scalar_select %p211, %s210, 63
        %s213 = smul.addr %s212, 8
        %s214 = scalar_lea.vmem %s0, %s213
        %s215 = smul.u32 32, %s14
      $region36: #{mask_forward.4} parent=31 // pred_fallthru
        _
      // Predicated region
      $region37: #{mask_forward.4} parent=31 // pred_check
        %p216 = pneg %p60
      $region38: #{mask_forward.4} parent=31 // pred_check_branch
        %218 = sbr.rel (%p216) target = $region40
      $region39: #{mask_forward.4} parent=31 // pred_region
        %s219 = smul.u32 32, %s14
        %p220 = scmp.lt.s32.totalorder %s219, 63
        %s221 = scalar_select %p220, %s219, 63
        %s222 = smul.addr %s221, 8
        %s223 = scalar_lea.vmem %s1, %s222
        %s224 = smul.u32 32, %s14
      $region40: #{mask_forward.4} parent=31 // pred_fallthru
        _
    $region32: #{mask_forward.4} parent=5 // pred_fallthru
      _
    %p225 = scmp.le.s32.totalorder 1, %s14
    %p226 = scmp.lt.s32.totalorder %s14, 3
    %p227 = pnand %p225, %p226
    %p228 = pneg %p227
    // Predicated region
    $region41: #{mask_forward.4} parent=5 // pred_check
      _
    $region42: #{mask_forward.4} parent=5 // pred_check_branch
      %230 = sbr.rel (%p227) target = $region44
    $region43: #{mask_forward.4} parent=5 // pred_region
      %s231 = ssub.s32 %s14, 1
      %s232 = smul.u32 32, %s19
      %p233 = scmp.lt.s32.totalorder %s232, 63
      %s234 = scalar_select %p233, %s232, 63
      %s235 = smul.addr %s234, 8
      %s236 = scalar_lea.vmem %s0, %s235
      %p237 = pneg %p40
      %p238 = pneg %p37
      %s239 = smul.u32 32, %s19
      %p240 = scmp.lt.s32.totalorder %s239, 63
      %s241 = scalar_select %p240, %s239, 63
      %s242 = smul.addr %s241, 8
      %s243 = scalar_lea.vmem %s1, %s242
      %p244 = pneg %p66
      %p245 = pneg %p63
      %p246 = pneg %p87
      %p247 = pneg %p84
      %p248 = pneg %p108
      %p249 = pneg %p105
      %p250 = pneg %p129
      %p251 = pneg %p126
      %p252 = pneg %p150
      %p253 = pneg %p147
      %p254 = pneg %p176
      %p255 = pneg %p173
      %s256 = smul.u32 32, %s19
      %p257 = scmp.lt.s32.totalorder %s256, 63
      %s258 = scalar_select %p257, %s256, 63
      %s259 = smul.addr %s258, 8
      %s260 = scalar_lea.vmem %s6, %s259
      %s261 = smul.u32 32, %s19
      %p262 = scmp.lt.s32.totalorder %s261, 63
      %s263 = scalar_select %p262, %s261, 63
      %s264 = smul.addr %s263, 8
      %s265 = scalar_lea.vmem %s0, %s264
      %s266 = smul.u32 32, %s19
      %s267 = smul.u32 32, %s19
      %p268 = scmp.lt.s32.totalorder %s267, 63
      %s269 = scalar_select %p268, %s267, 63
      %s270 = smul.addr %s269, 8
      %s271 = scalar_lea.vmem %s1, %s270
      %s272 = smul.u32 32, %s19
      %s273 = smul.u32 32, %s19
      %p274 = scmp.lt.s32.totalorder %s273, 63
      %s275 = scalar_select %p274, %s273, 63
      %s276 = smul.addr %s275, 8
      %s277 = scalar_lea.vmem %s6, %s276
      %s278 = smul.u32 32, %s19
      %v279 = vld [vmem:[%s265] sm:$0xff]
      %v280 = vld [vmem:[%s265 + $0x8] sm:$0xff]
      %v281 = vld [vmem:[%s265 + $0x10] sm:$0xff]
      %v282 = vld [vmem:[%s265 + $0x18] sm:$0xff]
      %v283 = vld [vmem:[%s265 + $0x20] sm:$0xff]
      %v284 = vld [vmem:[%s265 + $0x28] sm:$0xff]
      %v285 = vld [vmem:[%s265 + $0x30] sm:$0xff]
      %v286 = vld [vmem:[%s265 + $0x38] sm:$0xff]
      %v287 = vld [vmem:[%s265 + $0x40] sm:$0xff]
      %v288 = vld [vmem:[%s265 + $0x48] sm:$0xff]
      %v289 = vld [vmem:[%s265 + $0x50] sm:$0xff]
      %v290 = vld [vmem:[%s265 + $0x58] sm:$0xff]
      %v291 = vld [vmem:[%s265 + $0x60] sm:$0xff]
      %v292 = vld [vmem:[%s265 + $0x68] sm:$0xff]
      %v293 = vld [vmem:[%s265 + $0x70] sm:$0xff]
      %v294 = vld [vmem:[%s265 + $0x78] sm:$0xff]
      %v295 = vld [vmem:[%s265 + $0x80] sm:$0xff]
      %v296 = vld [vmem:[%s265 + $0x88] sm:$0xff]
      %v297 = vld [vmem:[%s265 + $0x90] sm:$0xff]
      %v298 = vld [vmem:[%s265 + $0x98] sm:$0xff]
      %v299 = vld [vmem:[%s265 + $0xa0] sm:$0xff]
      %v300 = vld [vmem:[%s265 + $0xa8] sm:$0xff]
      %v301 = vld [vmem:[%s265 + $0xb0] sm:$0xff]
      %v302 = vld [vmem:[%s265 + $0xb8] sm:$0xff]
      %v303 = vld [vmem:[%s265 + $0xc0] sm:$0xff]
      %v304 = vld [vmem:[%s265 + $0xc8] sm:$0xff]
      %v305 = vld [vmem:[%s265 + $0xd0] sm:$0xff]
      %v306 = vld [vmem:[%s265 + $0xd8] sm:$0xff]
      %v307 = vld [vmem:[%s265 + $0xe0] sm:$0xff]
      %v308 = vld [vmem:[%s265 + $0xe8] sm:$0xff]
      %v309 = vld [vmem:[%s265 + $0xf0] sm:$0xff]
      %v310 = vld [vmem:[%s265 + $0xf8] sm:$0xff]
      %v311 = vld [vmem:[%s2] sm:$0xff]
      %v312 = vld [vmem:[%s3] sm:$0x1]
      %v314 = vlaneseq
      %v315 = vshrl.u32 %v314, 7
      %v316 = vsub.s32 0, %v315
      %v317 = vrot.slane %v312, %v316
      %vm319 = vcmask 64512
      %v321 = vsel %vm319, %v279, 0
      %v324 = vsel %vm319, %v280, 0
      %v327 = vsel %vm319, %v281, 0
      %v330 = vsel %vm319, %v282, 0
      %v333 = vsel %vm319, %v283, 0
      %v336 = vsel %vm319, %v284, 0
      %v339 = vsel %vm319, %v285, 0
      %v342 = vsel %vm319, %v286, 0
      %v345 = vsel %vm319, %v287, 0
      %v348 = vsel %vm319, %v288, 0
      %v351 = vsel %vm319, %v289, 0
      %v354 = vsel %vm319, %v290, 0
      %v357 = vsel %vm319, %v291, 0
      %v360 = vsel %vm319, %v292, 0
      %v363 = vsel %vm319, %v293, 0
      %v366 = vsel %vm319, %v294, 0
      %v369 = vsel %vm319, %v295, 0
      %v372 = vsel %vm319, %v296, 0
      %v375 = vsel %vm319, %v297, 0
      %v378 = vsel %vm319, %v298, 0
      %v381 = vsel %vm319, %v299, 0
      %v384 = vsel %vm319, %v300, 0
      %v387 = vsel %vm319, %v301, 0
      %v390 = vsel %vm319, %v302, 0
      %v393 = vsel %vm319, %v303, 0
      %v396 = vsel %vm319, %v304, 0
      %v399 = vsel %vm319, %v305, 0
      %v402 = vsel %vm319, %v306, 0
      %v405 = vsel %vm319, %v307, 0
      %v408 = vsel %vm319, %v308, 0
      %v411 = vsel %vm319, %v309, 0
      %v414 = vsel %vm319, %v310, 0
      %416 = vmatprep.subr.mxu0 0.0
      %v417 = vand.u32 %v311, 4294901760
      %418 = vmatpush1.msra.mxu0 %v417
      %419 = vmatprep.subr.mxu0 0.0
      %420 = vmatpush1.msra.mxu0 0.0
      %421 = vmatprep.subr.mxu0 0.0
      %422 = vmatpush1.msra.mxu0 0.0
      %423 = vmatprep.subr.mxu0 0.0
      %424 = vmatpush1.msra.mxu0 0.0
      %425 = vmatprep.subr.mxu0 0.0
      %426 = vmatpush1.msra.mxu0 0.0
      %427 = vmatprep.subr.mxu0 0.0
      %428 = vmatpush1.msra.mxu0 0.0
      %429 = vmatprep.subr.mxu0 0.0
      %430 = vmatpush1.msra.mxu0 0.0
      %431 = vmatprep.subr.mxu0 0.0
      %432 = vmatpush1.msra.mxu0 0.0
      %433 = vmatprep.subr.mxu0 0.0
      %434 = vmatpush1.msra.mxu0 0.0
      %435 = vmatprep.subr.mxu0 0.0
      %436 = vmatpush1.msra.mxu0 0.0
      %437 = vmatprep.subr.mxu0 0.0
      %438 = vmatpush1.msra.mxu0 0.0
      %439 = vmatprep.subr.mxu0 0.0
      %440 = vmatpush1.msra.mxu0 0.0
      %441 = vmatprep.subr.mxu0 0.0
      %442 = vmatpush1.msra.mxu0 0.0
      %443 = vmatprep.subr.mxu0 0.0
      %444 = vmatpush1.msra.mxu0 0.0
      %445 = vmatprep.subr.mxu0 0.0
      %446 = vmatpush1.msra.mxu0 0.0
      %447 = vmatprep.subr.mxu0 0.0
      %448 = vmatpush1.msra.mxu0 0.0
      %449 = vmatprep.subr.mxu0 0.0
      %450 = vmatpush1.msra.mxu0 0.0
      %451 = vmatprep.subr.mxu0 0.0
      %452 = vmatpush1.msra.mxu0 0.0
      %453 = vmatprep.subr.mxu0 0.0
      %454 = vmatpush1.msra.mxu0 0.0
      %455 = vmatprep.subr.mxu0 0.0
      %456 = vmatpush1.msra.mxu0 0.0
      %457 = vmatprep.subr.mxu0 0.0
      %458 = vmatpush1.msra.mxu0 0.0
      %459 = vmatprep.subr.mxu0 0.0
      %460 = vmatpush1.msra.mxu0 0.0
      %461 = vmatprep.subr.mxu0 0.0
      %462 = vmatpush1.msra.mxu0 0.0
      %463 = vmatprep.subr.mxu0 0.0
      %464 = vmatpush1.msra.mxu0 0.0
      %465 = vmatprep.subr.mxu0 0.0
      %466 = vmatpush1.msra.mxu0 0.0
      %467 = vmatprep.subr.mxu0 0.0
      %468 = vmatpush1.msra.mxu0 0.0
      %469 = vmatprep.subr.mxu0 0.0
      %470 = vmatpush1.msra.mxu0 0.0
      %471 = vmatprep.subr.mxu0 0.0
      %472 = vmatpush1.msra.mxu0 0.0
      %473 = vmatprep.subr.mxu0 0.0
      %474 = vmatpush1.msra.mxu0 0.0
      %475 = vmatprep.subr.mxu0 0.0
      %476 = vmatpush1.msra.mxu0 0.0
      %477 = vmatprep.subr.mxu0 0.0
      %478 = vmatpush1.msra.mxu0 0.0
      %479 = vmatprep.subr.mxu0 0.0
      %480 = vmatpush1.msra.mxu0 0.0
      %481 = vmatprep.mubr.f32.mxu0 0.0
      %v482 = vand.u32 %v321, 4294901760
      %v483 = vsub.f32 %v321, %v482
      %v484 = vand.u32 %v483, 4294901760
      %v485 = vsub.f32 %v483, %v484
      %v486 = vand.u32 %v485, 4294901760
      %487 = vmatmul.mubr.f32.gmra.mrb[0].mxu0 %v486
      %v488 = vpop.f32.mrb[0].mxu0
      %v489 = vadd.f32 %v317, %v488
      %v490 = vpop.f32.mrb[0].mxu0
      %491 = vmatprep.mubr.f32.mxu0 0.0
      %v492 = vand.u32 %v324, 4294901760
      %v493 = vsub.f32 %v324, %v492
      %v494 = vand.u32 %v493, 4294901760
      %v495 = vsub.f32 %v493, %v494
      %v496 = vand.u32 %v495, 4294901760
      %497 = vmatmul.mubr.f32.gmra.mrb[0].mxu0 %v496
      %v498 = vpop.f32.mrb[0].mxu0
      %v499 = vadd.f32 %v317, %v498
      %v500 = vpop.f32.mrb[0].mxu0
      %501 = vmatprep.mubr.f32.mxu0 0.0
      %v502 = vand.u32 %v327, 4294901760
      %v503 = vsub.f32 %v327, %v502
      %v504 = vand.u32 %v503, 4294901760
      %v505 = vsub.f32 %v503, %v504
      %v506 = vand.u32 %v505, 4294901760
      %507 = vmatmul.mubr.f32.gmra.mrb[0].mxu0 %v506
      %v508 = vpop.f32.mrb[0].mxu0
      %v509 = vadd.f32 %v317, %v508
      %v510 = vpop.f32.mrb[0].mxu0
      %511 = vmatprep.mubr.f32.mxu0 0.0
      %v512 = vand.u32 %v330, 4294901760
      %v513 = vsub.f32 %v330, %v512
      %v514 = vand.u32 %v513, 4294901760
      %v515 = vsub.f32 %v513, %v514
      %v516 = vand.u32 %v515, 4294901760
      %517 = vmatmul.mubr.f32.gmra.mrb[0].mxu0 %v516
      %v518 = vpop.f32.mrb[0].mxu0
      %v519 = vadd.f32 %v317, %v518
      %v520 = vpop.f32.mrb[0].mxu0
      %521 = vmatprep.mubr.f32.mxu0 0.0
      %v522 = vand.u32 %v333, 4294901760
      %v523 = vsub.f32 %v333, %v522
      %v524 = vand.u32 %v523, 4294901760
      %v525 = vsub.f32 %v523, %v524
      %v526 = vand.u32 %v525, 4294901760
      %527 = vmatmul.mubr.f32.gmra.mrb[0].mxu0 %v526
      %v528 = vpop.f32.mrb[0].mxu0
      %v529 = vadd.f32 %v317, %v528
      %v530 = vpop.f32.mrb[0].mxu0
      %531 = vmatprep.mubr.f32.mxu0 0.0
      %v532 = vand.u32 %v336, 4294901760
      %v533 = vsub.f32 %v336, %v532
      %v534 = vand.u32 %v533, 4294901760
      %v535 = vsub.f32 %v533, %v534
      %v536 = vand.u32 %v535, 4294901760
      %537 = vmatmul.mubr.f32.gmra.mrb[0].mxu0 %v536
      %v538 = vpop.f32.mrb[0].mxu0
      %v539 = vadd.f32 %v317, %v538
      %v540 = vpop.f32.mrb[0].mxu0
      %541 = vmatprep.mubr.f32.mxu0 0.0
      %v542 = vand.u32 %v339, 4294901760
      %v543 = vsub.f32 %v339, %v542
      %v544 = vand.u32 %v543, 4294901760
      %v545 = vsub.f32 %v543, %v544
      %v546 = vand.u32 %v545, 4294901760
      %547 = vmatmul.mubr.f32.gmra.mrb[0].mxu0 %v546
      %v548 = vpop.f32.mrb[0].mxu0
      %v549 = vadd.f32 %v317, %v548
      %v550 = vpop.f32.mrb[0].mxu0
      %551 = vmatprep.mubr.f32.mxu0 0.0
      %v552 = vand.u32 %v342, 4294901760
      %v553 = vsub.f32 %v342, %v552
      %v554 = vand.u32 %v553, 4294901760
      %v555 = vsub.f32 %v553, %v554
      %v556 = vand.u32 %v555, 4294901760
      %557 = vmatmul.mubr.f32.gmra.mrb[0].mxu0 %v556
      %v558 = vpop.f32.mrb[0].mxu0
      %v559 = vadd.f32 %v317, %v558
      %v560 = vpop.f32.mrb[0].mxu0
      %561 = vmatprep.mubr.f32.mxu0 0.0
      %v562 = vand.u32 %v345, 4294901760
      %v563 = vsub.f32 %v345, %v562
      %v564 = vand.u32 %v563, 4294901760
      %v565 = vsub.f32 %v563, %v564
      %v566 = vand.u32 %v565, 4294901760
      %567 = vmatmul.mubr.f32.gmra.mrb[0].mxu0 %v566
      %v568 = vpop.f32.mrb[0].mxu0
      %v569 = vadd.f32 %v317, %v568
      %v570 = vpop.f32.mrb[0].mxu0
      %571 = vmatprep.mubr.f32.mxu0 0.0
      %v572 = vand.u32 %v348, 4294901760
      %v573 = vsub.f32 %v348, %v572
      %v574 = vand.u32 %v573, 4294901760
      %v575 = vsub.f32 %v573, %v574
      %v576 = vand.u32 %v575, 4294901760
      %577 = vmatmul.mubr.f32.gmra.mrb[0].mxu0 %v576
      %v578 = vpop.f32.mrb[0].mxu0
      %v579 = vadd.f32 %v317, %v578
      %v580 = vpop.f32.mrb[0].mxu0
      %581 = vmatprep.mubr.f32.mxu0 0.0
      %v582 = vand.u32 %v351, 4294901760
      %v583 = vsub.f32 %v351, %v582
      %v584 = vand.u32 %v583, 4294901760
      %v585 = vsub.f32 %v583, %v584
      %v586 = vand.u32 %v585, 4294901760
      %587 = vmatmul.mubr.f32.gmra.mrb[0].mxu0 %v586
      %v588 = vpop.f32.mrb[0].mxu0
      %v589 = vadd.f32 %v317, %v588
      %v590 = vpop.f32.mrb[0].mxu0
      %591 = vmatprep.mubr.f32.mxu0 0.0
      %v592 = vand.u32 %v354, 4294901760
      %v593 = vsub.f32 %v354, %v592
      %v594 = vand.u32 %v593, 4294901760
      %v595 = vsub.f32 %v593, %v594
      %v596 = vand.u32 %v595, 4294901760
      %597 = vmatmul.mubr.f32.gmra.mrb[0].mxu0 %v596
      %v598 = vpop.f32.mrb[0].mxu0
      %v599 = vadd.f32 %v317, %v598
      %v600 = vpop.f32.mrb[0].mxu0
      %601 = vmatprep.mubr.f32.mxu0 0.0
      %v602 = vand.u32 %v357, 4294901760
      %v603 = vsub.f32 %v357, %v602
      %v604 = vand.u32 %v603, 4294901760
      %v605 = vsub.f32 %v603, %v604
      %v606 = vand.u32 %v605, 4294901760
      %607 = vmatmul.mubr.f32.gmra.mrb[0].mxu0 %v606
      %v608 = vpop.f32.mrb[0].mxu0
      %v609 = vadd.f32 %v317, %v608
      %v610 = vpop.f32.mrb[0].mxu0
      %611 = vmatprep.mubr.f32.mxu0 0.0
      %v612 = vand.u32 %v360, 4294901760
      %v613 = vsub.f32 %v360, %v612
      %v614 = vand.u32 %v613, 4294901760
      %v615 = vsub.f32 %v613, %v614
      %v616 = vand.u32 %v615, 4294901760
      %617 = vmatmul.mubr.f32.gmra.mrb[0].mxu0 %v616
      %v618 = vpop.f32.mrb[0].mxu0
      %v619 = vadd.f32 %v317, %v618
      %v620 = vpop.f32.mrb[0].mxu0
      %621 = vmatprep.mubr.f32.mxu0 0.0
      %v622 = vand.u32 %v363, 4294901760
      %v623 = vsub.f32 %v363, %v622
      %v624 = vand.u32 %v623, 4294901760
      %v625 = vsub.f32 %v623, %v624
      %v626 = vand.u32 %v625, 4294901760
      %627 = vmatmul.mubr.f32.gmra.mrb[0].mxu0 %v626
      %v628 = vpop.f32.mrb[0].mxu0
      %v629 = vadd.f32 %v317, %v628
      %v630 = vpop.f32.mrb[0].mxu0
      %631 = vmatprep.mubr.f32.mxu0 0.0
      %v632 = vand.u32 %v366, 4294901760
      %v633 = vsub.f32 %v366, %v632
      %v634 = vand.u32 %v633, 4294901760
      %v635 = vsub.f32 %v633, %v634
      %v636 = vand.u32 %v635, 4294901760
      %637 = vmatmul.mubr.f32.gmra.mrb[0].mxu0 %v636
      %v638 = vpop.f32.mrb[0].mxu0
      %v639 = vadd.f32 %v317, %v638
      %v640 = vpop.f32.mrb[0].mxu0
      %641 = vmatprep.mubr.f32.mxu0 0.0
      %v642 = vand.u32 %v369, 4294901760
      %v643 = vsub.f32 %v369, %v642
      %v644 = vand.u32 %v643, 4294901760
      %v645 = vsub.f32 %v643, %v644
      %v646 = vand.u32 %v645, 4294901760
      %647 = vmatmul.mubr.f32.gmra.mrb[0].mxu0 %v646
      %v648 = vpop.f32.mrb[0].mxu0
      %v649 = vadd.f32 %v317, %v648
      %v650 = vpop.f32.mrb[0].mxu0
      %651 = vmatprep.mubr.f32.mxu0 0.0
      %v652 = vand.u32 %v372, 4294901760
      %v653 = vsub.f32 %v372, %v652
      %v654 = vand.u32 %v653, 4294901760
      %v655 = vsub.f32 %v653, %v654
      %v656 = vand.u32 %v655, 4294901760
      %657 = vmatmul.mubr.f32.gmra.mrb[0].mxu0 %v656
      %v658 = vpop.f32.mrb[0].mxu0
      %v659 = vadd.f32 %v317, %v658
      %v660 = vpop.f32.mrb[0].mxu0
      %661 = vmatprep.mubr.f32.mxu0 0.0
      %v662 = vand.u32 %v375, 4294901760
      %v663 = vsub.f32 %v375, %v662
      %v664 = vand.u32 %v663, 4294901760
      %v665 = vsub.f32 %v663, %v664
      %v666 = vand.u32 %v665, 4294901760
      %667 = vmatmul.mubr.f32.gmra.mrb[0].mxu0 %v666
      %v668 = vpop.f32.mrb[0].mxu0
      %v669 = vadd.f32 %v317, %v668
      %v670 = vpop.f32.mrb[0].mxu0
      %671 = vmatprep.mubr.f32.mxu0 0.0
      %v672 = vand.u32 %v378, 4294901760
      %v673 = vsub.f32 %v378, %v672
      %v674 = vand.u32 %v673, 4294901760
      %v675 = vsub.f32 %v673, %v674
      %v676 = vand.u32 %v675, 4294901760
      %677 = vmatmul.mubr.f32.gmra.mrb[0].mxu0 %v676
      %v678 = vpop.f32.mrb[0].mxu0
      %v679 = vadd.f32 %v317, %v678
      %v680 = vpop.f32.mrb[0].mxu0
      %681 = vmatprep.mubr.f32.mxu0 0.0
      %v682 = vand.u32 %v381, 4294901760
      %v683 = vsub.f32 %v381, %v682
      %v684 = vand.u32 %v683, 4294901760
      %v685 = vsub.f32 %v683, %v684
      %v686 = vand.u32 %v685, 4294901760
      %687 = vmatmul.mubr.f32.gmra.mrb[0].mxu0 %v686
      %v688 = vpop.f32.mrb[0].mxu0
      %v689 = vadd.f32 %v317, %v688
      %v690 = vpop.f32.mrb[0].mxu0
      %691 = vmatprep.mubr.f32.mxu0 0.0
      %v692 = vand.u32 %v384, 4294901760
      %v693 = vsub.f32 %v384, %v692
      %v694 = vand.u32 %v693, 4294901760
      %v695 = vsub.f32 %v693, %v694
      %v696 = vand.u32 %v695, 4294901760
      %697 = vmatmul.mubr.f32.gmra.mrb[0].mxu0 %v696
      %v698 = vpop.f32.mrb[0].mxu0
      %v699 = vadd.f32 %v317, %v698
      %v700 = vpop.f32.mrb[0].mxu0
      %701 = vmatprep.mubr.f32.mxu0 0.0
      %v702 = vand.u32 %v387, 4294901760
      %v703 = vsub.f32 %v387, %v702
      %v704 = vand.u32 %v703, 4294901760
      %v705 = vsub.f32 %v703, %v704
      %v706 = vand.u32 %v705, 4294901760
      %707 = vmatmul.mubr.f32.gmra.mrb[0].mxu0 %v706
      %v708 = vpop.f32.mrb[0].mxu0
      %v709 = vadd.f32 %v317, %v708
      %v710 = vpop.f32.mrb[0].mxu0
      %711 = vmatprep.mubr.f32.mxu0 0.0
      %v712 = vand.u32 %v390, 4294901760
      %v713 = vsub.f32 %v390, %v712
      %v714 = vand.u32 %v713, 4294901760
      %v715 = vsub.f32 %v713, %v714
      %v716 = vand.u32 %v715, 4294901760
      %717 = vmatmul.mubr.f32.gmra.mrb[0].mxu0 %v716
      %v718 = vpop.f32.mrb[0].mxu0
      %v719 = vadd.f32 %v317, %v718
      %v720 = vpop.f32.mrb[0].mxu0
      %721 = vmatprep.mubr.f32.mxu0 0.0
      %v722 = vand.u32 %v393, 4294901760
      %v723 = vsub.f32 %v393, %v722
      %v724 = vand.u32 %v723, 4294901760
      %v725 = vsub.f32 %v723, %v724
      %v726 = vand.u32 %v725, 4294901760
      %727 = vmatmul.mubr.f32.gmra.mrb[0].mxu0 %v726
      %v728 = vpop.f32.mrb[0].mxu0
      %v729 = vadd.f32 %v317, %v728
      %v730 = vpop.f32.mrb[0].mxu0
      %731 = vmatprep.mubr.f32.mxu0 0.0
      %v732 = vand.u32 %v396, 4294901760
      %v733 = vsub.f32 %v396, %v732
      %v734 = vand.u32 %v733, 4294901760
      %v735 = vsub.f32 %v733, %v734
      %v736 = vand.u32 %v735, 4294901760
      %737 = vmatmul.mubr.f32.gmra.mrb[0].mxu0 %v736
      %v738 = vpop.f32.mrb[0].mxu0
      %v739 = vadd.f32 %v317, %v738
      %v740 = vpop.f32.mrb[0].mxu0
      %741 = vmatprep.mubr.f32.mxu0 0.0
      %v742 = vand.u32 %v399, 4294901760
      %v743 = vsub.f32 %v399, %v742
      %v744 = vand.u32 %v743, 4294901760
      %v745 = vsub.f32 %v743, %v744
      %v746 = vand.u32 %v745, 4294901760
      %747 = vmatmul.mubr.f32.gmra.mrb[0].mxu0 %v746
      %v748 = vpop.f32.mrb[0].mxu0
      %v749 = vadd.f32 %v317, %v748
      %v750 = vpop.f32.mrb[0].mxu0
      %751 = vmatprep.mubr.f32.mxu0 0.0
      %v752 = vand.u32 %v402, 4294901760
      %v753 = vsub.f32 %v402, %v752
      %v754 = vand.u32 %v753, 4294901760
      %v755 = vsub.f32 %v753, %v754
      %v756 = vand.u32 %v755, 4294901760
      %757 = vmatmul.mubr.f32.gmra.mrb[0].mxu0 %v756
      %v758 = vpop.f32.mrb[0].mxu0
      %v759 = vadd.f32 %v317, %v758
      %v760 = vpop.f32.mrb[0].mxu0
      %761 = vmatprep.mubr.f32.mxu0 0.0
      %v762 = vand.u32 %v405, 4294901760
      %v763 = vsub.f32 %v405, %v762
      %v764 = vand.u32 %v763, 4294901760
      %v765 = vsub.f32 %v763, %v764
      %v766 = vand.u32 %v765, 4294901760
      %767 = vmatmul.mubr.f32.gmra.mrb[0].mxu0 %v766
      %v768 = vpop.f32.mrb[0].mxu0
      %v769 = vadd.f32 %v317, %v768
      %v770 = vpop.f32.mrb[0].mxu0
      %771 = vmatprep.mubr.f32.mxu0 0.0
      %v772 = vand.u32 %v408, 4294901760
      %v773 = vsub.f32 %v408, %v772
      %v774 = vand.u32 %v773, 4294901760
      %v775 = vsub.f32 %v773, %v774
      %v776 = vand.u32 %v775, 4294901760
      %777 = vmatmul.mubr.f32.gmra.mrb[0].mxu0 %v776
      %v778 = vpop.f32.mrb[0].mxu0
      %v779 = vadd.f32 %v317, %v778
      %v780 = vpop.f32.mrb[0].mxu0
      %781 = vmatprep.mubr.f32.mxu0 0.0
      %v782 = vand.u32 %v411, 4294901760
      %v783 = vsub.f32 %v411, %v782
      %v784 = vand.u32 %v783, 4294901760
      %v785 = vsub.f32 %v783, %v784
      %v786 = vand.u32 %v785, 4294901760
      %787 = vmatmul.mubr.f32.gmra.mrb[0].mxu0 %v786
      %v788 = vpop.f32.mrb[0].mxu0
      %v789 = vadd.f32 %v317, %v788
      %v790 = vpop.f32.mrb[0].mxu0
      %791 = vmatprep.mubr.f32.mxu0 0.0
      %v792 = vand.u32 %v414, 4294901760
      %v793 = vsub.f32 %v414, %v792
      %v794 = vand.u32 %v793, 4294901760
      %v795 = vsub.f32 %v793, %v794
      %v796 = vand.u32 %v795, 4294901760
      %797 = vmatmul.mubr.f32.gmra.mrb[0].mxu0 %v796
      %v798 = vpop.f32.mrb[0].mxu0
      %v799 = vadd.f32 %v317, %v798
      %v800 = vpop.f32.mrb[0].mxu0
      %801 = vdwg.mxu0
      %802 = vmatprep.subr.mxu0 0.0
      %v803 = vand.u32 %v311, 4294901760
      %v804 = vsub.f32 %v311, %v803
      %v805 = vand.u32 %v804, 4294901760
      %v806 = vsub.f32 %v804, %v805
      %v807 = vand.u32 %v806, 4294901760
      %808 = vmatpush1.msra.mxu0 %v807
      %809 = vmatprep.subr.mxu0 0.0
      %810 = vmatpush1.msra.mxu0 0.0
      %811 = vmatprep.subr.mxu0 0.0
      %812 = vmatpush1.msra.mxu0 0.0
      %813 = vmatprep.subr.mxu0 0.0
      %814 = vmatpush1.msra.mxu0 0.0
      %815 = vmatprep.subr.mxu0 0.0
      %816 = vmatpush1.msra.mxu0 0.0
      %817 = vmatprep.subr.mxu0 0.0
      %818 = vmatpush1.msra.mxu0 0.0
      %819 = vmatprep.subr.mxu0 0.0
      %820 = vmatpush1.msra.mxu0 0.0
      %821 = vmatprep.subr.mxu0 0.0
      %822 = vmatpush1.msra.mxu0 0.0
      %823 = vmatprep.subr.mxu0 0.0
      %824 = vmatpush1.msra.mxu0 0.0
      %825 = vmatprep.subr.mxu0 0.0
      %826 = vmatpush1.msra.mxu0 0.0
      %827 = vmatprep.subr.mxu0 0.0
      %828 = vmatpush1.msra.mxu0 0.0
      %829 = vmatprep.subr.mxu0 0.0
      %830 = vmatpush1.msra.mxu0 0.0
      %831 = vmatprep.subr.mxu0 0.0
      %832 = vmatpush1.msra.mxu0 0.0
      %833 = vmatprep.subr.mxu0 0.0
      %834 = vmatpush1.msra.mxu0 0.0
      %835 = vmatprep.subr.mxu0 0.0
      %836 = vmatpush1.msra.mxu0 0.0
      %837 = vmatprep.subr.mxu0 0.0
      %838 = vmatpush1.msra.mxu0 0.0
      %839 = vmatprep.subr.mxu0 0.0
      %840 = vmatpush1.msra.mxu0 0.0
      %841 = vmatprep.subr.mxu0 0.0
      %842 = vmatpush1.msra.mxu0 0.0
      %843 = vmatprep.subr.mxu0 0.0
      %844 = vmatpush1.msra.mxu0 0.0
      %845 = vmatprep.subr.mxu0 0.0
      %846 = vmatpush1.msra.mxu0 0.0
      %847 = vmatprep.subr.mxu0 0.0
      %848 = vmatpush1.msra.mxu0 0.0
      %849 = vmatprep.subr.mxu0 0.0
      %850 = vmatpush1.msra.mxu0 0.0
      %851 = vmatprep.subr.mxu0 0.0
      %852 = vmatpush1.msra.mxu0 0.0
      %853 = vmatprep.subr.mxu0 0.0
      %854 = vmatpush1.msra.mxu0 0.0
      %855 = vmatprep.subr.mxu0 0.0
      %856 = vmatpush1.msra.mxu0 0.0
      %857 = vmatprep.subr.mxu0 0.0
      %858 = vmatpush1.msra.mxu0 0.0
      %859 = vmatprep.subr.mxu0 0.0
      %860 = vmatpush1.msra.mxu0 0.0
      %861 = vmatprep.subr.mxu0 0.0
      %862 = vmatpush1.msra.mxu0 0.0
      %863 = vmatprep.subr.mxu0 0.0
      %864 = vmatpush1.msra.mxu0 0.0
      %865 = vmatprep.subr.mxu0 0.0
      %866 = vmatpush1.msra.mxu0 0.0
      %867 = vmatprep.subr.mxu0 0.0
      %868 = vmatpush1.msra.mxu0 0.0
      %869 = vmatprep.subr.mxu0 0.0
      %870 = vmatpush1.msra.mxu0 0.0
      %871 = vmatprep.mubr.f32.mxu0 0.0
      %v872 = vand.u32 %v321, 4294901760
      %873 = vmatmul.mubr.f32.gmra.mrb[0].mxu0 %v872
      %v874 = vpop.f32.mrb[0].mxu0
      %v875 = vadd.f32 %v489, %v874
      %v876 = vpop.f32.mrb[0].mxu0
      %877 = vmatprep.mubr.f32.mxu0 0.0
      %v878 = vand.u32 %v324, 4294901760
      %879 = vmatmul.mubr.f32.gmra.mrb[0].mxu0 %v878
      %v880 = vpop.f32.mrb[0].mxu0
      %v881 = vadd.f32 %v499, %v880
      %v882 = vpop.f32.mrb[0].mxu0
      %883 = vmatprep.mubr.f32.mxu0 0.0
      %v884 = vand.u32 %v327, 4294901760
      %885 = vmatmul.mubr.f32.gmra.mrb[0].mxu0 %v884
      %v886 = vpop.f32.mrb[0].mxu0
      %v887 = vadd.f32 %v509, %v886
      %v888 = vpop.f32.mrb[0].mxu0
      %889 = vmatprep.mubr.f32.mxu0 0.0
      %v890 = vand.u32 %v330, 4294901760
      %891 = vmatmul.mubr.f32.gmra.mrb[0].mxu0 %v890
      %v892 = vpop.f32.mrb[0].mxu0
      %v893 = vadd.f32 %v519, %v892
      %v894 = vpop.f32.mrb[0].mxu0
      %895 = vmatprep.mubr.f32.mxu0 0.0
      %v896 = vand.u32 %v333, 4294901760
      %897 = vmatmul.mubr.f32.gmra.mrb[0].mxu0 %v896
      %v898 = vpop.f32.mrb[0].mxu0
      %v899 = vadd.f32 %v529, %v898
      %v900 = vpop.f32.mrb[0].mxu0
      %901 = vmatprep.mubr.f32.mxu0 0.0
      %v902 = vand.u32 %v336, 4294901760
      %903 = vmatmul.mubr.f32.gmra.mrb[0].mxu0 %v902
      %v904 = vpop.f32.mrb[0].mxu0
      %v905 = vadd.f32 %v539, %v904
      %v906 = vpop.f32.mrb[0].mxu0
      %907 = vmatprep.mubr.f32.mxu0 0.0
      %v908 = vand.u32 %v339, 4294901760
      %909 = vmatmul.mubr.f32.gmra.mrb[0].mxu0 %v908
      %v910 = vpop.f32.mrb[0].mxu0
      %v911 = vadd.f32 %v549, %v910
      %v912 = vpop.f32.mrb[0].mxu0
      %913 = vmatprep.mubr.f32.mxu0 0.0
      %v914 = vand.u32 %v342, 4294901760
      %915 = vmatmul.mubr.f32.gmra.mrb[0].mxu0 %v914
      %v916 = vpop.f32.mrb[0].mxu0
      %v917 = vadd.f32 %v559, %v916
      %v918 = vpop.f32.mrb[0].mxu0
      %919 = vmatprep.mubr.f32.mxu0 0.0
      %v920 = vand.u32 %v345, 4294901760
      %921 = vmatmul.mubr.f32.gmra.mrb[0].mxu0 %v920
      %v922 = vpop.f32.mrb[0].mxu0
      %v923 = vadd.f32 %v569, %v922
      %v924 = vpop.f32.mrb[0].mxu0
      %925 = vmatprep.mubr.f32.mxu0 0.0
      %v926 = vand.u32 %v348, 4294901760
      %927 = vmatmul.mubr.f32.gmra.mrb[0].mxu0 %v926
      %v928 = vpop.f32.mrb[0].mxu0
      %v929 = vadd.f32 %v579, %v928
      %v930 = vpop.f32.mrb[0].mxu0
      %931 = vmatprep.mubr.f32.mxu0 0.0
      %v932 = vand.u32 %v351, 4294901760
      %933 = vmatmul.mubr.f32.gmra.mrb[0].mxu0 %v932
      %v934 = vpop.f32.mrb[0].mxu0
      %v935 = vadd.f32 %v589, %v934
      %v936 = vpop.f32.mrb[0].mxu0
      %937 = vmatprep.mubr.f32.mxu0 0.0
      %v938 = vand.u32 %v354, 4294901760
      %939 = vmatmul.mubr.f32.gmra.mrb[0].mxu0 %v938
      %v940 = vpop.f32.mrb[0].mxu0
      %v941 = vadd.f32 %v599, %v940
      %v942 = vpop.f32.mrb[0].mxu0
      %943 = vmatprep.mubr.f32.mxu0 0.0
      %v944 = vand.u32 %v357, 4294901760
      %945 = vmatmul.mubr.f32.gmra.mrb[0].mxu0 %v944
      %v946 = vpop.f32.mrb[0].mxu0
      %v947 = vadd.f32 %v609, %v946
      %v948 = vpop.f32.mrb[0].mxu0
      %949 = vmatprep.mubr.f32.mxu0 0.0
      %v950 = vand.u32 %v360, 4294901760
      %951 = vmatmul.mubr.f32.gmra.mrb[0].mxu0 %v950
      %v952 = vpop.f32.mrb[0].mxu0
      %v953 = vadd.f32 %v619, %v952
      %v954 = vpop.f32.mrb[0].mxu0
      %955 = vmatprep.mubr.f32.mxu0 0.0
      %v956 = vand.u32 %v363, 4294901760
      %957 = vmatmul.mubr.f32.gmra.mrb[0].mxu0 %v956
      %v958 = vpop.f32.mrb[0].mxu0
      %v959 = vadd.f32 %v629, %v958
      %v960 = vpop.f32.mrb[0].mxu0
      %961 = vmatprep.mubr.f32.mxu0 0.0
      %v962 = vand.u32 %v366, 4294901760
      %963 = vmatmul.mubr.f32.gmra.mrb[0].mxu0 %v962
      %v964 = vpop.f32.mrb[0].mxu0
      %v965 = vadd.f32 %v639, %v964
      %v966 = vpop.f32.mrb[0].mxu0
      %967 = vmatprep.mubr.f32.mxu0 0.0
      %v968 = vand.u32 %v369, 4294901760
      %969 = vmatmul.mubr.f32.gmra.mrb[0].mxu0 %v968
      %v970 = vpop.f32.mrb[0].mxu0
      %v971 = vadd.f32 %v649, %v970
      %v972 = vpop.f32.mrb[0].mxu0
      %973 = vmatprep.mubr.f32.mxu0 0.0
      %v974 = vand.u32 %v372, 4294901760
      %975 = vmatmul.mubr.f32.gmra.mrb[0].mxu0 %v974
      %v976 = vpop.f32.mrb[0].mxu0
      %v977 = vadd.f32 %v659, %v976
      %v978 = vpop.f32.mrb[0].mxu0
      %979 = vmatprep.mubr.f32.mxu0 0.0
      %v980 = vand.u32 %v375, 4294901760
      %981 = vmatmul.mubr.f32.gmra.mrb[0].mxu0 %v980
      %v982 = vpop.f32.mrb[0].mxu0
      %v983 = vadd.f32 %v669, %v982
      %v984 = vpop.f32.mrb[0].mxu0
      %985 = vmatprep.mubr.f32.mxu0 0.0
      %v986 = vand.u32 %v378, 4294901760
      %987 = vmatmul.mubr.f32.gmra.mrb[0].mxu0 %v986
      %v988 = vpop.f32.mrb[0].mxu0
      %v989 = vadd.f32 %v679, %v988
      %v990 = vpop.f32.mrb[0].mxu0
      %991 = vmatprep.mubr.f32.mxu0 0.0
      %v992 = vand.u32 %v381, 4294901760
      %993 = vmatmul.mubr.f32.gmra.mrb[0].mxu0 %v992
      %v994 = vpop.f32.mrb[0].mxu0
      %v995 = vadd.f32 %v689, %v994
      %v996 = vpop.f32.mrb[0].mxu0
      %997 = vmatprep.mubr.f32.mxu0 0.0
      %v998 = vand.u32 %v384, 4294901760
      %999 = vmatmul.mubr.f32.gmra.mrb[0].mxu0 %v998
      %v1000 = vpop.f32.mrb[0].mxu0
      %v1001 = vadd.f32 %v699, %v1000
      %v1002 = vpop.f32.mrb[0].mxu0
      %1003 = vmatprep.mubr.f32.mxu0 0.0
      %v1004 = vand.u32 %v387, 4294901760
      %1005 = vmatmul.mubr.f32.gmra.mrb[0].mxu0 %v1004
      %v1006 = vpop.f32.mrb[0].mxu0
      %v1007 = vadd.f32 %v709, %v1006
      %v1008 = vpop.f32.mrb[0].mxu0
      %1009 = vmatprep.mubr.f32.mxu0 0.0
      %v1010 = vand.u32 %v390, 4294901760
      %1011 = vmatmul.mubr.f32.gmra.mrb[0].mxu0 %v1010
      %v1012 = vpop.f32.mrb[0].mxu0
      %v1013 = vadd.f32 %v719, %v1012
      %v1014 = vpop.f32.mrb[0].mxu0
      %1015 = vmatprep.mubr.f32.mxu0 0.0
      %v1016 = vand.u32 %v393, 4294901760
      %1017 = vmatmul.mubr.f32.gmra.mrb[0].mxu0 %v1016
      %v1018 = vpop.f32.mrb[0].mxu0
      %v1019 = vadd.f32 %v729, %v1018
      %v1020 = vpop.f32.mrb[0].mxu0
      %1021 = vmatprep.mubr.f32.mxu0 0.0
      %v1022 = vand.u32 %v396, 4294901760
      %1023 = vmatmul.mubr.f32.gmra.mrb[0].mxu0 %v1022
      %v1024 = vpop.f32.mrb[0].mxu0
      %v1025 = vadd.f32 %v739, %v1024
      %v1026 = vpop.f32.mrb[0].mxu0
      %1027 = vmatprep.mubr.f32.mxu0 0.0
      %v1028 = vand.u32 %v399, 4294901760
      %1029 = vmatmul.mubr.f32.gmra.mrb[0].mxu0 %v1028
      %v1030 = vpop.f32.mrb[0].mxu0
      %v1031 = vadd.f32 %v749, %v1030
      %v1032 = vpop.f32.mrb[0].mxu0
      %1033 = vmatprep.mubr.f32.mxu0 0.0
      %v1034 = vand.u32 %v402, 4294901760
      %1035 = vmatmul.mubr.f32.gmra.mrb[0].mxu0 %v1034
      %v1036 = vpop.f32.mrb[0].mxu0
      %v1037 = vadd.f32 %v759, %v1036
      %v1038 = vpop.f32.mrb[0].mxu0
      %1039 = vmatprep.mubr.f32.mxu0 0.0
      %v1040 = vand.u32 %v405, 4294901760
      %1041 = vmatmul.mubr.f32.gmra.mrb[0].mxu0 %v1040
      %v1042 = vpop.f32.mrb[0].mxu0
      %v1043 = vadd.f32 %v769, %v1042
      %v1044 = vpop.f32.mrb[0].mxu0
      %1045 = vmatprep.mubr.f32.mxu0 0.0
      %v1046 = vand.u32 %v408, 4294901760
      %1047 = vmatmul.mubr.f32.gmra.mrb[0].mxu0 %v1046
      %v1048 = vpop.f32.mrb[0].mxu0
      %v1049 = vadd.f32 %v779, %v1048
      %v1050 = vpop.f32.mrb[0].mxu0
      %1051 = vmatprep.mubr.f32.mxu0 0.0
      %v1052 = vand.u32 %v411, 4294901760
      %1053 = vmatmul.mubr.f32.gmra.mrb[0].mxu0 %v1052
      %v1054 = vpop.f32.mrb[0].mxu0
      %v1055 = vadd.f32 %v789, %v1054
      %v1056 = vpop.f32.mrb[0].mxu0
      %1057 = vmatprep.mubr.f32.mxu0 0.0
      %v1058 = vand.u32 %v414, 4294901760
      %1059 = vmatmul.mubr.f32.gmra.mrb[0].mxu0 %v1058
      %v1060 = vpop.f32.mrb[0].mxu0
      %v1061 = vadd.f32 %v799, %v1060
      %v1062 = vpop.f32.mrb[0].mxu0
      %1063 = vdwg.mxu0
      %1064 = vmatprep.subr.mxu0 0.0
      %v1065 = vand.u32 %v311, 4294901760
      %v1066 = vsub.f32 %v311, %v1065
      %1067 = vmatpush1.msra.mxu0 %v1066
      %1068 = vmatprep.subr.mxu0 0.0
      %1069 = vmatpush1.msra.mxu0 0.0
      %1070 = vmatprep.subr.mxu0 0.0
      %1071 = vmatpush1.msra.mxu0 0.0
      %1072 = vmatprep.subr.mxu0 0.0
      %1073 = vmatpush1.msra.mxu0 0.0
      %1074 = vmatprep.subr.mxu0 0.0
      %1075 = vmatpush1.msra.mxu0 0.0
      %1076 = vmatprep.subr.mxu0 0.0
      %1077 = vmatpush1.msra.mxu0 0.0
      %1078 = vmatprep.subr.mxu0 0.0
      %1079 = vmatpush1.msra.mxu0 0.0
      %1080 = vmatprep.subr.mxu0 0.0
      %1081 = vmatpush1.msra.mxu0 0.0
      %1082 = vmatprep.subr.mxu0 0.0
      %1083 = vmatpush1.msra.mxu0 0.0
      %1084 = vmatprep.subr.mxu0 0.0
      %1085 = vmatpush1.msra.mxu0 0.0
      %1086 = vmatprep.subr.mxu0 0.0
      %1087 = vmatpush1.msra.mxu0 0.0
      %1088 = vmatprep.subr.mxu0 0.0
      %1089 = vmatpush1.msra.mxu0 0.0
      %1090 = vmatprep.subr.mxu0 0.0
      %1091 = vmatpush1.msra.mxu0 0.0
      %1092 = vmatprep.subr.mxu0 0.0
      %1093 = vmatpush1.msra.mxu0 0.0
      %1094 = vmatprep.subr.mxu0 0.0
      %1095 = vmatpush1.msra.mxu0 0.0
      %1096 = vmatprep.subr.mxu0 0.0
      %1097 = vmatpush1.msra.mxu0 0.0
      %1098 = vmatprep.subr.mxu0 0.0
      %1099 = vmatpush1.msra.mxu0 0.0
      %1100 = vmatprep.subr.mxu0 0.0
      %1101 = vmatpush1.msra.mxu0 0.0
      %1102 = vmatprep.subr.mxu0 0.0
      %1103 = vmatpush1.msra.mxu0 0.0
      %1104 = vmatprep.subr.mxu0 0.0
      %1105 = vmatpush1.msra.mxu0 0.0
      %1106 = vmatprep.subr.mxu0 0.0
      %1107 = vmatpush1.msra.mxu0 0.0
      %1108 = vmatprep.subr.mxu0 0.0
      %1109 = vmatpush1.msra.mxu0 0.0
      %1110 = vmatprep.subr.mxu0 0.0
      %1111 = vmatpush1.msra.mxu0 0.0
      %1112 = vmatprep.subr.mxu0 0.0
      %1113 = vmatpush1.msra.mxu0 0.0
      %1114 = vmatprep.subr.mxu0 0.0
      %1115 = vmatpush1.msra.mxu0 0.0
      %1116 = vmatprep.subr.mxu0 0.0
      %1117 = vmatpush1.msra.mxu0 0.0
      %1118 = vmatprep.subr.mxu0 0.0
      %1119 = vmatpush1.msra.mxu0 0.0
      %1120 = vmatprep.subr.mxu0 0.0
      %1121 = vmatpush1.msra.mxu0 0.0
      %1122 = vmatprep.subr.mxu0 0.0
      %1123 = vmatpush1.msra.mxu0 0.0
      %1124 = vmatprep.subr.mxu0 0.0
      %1125 = vmatpush1.msra.mxu0 0.0
      %1126 = vmatprep.subr.mxu0 0.0
      %1127 = vmatpush1.msra.mxu0 0.0
      %1128 = vmatprep.subr.mxu0 0.0
      %1129 = vmatpush1.msra.mxu0 0.0
      %1130 = vmatprep.mubr.f32.mxu0 0.0
      %v1131 = vand.u32 %v321, 4294901760
      %v1132 = vsub.f32 %v321, %v1131
      %1133 = vmatmul.mubr.f32.gmra.mrb[0].mxu0 %v1132
      %v1134 = vpop.f32.mrb[0].mxu0
      %v1135 = vadd.f32 %v875, %v1134
      %v1136 = vpop.f32.mrb[0].mxu0
      %1137 = vmatprep.mubr.f32.mxu0 0.0
      %v1138 = vand.u32 %v324, 4294901760
      %v1139 = vsub.f32 %v324, %v1138
      %1140 = vmatmul.mubr.f32.gmra.mrb[0].mxu0 %v1139
      %v1141 = vpop.f32.mrb[0].mxu0
      %v1142 = vadd.f32 %v881, %v1141
      %v1143 = vpop.f32.mrb[0].mxu0
      %1144 = vmatprep.mubr.f32.mxu0 0.0
      %v1145 = vand.u32 %v327, 4294901760
      %v1146 = vsub.f32 %v327, %v1145
      %1147 = vmatmul.mubr.f32.gmra.mrb[0].mxu0 %v1146
      %v1148 = vpop.f32.mrb[0].mxu0
      %v1149 = vadd.f32 %v887, %v1148
      %v1150 = vpop.f32.mrb[0].mxu0
      %1151 = vmatprep.mubr.f32.mxu0 0.0
      %v1152 = vand.u32 %v330, 4294901760
      %v1153 = vsub.f32 %v330, %v1152
      %1154 = vmatmul.mubr.f32.gmra.mrb[0].mxu0 %v1153
      %v1155 = vpop.f32.mrb[0].mxu0
      %v1156 = vadd.f32 %v893, %v1155
      %v1157 = vpop.f32.mrb[0].mxu0
      %1158 = vmatprep.mubr.f32.mxu0 0.0
      %v1159 = vand.u32 %v333, 4294901760
      %v1160 = vsub.f32 %v333, %v1159
      %1161 = vmatmul.mubr.f32.gmra.mrb[0].mxu0 %v1160
      %v1162 = vpop.f32.mrb[0].mxu0
      %v1163 = vadd.f32 %v899, %v1162
      %v1164 = vpop.f32.mrb[0].mxu0
      %1165 = vmatprep.mubr.f32.mxu0 0.0
      %v1166 = vand.u32 %v336, 4294901760
      %v1167 = vsub.f32 %v336, %v1166
      %1168 = vmatmul.mubr.f32.gmra.mrb[0].mxu0 %v1167
      %v1169 = vpop.f32.mrb[0].mxu0
      %v1170 = vadd.f32 %v905, %v1169
      %v1171 = vpop.f32.mrb[0].mxu0
      %1172 = vmatprep.mubr.f32.mxu0 0.0
      %v1173 = vand.u32 %v339, 4294901760
      %v1174 = vsub.f32 %v339, %v1173
      %1175 = vmatmul.mubr.f32.gmra.mrb[0].mxu0 %v1174
      %v1176 = vpop.f32.mrb[0].mxu0
      %v1177 = vadd.f32 %v911, %v1176
      %v1178 = vpop.f32.mrb[0].mxu0
      %1179 = vmatprep.mubr.f32.mxu0 0.0
      %v1180 = vand.u32 %v342, 4294901760
      %v1181 = vsub.f32 %v342, %v1180
      %1182 = vmatmul.mubr.f32.gmra.mrb[0].mxu0 %v1181
      %v1183 = vpop.f32.mrb[0].mxu0
      %v1184 = vadd.f32 %v917, %v1183
      %v1185 = vpop.f32.mrb[0].mxu0
      %1186 = vmatprep.mubr.f32.mxu0 0.0
      %v1187 = vand.u32 %v345, 4294901760
      %v1188 = vsub.f32 %v345, %v1187
      %1189 = vmatmul.mubr.f32.gmra.mrb[0].mxu0 %v1188
      %v1190 = vpop.f32.mrb[0].mxu0
      %v1191 = vadd.f32 %v923, %v1190
      %v1192 = vpop.f32.mrb[0].mxu0
      %1193 = vmatprep.mubr.f32.mxu0 0.0
      %v1194 = vand.u32 %v348, 4294901760
      %v1195 = vsub.f32 %v348, %v1194
      %1196 = vmatmul.mubr.f32.gmra.mrb[0].mxu0 %v1195
      %v1197 = vpop.f32.mrb[0].mxu0
      %v1198 = vadd.f32 %v929, %v1197
      %v1199 = vpop.f32.mrb[0].mxu0
      %1200 = vmatprep.mubr.f32.mxu0 0.0
      %v1201 = vand.u32 %v351, 4294901760
      %v1202 = vsub.f32 %v351, %v1201
      %1203 = vmatmul.mubr.f32.gmra.mrb[0].mxu0 %v1202
      %v1204 = vpop.f32.mrb[0].mxu0
      %v1205 = vadd.f32 %v935, %v1204
      %v1206 = vpop.f32.mrb[0].mxu0
      %1207 = vmatprep.mubr.f32.mxu0 0.0
      %v1208 = vand.u32 %v354, 4294901760
      %v1209 = vsub.f32 %v354, %v1208
      %1210 = vmatmul.mubr.f32.gmra.mrb[0].mxu0 %v1209
      %v1211 = vpop.f32.mrb[0].mxu0
      %v1212 = vadd.f32 %v941, %v1211
      %v1213 = vpop.f32.mrb[0].mxu0
      %1214 = vmatprep.mubr.f32.mxu0 0.0
      %v1215 = vand.u32 %v357, 4294901760
      %v1216 = vsub.f32 %v357, %v1215
      %1217 = vmatmul.mubr.f32.gmra.mrb[0].mxu0 %v1216
      %v1218 = vpop.f32.mrb[0].mxu0
      %v1219 = vadd.f32 %v947, %v1218
      %v1220 = vpop.f32.mrb[0].mxu0
      %1221 = vmatprep.mubr.f32.mxu0 0.0
      %v1222 = vand.u32 %v360, 4294901760
      %v1223 = vsub.f32 %v360, %v1222
      %1224 = vmatmul.mubr.f32.gmra.mrb[0].mxu0 %v1223
      %v1225 = vpop.f32.mrb[0].mxu0
      %v1226 = vadd.f32 %v953, %v1225
      %v1227 = vpop.f32.mrb[0].mxu0
      %1228 = vmatprep.mubr.f32.mxu0 0.0
      %v1229 = vand.u32 %v363, 4294901760
      %v1230 = vsub.f32 %v363, %v1229
      %1231 = vmatmul.mubr.f32.gmra.mrb[0].mxu0 %v1230
      %v1232 = vpop.f32.mrb[0].mxu0
      %v1233 = vadd.f32 %v959, %v1232
      %v1234 = vpop.f32.mrb[0].mxu0
      %1235 = vmatprep.mubr.f32.mxu0 0.0
      %v1236 = vand.u32 %v366, 4294901760
      %v1237 = vsub.f32 %v366, %v1236
      %1238 = vmatmul.mubr.f32.gmra.mrb[0].mxu0 %v1237
      %v1239 = vpop.f32.mrb[0].mxu0
      %v1240 = vadd.f32 %v965, %v1239
      %v1241 = vpop.f32.mrb[0].mxu0
      %1242 = vmatprep.mubr.f32.mxu0 0.0
      %v1243 = vand.u32 %v369, 4294901760
      %v1244 = vsub.f32 %v369, %v1243
      %1245 = vmatmul.mubr.f32.gmra.mrb[0].mxu0 %v1244
      %v1246 = vpop.f32.mrb[0].mxu0
      %v1247 = vadd.f32 %v971, %v1246
      %v1248 = vpop.f32.mrb[0].mxu0
      %1249 = vmatprep.mubr.f32.mxu0 0.0
      %v1250 = vand.u32 %v372, 4294901760
      %v1251 = vsub.f32 %v372, %v1250
      %1252 = vmatmul.mubr.f32.gmra.mrb[0].mxu0 %v1251
      %v1253 = vpop.f32.mrb[0].mxu0
      %v1254 = vadd.f32 %v977, %v1253
      %v1255 = vpop.f32.mrb[0].mxu0
      %1256 = vmatprep.mubr.f32.mxu0 0.0
      %v1257 = vand.u32 %v375, 4294901760
      %v1258 = vsub.f32 %v375, %v1257
      %1259 = vmatmul.mubr.f32.gmra.mrb[0].mxu0 %v1258
      %v1260 = vpop.f32.mrb[0].mxu0
      %v1261 = vadd.f32 %v983, %v1260
      %v1262 = vpop.f32.mrb[0].mxu0
      %1263 = vmatprep.mubr.f32.mxu0 0.0
      %v1264 = vand.u32 %v378, 4294901760
      %v1265 = vsub.f32 %v378, %v1264
      %1266 = vmatmul.mubr.f32.gmra.mrb[0].mxu0 %v1265
      %v1267 = vpop.f32.mrb[0].mxu0
      %v1268 = vadd.f32 %v989, %v1267
      %v1269 = vpop.f32.mrb[0].mxu0
      %1270 = vmatprep.mubr.f32.mxu0 0.0
      %v1271 = vand.u32 %v381, 4294901760
      %v1272 = vsub.f32 %v381, %v1271
      %1273 = vmatmul.mubr.f32.gmra.mrb[0].mxu0 %v1272
      %v1274 = vpop.f32.mrb[0].mxu0
      %v1275 = vadd.f32 %v995, %v1274
      %v1276 = vpop.f32.mrb[0].mxu0
      %1277 = vmatprep.mubr.f32.mxu0 0.0
      %v1278 = vand.u32 %v384, 4294901760
      %v1279 = vsub.f32 %v384, %v1278
      %1280 = vmatmul.mubr.f32.gmra.mrb[0].mxu0 %v1279
      %v1281 = vpop.f32.mrb[0].mxu0
      %v1282 = vadd.f32 %v1001, %v1281
      %v1283 = vpop.f32.mrb[0].mxu0
      %1284 = vmatprep.mubr.f32.mxu0 0.0
      %v1285 = vand.u32 %v387, 4294901760
      %v1286 = vsub.f32 %v387, %v1285
      %1287 = vmatmul.mubr.f32.gmra.mrb[0].mxu0 %v1286
      %v1288 = vpop.f32.mrb[0].mxu0
      %v1289 = vadd.f32 %v1007, %v1288
      %v1290 = vpop.f32.mrb[0].mxu0
      %1291 = vmatprep.mubr.f32.mxu0 0.0
      %v1292 = vand.u32 %v390, 4294901760
      %v1293 = vsub.f32 %v390, %v1292
      %1294 = vmatmul.mubr.f32.gmra.mrb[0].mxu0 %v1293
      %v1295 = vpop.f32.mrb[0].mxu0
      %v1296 = vadd.f32 %v1013, %v1295
      %v1297 = vpop.f32.mrb[0].mxu0
      %1298 = vmatprep.mubr.f32.mxu0 0.0
      %v1299 = vand.u32 %v393, 4294901760
      %v1300 = vsub.f32 %v393, %v1299
      %1301 = vmatmul.mubr.f32.gmra.mrb[0].mxu0 %v1300
      %v1302 = vpop.f32.mrb[0].mxu0
      %v1303 = vadd.f32 %v1019, %v1302
      %v1304 = vpop.f32.mrb[0].mxu0
      %1305 = vmatprep.mubr.f32.mxu0 0.0
      %v1306 = vand.u32 %v396, 4294901760
      %v1307 = vsub.f32 %v396, %v1306
      %1308 = vmatmul.mubr.f32.gmra.mrb[0].mxu0 %v1307
      %v1309 = vpop.f32.mrb[0].mxu0
      %v1310 = vadd.f32 %v1025, %v1309
      %v1311 = vpop.f32.mrb[0].mxu0
      %1312 = vmatprep.mubr.f32.mxu0 0.0
      %v1313 = vand.u32 %v399, 4294901760
      %v1314 = vsub.f32 %v399, %v1313
      %1315 = vmatmul.mubr.f32.gmra.mrb[0].mxu0 %v1314
      %v1316 = vpop.f32.mrb[0].mxu0
      %v1317 = vadd.f32 %v1031, %v1316
      %v1318 = vpop.f32.mrb[0].mxu0
      %1319 = vmatprep.mubr.f32.mxu0 0.0
      %v1320 = vand.u32 %v402, 4294901760
      %v1321 = vsub.f32 %v402, %v1320
      %1322 = vmatmul.mubr.f32.gmra.mrb[0].mxu0 %v1321
      %v1323 = vpop.f32.mrb[0].mxu0
      %v1324 = vadd.f32 %v1037, %v1323
      %v1325 = vpop.f32.mrb[0].mxu0
      %1326 = vmatprep.mubr.f32.mxu0 0.0
      %v1327 = vand.u32 %v405, 4294901760
      %v1328 = vsub.f32 %v405, %v1327
      %1329 = vmatmul.mubr.f32.gmra.mrb[0].mxu0 %v1328
      %v1330 = vpop.f32.mrb[0].mxu0
      %v1331 = vadd.f32 %v1043, %v1330
      %v1332 = vpop.f32.mrb[0].mxu0
      %1333 = vmatprep.mubr.f32.mxu0 0.0
      %v1334 = vand.u32 %v408, 4294901760
      %v1335 = vsub.f32 %v408, %v1334
      %1336 = vmatmul.mubr.f32.gmra.mrb[0].mxu0 %v1335
      %v1337 = vpop.f32.mrb[0].mxu0
      %v1338 = vadd.f32 %v1049, %v1337
      %v1339 = vpop.f32.mrb[0].mxu0
      %1340 = vmatprep.mubr.f32.mxu0 0.0
      %v1341 = vand.u32 %v411, 4294901760
      %v1342 = vsub.f32 %v411, %v1341
      %1343 = vmatmul.mubr.f32.gmra.mrb[0].mxu0 %v1342
      %v1344 = vpop.f32.mrb[0].mxu0
      %v1345 = vadd.f32 %v1055, %v1344
      %v1346 = vpop.f32.mrb[0].mxu0
      %1347 = vmatprep.mubr.f32.mxu0 0.0
      %v1348 = vand.u32 %v414, 4294901760
      %v1349 = vsub.f32 %v414, %v1348
      %1350 = vmatmul.mubr.f32.gmra.mrb[0].mxu0 %v1349
      %v1351 = vpop.f32.mrb[0].mxu0
      %v1352 = vadd.f32 %v1061, %v1351
      %v1353 = vpop.f32.mrb[0].mxu0
      %1354 = vdwg.mxu0
      %1355 = vmatprep.subr.mxu0 0.0
      %v1356 = vand.u32 %v311, 4294901760
      %1357 = vmatpush1.msra.mxu0 %v1356
      %1358 = vmatprep.subr.mxu0 0.0
      %1359 = vmatpush1.msra.mxu0 0.0
      %1360 = vmatprep.subr.mxu0 0.0
      %1361 = vmatpush1.msra.mxu0 0.0
      %1362 = vmatprep.subr.mxu0 0.0
      %1363 = vmatpush1.msra.mxu0 0.0
      %1364 = vmatprep.subr.mxu0 0.0
      %1365 = vmatpush1.msra.mxu0 0.0
      %1366 = vmatprep.subr.mxu0 0.0
      %1367 = vmatpush1.msra.mxu0 0.0
      %1368 = vmatprep.subr.mxu0 0.0
      %1369 = vmatpush1.msra.mxu0 0.0
      %1370 = vmatprep.subr.mxu0 0.0
      %1371 = vmatpush1.msra.mxu0 0.0
      %1372 = vmatprep.subr.mxu0 0.0
      %1373 = vmatpush1.msra.mxu0 0.0
      %1374 = vmatprep.subr.mxu0 0.0
      %1375 = vmatpush1.msra.mxu0 0.0
      %1376 = vmatprep.subr.mxu0 0.0
      %1377 = vmatpush1.msra.mxu0 0.0
      %1378 = vmatprep.subr.mxu0 0.0
      %1379 = vmatpush1.msra.mxu0 0.0
      %1380 = vmatprep.subr.mxu0 0.0
      %1381 = vmatpush1.msra.mxu0 0.0
      %1382 = vmatprep.subr.mxu0 0.0
      %1383 = vmatpush1.msra.mxu0 0.0
      %1384 = vmatprep.subr.mxu0 0.0
      %1385 = vmatpush1.msra.mxu0 0.0
      %1386 = vmatprep.subr.mxu0 0.0
      %1387 = vmatpush1.msra.mxu0 0.0
      %1388 = vmatprep.subr.mxu0 0.0
      %1389 = vmatpush1.msra.mxu0 0.0
      %1390 = vmatprep.subr.mxu0 0.0
      %1391 = vmatpush1.msra.mxu0 0.0
      %1392 = vmatprep.subr.mxu0 0.0
      %1393 = vmatpush1.msra.mxu0 0.0
      %1394 = vmatprep.subr.mxu0 0.0
      %1395 = vmatpush1.msra.mxu0 0.0
      %1396 = vmatprep.subr.mxu0 0.0
      %1397 = vmatpush1.msra.mxu0 0.0
      %1398 = vmatprep.subr.mxu0 0.0
      %1399 = vmatpush1.msra.mxu0 0.0
      %1400 = vmatprep.subr.mxu0 0.0
      %1401 = vmatpush1.msra.mxu0 0.0
      %1402 = vmatprep.subr.mxu0 0.0
      %1403 = vmatpush1.msra.mxu0 0.0
      %1404 = vmatprep.subr.mxu0 0.0
      %1405 = vmatpush1.msra.mxu0 0.0
      %1406 = vmatprep.subr.mxu0 0.0
      %1407 = vmatpush1.msra.mxu0 0.0
      %1408 = vmatprep.subr.mxu0 0.0
      %1409 = vmatpush1.msra.mxu0 0.0
      %1410 = vmatprep.subr.mxu0 0.0
      %1411 = vmatpush1.msra.mxu0 0.0
      %1412 = vmatprep.subr.mxu0 0.0
      %1413 = vmatpush1.msra.mxu0 0.0
      %1414 = vmatprep.subr.mxu0 0.0
      %1415 = vmatpush1.msra.mxu0 0.0
      %1416 = vmatprep.subr.mxu0 0.0
      %1417 = vmatpush1.msra.mxu0 0.0
      %1418 = vmatprep.subr.mxu0 0.0
      %1419 = vmatpush1.msra.mxu0 0.0
      %1420 = vmatprep.mubr.f32.mxu0 0.0
      %v1421 = vand.u32 %v321, 4294901760
      %v1422 = vsub.f32 %v321, %v1421
      %v1423 = vand.u32 %v1422, 4294901760
      %1424 = vmatmul.mubr.f32.gmra.mrb[0].mxu0 %v1423
      %v1425 = vpop.f32.mrb[0].mxu0
      %v1426 = vadd.f32 %v1135, %v1425
      %v1427 = vpop.f32.mrb[0].mxu0
      %1428 = vmatprep.mubr.f32.mxu0 0.0
      %v1429 = vand.u32 %v324, 4294901760
      %v1430 = vsub.f32 %v324, %v1429
      %v1431 = vand.u32 %v1430, 4294901760
      %1432 = vmatmul.mubr.f32.gmra.mrb[0].mxu0 %v1431
      %v1433 = vpop.f32.mrb[0].mxu0
      %v1434 = vadd.f32 %v1142, %v1433
      %v1435 = vpop.f32.mrb[0].mxu0
      %1436 = vmatprep.mubr.f32.mxu0 0.0
      %v1437 = vand.u32 %v327, 4294901760
      %v1438 = vsub.f32 %v327, %v1437
      %v1439 = vand.u32 %v1438, 4294901760
      %1440 = vmatmul.mubr.f32.gmra.mrb[0].mxu0 %v1439
      %v1441 = vpop.f32.mrb[0].mxu0
      %v1442 = vadd.f32 %v1149, %v1441
      %v1443 = vpop.f32.mrb[0].mxu0
      %1444 = vmatprep.mubr.f32.mxu0 0.0
      %v1445 = vand.u32 %v330, 4294901760
      %v1446 = vsub.f32 %v330, %v1445
      %v1447 = vand.u32 %v1446, 4294901760
      %1448 = vmatmul.mubr.f32.gmra.mrb[0].mxu0 %v1447
      %v1449 = vpop.f32.mrb[0].mxu0
      %v1450 = vadd.f32 %v1156, %v1449
      %v1451 = vpop.f32.mrb[0].mxu0
      %1452 = vmatprep.mubr.f32.mxu0 0.0
      %v1453 = vand.u32 %v333, 4294901760
      %v1454 = vsub.f32 %v333, %v1453
      %v1455 = vand.u32 %v1454, 4294901760
      %1456 = vmatmul.mubr.f32.gmra.mrb[0].mxu0 %v1455
      %v1457 = vpop.f32.mrb[0].mxu0
      %v1458 = vadd.f32 %v1163, %v1457
      %v1459 = vpop.f32.mrb[0].mxu0
      %1460 = vmatprep.mubr.f32.mxu0 0.0
      %v1461 = vand.u32 %v336, 4294901760
      %v1462 = vsub.f32 %v336, %v1461
      %v1463 = vand.u32 %v1462, 4294901760
      %1464 = vmatmul.mubr.f32.gmra.mrb[0].mxu0 %v1463
      %v1465 = vpop.f32.mrb[0].mxu0
      %v1466 = vadd.f32 %v1170, %v1465
      %v1467 = vpop.f32.mrb[0].mxu0
      %1468 = vmatprep.mubr.f32.mxu0 0.0
      %v1469 = vand.u32 %v339, 4294901760
      %v1470 = vsub.f32 %v339, %v1469
      %v1471 = vand.u32 %v1470, 4294901760
      %1472 = vmatmul.mubr.f32.gmra.mrb[0].mxu0 %v1471
      %v1473 = vpop.f32.mrb[0].mxu0
      %v1474 = vadd.f32 %v1177, %v1473
      %v1475 = vpop.f32.mrb[0].mxu0
      %1476 = vmatprep.mubr.f32.mxu0 0.0
      %v1477 = vand.u32 %v342, 4294901760
      %v1478 = vsub.f32 %v342, %v1477
      %v1479 = vand.u32 %v1478, 4294901760
      %1480 = vmatmul.mubr.f32.gmra.mrb[0].mxu0 %v1479
      %v1481 = vpop.f32.mrb[0].mxu0
      %v1482 = vadd.f32 %v1184, %v1481
      %v1483 = vpop.f32.mrb[0].mxu0
      %1484 = vmatprep.mubr.f32.mxu0 0.0
      %v1485 = vand.u32 %v345, 4294901760
      %v1486 = vsub.f32 %v345, %v1485
      %v1487 = vand.u32 %v1486, 4294901760
      %1488 = vmatmul.mubr.f32.gmra.mrb[0].mxu0 %v1487
      %v1489 = vpop.f32.mrb[0].mxu0
      %v1490 = vadd.f32 %v1191, %v1489
      %v1491 = vpop.f32.mrb[0].mxu0
      %1492 = vmatprep.mubr.f32.mxu0 0.0
      %v1493 = vand.u32 %v348, 4294901760
      %v1494 = vsub.f32 %v348, %v1493
      %v1495 = vand.u32 %v1494, 4294901760
      %1496 = vmatmul.mubr.f32.gmra.mrb[0].mxu0 %v1495
      %v1497 = vpop.f32.mrb[0].mxu0
      %v1498 = vadd.f32 %v1198, %v1497
      %v1499 = vpop.f32.mrb[0].mxu0
      %1500 = vmatprep.mubr.f32.mxu0 0.0
      %v1501 = vand.u32 %v351, 4294901760
      %v1502 = vsub.f32 %v351, %v1501
      %v1503 = vand.u32 %v1502, 4294901760
      %1504 = vmatmul.mubr.f32.gmra.mrb[0].mxu0 %v1503
      %v1505 = vpop.f32.mrb[0].mxu0
      %v1506 = vadd.f32 %v1205, %v1505
      %v1507 = vpop.f32.mrb[0].mxu0
      %1508 = vmatprep.mubr.f32.mxu0 0.0
      %v1509 = vand.u32 %v354, 4294901760
      %v1510 = vsub.f32 %v354, %v1509
      %v1511 = vand.u32 %v1510, 4294901760
      %1512 = vmatmul.mubr.f32.gmra.mrb[0].mxu0 %v1511
      %v1513 = vpop.f32.mrb[0].mxu0
      %v1514 = vadd.f32 %v1212, %v1513
      %v1515 = vpop.f32.mrb[0].mxu0
      %1516 = vmatprep.mubr.f32.mxu0 0.0
      %v1517 = vand.u32 %v357, 4294901760
      %v1518 = vsub.f32 %v357, %v1517
      %v1519 = vand.u32 %v1518, 4294901760
      %1520 = vmatmul.mubr.f32.gmra.mrb[0].mxu0 %v1519
      %v1521 = vpop.f32.mrb[0].mxu0
      %v1522 = vadd.f32 %v1219, %v1521
      %v1523 = vpop.f32.mrb[0].mxu0
      %1524 = vmatprep.mubr.f32.mxu0 0.0
      %v1525 = vand.u32 %v360, 4294901760
      %v1526 = vsub.f32 %v360, %v1525
      %v1527 = vand.u32 %v1526, 4294901760
      %1528 = vmatmul.mubr.f32.gmra.mrb[0].mxu0 %v1527
      %v1529 = vpop.f32.mrb[0].mxu0
      %v1530 = vadd.f32 %v1226, %v1529
      %v1531 = vpop.f32.mrb[0].mxu0
      %1532 = vmatprep.mubr.f32.mxu0 0.0
      %v1533 = vand.u32 %v363, 4294901760
      %v1534 = vsub.f32 %v363, %v1533
      %v1535 = vand.u32 %v1534, 4294901760
      %1536 = vmatmul.mubr.f32.gmra.mrb[0].mxu0 %v1535
      %v1537 = vpop.f32.mrb[0].mxu0
      %v1538 = vadd.f32 %v1233, %v1537
      %v1539 = vpop.f32.mrb[0].mxu0
      %1540 = vmatprep.mubr.f32.mxu0 0.0
      %v1541 = vand.u32 %v366, 4294901760
      %v1542 = vsub.f32 %v366, %v1541
      %v1543 = vand.u32 %v1542, 4294901760
      %1544 = vmatmul.mubr.f32.gmra.mrb[0].mxu0 %v1543
      %v1545 = vpop.f32.mrb[0].mxu0
      %v1546 = vadd.f32 %v1240, %v1545
      %v1547 = vpop.f32.mrb[0].mxu0
      %1548 = vmatprep.mubr.f32.mxu0 0.0
      %v1549 = vand.u32 %v369, 4294901760
      %v1550 = vsub.f32 %v369, %v1549
      %v1551 = vand.u32 %v1550, 4294901760
      %1552 = vmatmul.mubr.f32.gmra.mrb[0].mxu0 %v1551
      %v1553 = vpop.f32.mrb[0].mxu0
      %v1554 = vadd.f32 %v1247, %v1553
      %v1555 = vpop.f32.mrb[0].mxu0
      %1556 = vmatprep.mubr.f32.mxu0 0.0
      %v1557 = vand.u32 %v372, 4294901760
      %v1558 = vsub.f32 %v372, %v1557
      %v1559 = vand.u32 %v1558, 4294901760
      %1560 = vmatmul.mubr.f32.gmra.mrb[0].mxu0 %v1559
      %v1561 = vpop.f32.mrb[0].mxu0
      %v1562 = vadd.f32 %v1254, %v1561
      %v1563 = vpop.f32.mrb[0].mxu0
      %1564 = vmatprep.mubr.f32.mxu0 0.0
      %v1565 = vand.u32 %v375, 4294901760
      %v1566 = vsub.f32 %v375, %v1565
      %v1567 = vand.u32 %v1566, 4294901760
      %1568 = vmatmul.mubr.f32.gmra.mrb[0].mxu0 %v1567
      %v1569 = vpop.f32.mrb[0].mxu0
      %v1570 = vadd.f32 %v1261, %v1569
      %v1571 = vpop.f32.mrb[0].mxu0
      %1572 = vmatprep.mubr.f32.mxu0 0.0
      %v1573 = vand.u32 %v378, 4294901760
      %v1574 = vsub.f32 %v378, %v1573
      %v1575 = vand.u32 %v1574, 4294901760
      %1576 = vmatmul.mubr.f32.gmra.mrb[0].mxu0 %v1575
      %v1577 = vpop.f32.mrb[0].mxu0
      %v1578 = vadd.f32 %v1268, %v1577
      %v1579 = vpop.f32.mrb[0].mxu0
      %1580 = vmatprep.mubr.f32.mxu0 0.0
      %v1581 = vand.u32 %v381, 4294901760
      %v1582 = vsub.f32 %v381, %v1581
      %v1583 = vand.u32 %v1582, 4294901760
      %1584 = vmatmul.mubr.f32.gmra.mrb[0].mxu0 %v1583
      %v1585 = vpop.f32.mrb[0].mxu0
      %v1586 = vadd.f32 %v1275, %v1585
      %v1587 = vpop.f32.mrb[0].mxu0
      %1588 = vmatprep.mubr.f32.mxu0 0.0
      %v1589 = vand.u32 %v384, 4294901760
      %v1590 = vsub.f32 %v384, %v1589
      %v1591 = vand.u32 %v1590, 4294901760
      %1592 = vmatmul.mubr.f32.gmra.mrb[0].mxu0 %v1591
      %v1593 = vpop.f32.mrb[0].mxu0
      %v1594 = vadd.f32 %v1282, %v1593
      %v1595 = vpop.f32.mrb[0].mxu0
      %1596 = vmatprep.mubr.f32.mxu0 0.0
      %v1597 = vand.u32 %v387, 4294901760
      %v1598 = vsub.f32 %v387, %v1597
      %v1599 = vand.u32 %v1598, 4294901760
      %1600 = vmatmul.mubr.f32.gmra.mrb[0].mxu0 %v1599
      %v1601 = vpop.f32.mrb[0].mxu0
      %v1602 = vadd.f32 %v1289, %v1601
      %v1603 = vpop.f32.mrb[0].mxu0
      %1604 = vmatprep.mubr.f32.mxu0 0.0
      %v1605 = vand.u32 %v390, 4294901760
      %v1606 = vsub.f32 %v390, %v1605
      %v1607 = vand.u32 %v1606, 4294901760
      %1608 = vmatmul.mubr.f32.gmra.mrb[0].mxu0 %v1607
      %v1609 = vpop.f32.mrb[0].mxu0
      %v1610 = vadd.f32 %v1296, %v1609
      %v1611 = vpop.f32.mrb[0].mxu0
      %1612 = vmatprep.mubr.f32.mxu0 0.0
      %v1613 = vand.u32 %v393, 4294901760
      %v1614 = vsub.f32 %v393, %v1613
      %v1615 = vand.u32 %v1614, 4294901760
      %1616 = vmatmul.mubr.f32.gmra.mrb[0].mxu0 %v1615
      %v1617 = vpop.f32.mrb[0].mxu0
      %v1618 = vadd.f32 %v1303, %v1617
      %v1619 = vpop.f32.mrb[0].mxu0
      %1620 = vmatprep.mubr.f32.mxu0 0.0
      %v1621 = vand.u32 %v396, 4294901760
      %v1622 = vsub.f32 %v396, %v1621
      %v1623 = vand.u32 %v1622, 4294901760
      %1624 = vmatmul.mubr.f32.gmra.mrb[0].mxu0 %v1623
      %v1625 = vpop.f32.mrb[0].mxu0
      %v1626 = vadd.f32 %v1310, %v1625
      %v1627 = vpop.f32.mrb[0].mxu0
      %1628 = vmatprep.mubr.f32.mxu0 0.0
      %v1629 = vand.u32 %v399, 4294901760
      %v1630 = vsub.f32 %v399, %v1629
      %v1631 = vand.u32 %v1630, 4294901760
      %1632 = vmatmul.mubr.f32.gmra.mrb[0].mxu0 %v1631
      %v1633 = vpop.f32.mrb[0].mxu0
      %v1634 = vadd.f32 %v1317, %v1633
      %v1635 = vpop.f32.mrb[0].mxu0
      %1636 = vmatprep.mubr.f32.mxu0 0.0
      %v1637 = vand.u32 %v402, 4294901760
      %v1638 = vsub.f32 %v402, %v1637
      %v1639 = vand.u32 %v1638, 4294901760
      %1640 = vmatmul.mubr.f32.gmra.mrb[0].mxu0 %v1639
      %v1641 = vpop.f32.mrb[0].mxu0
      %v1642 = vadd.f32 %v1324, %v1641
      %v1643 = vpop.f32.mrb[0].mxu0
      %1644 = vmatprep.mubr.f32.mxu0 0.0
      %v1645 = vand.u32 %v405, 4294901760
      %v1646 = vsub.f32 %v405, %v1645
      %v1647 = vand.u32 %v1646, 4294901760
      %1648 = vmatmul.mubr.f32.gmra.mrb[0].mxu0 %v1647
      %v1649 = vpop.f32.mrb[0].mxu0
      %v1650 = vadd.f32 %v1331, %v1649
      %v1651 = vpop.f32.mrb[0].mxu0
      %1652 = vmatprep.mubr.f32.mxu0 0.0
      %v1653 = vand.u32 %v408, 4294901760
      %v1654 = vsub.f32 %v408, %v1653
      %v1655 = vand.u32 %v1654, 4294901760
      %1656 = vmatmul.mubr.f32.gmra.mrb[0].mxu0 %v1655
      %v1657 = vpop.f32.mrb[0].mxu0
      %v1658 = vadd.f32 %v1338, %v1657
      %v1659 = vpop.f32.mrb[0].mxu0
      %1660 = vmatprep.mubr.f32.mxu0 0.0
      %v1661 = vand.u32 %v411, 4294901760
      %v1662 = vsub.f32 %v411, %v1661
      %v1663 = vand.u32 %v1662, 4294901760
      %1664 = vmatmul.mubr.f32.gmra.mrb[0].mxu0 %v1663
      %v1665 = vpop.f32.mrb[0].mxu0
      %v1666 = vadd.f32 %v1345, %v1665
      %v1667 = vpop.f32.mrb[0].mxu0
      %1668 = vmatprep.mubr.f32.mxu0 0.0
      %v1669 = vand.u32 %v414, 4294901760
      %v1670 = vsub.f32 %v414, %v1669
      %v1671 = vand.u32 %v1670, 4294901760
      %1672 = vmatmul.mubr.f32.gmra.mrb[0].mxu0 %v1671
      %v1673 = vpop.f32.mrb[0].mxu0
      %v1674 = vadd.f32 %v1352, %v1673
      %v1675 = vpop.f32.mrb[0].mxu0
      %1676 = vdwg.mxu0
      %1677 = vmatprep.subr.mxu0 0.0
      %v1678 = vand.u32 %v311, 4294901760
      %v1679 = vsub.f32 %v311, %v1678
      %v1680 = vand.u32 %v1679, 4294901760
      %1681 = vmatpush1.msra.mxu0 %v1680
      %1682 = vmatprep.subr.mxu0 0.0
      %1683 = vmatpush1.msra.mxu0 0.0
      %1684 = vmatprep.subr.mxu0 0.0
      %1685 = vmatpush1.msra.mxu0 0.0
      %1686 = vmatprep.subr.mxu0 0.0
      %1687 = vmatpush1.msra.mxu0 0.0
      %1688 = vmatprep.subr.mxu0 0.0
      %1689 = vmatpush1.msra.mxu0 0.0
      %1690 = vmatprep.subr.mxu0 0.0
      %1691 = vmatpush1.msra.mxu0 0.0
      %1692 = vmatprep.subr.mxu0 0.0
      %1693 = vmatpush1.msra.mxu0 0.0
      %1694 = vmatprep.subr.mxu0 0.0
      %1695 = vmatpush1.msra.mxu0 0.0
      %1696 = vmatprep.subr.mxu0 0.0
      %1697 = vmatpush1.msra.mxu0 0.0
      %1698 = vmatprep.subr.mxu0 0.0
      %1699 = vmatpush1.msra.mxu0 0.0
      %1700 = vmatprep.subr.mxu0 0.0
      %1701 = vmatpush1.msra.mxu0 0.0
      %1702 = vmatprep.subr.mxu0 0.0
      %1703 = vmatpush1.msra.mxu0 0.0
      %1704 = vmatprep.subr.mxu0 0.0
      %1705 = vmatpush1.msra.mxu0 0.0
      %1706 = vmatprep.subr.mxu0 0.0
      %1707 = vmatpush1.msra.mxu0 0.0
      %1708 = vmatprep.subr.mxu0 0.0
      %1709 = vmatpush1.msra.mxu0 0.0
      %1710 = vmatprep.subr.mxu0 0.0
      %1711 = vmatpush1.msra.mxu0 0.0
      %1712 = vmatprep.subr.mxu0 0.0
      %1713 = vmatpush1.msra.mxu0 0.0
      %1714 = vmatprep.subr.mxu0 0.0
      %1715 = vmatpush1.msra.mxu0 0.0
      %1716 = vmatprep.subr.mxu0 0.0
      %1717 = vmatpush1.msra.mxu0 0.0
      %1718 = vmatprep.subr.mxu0 0.0
      %1719 = vmatpush1.msra.mxu0 0.0
      %1720 = vmatprep.subr.mxu0 0.0
      %1721 = vmatpush1.msra.mxu0 0.0
      %1722 = vmatprep.subr.mxu0 0.0
      %1723 = vmatpush1.msra.mxu0 0.0
      %1724 = vmatprep.subr.mxu0 0.0
      %1725 = vmatpush1.msra.mxu0 0.0
      %1726 = vmatprep.subr.mxu0 0.0
      %1727 = vmatpush1.msra.mxu0 0.0
      %1728 = vmatprep.subr.mxu0 0.0
      %1729 = vmatpush1.msra.mxu0 0.0
      %1730 = vmatprep.subr.mxu0 0.0
      %1731 = vmatpush1.msra.mxu0 0.0
      %1732 = vmatprep.subr.mxu0 0.0
      %1733 = vmatpush1.msra.mxu0 0.0
      %1734 = vmatprep.subr.mxu0 0.0
      %1735 = vmatpush1.msra.mxu0 0.0
      %1736 = vmatprep.subr.mxu0 0.0
      %1737 = vmatpush1.msra.mxu0 0.0
      %1738 = vmatprep.subr.mxu0 0.0
      %1739 = vmatpush1.msra.mxu0 0.0
      %1740 = vmatprep.subr.mxu0 0.0
      %1741 = vmatpush1.msra.mxu0 0.0
      %1742 = vmatprep.subr.mxu0 0.0
      %1743 = vmatpush1.msra.mxu0 0.0
      %1744 = vmatprep.mubr.f32.mxu0 0.0
      %v1745 = vand.u32 %v321, 4294901760
      %1746 = vmatmul.mubr.f32.gmra.mrb[0].mxu0 %v1745
      %v1747 = vpop.f32.mrb[0].mxu0
      %v1748 = vadd.f32 %v1426, %v1747
      %v1749 = vpop.f32.mrb[0].mxu0
      %1750 = vmatprep.mubr.f32.mxu0 0.0
      %v1751 = vand.u32 %v324, 4294901760
      %1752 = vmatmul.mubr.f32.gmra.mrb[0].mxu0 %v1751
      %v1753 = vpop.f32.mrb[0].mxu0
      %v1754 = vadd.f32 %v1434, %v1753
      %v1755 = vpop.f32.mrb[0].mxu0
      %1756 = vmatprep.mubr.f32.mxu0 0.0
      %v1757 = vand.u32 %v327, 4294901760
      %1758 = vmatmul.mubr.f32.gmra.mrb[0].mxu0 %v1757
      %v1759 = vpop.f32.mrb[0].mxu0
      %v1760 = vadd.f32 %v1442, %v1759
      %v1761 = vpop.f32.mrb[0].mxu0
      %1762 = vmatprep.mubr.f32.mxu0 0.0
      %v1763 = vand.u32 %v330, 4294901760
      %1764 = vmatmul.mubr.f32.gmra.mrb[0].mxu0 %v1763
      %v1765 = vpop.f32.mrb[0].mxu0
      %v1766 = vadd.f32 %v1450, %v1765
      %v1767 = vpop.f32.mrb[0].mxu0
      %1768 = vmatprep.mubr.f32.mxu0 0.0
      %v1769 = vand.u32 %v333, 4294901760
      %1770 = vmatmul.mubr.f32.gmra.mrb[0].mxu0 %v1769
      %v1771 = vpop.f32.mrb[0].mxu0
      %v1772 = vadd.f32 %v1458, %v1771
      %v1773 = vpop.f32.mrb[0].mxu0
      %1774 = vmatprep.mubr.f32.mxu0 0.0
      %v1775 = vand.u32 %v336, 4294901760
      %1776 = vmatmul.mubr.f32.gmra.mrb[0].mxu0 %v1775
      %v1777 = vpop.f32.mrb[0].mxu0
      %v1778 = vadd.f32 %v1466, %v1777
      %v1779 = vpop.f32.mrb[0].mxu0
      %1780 = vmatprep.mubr.f32.mxu0 0.0
      %v1781 = vand.u32 %v339, 4294901760
      %1782 = vmatmul.mubr.f32.gmra.mrb[0].mxu0 %v1781
      %v1783 = vpop.f32.mrb[0].mxu0
      %v1784 = vadd.f32 %v1474, %v1783
      %v1785 = vpop.f32.mrb[0].mxu0
      %1786 = vmatprep.mubr.f32.mxu0 0.0
      %v1787 = vand.u32 %v342, 4294901760
      %1788 = vmatmul.mubr.f32.gmra.mrb[0].mxu0 %v1787
      %v1789 = vpop.f32.mrb[0].mxu0
      %v1790 = vadd.f32 %v1482, %v1789
      %v1791 = vpop.f32.mrb[0].mxu0
      %1792 = vmatprep.mubr.f32.mxu0 0.0
      %v1793 = vand.u32 %v345, 4294901760
      %1794 = vmatmul.mubr.f32.gmra.mrb[0].mxu0 %v1793
      %v1795 = vpop.f32.mrb[0].mxu0
      %v1796 = vadd.f32 %v1490, %v1795
      %v1797 = vpop.f32.mrb[0].mxu0
      %1798 = vmatprep.mubr.f32.mxu0 0.0
      %v1799 = vand.u32 %v348, 4294901760
      %1800 = vmatmul.mubr.f32.gmra.mrb[0].mxu0 %v1799
      %v1801 = vpop.f32.mrb[0].mxu0
      %v1802 = vadd.f32 %v1498, %v1801
      %v1803 = vpop.f32.mrb[0].mxu0
      %1804 = vmatprep.mubr.f32.mxu0 0.0
      %v1805 = vand.u32 %v351, 4294901760
      %1806 = vmatmul.mubr.f32.gmra.mrb[0].mxu0 %v1805
      %v1807 = vpop.f32.mrb[0].mxu0
      %v1808 = vadd.f32 %v1506, %v1807
      %v1809 = vpop.f32.mrb[0].mxu0
      %1810 = vmatprep.mubr.f32.mxu0 0.0
      %v1811 = vand.u32 %v354, 4294901760
      %1812 = vmatmul.mubr.f32.gmra.mrb[0].mxu0 %v1811
      %v1813 = vpop.f32.mrb[0].mxu0
      %v1814 = vadd.f32 %v1514, %v1813
      %v1815 = vpop.f32.mrb[0].mxu0
      %1816 = vmatprep.mubr.f32.mxu0 0.0
      %v1817 = vand.u32 %v357, 4294901760
      %1818 = vmatmul.mubr.f32.gmra.mrb[0].mxu0 %v1817
      %v1819 = vpop.f32.mrb[0].mxu0
      %v1820 = vadd.f32 %v1522, %v1819
      %v1821 = vpop.f32.mrb[0].mxu0
      %1822 = vmatprep.mubr.f32.mxu0 0.0
      %v1823 = vand.u32 %v360, 4294901760
      %1824 = vmatmul.mubr.f32.gmra.mrb[0].mxu0 %v1823
      %v1825 = vpop.f32.mrb[0].mxu0
      %v1826 = vadd.f32 %v1530, %v1825
      %v1827 = vpop.f32.mrb[0].mxu0
      %1828 = vmatprep.mubr.f32.mxu0 0.0
      %v1829 = vand.u32 %v363, 4294901760
      %1830 = vmatmul.mubr.f32.gmra.mrb[0].mxu0 %v1829
      %v1831 = vpop.f32.mrb[0].mxu0
      %v1832 = vadd.f32 %v1538, %v1831
      %v1833 = vpop.f32.mrb[0].mxu0
      %1834 = vmatprep.mubr.f32.mxu0 0.0
      %v1835 = vand.u32 %v366, 4294901760
      %1836 = vmatmul.mubr.f32.gmra.mrb[0].mxu0 %v1835
      %v1837 = vpop.f32.mrb[0].mxu0
      %v1838 = vadd.f32 %v1546, %v1837
      %v1839 = vpop.f32.mrb[0].mxu0
      %1840 = vmatprep.mubr.f32.mxu0 0.0
      %v1841 = vand.u32 %v369, 4294901760
      %1842 = vmatmul.mubr.f32.gmra.mrb[0].mxu0 %v1841
      %v1843 = vpop.f32.mrb[0].mxu0
      %v1844 = vadd.f32 %v1554, %v1843
      %v1845 = vpop.f32.mrb[0].mxu0
      %1846 = vmatprep.mubr.f32.mxu0 0.0
      %v1847 = vand.u32 %v372, 4294901760
      %1848 = vmatmul.mubr.f32.gmra.mrb[0].mxu0 %v1847
      %v1849 = vpop.f32.mrb[0].mxu0
      %v1850 = vadd.f32 %v1562, %v1849
      %v1851 = vpop.f32.mrb[0].mxu0
      %1852 = vmatprep.mubr.f32.mxu0 0.0
      %v1853 = vand.u32 %v375, 4294901760
      %1854 = vmatmul.mubr.f32.gmra.mrb[0].mxu0 %v1853
      %v1855 = vpop.f32.mrb[0].mxu0
      %v1856 = vadd.f32 %v1570, %v1855
      %v1857 = vpop.f32.mrb[0].mxu0
      %1858 = vmatprep.mubr.f32.mxu0 0.0
      %v1859 = vand.u32 %v378, 4294901760
      %1860 = vmatmul.mubr.f32.gmra.mrb[0].mxu0 %v1859
      %v1861 = vpop.f32.mrb[0].mxu0
      %v1862 = vadd.f32 %v1578, %v1861
      %v1863 = vpop.f32.mrb[0].mxu0
      %1864 = vmatprep.mubr.f32.mxu0 0.0
      %v1865 = vand.u32 %v381, 4294901760
      %1866 = vmatmul.mubr.f32.gmra.mrb[0].mxu0 %v1865
      %v1867 = vpop.f32.mrb[0].mxu0
      %v1868 = vadd.f32 %v1586, %v1867
      %v1869 = vpop.f32.mrb[0].mxu0
      %1870 = vmatprep.mubr.f32.mxu0 0.0
      %v1871 = vand.u32 %v384, 4294901760
      %1872 = vmatmul.mubr.f32.gmra.mrb[0].mxu0 %v1871
      %v1873 = vpop.f32.mrb[0].mxu0
      %v1874 = vadd.f32 %v1594, %v1873
      %v1875 = vpop.f32.mrb[0].mxu0
      %1876 = vmatprep.mubr.f32.mxu0 0.0
      %v1877 = vand.u32 %v387, 4294901760
      %1878 = vmatmul.mubr.f32.gmra.mrb[0].mxu0 %v1877
      %v1879 = vpop.f32.mrb[0].mxu0
      %v1880 = vadd.f32 %v1602, %v1879
      %v1881 = vpop.f32.mrb[0].mxu0
      %1882 = vmatprep.mubr.f32.mxu0 0.0
      %v1883 = vand.u32 %v390, 4294901760
      %1884 = vmatmul.mubr.f32.gmra.mrb[0].mxu0 %v1883
      %v1885 = vpop.f32.mrb[0].mxu0
      %v1886 = vadd.f32 %v1610, %v1885
      %v1887 = vpop.f32.mrb[0].mxu0
      %1888 = vmatprep.mubr.f32.mxu0 0.0
      %v1889 = vand.u32 %v393, 4294901760
      %1890 = vmatmul.mubr.f32.gmra.mrb[0].mxu0 %v1889
      %v1891 = vpop.f32.mrb[0].mxu0
      %v1892 = vadd.f32 %v1618, %v1891
      %v1893 = vpop.f32.mrb[0].mxu0
      %1894 = vmatprep.mubr.f32.mxu0 0.0
      %v1895 = vand.u32 %v396, 4294901760
      %1896 = vmatmul.mubr.f32.gmra.mrb[0].mxu0 %v1895
      %v1897 = vpop.f32.mrb[0].mxu0
      %v1898 = vadd.f32 %v1626, %v1897
      %v1899 = vpop.f32.mrb[0].mxu0
      %1900 = vmatprep.mubr.f32.mxu0 0.0
      %v1901 = vand.u32 %v399, 4294901760
      %1902 = vmatmul.mubr.f32.gmra.mrb[0].mxu0 %v1901
      %v1903 = vpop.f32.mrb[0].mxu0
      %v1904 = vadd.f32 %v1634, %v1903
      %v1905 = vpop.f32.mrb[0].mxu0
      %1906 = vmatprep.mubr.f32.mxu0 0.0
      %v1907 = vand.u32 %v402, 4294901760
      %1908 = vmatmul.mubr.f32.gmra.mrb[0].mxu0 %v1907
      %v1909 = vpop.f32.mrb[0].mxu0
      %v1910 = vadd.f32 %v1642, %v1909
      %v1911 = vpop.f32.mrb[0].mxu0
      %1912 = vmatprep.mubr.f32.mxu0 0.0
      %v1913 = vand.u32 %v405, 4294901760
      %1914 = vmatmul.mubr.f32.gmra.mrb[0].mxu0 %v1913
      %v1915 = vpop.f32.mrb[0].mxu0
      %v1916 = vadd.f32 %v1650, %v1915
      %v1917 = vpop.f32.mrb[0].mxu0
      %1918 = vmatprep.mubr.f32.mxu0 0.0
      %v1919 = vand.u32 %v408, 4294901760
      %1920 = vmatmul.mubr.f32.gmra.mrb[0].mxu0 %v1919
      %v1921 = vpop.f32.mrb[0].mxu0
      %v1922 = vadd.f32 %v1658, %v1921
      %v1923 = vpop.f32.mrb[0].mxu0
      %1924 = vmatprep.mubr.f32.mxu0 0.0
      %v1925 = vand.u32 %v411, 4294901760
      %1926 = vmatmul.mubr.f32.gmra.mrb[0].mxu0 %v1925
      %v1927 = vpop.f32.mrb[0].mxu0
      %v1928 = vadd.f32 %v1666, %v1927
      %v1929 = vpop.f32.mrb[0].mxu0
      %1930 = vmatprep.mubr.f32.mxu0 0.0
      %v1931 = vand.u32 %v414, 4294901760
      %1932 = vmatmul.mubr.f32.gmra.mrb[0].mxu0 %v1931
      %v1933 = vpop.f32.mrb[0].mxu0
      %v1934 = vadd.f32 %v1674, %v1933
      %v1935 = vpop.f32.mrb[0].mxu0
      %1936 = vdwg.mxu0
      %1937 = vmatprep.subr.mxu0 0.0
      %v1938 = vand.u32 %v311, 4294901760
      %1939 = vmatpush1.msra.mxu0 %v1938
      %1940 = vmatprep.subr.mxu0 0.0
      %1941 = vmatpush1.msra.mxu0 0.0
      %1942 = vmatprep.subr.mxu0 0.0
      %1943 = vmatpush1.msra.mxu0 0.0
      %1944 = vmatprep.subr.mxu0 0.0
      %1945 = vmatpush1.msra.mxu0 0.0
      %1946 = vmatprep.subr.mxu0 0.0
      %1947 = vmatpush1.msra.mxu0 0.0
      %1948 = vmatprep.subr.mxu0 0.0
      %1949 = vmatpush1.msra.mxu0 0.0
      %1950 = vmatprep.subr.mxu0 0.0
      %1951 = vmatpush1.msra.mxu0 0.0
      %1952 = vmatprep.subr.mxu0 0.0
      %1953 = vmatpush1.msra.mxu0 0.0
      %1954 = vmatprep.subr.mxu0 0.0
      %1955 = vmatpush1.msra.mxu0 0.0
      %1956 = vmatprep.subr.mxu0 0.0
      %1957 = vmatpush1.msra.mxu0 0.0
      %1958 = vmatprep.subr.mxu0 0.0
      %1959 = vmatpush1.msra.mxu0 0.0
      %1960 = vmatprep.subr.mxu0 0.0
      %1961 = vmatpush1.msra.mxu0 0.0
      %1962 = vmatprep.subr.mxu0 0.0
      %1963 = vmatpush1.msra.mxu0 0.0
      %1964 = vmatprep.subr.mxu0 0.0
      %1965 = vmatpush1.msra.mxu0 0.0
      %1966 = vmatprep.subr.mxu0 0.0
      %1967 = vmatpush1.msra.mxu0 0.0
      %1968 = vmatprep.subr.mxu0 0.0
      %1969 = vmatpush1.msra.mxu0 0.0
      %1970 = vmatprep.subr.mxu0 0.0
      %1971 = vmatpush1.msra.mxu0 0.0
      %1972 = vmatprep.subr.mxu0 0.0
      %1973 = vmatpush1.msra.mxu0 0.0
      %1974 = vmatprep.subr.mxu0 0.0
      %1975 = vmatpush1.msra.mxu0 0.0
      %1976 = vmatprep.subr.mxu0 0.0
      %1977 = vmatpush1.msra.mxu0 0.0
      %1978 = vmatprep.subr.mxu0 0.0
      %1979 = vmatpush1.msra.mxu0 0.0
      %1980 = vmatprep.subr.mxu0 0.0
      %1981 = vmatpush1.msra.mxu0 0.0
      %1982 = vmatprep.subr.mxu0 0.0
      %1983 = vmatpush1.msra.mxu0 0.0
      %1984 = vmatprep.subr.mxu0 0.0
      %1985 = vmatpush1.msra.mxu0 0.0
      %1986 = vmatprep.subr.mxu0 0.0
      %1987 = vmatpush1.msra.mxu0 0.0
      %1988 = vmatprep.subr.mxu0 0.0
      %1989 = vmatpush1.msra.mxu0 0.0
      %1990 = vmatprep.subr.mxu0 0.0
      %1991 = vmatpush1.msra.mxu0 0.0
      %1992 = vmatprep.subr.mxu0 0.0
      %1993 = vmatpush1.msra.mxu0 0.0
      %1994 = vmatprep.subr.mxu0 0.0
      %1995 = vmatpush1.msra.mxu0 0.0
      %1996 = vmatprep.subr.mxu0 0.0
      %1997 = vmatpush1.msra.mxu0 0.0
      %1998 = vmatprep.subr.mxu0 0.0
      %1999 = vmatpush1.msra.mxu0 0.0
      %2000 = vmatprep.subr.mxu0 0.0
      %2001 = vmatpush1.msra.mxu0 0.0
      %2002 = vmatprep.mubr.f32.mxu0 0.0
      %v2003 = vand.u32 %v321, 4294901760
      %2004 = vmatmul.mubr.f32.gmra.mrb[0].mxu0 %v2003
      %v2005 = vpop.f32.mrb[0].mxu0
      %v2006 = vadd.f32 %v1748, %v2005
      %v2007 = vpop.f32.mrb[0].mxu0
      %2008 = vmatprep.mubr.f32.mxu0 0.0
      %v2009 = vand.u32 %v324, 4294901760
      %2010 = vmatmul.mubr.f32.gmra.mrb[0].mxu0 %v2009
      %v2011 = vpop.f32.mrb[0].mxu0
      %v2012 = vadd.f32 %v1754, %v2011
      %v2013 = vpop.f32.mrb[0].mxu0
      %2014 = vmatprep.mubr.f32.mxu0 0.0
      %v2015 = vand.u32 %v327, 4294901760
      %2016 = vmatmul.mubr.f32.gmra.mrb[0].mxu0 %v2015
      %v2017 = vpop.f32.mrb[0].mxu0
      %v2018 = vadd.f32 %v1760, %v2017
      %v2019 = vpop.f32.mrb[0].mxu0
      %2020 = vmatprep.mubr.f32.mxu0 0.0
      %v2021 = vand.u32 %v330, 4294901760
      %2022 = vmatmul.mubr.f32.gmra.mrb[0].mxu0 %v2021
      %v2023 = vpop.f32.mrb[0].mxu0
      %v2024 = vadd.f32 %v1766, %v2023
      %v2025 = vpop.f32.mrb[0].mxu0
      %2026 = vmatprep.mubr.f32.mxu0 0.0
      %v2027 = vand.u32 %v333, 4294901760
      %2028 = vmatmul.mubr.f32.gmra.mrb[0].mxu0 %v2027
      %v2029 = vpop.f32.mrb[0].mxu0
      %v2030 = vadd.f32 %v1772, %v2029
      %v2031 = vpop.f32.mrb[0].mxu0
      %2032 = vmatprep.mubr.f32.mxu0 0.0
      %v2033 = vand.u32 %v336, 4294901760
      %2034 = vmatmul.mubr.f32.gmra.mrb[0].mxu0 %v2033
      %v2035 = vpop.f32.mrb[0].mxu0
      %v2036 = vadd.f32 %v1778, %v2035
      %v2037 = vpop.f32.mrb[0].mxu0
      %2038 = vmatprep.mubr.f32.mxu0 0.0
      %v2039 = vand.u32 %v339, 4294901760
      %2040 = vmatmul.mubr.f32.gmra.mrb[0].mxu0 %v2039
      %v2041 = vpop.f32.mrb[0].mxu0
      %v2042 = vadd.f32 %v1784, %v2041
      %v2043 = vpop.f32.mrb[0].mxu0
      %2044 = vmatprep.mubr.f32.mxu0 0.0
      %v2045 = vand.u32 %v342, 4294901760
      %2046 = vmatmul.mubr.f32.gmra.mrb[0].mxu0 %v2045
      %v2047 = vpop.f32.mrb[0].mxu0
      %v2048 = vadd.f32 %v1790, %v2047
      %v2049 = vpop.f32.mrb[0].mxu0
      %2050 = vmatprep.mubr.f32.mxu0 0.0
      %v2051 = vand.u32 %v345, 4294901760
      %2052 = vmatmul.mubr.f32.gmra.mrb[0].mxu0 %v2051
      %v2053 = vpop.f32.mrb[0].mxu0
      %v2054 = vadd.f32 %v1796, %v2053
      %v2055 = vpop.f32.mrb[0].mxu0
      %2056 = vmatprep.mubr.f32.mxu0 0.0
      %v2057 = vand.u32 %v348, 4294901760
      %2058 = vmatmul.mubr.f32.gmra.mrb[0].mxu0 %v2057
      %v2059 = vpop.f32.mrb[0].mxu0
      %v2060 = vadd.f32 %v1802, %v2059
      %v2061 = vpop.f32.mrb[0].mxu0
      %2062 = vmatprep.mubr.f32.mxu0 0.0
      %v2063 = vand.u32 %v351, 4294901760
      %2064 = vmatmul.mubr.f32.gmra.mrb[0].mxu0 %v2063
      %v2065 = vpop.f32.mrb[0].mxu0
      %v2066 = vadd.f32 %v1808, %v2065
      %v2067 = vpop.f32.mrb[0].mxu0
      %2068 = vmatprep.mubr.f32.mxu0 0.0
      %v2069 = vand.u32 %v354, 4294901760
      %2070 = vmatmul.mubr.f32.gmra.mrb[0].mxu0 %v2069
      %v2071 = vpop.f32.mrb[0].mxu0
      %v2072 = vadd.f32 %v1814, %v2071
      %v2073 = vpop.f32.mrb[0].mxu0
      %2074 = vmatprep.mubr.f32.mxu0 0.0
      %v2075 = vand.u32 %v357, 4294901760
      %2076 = vmatmul.mubr.f32.gmra.mrb[0].mxu0 %v2075
      %v2077 = vpop.f32.mrb[0].mxu0
      %v2078 = vadd.f32 %v1820, %v2077
      %v2079 = vpop.f32.mrb[0].mxu0
      %2080 = vmatprep.mubr.f32.mxu0 0.0
      %v2081 = vand.u32 %v360, 4294901760
      %2082 = vmatmul.mubr.f32.gmra.mrb[0].mxu0 %v2081
      %v2083 = vpop.f32.mrb[0].mxu0
      %v2084 = vadd.f32 %v1826, %v2083
      %v2085 = vpop.f32.mrb[0].mxu0
      %2086 = vmatprep.mubr.f32.mxu0 0.0
      %v2087 = vand.u32 %v363, 4294901760
      %2088 = vmatmul.mubr.f32.gmra.mrb[0].mxu0 %v2087
      %v2089 = vpop.f32.mrb[0].mxu0
      %v2090 = vadd.f32 %v1832, %v2089
      %v2091 = vpop.f32.mrb[0].mxu0
      %2092 = vmatprep.mubr.f32.mxu0 0.0
      %v2093 = vand.u32 %v366, 4294901760
      %2094 = vmatmul.mubr.f32.gmra.mrb[0].mxu0 %v2093
      %v2095 = vpop.f32.mrb[0].mxu0
      %v2096 = vadd.f32 %v1838, %v2095
      %v2097 = vpop.f32.mrb[0].mxu0
      %2098 = vmatprep.mubr.f32.mxu0 0.0
      %v2099 = vand.u32 %v369, 4294901760
      %2100 = vmatmul.mubr.f32.gmra.mrb[0].mxu0 %v2099
      %v2101 = vpop.f32.mrb[0].mxu0
      %v2102 = vadd.f32 %v1844, %v2101
      %v2103 = vpop.f32.mrb[0].mxu0
      %2104 = vmatprep.mubr.f32.mxu0 0.0
      %v2105 = vand.u32 %v372, 4294901760
      %2106 = vmatmul.mubr.f32.gmra.mrb[0].mxu0 %v2105
      %v2107 = vpop.f32.mrb[0].mxu0
      %v2108 = vadd.f32 %v1850, %v2107
      %v2109 = vpop.f32.mrb[0].mxu0
      %2110 = vmatprep.mubr.f32.mxu0 0.0
      %v2111 = vand.u32 %v375, 4294901760
      %2112 = vmatmul.mubr.f32.gmra.mrb[0].mxu0 %v2111
      %v2113 = vpop.f32.mrb[0].mxu0
      %v2114 = vadd.f32 %v1856, %v2113
      %v2115 = vpop.f32.mrb[0].mxu0
      %2116 = vmatprep.mubr.f32.mxu0 0.0
      %v2117 = vand.u32 %v378, 4294901760
      %2118 = vmatmul.mubr.f32.gmra.mrb[0].mxu0 %v2117
      %v2119 = vpop.f32.mrb[0].mxu0
      %v2120 = vadd.f32 %v1862, %v2119
      %v2121 = vpop.f32.mrb[0].mxu0
      %2122 = vmatprep.mubr.f32.mxu0 0.0
      %v2123 = vand.u32 %v381, 4294901760
      %2124 = vmatmul.mubr.f32.gmra.mrb[0].mxu0 %v2123
      %v2125 = vpop.f32.mrb[0].mxu0
      %v2126 = vadd.f32 %v1868, %v2125
      %v2127 = vpop.f32.mrb[0].mxu0
      %2128 = vmatprep.mubr.f32.mxu0 0.0
      %v2129 = vand.u32 %v384, 4294901760
      %2130 = vmatmul.mubr.f32.gmra.mrb[0].mxu0 %v2129
      %v2131 = vpop.f32.mrb[0].mxu0
      %v2132 = vadd.f32 %v1874, %v2131
      %v2133 = vpop.f32.mrb[0].mxu0
      %2134 = vmatprep.mubr.f32.mxu0 0.0
      %v2135 = vand.u32 %v387, 4294901760
      %2136 = vmatmul.mubr.f32.gmra.mrb[0].mxu0 %v2135
      %v2137 = vpop.f32.mrb[0].mxu0
      %v2138 = vadd.f32 %v1880, %v2137
      %v2139 = vpop.f32.mrb[0].mxu0
      %2140 = vmatprep.mubr.f32.mxu0 0.0
      %v2141 = vand.u32 %v390, 4294901760
      %2142 = vmatmul.mubr.f32.gmra.mrb[0].mxu0 %v2141
      %v2143 = vpop.f32.mrb[0].mxu0
      %v2144 = vadd.f32 %v1886, %v2143
      %v2145 = vpop.f32.mrb[0].mxu0
      %2146 = vmatprep.mubr.f32.mxu0 0.0
      %v2147 = vand.u32 %v393, 4294901760
      %2148 = vmatmul.mubr.f32.gmra.mrb[0].mxu0 %v2147
      %v2149 = vpop.f32.mrb[0].mxu0
      %v2150 = vadd.f32 %v1892, %v2149
      %v2151 = vpop.f32.mrb[0].mxu0
      %2152 = vmatprep.mubr.f32.mxu0 0.0
      %v2153 = vand.u32 %v396, 4294901760
      %2154 = vmatmul.mubr.f32.gmra.mrb[0].mxu0 %v2153
      %v2155 = vpop.f32.mrb[0].mxu0
      %v2156 = vadd.f32 %v1898, %v2155
      %v2157 = vpop.f32.mrb[0].mxu0
      %2158 = vmatprep.mubr.f32.mxu0 0.0
      %v2159 = vand.u32 %v399, 4294901760
      %2160 = vmatmul.mubr.f32.gmra.mrb[0].mxu0 %v2159
      %v2161 = vpop.f32.mrb[0].mxu0
      %v2162 = vadd.f32 %v1904, %v2161
      %v2163 = vpop.f32.mrb[0].mxu0
      %2164 = vmatprep.mubr.f32.mxu0 0.0
      %v2165 = vand.u32 %v402, 4294901760
      %2166 = vmatmul.mubr.f32.gmra.mrb[0].mxu0 %v2165
      %v2167 = vpop.f32.mrb[0].mxu0
      %v2168 = vadd.f32 %v1910, %v2167
      %v2169 = vpop.f32.mrb[0].mxu0
      %2170 = vmatprep.mubr.f32.mxu0 0.0
      %v2171 = vand.u32 %v405, 4294901760
      %2172 = vmatmul.mubr.f32.gmra.mrb[0].mxu0 %v2171
      %v2173 = vpop.f32.mrb[0].mxu0
      %v2174 = vadd.f32 %v1916, %v2173
      %v2175 = vpop.f32.mrb[0].mxu0
      %2176 = vmatprep.mubr.f32.mxu0 0.0
      %v2177 = vand.u32 %v408, 4294901760
      %2178 = vmatmul.mubr.f32.gmra.mrb[0].mxu0 %v2177
      %v2179 = vpop.f32.mrb[0].mxu0
      %v2180 = vadd.f32 %v1922, %v2179
      %v2181 = vpop.f32.mrb[0].mxu0
      %2182 = vmatprep.mubr.f32.mxu0 0.0
      %v2183 = vand.u32 %v411, 4294901760
      %2184 = vmatmul.mubr.f32.gmra.mrb[0].mxu0 %v2183
      %v2185 = vpop.f32.mrb[0].mxu0
      %v2186 = vadd.f32 %v1928, %v2185
      %v2187 = vpop.f32.mrb[0].mxu0
      %2188 = vmatprep.mubr.f32.mxu0 0.0
      %v2189 = vand.u32 %v414, 4294901760
      %2190 = vmatmul.mubr.f32.gmra.mrb[0].mxu0 %v2189
      %v2191 = vpop.f32.mrb[0].mxu0
      %v2192 = vadd.f32 %v1934, %v2191
      %v2193 = vpop.f32.mrb[0].mxu0
      %2194 = vdwg.mxu0
      %v2195 = vmax.f32 %v2006, 0.0
      %v2196 = vmax.f32 %v2012, 0.0
      %v2197 = vmax.f32 %v2018, 0.0
      %v2198 = vmax.f32 %v2024, 0.0
      %v2199 = vmax.f32 %v2030, 0.0
      %v2200 = vmax.f32 %v2036, 0.0
      %v2201 = vmax.f32 %v2042, 0.0
      %v2202 = vmax.f32 %v2048, 0.0
      %v2203 = vmax.f32 %v2054, 0.0
      %v2204 = vmax.f32 %v2060, 0.0
      %v2205 = vmax.f32 %v2066, 0.0
      %v2206 = vmax.f32 %v2072, 0.0
      %v2207 = vmax.f32 %v2078, 0.0
      %v2208 = vmax.f32 %v2084, 0.0
      %v2209 = vmax.f32 %v2090, 0.0
      %v2210 = vmax.f32 %v2096, 0.0
      %v2211 = vmax.f32 %v2102, 0.0
      %v2212 = vmax.f32 %v2108, 0.0
      %v2213 = vmax.f32 %v2114, 0.0
      %v2214 = vmax.f32 %v2120, 0.0
      %v2215 = vmax.f32 %v2126, 0.0
      %v2216 = vmax.f32 %v2132, 0.0
      %v2217 = vmax.f32 %v2138, 0.0
      %v2218 = vmax.f32 %v2144, 0.0
      %v2219 = vmax.f32 %v2150, 0.0
      %v2220 = vmax.f32 %v2156, 0.0
      %v2221 = vmax.f32 %v2162, 0.0
      %v2222 = vmax.f32 %v2168, 0.0
      %v2223 = vmax.f32 %v2174, 0.0
      %v2224 = vmax.f32 %v2180, 0.0
      %v2225 = vmax.f32 %v2186, 0.0
      %v2226 = vmax.f32 %v2192, 0.0
      %v2227 = vld [vmem:[%s4] sm:$0xf]
      %v2228 = vld [vmem:[#allocation2] sm:$0x1]
      %v2230 = vlaneseq
      %v2231 = vshrl.u32 %v2230, 7
      %v2232 = vsub.s32 0, %v2231
      %v2233 = vrot.slane %v2228, %v2232
      %vm2235 = vcmask 31744
      %v2237 = vsel %vm2235, %v2195, 0
      %v2240 = vsel %vm2235, %v2196, 0
      %v2243 = vsel %vm2235, %v2197, 0
      %v2246 = vsel %vm2235, %v2198, 0
      %v2249 = vsel %vm2235, %v2199, 0
      %v2252 = vsel %vm2235, %v2200, 0
      %v2255 = vsel %vm2235, %v2201, 0
      %v2258 = vsel %vm2235, %v2202, 0
      %v2261 = vsel %vm2235, %v2203, 0
      %v2264 = vsel %vm2235, %v2204, 0
      %v2267 = vsel %vm2235, %v2205, 0
      %v2270 = vsel %vm2235, %v2206, 0
      %v2273 = vsel %vm2235, %v2207, 0
      %v2276 = vsel %vm2235, %v2208, 0
      %v2279 = vsel %vm2235, %v2209, 0
      %v2282 = vsel %vm2235, %v2210, 0
      %v2285 = vsel %vm2235, %v2211, 0
      %v2288 = vsel %vm2235, %v2212, 0
      %v2291 = vsel %vm2235, %v2213, 0
      %v2294 = vsel %vm2235, %v2214, 0
      %v2297 = vsel %vm2235, %v2215, 0
      %v2300 = vsel %vm2235, %v2216, 0
      %v2303 = vsel %vm2235, %v2217, 0
      %v2306 = vsel %vm2235, %v2218, 0
      %v2309 = vsel %vm2235, %v2219, 0
      %v2312 = vsel %vm2235, %v2220, 0
      %v2315 = vsel %vm2235, %v2221, 0
      %v2318 = vsel %vm2235, %v2222, 0
      %v2321 = vsel %vm2235, %v2223, 0
      %v2324 = vsel %vm2235, %v2224, 0
      %v2327 = vsel %vm2235, %v2225, 0
      %v2330 = vsel %vm2235, %v2226, 0
      %vm2332 = vcmask 1043456
      %v2334 = vsel %vm2332, %v2227, 0
      %2336 = vmatprep.subr.mxu0 0.0
      %v2337 = vand.u32 %v2334, 4294901760
      %2338 = vmatpush1.msra.mxu0 %v2337
      %2339 = vmatprep.subr.mxu0 0.0
      %2340 = vmatpush1.msra.mxu0 0.0
      %2341 = vmatprep.subr.mxu0 0.0
      %2342 = vmatpush1.msra.mxu0 0.0
      %2343 = vmatprep.subr.mxu0 0.0
      %2344 = vmatpush1.msra.mxu0 0.0
      %2345 = vmatprep.subr.mxu0 0.0
      %2346 = vmatpush1.msra.mxu0 0.0
      %2347 = vmatprep.subr.mxu0 0.0
      %2348 = vmatpush1.msra.mxu0 0.0
      %2349 = vmatprep.subr.mxu0 0.0
      %2350 = vmatpush1.msra.mxu0 0.0
      %2351 = vmatprep.subr.mxu0 0.0
      %2352 = vmatpush1.msra.mxu0 0.0
      %2353 = vmatprep.subr.mxu0 0.0
      %2354 = vmatpush1.msra.mxu0 0.0
      %2355 = vmatprep.subr.mxu0 0.0
      %2356 = vmatpush1.msra.mxu0 0.0
      %2357 = vmatprep.subr.mxu0 0.0
      %2358 = vmatpush1.msra.mxu0 0.0
      %2359 = vmatprep.subr.mxu0 0.0
      %2360 = vmatpush1.msra.mxu0 0.0
      %2361 = vmatprep.subr.mxu0 0.0
      %2362 = vmatpush1.msra.mxu0 0.0
      %2363 = vmatprep.subr.mxu0 0.0
      %2364 = vmatpush1.msra.mxu0 0.0
      %2365 = vmatprep.subr.mxu0 0.0
      %2366 = vmatpush1.msra.mxu0 0.0
      %2367 = vmatprep.subr.mxu0 0.0
      %2368 = vmatpush1.msra.mxu0 0.0
      %2369 = vmatprep.subr.mxu0 0.0
      %2370 = vmatpush1.msra.mxu0 0.0
      %2371 = vmatprep.subr.mxu0 0.0
      %2372 = vmatpush1.msra.mxu0 0.0
      %2373 = vmatprep.subr.mxu0 0.0
      %2374 = vmatpush1.msra.mxu0 0.0
      %2375 = vmatprep.subr.mxu0 0.0
      %2376 = vmatpush1.msra.mxu0 0.0
      %2377 = vmatprep.subr.mxu0 0.0
      %2378 = vmatpush1.msra.mxu0 0.0
      %2379 = vmatprep.subr.mxu0 0.0
      %2380 = vmatpush1.msra.mxu0 0.0
      %2381 = vmatprep.subr.mxu0 0.0
      %2382 = vmatpush1.msra.mxu0 0.0
      %2383 = vmatprep.subr.mxu0 0.0
      %2384 = vmatpush1.msra.mxu0 0.0
      %2385 = vmatprep.subr.mxu0 0.0
      %2386 = vmatpush1.msra.mxu0 0.0
      %2387 = vmatprep.subr.mxu0 0.0
      %2388 = vmatpush1.msra.mxu0 0.0
      %2389 = vmatprep.subr.mxu0 0.0
      %2390 = vmatpush1.msra.mxu0 0.0
      %2391 = vmatprep.subr.mxu0 0.0
      %2392 = vmatpush1.msra.mxu0 0.0
      %2393 = vmatprep.subr.mxu0 0.0
      %2394 = vmatpush1.msra.mxu0 0.0
      %2395 = vmatprep.subr.mxu0 0.0
      %2396 = vmatpush1.msra.mxu0 0.0
      %2397 = vmatprep.subr.mxu0 0.0
      %2398 = vmatpush1.msra.mxu0 0.0
      %2399 = vmatprep.subr.mxu0 0.0
      %2400 = vmatpush1.msra.mxu0 0.0
      %2401 = vmatprep.mubr.f32.mxu0 0.0
      %v2402 = vand.u32 %v2237, 4294901760
      %v2403 = vsub.f32 %v2237, %v2402
      %v2404 = vand.u32 %v2403, 4294901760
      %v2405 = vsub.f32 %v2403, %v2404
      %v2406 = vand.u32 %v2405, 4294901760
      %2407 = vmatmul.mubr.f32.gmra.mrb[0].mxu0 %v2406
      %v2408 = vpop.f32.mrb[0].mxu0
      %v2409 = vadd.f32 %v2233, %v2408
      %v2410 = vpop.f32.mrb[0].mxu0
      %2411 = vmatprep.mubr.f32.mxu0 0.0
      %v2412 = vand.u32 %v2240, 4294901760
      %v2413 = vsub.f32 %v2240, %v2412
      %v2414 = vand.u32 %v2413, 4294901760
      %v2415 = vsub.f32 %v2413, %v2414
      %v2416 = vand.u32 %v2415, 4294901760
      %2417 = vmatmul.mubr.f32.gmra.mrb[0].mxu0 %v2416
      %v2418 = vpop.f32.mrb[0].mxu0
      %v2419 = vadd.f32 %v2233, %v2418
      %v2420 = vpop.f32.mrb[0].mxu0
      %2421 = vmatprep.mubr.f32.mxu0 0.0
      %v2422 = vand.u32 %v2243, 4294901760
      %v2423 = vsub.f32 %v2243, %v2422
      %v2424 = vand.u32 %v2423, 4294901760
      %v2425 = vsub.f32 %v2423, %v2424
      %v2426 = vand.u32 %v2425, 4294901760
      %2427 = vmatmul.mubr.f32.gmra.mrb[0].mxu0 %v2426
      %v2428 = vpop.f32.mrb[0].mxu0
      %v2429 = vadd.f32 %v2233, %v2428
      %v2430 = vpop.f32.mrb[0].mxu0
      %2431 = vmatprep.mubr.f32.mxu0 0.0
      %v2432 = vand.u32 %v2246, 4294901760
      %v2433 = vsub.f32 %v2246, %v2432
      %v2434 = vand.u32 %v2433, 4294901760
      %v2435 = vsub.f32 %v2433, %v2434
      %v2436 = vand.u32 %v2435, 4294901760
      %2437 = vmatmul.mubr.f32.gmra.mrb[0].mxu0 %v2436
      %v2438 = vpop.f32.mrb[0].mxu0
      %v2439 = vadd.f32 %v2233, %v2438
      %v2440 = vpop.f32.mrb[0].mxu0
      %2441 = vmatprep.mubr.f32.mxu0 0.0
      %v2442 = vand.u32 %v2249, 4294901760
      %v2443 = vsub.f32 %v2249, %v2442
      %v2444 = vand.u32 %v2443, 4294901760
      %v2445 = vsub.f32 %v2443, %v2444
      %v2446 = vand.u32 %v2445, 4294901760
      %2447 = vmatmul.mubr.f32.gmra.mrb[0].mxu0 %v2446
      %v2448 = vpop.f32.mrb[0].mxu0
      %v2449 = vadd.f32 %v2233, %v2448
      %v2450 = vpop.f32.mrb[0].mxu0
      %2451 = vmatprep.mubr.f32.mxu0 0.0
      %v2452 = vand.u32 %v2252, 4294901760
      %v2453 = vsub.f32 %v2252, %v2452
      %v2454 = vand.u32 %v2453, 4294901760
      %v2455 = vsub.f32 %v2453, %v2454
      %v2456 = vand.u32 %v2455, 4294901760
      %2457 = vmatmul.mubr.f32.gmra.mrb[0].mxu0 %v2456
      %v2458 = vpop.f32.mrb[0].mxu0
      %v2459 = vadd.f32 %v2233, %v2458
      %v2460 = vpop.f32.mrb[0].mxu0
      %2461 = vmatprep.mubr.f32.mxu0 0.0
      %v2462 = vand.u32 %v2255, 4294901760
      %v2463 = vsub.f32 %v2255, %v2462
      %v2464 = vand.u32 %v2463, 4294901760
      %v2465 = vsub.f32 %v2463, %v2464
      %v2466 = vand.u32 %v2465, 4294901760
      %2467 = vmatmul.mubr.f32.gmra.mrb[0].mxu0 %v2466
      %v2468 = vpop.f32.mrb[0].mxu0
      %v2469 = vadd.f32 %v2233, %v2468
      %v2470 = vpop.f32.mrb[0].mxu0
      %2471 = vmatprep.mubr.f32.mxu0 0.0
      %v2472 = vand.u32 %v2258, 4294901760
      %v2473 = vsub.f32 %v2258, %v2472
      %v2474 = vand.u32 %v2473, 4294901760
      %v2475 = vsub.f32 %v2473, %v2474
      %v2476 = vand.u32 %v2475, 4294901760
      %2477 = vmatmul.mubr.f32.gmra.mrb[0].mxu0 %v2476
      %v2478 = vpop.f32.mrb[0].mxu0
      %v2479 = vadd.f32 %v2233, %v2478
      %v2480 = vpop.f32.mrb[0].mxu0
      %2481 = vmatprep.mubr.f32.mxu0 0.0
      %v2482 = vand.u32 %v2261, 4294901760
      %v2483 = vsub.f32 %v2261, %v2482
      %v2484 = vand.u32 %v2483, 4294901760
      %v2485 = vsub.f32 %v2483, %v2484
      %v2486 = vand.u32 %v2485, 4294901760
      %2487 = vmatmul.mubr.f32.gmra.mrb[0].mxu0 %v2486
      %v2488 = vpop.f32.mrb[0].mxu0
      %v2489 = vadd.f32 %v2233, %v2488
      %v2490 = vpop.f32.mrb[0].mxu0
      %2491 = vmatprep.mubr.f32.mxu0 0.0
      %v2492 = vand.u32 %v2264, 4294901760
      %v2493 = vsub.f32 %v2264, %v2492
      %v2494 = vand.u32 %v2493, 4294901760
      %v2495 = vsub.f32 %v2493, %v2494
      %v2496 = vand.u32 %v2495, 4294901760
      %2497 = vmatmul.mubr.f32.gmra.mrb[0].mxu0 %v2496
      %v2498 = vpop.f32.mrb[0].mxu0
      %v2499 = vadd.f32 %v2233, %v2498
      %v2500 = vpop.f32.mrb[0].mxu0
      %2501 = vmatprep.mubr.f32.mxu0 0.0
      %v2502 = vand.u32 %v2267, 4294901760
      %v2503 = vsub.f32 %v2267, %v2502
      %v2504 = vand.u32 %v2503, 4294901760
      %v2505 = vsub.f32 %v2503, %v2504
      %v2506 = vand.u32 %v2505, 4294901760
      %2507 = vmatmul.mubr.f32.gmra.mrb[0].mxu0 %v2506
      %v2508 = vpop.f32.mrb[0].mxu0
      %v2509 = vadd.f32 %v2233, %v2508
      %v2510 = vpop.f32.mrb[0].mxu0
      %2511 = vmatprep.mubr.f32.mxu0 0.0
      %v2512 = vand.u32 %v2270, 4294901760
      %v2513 = vsub.f32 %v2270, %v2512
      %v2514 = vand.u32 %v2513, 4294901760
      %v2515 = vsub.f32 %v2513, %v2514
      %v2516 = vand.u32 %v2515, 4294901760
      %2517 = vmatmul.mubr.f32.gmra.mrb[0].mxu0 %v2516
      %v2518 = vpop.f32.mrb[0].mxu0
      %v2519 = vadd.f32 %v2233, %v2518
      %v2520 = vpop.f32.mrb[0].mxu0
      %2521 = vmatprep.mubr.f32.mxu0 0.0
      %v2522 = vand.u32 %v2273, 4294901760
      %v2523 = vsub.f32 %v2273, %v2522
      %v2524 = vand.u32 %v2523, 4294901760
      %v2525 = vsub.f32 %v2523, %v2524
      %v2526 = vand.u32 %v2525, 4294901760
      %2527 = vmatmul.mubr.f32.gmra.mrb[0].mxu0 %v2526
      %v2528 = vpop.f32.mrb[0].mxu0
      %v2529 = vadd.f32 %v2233, %v2528
      %v2530 = vpop.f32.mrb[0].mxu0
      %2531 = vmatprep.mubr.f32.mxu0 0.0
      %v2532 = vand.u32 %v2276, 4294901760
      %v2533 = vsub.f32 %v2276, %v2532
      %v2534 = vand.u32 %v2533, 4294901760
      %v2535 = vsub.f32 %v2533, %v2534
      %v2536 = vand.u32 %v2535, 4294901760
      %2537 = vmatmul.mubr.f32.gmra.mrb[0].mxu0 %v2536
      %v2538 = vpop.f32.mrb[0].mxu0
      %v2539 = vadd.f32 %v2233, %v2538
      %v2540 = vpop.f32.mrb[0].mxu0
      %2541 = vmatprep.mubr.f32.mxu0 0.0
      %v2542 = vand.u32 %v2279, 4294901760
      %v2543 = vsub.f32 %v2279, %v2542
      %v2544 = vand.u32 %v2543, 4294901760
      %v2545 = vsub.f32 %v2543, %v2544
      %v2546 = vand.u32 %v2545, 4294901760
      %2547 = vmatmul.mubr.f32.gmra.mrb[0].mxu0 %v2546
      %v2548 = vpop.f32.mrb[0].mxu0
      %v2549 = vadd.f32 %v2233, %v2548
      %v2550 = vpop.f32.mrb[0].mxu0
      %2551 = vmatprep.mubr.f32.mxu0 0.0
      %v2552 = vand.u32 %v2282, 4294901760
      %v2553 = vsub.f32 %v2282, %v2552
      %v2554 = vand.u32 %v2553, 4294901760
      %v2555 = vsub.f32 %v2553, %v2554
      %v2556 = vand.u32 %v2555, 4294901760
      %2557 = vmatmul.mubr.f32.gmra.mrb[0].mxu0 %v2556
      %v2558 = vpop.f32.mrb[0].mxu0
      %v2559 = vadd.f32 %v2233, %v2558
      %v2560 = vpop.f32.mrb[0].mxu0
      %2561 = vmatprep.mubr.f32.mxu0 0.0
      %v2562 = vand.u32 %v2285, 4294901760
      %v2563 = vsub.f32 %v2285, %v2562
      %v2564 = vand.u32 %v2563, 4294901760
      %v2565 = vsub.f32 %v2563, %v2564
      %v2566 = vand.u32 %v2565, 4294901760
      %2567 = vmatmul.mubr.f32.gmra.mrb[0].mxu0 %v2566
      %v2568 = vpop.f32.mrb[0].mxu0
      %v2569 = vadd.f32 %v2233, %v2568
      %v2570 = vpop.f32.mrb[0].mxu0
      %2571 = vmatprep.mubr.f32.mxu0 0.0
      %v2572 = vand.u32 %v2288, 4294901760
      %v2573 = vsub.f32 %v2288, %v2572
      %v2574 = vand.u32 %v2573, 4294901760
      %v2575 = vsub.f32 %v2573, %v2574
      %v2576 = vand.u32 %v2575, 4294901760
      %2577 = vmatmul.mubr.f32.gmra.mrb[0].mxu0 %v2576
      %v2578 = vpop.f32.mrb[0].mxu0
      %v2579 = vadd.f32 %v2233, %v2578
      %v2580 = vpop.f32.mrb[0].mxu0
      %2581 = vmatprep.mubr.f32.mxu0 0.0
      %v2582 = vand.u32 %v2291, 4294901760
      %v2583 = vsub.f32 %v2291, %v2582
      %v2584 = vand.u32 %v2583, 4294901760
      %v2585 = vsub.f32 %v2583, %v2584
      %v2586 = vand.u32 %v2585, 4294901760
      %2587 = vmatmul.mubr.f32.gmra.mrb[0].mxu0 %v2586
      %v2588 = vpop.f32.mrb[0].mxu0
      %v2589 = vadd.f32 %v2233, %v2588
      %v2590 = vpop.f32.mrb[0].mxu0
      %2591 = vmatprep.mubr.f32.mxu0 0.0
      %v2592 = vand.u32 %v2294, 4294901760
      %v2593 = vsub.f32 %v2294, %v2592
      %v2594 = vand.u32 %v2593, 4294901760
      %v2595 = vsub.f32 %v2593, %v2594
      %v2596 = vand.u32 %v2595, 4294901760
      %2597 = vmatmul.mubr.f32.gmra.mrb[0].mxu0 %v2596
      %v2598 = vpop.f32.mrb[0].mxu0
      %v2599 = vadd.f32 %v2233, %v2598
      %v2600 = vpop.f32.mrb[0].mxu0
      %2601 = vmatprep.mubr.f32.mxu0 0.0
      %v2602 = vand.u32 %v2297, 4294901760
      %v2603 = vsub.f32 %v2297, %v2602
      %v2604 = vand.u32 %v2603, 4294901760
      %v2605 = vsub.f32 %v2603, %v2604
      %v2606 = vand.u32 %v2605, 4294901760
      %2607 = vmatmul.mubr.f32.gmra.mrb[0].mxu0 %v2606
      %v2608 = vpop.f32.mrb[0].mxu0
      %v2609 = vadd.f32 %v2233, %v2608
      %v2610 = vpop.f32.mrb[0].mxu0
      %2611 = vmatprep.mubr.f32.mxu0 0.0
      %v2612 = vand.u32 %v2300, 4294901760
      %v2613 = vsub.f32 %v2300, %v2612
      %v2614 = vand.u32 %v2613, 4294901760
      %v2615 = vsub.f32 %v2613, %v2614
      %v2616 = vand.u32 %v2615, 4294901760
      %2617 = vmatmul.mubr.f32.gmra.mrb[0].mxu0 %v2616
      %v2618 = vpop.f32.mrb[0].mxu0
      %v2619 = vadd.f32 %v2233, %v2618
      %v2620 = vpop.f32.mrb[0].mxu0
      %2621 = vmatprep.mubr.f32.mxu0 0.0
      %v2622 = vand.u32 %v2303, 4294901760
      %v2623 = vsub.f32 %v2303, %v2622
      %v2624 = vand.u32 %v2623, 4294901760
      %v2625 = vsub.f32 %v2623, %v2624
      %v2626 = vand.u32 %v2625, 4294901760
      %2627 = vmatmul.mubr.f32.gmra.mrb[0].mxu0 %v2626
      %v2628 = vpop.f32.mrb[0].mxu0
      %v2629 = vadd.f32 %v2233, %v2628
      %v2630 = vpop.f32.mrb[0].mxu0
      %2631 = vmatprep.mubr.f32.mxu0 0.0
      %v2632 = vand.u32 %v2306, 4294901760
      %v2633 = vsub.f32 %v2306, %v2632
      %v2634 = vand.u32 %v2633, 4294901760
      %v2635 = vsub.f32 %v2633, %v2634
      %v2636 = vand.u32 %v2635, 4294901760
      %2637 = vmatmul.mubr.f32.gmra.mrb[0].mxu0 %v2636
      %v2638 = vpop.f32.mrb[0].mxu0
      %v2639 = vadd.f32 %v2233, %v2638
      %v2640 = vpop.f32.mrb[0].mxu0
      %2641 = vmatprep.mubr.f32.mxu0 0.0
      %v2642 = vand.u32 %v2309, 4294901760
      %v2643 = vsub.f32 %v2309, %v2642
      %v2644 = vand.u32 %v2643, 4294901760
      %v2645 = vsub.f32 %v2643, %v2644
      %v2646 = vand.u32 %v2645, 4294901760
      %2647 = vmatmul.mubr.f32.gmra.mrb[0].mxu0 %v2646
      %v2648 = vpop.f32.mrb[0].mxu0
      %v2649 = vadd.f32 %v2233, %v2648
      %v2650 = vpop.f32.mrb[0].mxu0
      %2651 = vmatprep.mubr.f32.mxu0 0.0
      %v2652 = vand.u32 %v2312, 4294901760
      %v2653 = vsub.f32 %v2312, %v2652
      %v2654 = vand.u32 %v2653, 4294901760
      %v2655 = vsub.f32 %v2653, %v2654
      %v2656 = vand.u32 %v2655, 4294901760
      %2657 = vmatmul.mubr.f32.gmra.mrb[0].mxu0 %v2656
      %v2658 = vpop.f32.mrb[0].mxu0
      %v2659 = vadd.f32 %v2233, %v2658
      %v2660 = vpop.f32.mrb[0].mxu0
      %2661 = vmatprep.mubr.f32.mxu0 0.0
      %v2662 = vand.u32 %v2315, 4294901760
      %v2663 = vsub.f32 %v2315, %v2662
      %v2664 = vand.u32 %v2663, 4294901760
      %v2665 = vsub.f32 %v2663, %v2664
      %v2666 = vand.u32 %v2665, 4294901760
      %2667 = vmatmul.mubr.f32.gmra.mrb[0].mxu0 %v2666
      %v2668 = vpop.f32.mrb[0].mxu0
      %v2669 = vadd.f32 %v2233, %v2668
      %v2670 = vpop.f32.mrb[0].mxu0
      %2671 = vmatprep.mubr.f32.mxu0 0.0
      %v2672 = vand.u32 %v2318, 4294901760
      %v2673 = vsub.f32 %v2318, %v2672
      %v2674 = vand.u32 %v2673, 4294901760
      %v2675 = vsub.f32 %v2673, %v2674
      %v2676 = vand.u32 %v2675, 4294901760
      %2677 = vmatmul.mubr.f32.gmra.mrb[0].mxu0 %v2676
      %v2678 = vpop.f32.mrb[0].mxu0
      %v2679 = vadd.f32 %v2233, %v2678
      %v2680 = vpop.f32.mrb[0].mxu0
      %2681 = vmatprep.mubr.f32.mxu0 0.0
      %v2682 = vand.u32 %v2321, 4294901760
      %v2683 = vsub.f32 %v2321, %v2682
      %v2684 = vand.u32 %v2683, 4294901760
      %v2685 = vsub.f32 %v2683, %v2684
      %v2686 = vand.u32 %v2685, 4294901760
      %2687 = vmatmul.mubr.f32.gmra.mrb[0].mxu0 %v2686
      %v2688 = vpop.f32.mrb[0].mxu0
      %v2689 = vadd.f32 %v2233, %v2688
      %v2690 = vpop.f32.mrb[0].mxu0
      %2691 = vmatprep.mubr.f32.mxu0 0.0
      %v2692 = vand.u32 %v2324, 4294901760
      %v2693 = vsub.f32 %v2324, %v2692
      %v2694 = vand.u32 %v2693, 4294901760
      %v2695 = vsub.f32 %v2693, %v2694
      %v2696 = vand.u32 %v2695, 4294901760
      %2697 = vmatmul.mubr.f32.gmra.mrb[0].mxu0 %v2696
      %v2698 = vpop.f32.mrb[0].mxu0
      %v2699 = vadd.f32 %v2233, %v2698
      %v2700 = vpop.f32.mrb[0].mxu0
      %2701 = vmatprep.mubr.f32.mxu0 0.0
      %v2702 = vand.u32 %v2327, 4294901760
      %v2703 = vsub.f32 %v2327, %v2702
      %v2704 = vand.u32 %v2703, 4294901760
      %v2705 = vsub.f32 %v2703, %v2704
      %v2706 = vand.u32 %v2705, 4294901760
      %2707 = vmatmul.mubr.f32.gmra.mrb[0].mxu0 %v2706
      %v2708 = vpop.f32.mrb[0].mxu0
      %v2709 = vadd.f32 %v2233, %v2708
      %v2710 = vpop.f32.mrb[0].mxu0
      %2711 = vmatprep.mubr.f32.mxu0 0.0
      %v2712 = vand.u32 %v2330, 4294901760
      %v2713 = vsub.f32 %v2330, %v2712
      %v2714 = vand.u32 %v2713, 4294901760
      %v2715 = vsub.f32 %v2713, %v2714
      %v2716 = vand.u32 %v2715, 4294901760
      %2717 = vmatmul.mubr.f32.gmra.mrb[0].mxu0 %v2716
      %v2718 = vpop.f32.mrb[0].mxu0
      %v2719 = vadd.f32 %v2233, %v2718
      %v2720 = vpop.f32.mrb[0].mxu0
      %2721 = vdwg.mxu0
      %2722 = vmatprep.subr.mxu0 0.0
      %v2723 = vand.u32 %v2334, 4294901760
      %v2724 = vsub.f32 %v2334, %v2723
      %v2725 = vand.u32 %v2724, 4294901760
      %v2726 = vsub.f32 %v2724, %v2725
      %v2727 = vand.u32 %v2726, 4294901760
      %2728 = vmatpush1.msra.mxu0 %v2727
      %2729 = vmatprep.subr.mxu0 0.0
      %2730 = vmatpush1.msra.mxu0 0.0
      %2731 = vmatprep.subr.mxu0 0.0
      %2732 = vmatpush1.msra.mxu0 0.0
      %2733 = vmatprep.subr.mxu0 0.0
      %2734 = vmatpush1.msra.mxu0 0.0
      %2735 = vmatprep.subr.mxu0 0.0
      %2736 = vmatpush1.msra.mxu0 0.0
      %2737 = vmatprep.subr.mxu0 0.0
      %2738 = vmatpush1.msra.mxu0 0.0
      %2739 = vmatprep.subr.mxu0 0.0
      %2740 = vmatpush1.msra.mxu0 0.0
      %2741 = vmatprep.subr.mxu0 0.0
      %2742 = vmatpush1.msra.mxu0 0.0
      %2743 = vmatprep.subr.mxu0 0.0
      %2744 = vmatpush1.msra.mxu0 0.0
      %2745 = vmatprep.subr.mxu0 0.0
      %2746 = vmatpush1.msra.mxu0 0.0
      %2747 = vmatprep.subr.mxu0 0.0
      %2748 = vmatpush1.msra.mxu0 0.0
      %2749 = vmatprep.subr.mxu0 0.0
      %2750 = vmatpush1.msra.mxu0 0.0
      %2751 = vmatprep.subr.mxu0 0.0
      %2752 = vmatpush1.msra.mxu0 0.0
      %2753 = vmatprep.subr.mxu0 0.0
      %2754 = vmatpush1.msra.mxu0 0.0
      %2755 = vmatprep.subr.mxu0 0.0
      %2756 = vmatpush1.msra.mxu0 0.0
      %2757 = vmatprep.subr.mxu0 0.0
      %2758 = vmatpush1.msra.mxu0 0.0
      %2759 = vmatprep.subr.mxu0 0.0
      %2760 = vmatpush1.msra.mxu0 0.0
      %2761 = vmatprep.subr.mxu0 0.0
      %2762 = vmatpush1.msra.mxu0 0.0
      %2763 = vmatprep.subr.mxu0 0.0
      %2764 = vmatpush1.msra.mxu0 0.0
      %2765 = vmatprep.subr.mxu0 0.0
      %2766 = vmatpush1.msra.mxu0 0.0
      %2767 = vmatprep.subr.mxu0 0.0
      %2768 = vmatpush1.msra.mxu0 0.0
      %2769 = vmatprep.subr.mxu0 0.0
      %2770 = vmatpush1.msra.mxu0 0.0
      %2771 = vmatprep.subr.mxu0 0.0
      %2772 = vmatpush1.msra.mxu0 0.0
      %2773 = vmatprep.subr.mxu0 0.0
      %2774 = vmatpush1.msra.mxu0 0.0
      %2775 = vmatprep.subr.mxu0 0.0
      %2776 = vmatpush1.msra.mxu0 0.0
      %2777 = vmatprep.subr.mxu0 0.0
      %2778 = vmatpush1.msra.mxu0 0.0
      %2779 = vmatprep.subr.mxu0 0.0
      %2780 = vmatpush1.msra.mxu0 0.0
      %2781 = vmatprep.subr.mxu0 0.0
      %2782 = vmatpush1.msra.mxu0 0.0
      %2783 = vmatprep.subr.mxu0 0.0
      %2784 = vmatpush1.msra.mxu0 0.0
      %2785 = vmatprep.subr.mxu0 0.0
      %2786 = vmatpush1.msra.mxu0 0.0
      %2787 = vmatprep.subr.mxu0 0.0
      %2788 = vmatpush1.msra.mxu0 0.0
      %2789 = vmatprep.subr.mxu0 0.0
      %2790 = vmatpush1.msra.mxu0 0.0
      %2791 = vmatprep.mubr.f32.mxu0 0.0
      %v2792 = vand.u32 %v2237, 4294901760
      %2793 = vmatmul.mubr.f32.gmra.mrb[0].mxu0 %v2792
      %v2794 = vpop.f32.mrb[0].mxu0
      %v2795 = vadd.f32 %v2409, %v2794
      %v2796 = vpop.f32.mrb[0].mxu0
      %2797 = vmatprep.mubr.f32.mxu0 0.0
      %v2798 = vand.u32 %v2240, 4294901760
      %2799 = vmatmul.mubr.f32.gmra.mrb[0].mxu0 %v2798
      %v2800 = vpop.f32.mrb[0].mxu0
      %v2801 = vadd.f32 %v2419, %v2800
      %v2802 = vpop.f32.mrb[0].mxu0
      %2803 = vmatprep.mubr.f32.mxu0 0.0
      %v2804 = vand.u32 %v2243, 4294901760
      %2805 = vmatmul.mubr.f32.gmra.mrb[0].mxu0 %v2804
      %v2806 = vpop.f32.mrb[0].mxu0
      %v2807 = vadd.f32 %v2429, %v2806
      %v2808 = vpop.f32.mrb[0].mxu0
      %2809 = vmatprep.mubr.f32.mxu0 0.0
      %v2810 = vand.u32 %v2246, 4294901760
      %2811 = vmatmul.mubr.f32.gmra.mrb[0].mxu0 %v2810
      %v2812 = vpop.f32.mrb[0].mxu0
      %v2813 = vadd.f32 %v2439, %v2812
      %v2814 = vpop.f32.mrb[0].mxu0
      %2815 = vmatprep.mubr.f32.mxu0 0.0
      %v2816 = vand.u32 %v2249, 4294901760
      %2817 = vmatmul.mubr.f32.gmra.mrb[0].mxu0 %v2816
      %v2818 = vpop.f32.mrb[0].mxu0
      %v2819 = vadd.f32 %v2449, %v2818
      %v2820 = vpop.f32.mrb[0].mxu0
      %2821 = vmatprep.mubr.f32.mxu0 0.0
      %v2822 = vand.u32 %v2252, 4294901760
      %2823 = vmatmul.mubr.f32.gmra.mrb[0].mxu0 %v2822
      %v2824 = vpop.f32.mrb[0].mxu0
      %v2825 = vadd.f32 %v2459, %v2824
      %v2826 = vpop.f32.mrb[0].mxu0
      %2827 = vmatprep.mubr.f32.mxu0 0.0
      %v2828 = vand.u32 %v2255, 4294901760
      %2829 = vmatmul.mubr.f32.gmra.mrb[0].mxu0 %v2828
      %v2830 = vpop.f32.mrb[0].mxu0
      %v2831 = vadd.f32 %v2469, %v2830
      %v2832 = vpop.f32.mrb[0].mxu0
      %2833 = vmatprep.mubr.f32.mxu0 0.0
      %v2834 = vand.u32 %v2258, 4294901760
      %2835 = vmatmul.mubr.f32.gmra.mrb[0].mxu0 %v2834
      %v2836 = vpop.f32.mrb[0].mxu0
      %v2837 = vadd.f32 %v2479, %v2836
      %v2838 = vpop.f32.mrb[0].mxu0
      %2839 = vmatprep.mubr.f32.mxu0 0.0
      %v2840 = vand.u32 %v2261, 4294901760
      %2841 = vmatmul.mubr.f32.gmra.mrb[0].mxu0 %v2840
      %v2842 = vpop.f32.mrb[0].mxu0
      %v2843 = vadd.f32 %v2489, %v2842
      %v2844 = vpop.f32.mrb[0].mxu0
      %2845 = vmatprep.mubr.f32.mxu0 0.0
      %v2846 = vand.u32 %v2264, 4294901760
      %2847 = vmatmul.mubr.f32.gmra.mrb[0].mxu0 %v2846
      %v2848 = vpop.f32.mrb[0].mxu0
      %v2849 = vadd.f32 %v2499, %v2848
      %v2850 = vpop.f32.mrb[0].mxu0
      %2851 = vmatprep.mubr.f32.mxu0 0.0
      %v2852 = vand.u32 %v2267, 4294901760
      %2853 = vmatmul.mubr.f32.gmra.mrb[0].mxu0 %v2852
      %v2854 = vpop.f32.mrb[0].mxu0
      %v2855 = vadd.f32 %v2509, %v2854
      %v2856 = vpop.f32.mrb[0].mxu0
      %2857 = vmatprep.mubr.f32.mxu0 0.0
      %v2858 = vand.u32 %v2270, 4294901760
      %2859 = vmatmul.mubr.f32.gmra.mrb[0].mxu0 %v2858
      %v2860 = vpop.f32.mrb[0].mxu0
      %v2861 = vadd.f32 %v2519, %v2860
      %v2862 = vpop.f32.mrb[0].mxu0
      %2863 = vmatprep.mubr.f32.mxu0 0.0
      %v2864 = vand.u32 %v2273, 4294901760
      %2865 = vmatmul.mubr.f32.gmra.mrb[0].mxu0 %v2864
      %v2866 = vpop.f32.mrb[0].mxu0
      %v2867 = vadd.f32 %v2529, %v2866
      %v2868 = vpop.f32.mrb[0].mxu0
      %2869 = vmatprep.mubr.f32.mxu0 0.0
      %v2870 = vand.u32 %v2276, 4294901760
      %2871 = vmatmul.mubr.f32.gmra.mrb[0].mxu0 %v2870
      %v2872 = vpop.f32.mrb[0].mxu0
      %v2873 = vadd.f32 %v2539, %v2872
      %v2874 = vpop.f32.mrb[0].mxu0
      %2875 = vmatprep.mubr.f32.mxu0 0.0
      %v2876 = vand.u32 %v2279, 4294901760
      %2877 = vmatmul.mubr.f32.gmra.mrb[0].mxu0 %v2876
      %v2878 = vpop.f32.mrb[0].mxu0
      %v2879 = vadd.f32 %v2549, %v2878
      %v2880 = vpop.f32.mrb[0].mxu0
      %2881 = vmatprep.mubr.f32.mxu0 0.0
      %v2882 = vand.u32 %v2282, 4294901760
      %2883 = vmatmul.mubr.f32.gmra.mrb[0].mxu0 %v2882
      %v2884 = vpop.f32.mrb[0].mxu0
      %v2885 = vadd.f32 %v2559, %v2884
      %v2886 = vpop.f32.mrb[0].mxu0
      %2887 = vmatprep.mubr.f32.mxu0 0.0
      %v2888 = vand.u32 %v2285, 4294901760
      %2889 = vmatmul.mubr.f32.gmra.mrb[0].mxu0 %v2888
      %v2890 = vpop.f32.mrb[0].mxu0
      %v2891 = vadd.f32 %v2569, %v2890
      %v2892 = vpop.f32.mrb[0].mxu0
      %2893 = vmatprep.mubr.f32.mxu0 0.0
      %v2894 = vand.u32 %v2288, 4294901760
      %2895 = vmatmul.mubr.f32.gmra.mrb[0].mxu0 %v2894
      %v2896 = vpop.f32.mrb[0].mxu0
      %v2897 = vadd.f32 %v2579, %v2896
      %v2898 = vpop.f32.mrb[0].mxu0
      %2899 = vmatprep.mubr.f32.mxu0 0.0
      %v2900 = vand.u32 %v2291, 4294901760
      %2901 = vmatmul.mubr.f32.gmra.mrb[0].mxu0 %v2900
      %v2902 = vpop.f32.mrb[0].mxu0
      %v2903 = vadd.f32 %v2589, %v2902
      %v2904 = vpop.f32.mrb[0].mxu0
      %2905 = vmatprep.mubr.f32.mxu0 0.0
      %v2906 = vand.u32 %v2294, 4294901760
      %2907 = vmatmul.mubr.f32.gmra.mrb[0].mxu0 %v2906
      %v2908 = vpop.f32.mrb[0].mxu0
      %v2909 = vadd.f32 %v2599, %v2908
      %v2910 = vpop.f32.mrb[0].mxu0
      %2911 = vmatprep.mubr.f32.mxu0 0.0
      %v2912 = vand.u32 %v2297, 4294901760
      %2913 = vmatmul.mubr.f32.gmra.mrb[0].mxu0 %v2912
      %v2914 = vpop.f32.mrb[0].mxu0
      %v2915 = vadd.f32 %v2609, %v2914
      %v2916 = vpop.f32.mrb[0].mxu0
      %2917 = vmatprep.mubr.f32.mxu0 0.0
      %v2918 = vand.u32 %v2300, 4294901760
      %2919 = vmatmul.mubr.f32.gmra.mrb[0].mxu0 %v2918
      %v2920 = vpop.f32.mrb[0].mxu0
      %v2921 = vadd.f32 %v2619, %v2920
      %v2922 = vpop.f32.mrb[0].mxu0
      %2923 = vmatprep.mubr.f32.mxu0 0.0
      %v2924 = vand.u32 %v2303, 4294901760
      %2925 = vmatmul.mubr.f32.gmra.mrb[0].mxu0 %v2924
      %v2926 = vpop.f32.mrb[0].mxu0
      %v2927 = vadd.f32 %v2629, %v2926
      %v2928 = vpop.f32.mrb[0].mxu0
      %2929 = vmatprep.mubr.f32.mxu0 0.0
      %v2930 = vand.u32 %v2306, 4294901760
      %2931 = vmatmul.mubr.f32.gmra.mrb[0].mxu0 %v2930
      %v2932 = vpop.f32.mrb[0].mxu0
      %v2933 = vadd.f32 %v2639, %v2932
      %v2934 = vpop.f32.mrb[0].mxu0
      %2935 = vmatprep.mubr.f32.mxu0 0.0
      %v2936 = vand.u32 %v2309, 4294901760
      %2937 = vmatmul.mubr.f32.gmra.mrb[0].mxu0 %v2936
      %v2938 = vpop.f32.mrb[0].mxu0
      %v2939 = vadd.f32 %v2649, %v2938
      %v2940 = vpop.f32.mrb[0].mxu0
      %2941 = vmatprep.mubr.f32.mxu0 0.0
      %v2942 = vand.u32 %v2312, 4294901760
      %2943 = vmatmul.mubr.f32.gmra.mrb[0].mxu0 %v2942
      %v2944 = vpop.f32.mrb[0].mxu0
      %v2945 = vadd.f32 %v2659, %v2944
      %v2946 = vpop.f32.mrb[0].mxu0
      %2947 = vmatprep.mubr.f32.mxu0 0.0
      %v2948 = vand.u32 %v2315, 4294901760
      %2949 = vmatmul.mubr.f32.gmra.mrb[0].mxu0 %v2948
      %v2950 = vpop.f32.mrb[0].mxu0
      %v2951 = vadd.f32 %v2669, %v2950
      %v2952 = vpop.f32.mrb[0].mxu0
      %2953 = vmatprep.mubr.f32.mxu0 0.0
      %v2954 = vand.u32 %v2318, 4294901760
      %2955 = vmatmul.mubr.f32.gmra.mrb[0].mxu0 %v2954
      %v2956 = vpop.f32.mrb[0].mxu0
      %v2957 = vadd.f32 %v2679, %v2956
      %v2958 = vpop.f32.mrb[0].mxu0
      %2959 = vmatprep.mubr.f32.mxu0 0.0
      %v2960 = vand.u32 %v2321, 4294901760
      %2961 = vmatmul.mubr.f32.gmra.mrb[0].mxu0 %v2960
      %v2962 = vpop.f32.mrb[0].mxu0
      %v2963 = vadd.f32 %v2689, %v2962
      %v2964 = vpop.f32.mrb[0].mxu0
      %2965 = vmatprep.mubr.f32.mxu0 0.0
      %v2966 = vand.u32 %v2324, 4294901760
      %2967 = vmatmul.mubr.f32.gmra.mrb[0].mxu0 %v2966
      %v2968 = vpop.f32.mrb[0].mxu0
      %v2969 = vadd.f32 %v2699, %v2968
      %v2970 = vpop.f32.mrb[0].mxu0
      %2971 = vmatprep.mubr.f32.mxu0 0.0
      %v2972 = vand.u32 %v2327, 4294901760
      %2973 = vmatmul.mubr.f32.gmra.mrb[0].mxu0 %v2972
      %v2974 = vpop.f32.mrb[0].mxu0
      %v2975 = vadd.f32 %v2709, %v2974
      %v2976 = vpop.f32.mrb[0].mxu0
      %2977 = vmatprep.mubr.f32.mxu0 0.0
      %v2978 = vand.u32 %v2330, 4294901760
      %2979 = vmatmul.mubr.f32.gmra.mrb[0].mxu0 %v2978
      %v2980 = vpop.f32.mrb[0].mxu0
      %v2981 = vadd.f32 %v2719, %v2980
      %v2982 = vpop.f32.mrb[0].mxu0
      %2983 = vdwg.mxu0
      %2984 = vmatprep.subr.mxu0 0.0
      %v2985 = vand.u32 %v2334, 4294901760
      %v2986 = vsub.f32 %v2334, %v2985
      %2987 = vmatpush1.msra.mxu0 %v2986
      %2988 = vmatprep.subr.mxu0 0.0
      %2989 = vmatpush1.msra.mxu0 0.0
      %2990 = vmatprep.subr.mxu0 0.0
      %2991 = vmatpush1.msra.mxu0 0.0
      %2992 = vmatprep.subr.mxu0 0.0
      %2993 = vmatpush1.msra.mxu0 0.0
      %2994 = vmatprep.subr.mxu0 0.0
      %2995 = vmatpush1.msra.mxu0 0.0
      %2996 = vmatprep.subr.mxu0 0.0
      %2997 = vmatpush1.msra.mxu0 0.0
      %2998 = vmatprep.subr.mxu0 0.0
      %2999 = vmatpush1.msra.mxu0 0.0
      %3000 = vmatprep.subr.mxu0 0.0
      %3001 = vmatpush1.msra.mxu0 0.0
      %3002 = vmatprep.subr.mxu0 0.0
      %3003 = vmatpush1.msra.mxu0 0.0
      %3004 = vmatprep.subr.mxu0 0.0
      %3005 = vmatpush1.msra.mxu0 0.0
      %3006 = vmatprep.subr.mxu0 0.0
      %3007 = vmatpush1.msra.mxu0 0.0
      %3008 = vmatprep.subr.mxu0 0.0
      %3009 = vmatpush1.msra.mxu0 0.0
      %3010 = vmatprep.subr.mxu0 0.0
      %3011 = vmatpush1.msra.mxu0 0.0
      %3012 = vmatprep.subr.mxu0 0.0
      %3013 = vmatpush1.msra.mxu0 0.0
      %3014 = vmatprep.subr.mxu0 0.0
      %3015 = vmatpush1.msra.mxu0 0.0
      %3016 = vmatprep.subr.mxu0 0.0
      %3017 = vmatpush1.msra.mxu0 0.0
      %3018 = vmatprep.subr.mxu0 0.0
      %3019 = vmatpush1.msra.mxu0 0.0
      %3020 = vmatprep.subr.mxu0 0.0
      %3021 = vmatpush1.msra.mxu0 0.0
      %3022 = vmatprep.subr.mxu0 0.0
      %3023 = vmatpush1.msra.mxu0 0.0
      %3024 = vmatprep.subr.mxu0 0.0
      %3025 = vmatpush1.msra.mxu0 0.0
      %3026 = vmatprep.subr.mxu0 0.0
      %3027 = vmatpush1.msra.mxu0 0.0
      %3028 = vmatprep.subr.mxu0 0.0
      %3029 = vmatpush1.msra.mxu0 0.0
      %3030 = vmatprep.subr.mxu0 0.0
      %3031 = vmatpush1.msra.mxu0 0.0
      %3032 = vmatprep.subr.mxu0 0.0
      %3033 = vmatpush1.msra.mxu0 0.0
      %3034 = vmatprep.subr.mxu0 0.0
      %3035 = vmatpush1.msra.mxu0 0.0
      %3036 = vmatprep.subr.mxu0 0.0
      %3037 = vmatpush1.msra.mxu0 0.0
      %3038 = vmatprep.subr.mxu0 0.0
      %3039 = vmatpush1.msra.mxu0 0.0
      %3040 = vmatprep.subr.mxu0 0.0
      %3041 = vmatpush1.msra.mxu0 0.0
      %3042 = vmatprep.subr.mxu0 0.0
      %3043 = vmatpush1.msra.mxu0 0.0
      %3044 = vmatprep.subr.mxu0 0.0
      %3045 = vmatpush1.msra.mxu0 0.0
      %3046 = vmatprep.subr.mxu0 0.0
      %3047 = vmatpush1.msra.mxu0 0.0
      %3048 = vmatprep.subr.mxu0 0.0
      %3049 = vmatpush1.msra.mxu0 0.0
      %3050 = vmatprep.mubr.f32.mxu0 0.0
      %v3051 = vand.u32 %v2237, 4294901760
      %v3052 = vsub.f32 %v2237, %v3051
      %3053 = vmatmul.mubr.f32.gmra.mrb[0].mxu0 %v3052
      %v3054 = vpop.f32.mrb[0].mxu0
      %v3055 = vadd.f32 %v2795, %v3054
      %v3056 = vpop.f32.mrb[0].mxu0
      %3057 = vmatprep.mubr.f32.mxu0 0.0
      %v3058 = vand.u32 %v2240, 4294901760
      %v3059 = vsub.f32 %v2240, %v3058
      %3060 = vmatmul.mubr.f32.gmra.mrb[0].mxu0 %v3059
      %v3061 = vpop.f32.mrb[0].mxu0
      %v3062 = vadd.f32 %v2801, %v3061
      %v3063 = vpop.f32.mrb[0].mxu0
      %3064 = vmatprep.mubr.f32.mxu0 0.0
      %v3065 = vand.u32 %v2243, 4294901760
      %v3066 = vsub.f32 %v2243, %v3065
      %3067 = vmatmul.mubr.f32.gmra.mrb[0].mxu0 %v3066
      %v3068 = vpop.f32.mrb[0].mxu0
      %v3069 = vadd.f32 %v2807, %v3068
      %v3070 = vpop.f32.mrb[0].mxu0
      %3071 = vmatprep.mubr.f32.mxu0 0.0
      %v3072 = vand.u32 %v2246, 4294901760
      %v3073 = vsub.f32 %v2246, %v3072
      %3074 = vmatmul.mubr.f32.gmra.mrb[0].mxu0 %v3073
      %v3075 = vpop.f32.mrb[0].mxu0
      %v3076 = vadd.f32 %v2813, %v3075
      %v3077 = vpop.f32.mrb[0].mxu0
      %3078 = vmatprep.mubr.f32.mxu0 0.0
      %v3079 = vand.u32 %v2249, 4294901760
      %v3080 = vsub.f32 %v2249, %v3079
      %3081 = vmatmul.mubr.f32.gmra.mrb[0].mxu0 %v3080
      %v3082 = vpop.f32.mrb[0].mxu0
      %v3083 = vadd.f32 %v2819, %v3082
      %v3084 = vpop.f32.mrb[0].mxu0
      %3085 = vmatprep.mubr.f32.mxu0 0.0
      %v3086 = vand.u32 %v2252, 4294901760
      %v3087 = vsub.f32 %v2252, %v3086
      %3088 = vmatmul.mubr.f32.gmra.mrb[0].mxu0 %v3087
      %v3089 = vpop.f32.mrb[0].mxu0
      %v3090 = vadd.f32 %v2825, %v3089
      %v3091 = vpop.f32.mrb[0].mxu0
      %3092 = vmatprep.mubr.f32.mxu0 0.0
      %v3093 = vand.u32 %v2255, 4294901760
      %v3094 = vsub.f32 %v2255, %v3093
      %3095 = vmatmul.mubr.f32.gmra.mrb[0].mxu0 %v3094
      %v3096 = vpop.f32.mrb[0].mxu0
      %v3097 = vadd.f32 %v2831, %v3096
      %v3098 = vpop.f32.mrb[0].mxu0
      %3099 = vmatprep.mubr.f32.mxu0 0.0
      %v3100 = vand.u32 %v2258, 4294901760
      %v3101 = vsub.f32 %v2258, %v3100
      %3102 = vmatmul.mubr.f32.gmra.mrb[0].mxu0 %v3101
      %v3103 = vpop.f32.mrb[0].mxu0
      %v3104 = vadd.f32 %v2837, %v3103
      %v3105 = vpop.f32.mrb[0].mxu0
      %3106 = vmatprep.mubr.f32.mxu0 0.0
      %v3107 = vand.u32 %v2261, 4294901760
      %v3108 = vsub.f32 %v2261, %v3107
      %3109 = vmatmul.mubr.f32.gmra.mrb[0].mxu0 %v3108
      %v3110 = vpop.f32.mrb[0].mxu0
      %v3111 = vadd.f32 %v2843, %v3110
      %v3112 = vpop.f32.mrb[0].mxu0
      %3113 = vmatprep.mubr.f32.mxu0 0.0
      %v3114 = vand.u32 %v2264, 4294901760
      %v3115 = vsub.f32 %v2264, %v3114
      %3116 = vmatmul.mubr.f32.gmra.mrb[0].mxu0 %v3115
      %v3117 = vpop.f32.mrb[0].mxu0
      %v3118 = vadd.f32 %v2849, %v3117
      %v3119 = vpop.f32.mrb[0].mxu0
      %3120 = vmatprep.mubr.f32.mxu0 0.0
      %v3121 = vand.u32 %v2267, 4294901760
      %v3122 = vsub.f32 %v2267, %v3121
      %3123 = vmatmul.mubr.f32.gmra.mrb[0].mxu0 %v3122
      %v3124 = vpop.f32.mrb[0].mxu0
      %v3125 = vadd.f32 %v2855, %v3124
      %v3126 = vpop.f32.mrb[0].mxu0
      %3127 = vmatprep.mubr.f32.mxu0 0.0
      %v3128 = vand.u32 %v2270, 4294901760
      %v3129 = vsub.f32 %v2270, %v3128
      %3130 = vmatmul.mubr.f32.gmra.mrb[0].mxu0 %v3129
      %v3131 = vpop.f32.mrb[0].mxu0
      %v3132 = vadd.f32 %v2861, %v3131
      %v3133 = vpop.f32.mrb[0].mxu0
      %3134 = vmatprep.mubr.f32.mxu0 0.0
      %v3135 = vand.u32 %v2273, 4294901760
      %v3136 = vsub.f32 %v2273, %v3135
      %3137 = vmatmul.mubr.f32.gmra.mrb[0].mxu0 %v3136
      %v3138 = vpop.f32.mrb[0].mxu0
      %v3139 = vadd.f32 %v2867, %v3138
      %v3140 = vpop.f32.mrb[0].mxu0
      %3141 = vmatprep.mubr.f32.mxu0 0.0
      %v3142 = vand.u32 %v2276, 4294901760
      %v3143 = vsub.f32 %v2276, %v3142
      %3144 = vmatmul.mubr.f32.gmra.mrb[0].mxu0 %v3143
      %v3145 = vpop.f32.mrb[0].mxu0
      %v3146 = vadd.f32 %v2873, %v3145
      %v3147 = vpop.f32.mrb[0].mxu0
      %3148 = vmatprep.mubr.f32.mxu0 0.0
      %v3149 = vand.u32 %v2279, 4294901760
      %v3150 = vsub.f32 %v2279, %v3149
      %3151 = vmatmul.mubr.f32.gmra.mrb[0].mxu0 %v3150
      %v3152 = vpop.f32.mrb[0].mxu0
      %v3153 = vadd.f32 %v2879, %v3152
      %v3154 = vpop.f32.mrb[0].mxu0
      %3155 = vmatprep.mubr.f32.mxu0 0.0
      %v3156 = vand.u32 %v2282, 4294901760
      %v3157 = vsub.f32 %v2282, %v3156
      %3158 = vmatmul.mubr.f32.gmra.mrb[0].mxu0 %v3157
      %v3159 = vpop.f32.mrb[0].mxu0
      %v3160 = vadd.f32 %v2885, %v3159
      %v3161 = vpop.f32.mrb[0].mxu0
      %3162 = vmatprep.mubr.f32.mxu0 0.0
      %v3163 = vand.u32 %v2285, 4294901760
      %v3164 = vsub.f32 %v2285, %v3163
      %3165 = vmatmul.mubr.f32.gmra.mrb[0].mxu0 %v3164
      %v3166 = vpop.f32.mrb[0].mxu0
      %v3167 = vadd.f32 %v2891, %v3166
      %v3168 = vpop.f32.mrb[0].mxu0
      %3169 = vmatprep.mubr.f32.mxu0 0.0
      %v3170 = vand.u32 %v2288, 4294901760
      %v3171 = vsub.f32 %v2288, %v3170
      %3172 = vmatmul.mubr.f32.gmra.mrb[0].mxu0 %v3171
      %v3173 = vpop.f32.mrb[0].mxu0
      %v3174 = vadd.f32 %v2897, %v3173
      %v3175 = vpop.f32.mrb[0].mxu0
      %3176 = vmatprep.mubr.f32.mxu0 0.0
      %v3177 = vand.u32 %v2291, 4294901760
      %v3178 = vsub.f32 %v2291, %v3177
      %3179 = vmatmul.mubr.f32.gmra.mrb[0].mxu0 %v3178
      %v3180 = vpop.f32.mrb[0].mxu0
      %v3181 = vadd.f32 %v2903, %v3180
      %v3182 = vpop.f32.mrb[0].mxu0
      %3183 = vmatprep.mubr.f32.mxu0 0.0
      %v3184 = vand.u32 %v2294, 4294901760
      %v3185 = vsub.f32 %v2294, %v3184
      %3186 = vmatmul.mubr.f32.gmra.mrb[0].mxu0 %v3185
      %v3187 = vpop.f32.mrb[0].mxu0
      %v3188 = vadd.f32 %v2909, %v3187
      %v3189 = vpop.f32.mrb[0].mxu0
      %3190 = vmatprep.mubr.f32.mxu0 0.0
      %v3191 = vand.u32 %v2297, 4294901760
      %v3192 = vsub.f32 %v2297, %v3191
      %3193 = vmatmul.mubr.f32.gmra.mrb[0].mxu0 %v3192
      %v3194 = vpop.f32.mrb[0].mxu0
      %v3195 = vadd.f32 %v2915, %v3194
      %v3196 = vpop.f32.mrb[0].mxu0
      %3197 = vmatprep.mubr.f32.mxu0 0.0
      %v3198 = vand.u32 %v2300, 4294901760
      %v3199 = vsub.f32 %v2300, %v3198
      %3200 = vmatmul.mubr.f32.gmra.mrb[0].mxu0 %v3199
      %v3201 = vpop.f32.mrb[0].mxu0
      %v3202 = vadd.f32 %v2921, %v3201
      %v3203 = vpop.f32.mrb[0].mxu0
      %3204 = vmatprep.mubr.f32.mxu0 0.0
      %v3205 = vand.u32 %v2303, 4294901760
      %v3206 = vsub.f32 %v2303, %v3205
      %3207 = vmatmul.mubr.f32.gmra.mrb[0].mxu0 %v3206
      %v3208 = vpop.f32.mrb[0].mxu0
      %v3209 = vadd.f32 %v2927, %v3208
      %v3210 = vpop.f32.mrb[0].mxu0
      %3211 = vmatprep.mubr.f32.mxu0 0.0
      %v3212 = vand.u32 %v2306, 4294901760
      %v3213 = vsub.f32 %v2306, %v3212
      %3214 = vmatmul.mubr.f32.gmra.mrb[0].mxu0 %v3213
      %v3215 = vpop.f32.mrb[0].mxu0
      %v3216 = vadd.f32 %v2933, %v3215
      %v3217 = vpop.f32.mrb[0].mxu0
      %3218 = vmatprep.mubr.f32.mxu0 0.0
      %v3219 = vand.u32 %v2309, 4294901760
      %v3220 = vsub.f32 %v2309, %v3219
      %3221 = vmatmul.mubr.f32.gmra.mrb[0].mxu0 %v3220
      %v3222 = vpop.f32.mrb[0].mxu0
      %v3223 = vadd.f32 %v2939, %v3222
      %v3224 = vpop.f32.mrb[0].mxu0
      %3225 = vmatprep.mubr.f32.mxu0 0.0
      %v3226 = vand.u32 %v2312, 4294901760
      %v3227 = vsub.f32 %v2312, %v3226
      %3228 = vmatmul.mubr.f32.gmra.mrb[0].mxu0 %v3227
      %v3229 = vpop.f32.mrb[0].mxu0
      %v3230 = vadd.f32 %v2945, %v3229
      %v3231 = vpop.f32.mrb[0].mxu0
      %3232 = vmatprep.mubr.f32.mxu0 0.0
      %v3233 = vand.u32 %v2315, 4294901760
      %v3234 = vsub.f32 %v2315, %v3233
      %3235 = vmatmul.mubr.f32.gmra.mrb[0].mxu0 %v3234
      %v3236 = vpop.f32.mrb[0].mxu0
      %v3237 = vadd.f32 %v2951, %v3236
      %v3238 = vpop.f32.mrb[0].mxu0
      %3239 = vmatprep.mubr.f32.mxu0 0.0
      %v3240 = vand.u32 %v2318, 4294901760
      %v3241 = vsub.f32 %v2318, %v3240
      %3242 = vmatmul.mubr.f32.gmra.mrb[0].mxu0 %v3241
      %v3243 = vpop.f32.mrb[0].mxu0
      %v3244 = vadd.f32 %v2957, %v3243
      %v3245 = vpop.f32.mrb[0].mxu0
      %3246 = vmatprep.mubr.f32.mxu0 0.0
      %v3247 = vand.u32 %v2321, 4294901760
      %v3248 = vsub.f32 %v2321, %v3247
      %3249 = vmatmul.mubr.f32.gmra.mrb[0].mxu0 %v3248
      %v3250 = vpop.f32.mrb[0].mxu0
      %v3251 = vadd.f32 %v2963, %v3250
      %v3252 = vpop.f32.mrb[0].mxu0
      %3253 = vmatprep.mubr.f32.mxu0 0.0
      %v3254 = vand.u32 %v2324, 4294901760
      %v3255 = vsub.f32 %v2324, %v3254
      %3256 = vmatmul.mubr.f32.gmra.mrb[0].mxu0 %v3255
      %v3257 = vpop.f32.mrb[0].mxu0
      %v3258 = vadd.f32 %v2969, %v3257
      %v3259 = vpop.f32.mrb[0].mxu0
      %3260 = vmatprep.mubr.f32.mxu0 0.0
      %v3261 = vand.u32 %v2327, 4294901760
      %v3262 = vsub.f32 %v2327, %v3261
      %3263 = vmatmul.mubr.f32.gmra.mrb[0].mxu0 %v3262
      %v3264 = vpop.f32.mrb[0].mxu0
      %v3265 = vadd.f32 %v2975, %v3264
      %v3266 = vpop.f32.mrb[0].mxu0
      %3267 = vmatprep.mubr.f32.mxu0 0.0
      %v3268 = vand.u32 %v2330, 4294901760
      %v3269 = vsub.f32 %v2330, %v3268
      %3270 = vmatmul.mubr.f32.gmra.mrb[0].mxu0 %v3269
      %v3271 = vpop.f32.mrb[0].mxu0
      %v3272 = vadd.f32 %v2981, %v3271
      %v3273 = vpop.f32.mrb[0].mxu0
      %3274 = vdwg.mxu0
      %3275 = vmatprep.subr.mxu0 0.0
      %v3276 = vand.u32 %v2334, 4294901760
      %3277 = vmatpush1.msra.mxu0 %v3276
      %3278 = vmatprep.subr.mxu0 0.0
      %3279 = vmatpush1.msra.mxu0 0.0
      %3280 = vmatprep.subr.mxu0 0.0
      %3281 = vmatpush1.msra.mxu0 0.0
      %3282 = vmatprep.subr.mxu0 0.0
      %3283 = vmatpush1.msra.mxu0 0.0
      %3284 = vmatprep.subr.mxu0 0.0
      %3285 = vmatpush1.msra.mxu0 0.0
      %3286 = vmatprep.subr.mxu0 0.0
      %3287 = vmatpush1.msra.mxu0 0.0
      %3288 = vmatprep.subr.mxu0 0.0
      %3289 = vmatpush1.msra.mxu0 0.0
      %3290 = vmatprep.subr.mxu0 0.0
      %3291 = vmatpush1.msra.mxu0 0.0
      %3292 = vmatprep.subr.mxu0 0.0
      %3293 = vmatpush1.msra.mxu0 0.0
      %3294 = vmatprep.subr.mxu0 0.0
      %3295 = vmatpush1.msra.mxu0 0.0
      %3296 = vmatprep.subr.mxu0 0.0
      %3297 = vmatpush1.msra.mxu0 0.0
      %3298 = vmatprep.subr.mxu0 0.0
      %3299 = vmatpush1.msra.mxu0 0.0
      %3300 = vmatprep.subr.mxu0 0.0
      %3301 = vmatpush1.msra.mxu0 0.0
      %3302 = vmatprep.subr.mxu0 0.0
      %3303 = vmatpush1.msra.mxu0 0.0
      %3304 = vmatprep.subr.mxu0 0.0
      %3305 = vmatpush1.msra.mxu0 0.0
      %3306 = vmatprep.subr.mxu0 0.0
      %3307 = vmatpush1.msra.mxu0 0.0
      %3308 = vmatprep.subr.mxu0 0.0
      %3309 = vmatpush1.msra.mxu0 0.0
      %3310 = vmatprep.subr.mxu0 0.0
      %3311 = vmatpush1.msra.mxu0 0.0
      %3312 = vmatprep.subr.mxu0 0.0
      %3313 = vmatpush1.msra.mxu0 0.0
      %3314 = vmatprep.subr.mxu0 0.0
      %3315 = vmatpush1.msra.mxu0 0.0
      %3316 = vmatprep.subr.mxu0 0.0
      %3317 = vmatpush1.msra.mxu0 0.0
      %3318 = vmatprep.subr.mxu0 0.0
      %3319 = vmatpush1.msra.mxu0 0.0
      %3320 = vmatprep.subr.mxu0 0.0
      %3321 = vmatpush1.msra.mxu0 0.0
      %3322 = vmatprep.subr.mxu0 0.0
      %3323 = vmatpush1.msra.mxu0 0.0
      %3324 = vmatprep.subr.mxu0 0.0
      %3325 = vmatpush1.msra.mxu0 0.0
      %3326 = vmatprep.subr.mxu0 0.0
      %3327 = vmatpush1.msra.mxu0 0.0
      %3328 = vmatprep.subr.mxu0 0.0
      %3329 = vmatpush1.msra.mxu0 0.0
      %3330 = vmatprep.subr.mxu0 0.0
      %3331 = vmatpush1.msra.mxu0 0.0
      %3332 = vmatprep.subr.mxu0 0.0
      %3333 = vmatpush1.msra.mxu0 0.0
      %3334 = vmatprep.subr.mxu0 0.0
      %3335 = vmatpush1.msra.mxu0 0.0
      %3336 = vmatprep.subr.mxu0 0.0
      %3337 = vmatpush1.msra.mxu0 0.0
      %3338 = vmatprep.subr.mxu0 0.0
      %3339 = vmatpush1.msra.mxu0 0.0
      %3340 = vmatprep.mubr.f32.mxu0 0.0
      %v3341 = vand.u32 %v2237, 4294901760
      %v3342 = vsub.f32 %v2237, %v3341
      %v3343 = vand.u32 %v3342, 4294901760
      %3344 = vmatmul.mubr.f32.gmra.mrb[0].mxu0 %v3343
      %v3345 = vpop.f32.mrb[0].mxu0
      %v3346 = vadd.f32 %v3055, %v3345
      %v3347 = vpop.f32.mrb[0].mxu0
      %3348 = vmatprep.mubr.f32.mxu0 0.0
      %v3349 = vand.u32 %v2240, 4294901760
      %v3350 = vsub.f32 %v2240, %v3349
      %v3351 = vand.u32 %v3350, 4294901760
      %3352 = vmatmul.mubr.f32.gmra.mrb[0].mxu0 %v3351
      %v3353 = vpop.f32.mrb[0].mxu0
      %v3354 = vadd.f32 %v3062, %v3353
      %v3355 = vpop.f32.mrb[0].mxu0
      %3356 = vmatprep.mubr.f32.mxu0 0.0
      %v3357 = vand.u32 %v2243, 4294901760
      %v3358 = vsub.f32 %v2243, %v3357
      %v3359 = vand.u32 %v3358, 4294901760
      %3360 = vmatmul.mubr.f32.gmra.mrb[0].mxu0 %v3359
      %v3361 = vpop.f32.mrb[0].mxu0
      %v3362 = vadd.f32 %v3069, %v3361
      %v3363 = vpop.f32.mrb[0].mxu0
      %3364 = vmatprep.mubr.f32.mxu0 0.0
      %v3365 = vand.u32 %v2246, 4294901760
      %v3366 = vsub.f32 %v2246, %v3365
      %v3367 = vand.u32 %v3366, 4294901760
      %3368 = vmatmul.mubr.f32.gmra.mrb[0].mxu0 %v3367
      %v3369 = vpop.f32.mrb[0].mxu0
      %v3370 = vadd.f32 %v3076, %v3369
      %v3371 = vpop.f32.mrb[0].mxu0
      %3372 = vmatprep.mubr.f32.mxu0 0.0
      %v3373 = vand.u32 %v2249, 4294901760
      %v3374 = vsub.f32 %v2249, %v3373
      %v3375 = vand.u32 %v3374, 4294901760
      %3376 = vmatmul.mubr.f32.gmra.mrb[0].mxu0 %v3375
      %v3377 = vpop.f32.mrb[0].mxu0
      %v3378 = vadd.f32 %v3083, %v3377
      %v3379 = vpop.f32.mrb[0].mxu0
      %3380 = vmatprep.mubr.f32.mxu0 0.0
      %v3381 = vand.u32 %v2252, 4294901760
      %v3382 = vsub.f32 %v2252, %v3381
      %v3383 = vand.u32 %v3382, 4294901760
      %3384 = vmatmul.mubr.f32.gmra.mrb[0].mxu0 %v3383
      %v3385 = vpop.f32.mrb[0].mxu0
      %v3386 = vadd.f32 %v3090, %v3385
      %v3387 = vpop.f32.mrb[0].mxu0
      %3388 = vmatprep.mubr.f32.mxu0 0.0
      %v3389 = vand.u32 %v2255, 4294901760
      %v3390 = vsub.f32 %v2255, %v3389
      %v3391 = vand.u32 %v3390, 4294901760
      %3392 = vmatmul.mubr.f32.gmra.mrb[0].mxu0 %v3391
      %v3393 = vpop.f32.mrb[0].mxu0
      %v3394 = vadd.f32 %v3097, %v3393
      %v3395 = vpop.f32.mrb[0].mxu0
      %3396 = vmatprep.mubr.f32.mxu0 0.0
      %v3397 = vand.u32 %v2258, 4294901760
      %v3398 = vsub.f32 %v2258, %v3397
      %v3399 = vand.u32 %v3398, 4294901760
      %3400 = vmatmul.mubr.f32.gmra.mrb[0].mxu0 %v3399
      %v3401 = vpop.f32.mrb[0].mxu0
      %v3402 = vadd.f32 %v3104, %v3401
      %v3403 = vpop.f32.mrb[0].mxu0
      %3404 = vmatprep.mubr.f32.mxu0 0.0
      %v3405 = vand.u32 %v2261, 4294901760
      %v3406 = vsub.f32 %v2261, %v3405
      %v3407 = vand.u32 %v3406, 4294901760
      %3408 = vmatmul.mubr.f32.gmra.mrb[0].mxu0 %v3407
      %v3409 = vpop.f32.mrb[0].mxu0
      %v3410 = vadd.f32 %v3111, %v3409
      %v3411 = vpop.f32.mrb[0].mxu0
      %3412 = vmatprep.mubr.f32.mxu0 0.0
      %v3413 = vand.u32 %v2264, 4294901760
      %v3414 = vsub.f32 %v2264, %v3413
      %v3415 = vand.u32 %v3414, 4294901760
      %3416 = vmatmul.mubr.f32.gmra.mrb[0].mxu0 %v3415
      %v3417 = vpop.f32.mrb[0].mxu0
      %v3418 = vadd.f32 %v3118, %v3417
      %v3419 = vpop.f32.mrb[0].mxu0
      %3420 = vmatprep.mubr.f32.mxu0 0.0
      %v3421 = vand.u32 %v2267, 4294901760
      %v3422 = vsub.f32 %v2267, %v3421
      %v3423 = vand.u32 %v3422, 4294901760
      %3424 = vmatmul.mubr.f32.gmra.mrb[0].mxu0 %v3423
      %v3425 = vpop.f32.mrb[0].mxu0
      %v3426 = vadd.f32 %v3125, %v3425
      %v3427 = vpop.f32.mrb[0].mxu0
      %3428 = vmatprep.mubr.f32.mxu0 0.0
      %v3429 = vand.u32 %v2270, 4294901760
      %v3430 = vsub.f32 %v2270, %v3429
      %v3431 = vand.u32 %v3430, 4294901760
      %3432 = vmatmul.mubr.f32.gmra.mrb[0].mxu0 %v3431
      %v3433 = vpop.f32.mrb[0].mxu0
      %v3434 = vadd.f32 %v3132, %v3433
      %v3435 = vpop.f32.mrb[0].mxu0
      %3436 = vmatprep.mubr.f32.mxu0 0.0
      %v3437 = vand.u32 %v2273, 4294901760
      %v3438 = vsub.f32 %v2273, %v3437
      %v3439 = vand.u32 %v3438, 4294901760
      %3440 = vmatmul.mubr.f32.gmra.mrb[0].mxu0 %v3439
      %v3441 = vpop.f32.mrb[0].mxu0
      %v3442 = vadd.f32 %v3139, %v3441
      %v3443 = vpop.f32.mrb[0].mxu0
      %3444 = vmatprep.mubr.f32.mxu0 0.0
      %v3445 = vand.u32 %v2276, 4294901760
      %v3446 = vsub.f32 %v2276, %v3445
      %v3447 = vand.u32 %v3446, 4294901760
      %3448 = vmatmul.mubr.f32.gmra.mrb[0].mxu0 %v3447
      %v3449 = vpop.f32.mrb[0].mxu0
      %v3450 = vadd.f32 %v3146, %v3449
      %v3451 = vpop.f32.mrb[0].mxu0
      %3452 = vmatprep.mubr.f32.mxu0 0.0
      %v3453 = vand.u32 %v2279, 4294901760
      %v3454 = vsub.f32 %v2279, %v3453
      %v3455 = vand.u32 %v3454, 4294901760
      %3456 = vmatmul.mubr.f32.gmra.mrb[0].mxu0 %v3455
      %v3457 = vpop.f32.mrb[0].mxu0
      %v3458 = vadd.f32 %v3153, %v3457
      %v3459 = vpop.f32.mrb[0].mxu0
      %3460 = vmatprep.mubr.f32.mxu0 0.0
      %v3461 = vand.u32 %v2282, 4294901760
      %v3462 = vsub.f32 %v2282, %v3461
      %v3463 = vand.u32 %v3462, 4294901760
      %3464 = vmatmul.mubr.f32.gmra.mrb[0].mxu0 %v3463
      %v3465 = vpop.f32.mrb[0].mxu0
      %v3466 = vadd.f32 %v3160, %v3465
      %v3467 = vpop.f32.mrb[0].mxu0
      %3468 = vmatprep.mubr.f32.mxu0 0.0
      %v3469 = vand.u32 %v2285, 4294901760
      %v3470 = vsub.f32 %v2285, %v3469
      %v3471 = vand.u32 %v3470, 4294901760
      %3472 = vmatmul.mubr.f32.gmra.mrb[0].mxu0 %v3471
      %v3473 = vpop.f32.mrb[0].mxu0
      %v3474 = vadd.f32 %v3167, %v3473
      %v3475 = vpop.f32.mrb[0].mxu0
      %3476 = vmatprep.mubr.f32.mxu0 0.0
      %v3477 = vand.u32 %v2288, 4294901760
      %v3478 = vsub.f32 %v2288, %v3477
      %v3479 = vand.u32 %v3478, 4294901760
      %3480 = vmatmul.mubr.f32.gmra.mrb[0].mxu0 %v3479
      %v3481 = vpop.f32.mrb[0].mxu0
      %v3482 = vadd.f32 %v3174, %v3481
      %v3483 = vpop.f32.mrb[0].mxu0
      %3484 = vmatprep.mubr.f32.mxu0 0.0
      %v3485 = vand.u32 %v2291, 4294901760
      %v3486 = vsub.f32 %v2291, %v3485
      %v3487 = vand.u32 %v3486, 4294901760
      %3488 = vmatmul.mubr.f32.gmra.mrb[0].mxu0 %v3487
      %v3489 = vpop.f32.mrb[0].mxu0
      %v3490 = vadd.f32 %v3181, %v3489
      %v3491 = vpop.f32.mrb[0].mxu0
      %3492 = vmatprep.mubr.f32.mxu0 0.0
      %v3493 = vand.u32 %v2294, 4294901760
      %v3494 = vsub.f32 %v2294, %v3493
      %v3495 = vand.u32 %v3494, 4294901760
      %3496 = vmatmul.mubr.f32.gmra.mrb[0].mxu0 %v3495
      %v3497 = vpop.f32.mrb[0].mxu0
      %v3498 = vadd.f32 %v3188, %v3497
      %v3499 = vpop.f32.mrb[0].mxu0
      %3500 = vmatprep.mubr.f32.mxu0 0.0
      %v3501 = vand.u32 %v2297, 4294901760
      %v3502 = vsub.f32 %v2297, %v3501
      %v3503 = vand.u32 %v3502, 4294901760
      %3504 = vmatmul.mubr.f32.gmra.mrb[0].mxu0 %v3503
      %v3505 = vpop.f32.mrb[0].mxu0
      %v3506 = vadd.f32 %v3195, %v3505
      %v3507 = vpop.f32.mrb[0].mxu0
      %3508 = vmatprep.mubr.f32.mxu0 0.0
      %v3509 = vand.u32 %v2300, 4294901760
      %v3510 = vsub.f32 %v2300, %v3509
      %v3511 = vand.u32 %v3510, 4294901760
      %3512 = vmatmul.mubr.f32.gmra.mrb[0].mxu0 %v3511
      %v3513 = vpop.f32.mrb[0].mxu0
      %v3514 = vadd.f32 %v3202, %v3513
      %v3515 = vpop.f32.mrb[0].mxu0
      %3516 = vmatprep.mubr.f32.mxu0 0.0
      %v3517 = vand.u32 %v2303, 4294901760
      %v3518 = vsub.f32 %v2303, %v3517
      %v3519 = vand.u32 %v3518, 4294901760
      %3520 = vmatmul.mubr.f32.gmra.mrb[0].mxu0 %v3519
      %v3521 = vpop.f32.mrb[0].mxu0
      %v3522 = vadd.f32 %v3209, %v3521
      %v3523 = vpop.f32.mrb[0].mxu0
      %3524 = vmatprep.mubr.f32.mxu0 0.0
      %v3525 = vand.u32 %v2306, 4294901760
      %v3526 = vsub.f32 %v2306, %v3525
      %v3527 = vand.u32 %v3526, 4294901760
      %3528 = vmatmul.mubr.f32.gmra.mrb[0].mxu0 %v3527
      %v3529 = vpop.f32.mrb[0].mxu0
      %v3530 = vadd.f32 %v3216, %v3529
      %v3531 = vpop.f32.mrb[0].mxu0
      %3532 = vmatprep.mubr.f32.mxu0 0.0
      %v3533 = vand.u32 %v2309, 4294901760
      %v3534 = vsub.f32 %v2309, %v3533
      %v3535 = vand.u32 %v3534, 4294901760
      %3536 = vmatmul.mubr.f32.gmra.mrb[0].mxu0 %v3535
      %v3537 = vpop.f32.mrb[0].mxu0
      %v3538 = vadd.f32 %v3223, %v3537
      %v3539 = vpop.f32.mrb[0].mxu0
      %3540 = vmatprep.mubr.f32.mxu0 0.0
      %v3541 = vand.u32 %v2312, 4294901760
      %v3542 = vsub.f32 %v2312, %v3541
      %v3543 = vand.u32 %v3542, 4294901760
      %3544 = vmatmul.mubr.f32.gmra.mrb[0].mxu0 %v3543
      %v3545 = vpop.f32.mrb[0].mxu0
      %v3546 = vadd.f32 %v3230, %v3545
      %v3547 = vpop.f32.mrb[0].mxu0
      %3548 = vmatprep.mubr.f32.mxu0 0.0
      %v3549 = vand.u32 %v2315, 4294901760
      %v3550 = vsub.f32 %v2315, %v3549
      %v3551 = vand.u32 %v3550, 4294901760
      %3552 = vmatmul.mubr.f32.gmra.mrb[0].mxu0 %v3551
      %v3553 = vpop.f32.mrb[0].mxu0
      %v3554 = vadd.f32 %v3237, %v3553
      %v3555 = vpop.f32.mrb[0].mxu0
      %3556 = vmatprep.mubr.f32.mxu0 0.0
      %v3557 = vand.u32 %v2318, 4294901760
      %v3558 = vsub.f32 %v2318, %v3557
      %v3559 = vand.u32 %v3558, 4294901760
      %3560 = vmatmul.mubr.f32.gmra.mrb[0].mxu0 %v3559
      %v3561 = vpop.f32.mrb[0].mxu0
      %v3562 = vadd.f32 %v3244, %v3561
      %v3563 = vpop.f32.mrb[0].mxu0
      %3564 = vmatprep.mubr.f32.mxu0 0.0
      %v3565 = vand.u32 %v2321, 4294901760
      %v3566 = vsub.f32 %v2321, %v3565
      %v3567 = vand.u32 %v3566, 4294901760
      %3568 = vmatmul.mubr.f32.gmra.mrb[0].mxu0 %v3567
      %v3569 = vpop.f32.mrb[0].mxu0
      %v3570 = vadd.f32 %v3251, %v3569
      %v3571 = vpop.f32.mrb[0].mxu0
      %3572 = vmatprep.mubr.f32.mxu0 0.0
      %v3573 = vand.u32 %v2324, 4294901760
      %v3574 = vsub.f32 %v2324, %v3573
      %v3575 = vand.u32 %v3574, 4294901760
      %3576 = vmatmul.mubr.f32.gmra.mrb[0].mxu0 %v3575
      %v3577 = vpop.f32.mrb[0].mxu0
      %v3578 = vadd.f32 %v3258, %v3577
      %v3579 = vpop.f32.mrb[0].mxu0
      %3580 = vmatprep.mubr.f32.mxu0 0.0
      %v3581 = vand.u32 %v2327, 4294901760
      %v3582 = vsub.f32 %v2327, %v3581
      %v3583 = vand.u32 %v3582, 4294901760
      %3584 = vmatmul.mubr.f32.gmra.mrb[0].mxu0 %v3583
      %v3585 = vpop.f32.mrb[0].mxu0
      %v3586 = vadd.f32 %v3265, %v3585
      %v3587 = vpop.f32.mrb[0].mxu0
      %3588 = vmatprep.mubr.f32.mxu0 0.0
      %v3589 = vand.u32 %v2330, 4294901760
      %v3590 = vsub.f32 %v2330, %v3589
      %v3591 = vand.u32 %v3590, 4294901760
      %3592 = vmatmul.mubr.f32.gmra.mrb[0].mxu0 %v3591
      %v3593 = vpop.f32.mrb[0].mxu0
      %v3594 = vadd.f32 %v3272, %v3593
      %v3595 = vpop.f32.mrb[0].mxu0
      %3596 = vdwg.mxu0
      %3597 = vmatprep.subr.mxu0 0.0
      %v3598 = vand.u32 %v2334, 4294901760
      %v3599 = vsub.f32 %v2334, %v3598
      %v3600 = vand.u32 %v3599, 4294901760
      %3601 = vmatpush1.msra.mxu0 %v3600
      %3602 = vmatprep.subr.mxu0 0.0
      %3603 = vmatpush1.msra.mxu0 0.0
      %3604 = vmatprep.subr.mxu0 0.0
      %3605 = vmatpush1.msra.mxu0 0.0
      %3606 = vmatprep.subr.mxu0 0.0
      %3607 = vmatpush1.msra.mxu0 0.0
      %3608 = vmatprep.subr.mxu0 0.0
      %3609 = vmatpush1.msra.mxu0 0.0
      %3610 = vmatprep.subr.mxu0 0.0
      %3611 = vmatpush1.msra.mxu0 0.0
      %3612 = vmatprep.subr.mxu0 0.0
      %3613 = vmatpush1.msra.mxu0 0.0
      %3614 = vmatprep.subr.mxu0 0.0
      %3615 = vmatpush1.msra.mxu0 0.0
      %3616 = vmatprep.subr.mxu0 0.0
      %3617 = vmatpush1.msra.mxu0 0.0
      %3618 = vmatprep.subr.mxu0 0.0
      %3619 = vmatpush1.msra.mxu0 0.0
      %3620 = vmatprep.subr.mxu0 0.0
      %3621 = vmatpush1.msra.mxu0 0.0
      %3622 = vmatprep.subr.mxu0 0.0
      %3623 = vmatpush1.msra.mxu0 0.0
      %3624 = vmatprep.subr.mxu0 0.0
      %3625 = vmatpush1.msra.mxu0 0.0
      %3626 = vmatprep.subr.mxu0 0.0
      %3627 = vmatpush1.msra.mxu0 0.0
      %3628 = vmatprep.subr.mxu0 0.0
      %3629 = vmatpush1.msra.mxu0 0.0
      %3630 = vmatprep.subr.mxu0 0.0
      %3631 = vmatpush1.msra.mxu0 0.0
      %3632 = vmatprep.subr.mxu0 0.0
      %3633 = vmatpush1.msra.mxu0 0.0
      %3634 = vmatprep.subr.mxu0 0.0
      %3635 = vmatpush1.msra.mxu0 0.0
      %3636 = vmatprep.subr.mxu0 0.0
      %3637 = vmatpush1.msra.mxu0 0.0
      %3638 = vmatprep.subr.mxu0 0.0
      %3639 = vmatpush1.msra.mxu0 0.0
      %3640 = vmatprep.subr.mxu0 0.0
      %3641 = vmatpush1.msra.mxu0 0.0
      %3642 = vmatprep.subr.mxu0 0.0
      %3643 = vmatpush1.msra.mxu0 0.0
      %3644 = vmatprep.subr.mxu0 0.0
      %3645 = vmatpush1.msra.mxu0 0.0
      %3646 = vmatprep.subr.mxu0 0.0
      %3647 = vmatpush1.msra.mxu0 0.0
      %3648 = vmatprep.subr.mxu0 0.0
      %3649 = vmatpush1.msra.mxu0 0.0
      %3650 = vmatprep.subr.mxu0 0.0
      %3651 = vmatpush1.msra.mxu0 0.0
      %3652 = vmatprep.subr.mxu0 0.0
      %3653 = vmatpush1.msra.mxu0 0.0
      %3654 = vmatprep.subr.mxu0 0.0
      %3655 = vmatpush1.msra.mxu0 0.0
      %3656 = vmatprep.subr.mxu0 0.0
      %3657 = vmatpush1.msra.mxu0 0.0
      %3658 = vmatprep.subr.mxu0 0.0
      %3659 = vmatpush1.msra.mxu0 0.0
      %3660 = vmatprep.subr.mxu0 0.0
      %3661 = vmatpush1.msra.mxu0 0.0
      %3662 = vmatprep.subr.mxu0 0.0
      %3663 = vmatpush1.msra.mxu0 0.0
      %3664 = vmatprep.mubr.f32.mxu0 0.0
      %v3665 = vand.u32 %v2237, 4294901760
      %3666 = vmatmul.mubr.f32.gmra.mrb[0].mxu0 %v3665
      %v3667 = vpop.f32.mrb[0].mxu0
      %v3668 = vadd.f32 %v3346, %v3667
      %v3669 = vpop.f32.mrb[0].mxu0
      %3670 = vmatprep.mubr.f32.mxu0 0.0
      %v3671 = vand.u32 %v2240, 4294901760
      %3672 = vmatmul.mubr.f32.gmra.mrb[0].mxu0 %v3671
      %v3673 = vpop.f32.mrb[0].mxu0
      %v3674 = vadd.f32 %v3354, %v3673
      %v3675 = vpop.f32.mrb[0].mxu0
      %3676 = vmatprep.mubr.f32.mxu0 0.0
      %v3677 = vand.u32 %v2243, 4294901760
      %3678 = vmatmul.mubr.f32.gmra.mrb[0].mxu0 %v3677
      %v3679 = vpop.f32.mrb[0].mxu0
      %v3680 = vadd.f32 %v3362, %v3679
      %v3681 = vpop.f32.mrb[0].mxu0
      %3682 = vmatprep.mubr.f32.mxu0 0.0
      %v3683 = vand.u32 %v2246, 4294901760
      %3684 = vmatmul.mubr.f32.gmra.mrb[0].mxu0 %v3683
      %v3685 = vpop.f32.mrb[0].mxu0
      %v3686 = vadd.f32 %v3370, %v3685
      %v3687 = vpop.f32.mrb[0].mxu0
      %3688 = vmatprep.mubr.f32.mxu0 0.0
      %v3689 = vand.u32 %v2249, 4294901760
      %3690 = vmatmul.mubr.f32.gmra.mrb[0].mxu0 %v3689
      %v3691 = vpop.f32.mrb[0].mxu0
      %v3692 = vadd.f32 %v3378, %v3691
      %v3693 = vpop.f32.mrb[0].mxu0
      %3694 = vmatprep.mubr.f32.mxu0 0.0
      %v3695 = vand.u32 %v2252, 4294901760
      %3696 = vmatmul.mubr.f32.gmra.mrb[0].mxu0 %v3695
      %v3697 = vpop.f32.mrb[0].mxu0
      %v3698 = vadd.f32 %v3386, %v3697
      %v3699 = vpop.f32.mrb[0].mxu0
      %3700 = vmatprep.mubr.f32.mxu0 0.0
      %v3701 = vand.u32 %v2255, 4294901760
      %3702 = vmatmul.mubr.f32.gmra.mrb[0].mxu0 %v3701
      %v3703 = vpop.f32.mrb[0].mxu0
      %v3704 = vadd.f32 %v3394, %v3703
      %v3705 = vpop.f32.mrb[0].mxu0
      %3706 = vmatprep.mubr.f32.mxu0 0.0
      %v3707 = vand.u32 %v2258, 4294901760
      %3708 = vmatmul.mubr.f32.gmra.mrb[0].mxu0 %v3707
      %v3709 = vpop.f32.mrb[0].mxu0
      %v3710 = vadd.f32 %v3402, %v3709
      %v3711 = vpop.f32.mrb[0].mxu0
      %3712 = vmatprep.mubr.f32.mxu0 0.0
      %v3713 = vand.u32 %v2261, 4294901760
      %3714 = vmatmul.mubr.f32.gmra.mrb[0].mxu0 %v3713
      %v3715 = vpop.f32.mrb[0].mxu0
      %v3716 = vadd.f32 %v3410, %v3715
      %v3717 = vpop.f32.mrb[0].mxu0
      %3718 = vmatprep.mubr.f32.mxu0 0.0
      %v3719 = vand.u32 %v2264, 4294901760
      %3720 = vmatmul.mubr.f32.gmra.mrb[0].mxu0 %v3719
      %v3721 = vpop.f32.mrb[0].mxu0
      %v3722 = vadd.f32 %v3418, %v3721
      %v3723 = vpop.f32.mrb[0].mxu0
      %3724 = vmatprep.mubr.f32.mxu0 0.0
      %v3725 = vand.u32 %v2267, 4294901760
      %3726 = vmatmul.mubr.f32.gmra.mrb[0].mxu0 %v3725
      %v3727 = vpop.f32.mrb[0].mxu0
      %v3728 = vadd.f32 %v3426, %v3727
      %v3729 = vpop.f32.mrb[0].mxu0
      %3730 = vmatprep.mubr.f32.mxu0 0.0
      %v3731 = vand.u32 %v2270, 4294901760
      %3732 = vmatmul.mubr.f32.gmra.mrb[0].mxu0 %v3731
      %v3733 = vpop.f32.mrb[0].mxu0
      %v3734 = vadd.f32 %v3434, %v3733
      %v3735 = vpop.f32.mrb[0].mxu0
      %3736 = vmatprep.mubr.f32.mxu0 0.0
      %v3737 = vand.u32 %v2273, 4294901760
      %3738 = vmatmul.mubr.f32.gmra.mrb[0].mxu0 %v3737
      %v3739 = vpop.f32.mrb[0].mxu0
      %v3740 = vadd.f32 %v3442, %v3739
      %v3741 = vpop.f32.mrb[0].mxu0
      %3742 = vmatprep.mubr.f32.mxu0 0.0
      %v3743 = vand.u32 %v2276, 4294901760
      %3744 = vmatmul.mubr.f32.gmra.mrb[0].mxu0 %v3743
      %v3745 = vpop.f32.mrb[0].mxu0
      %v3746 = vadd.f32 %v3450, %v3745
      %v3747 = vpop.f32.mrb[0].mxu0
      %3748 = vmatprep.mubr.f32.mxu0 0.0
      %v3749 = vand.u32 %v2279, 4294901760
      %3750 = vmatmul.mubr.f32.gmra.mrb[0].mxu0 %v3749
      %v3751 = vpop.f32.mrb[0].mxu0
      %v3752 = vadd.f32 %v3458, %v3751
      %v3753 = vpop.f32.mrb[0].mxu0
      %3754 = vmatprep.mubr.f32.mxu0 0.0
      %v3755 = vand.u32 %v2282, 4294901760
      %3756 = vmatmul.mubr.f32.gmra.mrb[0].mxu0 %v3755
      %v3757 = vpop.f32.mrb[0].mxu0
      %v3758 = vadd.f32 %v3466, %v3757
      %v3759 = vpop.f32.mrb[0].mxu0
      %3760 = vmatprep.mubr.f32.mxu0 0.0
      %v3761 = vand.u32 %v2285, 4294901760
      %3762 = vmatmul.mubr.f32.gmra.mrb[0].mxu0 %v3761
      %v3763 = vpop.f32.mrb[0].mxu0
      %v3764 = vadd.f32 %v3474, %v3763
      %v3765 = vpop.f32.mrb[0].mxu0
      %3766 = vmatprep.mubr.f32.mxu0 0.0
      %v3767 = vand.u32 %v2288, 4294901760
      %3768 = vmatmul.mubr.f32.gmra.mrb[0].mxu0 %v3767
      %v3769 = vpop.f32.mrb[0].mxu0
      %v3770 = vadd.f32 %v3482, %v3769
      %v3771 = vpop.f32.mrb[0].mxu0
      %3772 = vmatprep.mubr.f32.mxu0 0.0
      %v3773 = vand.u32 %v2291, 4294901760
      %3774 = vmatmul.mubr.f32.gmra.mrb[0].mxu0 %v3773
      %v3775 = vpop.f32.mrb[0].mxu0
      %v3776 = vadd.f32 %v3490, %v3775
      %v3777 = vpop.f32.mrb[0].mxu0
      %3778 = vmatprep.mubr.f32.mxu0 0.0
      %v3779 = vand.u32 %v2294, 4294901760
      %3780 = vmatmul.mubr.f32.gmra.mrb[0].mxu0 %v3779
      %v3781 = vpop.f32.mrb[0].mxu0
      %v3782 = vadd.f32 %v3498, %v3781
      %v3783 = vpop.f32.mrb[0].mxu0
      %3784 = vmatprep.mubr.f32.mxu0 0.0
      %v3785 = vand.u32 %v2297, 4294901760
      %3786 = vmatmul.mubr.f32.gmra.mrb[0].mxu0 %v3785
      %v3787 = vpop.f32.mrb[0].mxu0
      %v3788 = vadd.f32 %v3506, %v3787
      %v3789 = vpop.f32.mrb[0].mxu0
      %3790 = vmatprep.mubr.f32.mxu0 0.0
      %v3791 = vand.u32 %v2300, 4294901760
      %3792 = vmatmul.mubr.f32.gmra.mrb[0].mxu0 %v3791
      %v3793 = vpop.f32.mrb[0].mxu0
      %v3794 = vadd.f32 %v3514, %v3793
      %v3795 = vpop.f32.mrb[0].mxu0
      %3796 = vmatprep.mubr.f32.mxu0 0.0
      %v3797 = vand.u32 %v2303, 4294901760
      %3798 = vmatmul.mubr.f32.gmra.mrb[0].mxu0 %v3797
      %v3799 = vpop.f32.mrb[0].mxu0
      %v3800 = vadd.f32 %v3522, %v3799
      %v3801 = vpop.f32.mrb[0].mxu0
      %3802 = vmatprep.mubr.f32.mxu0 0.0
      %v3803 = vand.u32 %v2306, 4294901760
      %3804 = vmatmul.mubr.f32.gmra.mrb[0].mxu0 %v3803
      %v3805 = vpop.f32.mrb[0].mxu0
      %v3806 = vadd.f32 %v3530, %v3805
      %v3807 = vpop.f32.mrb[0].mxu0
      %3808 = vmatprep.mubr.f32.mxu0 0.0
      %v3809 = vand.u32 %v2309, 4294901760
      %3810 = vmatmul.mubr.f32.gmra.mrb[0].mxu0 %v3809
      %v3811 = vpop.f32.mrb[0].mxu0
      %v3812 = vadd.f32 %v3538, %v3811
      %v3813 = vpop.f32.mrb[0].mxu0
      %3814 = vmatprep.mubr.f32.mxu0 0.0
      %v3815 = vand.u32 %v2312, 4294901760
      %3816 = vmatmul.mubr.f32.gmra.mrb[0].mxu0 %v3815
      %v3817 = vpop.f32.mrb[0].mxu0
      %v3818 = vadd.f32 %v3546, %v3817
      %v3819 = vpop.f32.mrb[0].mxu0
      %3820 = vmatprep.mubr.f32.mxu0 0.0
      %v3821 = vand.u32 %v2315, 4294901760
      %3822 = vmatmul.mubr.f32.gmra.mrb[0].mxu0 %v3821
      %v3823 = vpop.f32.mrb[0].mxu0
      %v3824 = vadd.f32 %v3554, %v3823
      %v3825 = vpop.f32.mrb[0].mxu0
      %3826 = vmatprep.mubr.f32.mxu0 0.0
      %v3827 = vand.u32 %v2318, 4294901760
      %3828 = vmatmul.mubr.f32.gmra.mrb[0].mxu0 %v3827
      %v3829 = vpop.f32.mrb[0].mxu0
      %v3830 = vadd.f32 %v3562, %v3829
      %v3831 = vpop.f32.mrb[0].mxu0
      %3832 = vmatprep.mubr.f32.mxu0 0.0
      %v3833 = vand.u32 %v2321, 4294901760
      %3834 = vmatmul.mubr.f32.gmra.mrb[0].mxu0 %v3833
      %v3835 = vpop.f32.mrb[0].mxu0
      %v3836 = vadd.f32 %v3570, %v3835
      %v3837 = vpop.f32.mrb[0].mxu0
      %3838 = vmatprep.mubr.f32.mxu0 0.0
      %v3839 = vand.u32 %v2324, 4294901760
      %3840 = vmatmul.mubr.f32.gmra.mrb[0].mxu0 %v3839
      %v3841 = vpop.f32.mrb[0].mxu0
      %v3842 = vadd.f32 %v3578, %v3841
      %v3843 = vpop.f32.mrb[0].mxu0
      %3844 = vmatprep.mubr.f32.mxu0 0.0
      %v3845 = vand.u32 %v2327, 4294901760
      %3846 = vmatmul.mubr.f32.gmra.mrb[0].mxu0 %v3845
      %v3847 = vpop.f32.mrb[0].mxu0
      %v3848 = vadd.f32 %v3586, %v3847
      %v3849 = vpop.f32.mrb[0].mxu0
      %3850 = vmatprep.mubr.f32.mxu0 0.0
      %v3851 = vand.u32 %v2330, 4294901760
      %3852 = vmatmul.mubr.f32.gmra.mrb[0].mxu0 %v3851
      %v3853 = vpop.f32.mrb[0].mxu0
      %v3854 = vadd.f32 %v3594, %v3853
      %v3855 = vpop.f32.mrb[0].mxu0
      %3856 = vdwg.mxu0
      %3857 = vmatprep.subr.mxu0 0.0
      %v3858 = vand.u32 %v2334, 4294901760
      %3859 = vmatpush1.msra.mxu0 %v3858
      %3860 = vmatprep.subr.mxu0 0.0
      %3861 = vmatpush1.msra.mxu0 0.0
      %3862 = vmatprep.subr.mxu0 0.0
      %3863 = vmatpush1.msra.mxu0 0.0
      %3864 = vmatprep.subr.mxu0 0.0
      %3865 = vmatpush1.msra.mxu0 0.0
      %3866 = vmatprep.subr.mxu0 0.0
      %3867 = vmatpush1.msra.mxu0 0.0
      %3868 = vmatprep.subr.mxu0 0.0
      %3869 = vmatpush1.msra.mxu0 0.0
      %3870 = vmatprep.subr.mxu0 0.0
      %3871 = vmatpush1.msra.mxu0 0.0
      %3872 = vmatprep.subr.mxu0 0.0
      %3873 = vmatpush1.msra.mxu0 0.0
      %3874 = vmatprep.subr.mxu0 0.0
      %3875 = vmatpush1.msra.mxu0 0.0
      %3876 = vmatprep.subr.mxu0 0.0
      %3877 = vmatpush1.msra.mxu0 0.0
      %3878 = vmatprep.subr.mxu0 0.0
      %3879 = vmatpush1.msra.mxu0 0.0
      %3880 = vmatprep.subr.mxu0 0.0
      %3881 = vmatpush1.msra.mxu0 0.0
      %3882 = vmatprep.subr.mxu0 0.0
      %3883 = vmatpush1.msra.mxu0 0.0
      %3884 = vmatprep.subr.mxu0 0.0
      %3885 = vmatpush1.msra.mxu0 0.0
      %3886 = vmatprep.subr.mxu0 0.0
      %3887 = vmatpush1.msra.mxu0 0.0
      %3888 = vmatprep.subr.mxu0 0.0
      %3889 = vmatpush1.msra.mxu0 0.0
      %3890 = vmatprep.subr.mxu0 0.0
      %3891 = vmatpush1.msra.mxu0 0.0
      %3892 = vmatprep.subr.mxu0 0.0
      %3893 = vmatpush1.msra.mxu0 0.0
      %3894 = vmatprep.subr.mxu0 0.0
      %3895 = vmatpush1.msra.mxu0 0.0
      %3896 = vmatprep.subr.mxu0 0.0
      %3897 = vmatpush1.msra.mxu0 0.0
      %3898 = vmatprep.subr.mxu0 0.0
      %3899 = vmatpush1.msra.mxu0 0.0
      %3900 = vmatprep.subr.mxu0 0.0
      %3901 = vmatpush1.msra.mxu0 0.0
      %3902 = vmatprep.subr.mxu0 0.0
      %3903 = vmatpush1.msra.mxu0 0.0
      %3904 = vmatprep.subr.mxu0 0.0
      %3905 = vmatpush1.msra.mxu0 0.0
      %3906 = vmatprep.subr.mxu0 0.0
      %3907 = vmatpush1.msra.mxu0 0.0
      %3908 = vmatprep.subr.mxu0 0.0
      %3909 = vmatpush1.msra.mxu0 0.0
      %3910 = vmatprep.subr.mxu0 0.0
      %3911 = vmatpush1.msra.mxu0 0.0
      %3912 = vmatprep.subr.mxu0 0.0
      %3913 = vmatpush1.msra.mxu0 0.0
      %3914 = vmatprep.subr.mxu0 0.0
      %3915 = vmatpush1.msra.mxu0 0.0
      %3916 = vmatprep.subr.mxu0 0.0
      %3917 = vmatpush1.msra.mxu0 0.0
      %3918 = vmatprep.subr.mxu0 0.0
      %3919 = vmatpush1.msra.mxu0 0.0
      %3920 = vmatprep.subr.mxu0 0.0
      %3921 = vmatpush1.msra.mxu0 0.0
      %3922 = vmatprep.mubr.f32.mxu0 0.0
      %v3923 = vand.u32 %v2237, 4294901760
      %3924 = vmatmul.mubr.f32.gmra.mrb[0].mxu0 %v3923
      %v3925 = vpop.f32.mrb[0].mxu0
      %v3926 = vadd.f32 %v3668, %v3925
      %v3927 = vpop.f32.mrb[0].mxu0
      %3928 = vmatprep.mubr.f32.mxu0 0.0
      %v3929 = vand.u32 %v2240, 4294901760
      %3930 = vmatmul.mubr.f32.gmra.mrb[0].mxu0 %v3929
      %v3931 = vpop.f32.mrb[0].mxu0
      %v3932 = vadd.f32 %v3674, %v3931
      %v3933 = vpop.f32.mrb[0].mxu0
      %3934 = vmatprep.mubr.f32.mxu0 0.0
      %v3935 = vand.u32 %v2243, 4294901760
      %3936 = vmatmul.mubr.f32.gmra.mrb[0].mxu0 %v3935
      %v3937 = vpop.f32.mrb[0].mxu0
      %v3938 = vadd.f32 %v3680, %v3937
      %v3939 = vpop.f32.mrb[0].mxu0
      %3940 = vmatprep.mubr.f32.mxu0 0.0
      %v3941 = vand.u32 %v2246, 4294901760
      %3942 = vmatmul.mubr.f32.gmra.mrb[0].mxu0 %v3941
      %v3943 = vpop.f32.mrb[0].mxu0
      %v3944 = vadd.f32 %v3686, %v3943
      %v3945 = vpop.f32.mrb[0].mxu0
      %3946 = vmatprep.mubr.f32.mxu0 0.0
      %v3947 = vand.u32 %v2249, 4294901760
      %3948 = vmatmul.mubr.f32.gmra.mrb[0].mxu0 %v3947
      %v3949 = vpop.f32.mrb[0].mxu0
      %v3950 = vadd.f32 %v3692, %v3949
      %v3951 = vpop.f32.mrb[0].mxu0
      %3952 = vmatprep.mubr.f32.mxu0 0.0
      %v3953 = vand.u32 %v2252, 4294901760
      %3954 = vmatmul.mubr.f32.gmra.mrb[0].mxu0 %v3953
      %v3955 = vpop.f32.mrb[0].mxu0
      %v3956 = vadd.f32 %v3698, %v3955
      %v3957 = vpop.f32.mrb[0].mxu0
      %3958 = vmatprep.mubr.f32.mxu0 0.0
      %v3959 = vand.u32 %v2255, 4294901760
      %3960 = vmatmul.mubr.f32.gmra.mrb[0].mxu0 %v3959
      %v3961 = vpop.f32.mrb[0].mxu0
      %v3962 = vadd.f32 %v3704, %v3961
      %v3963 = vpop.f32.mrb[0].mxu0
      %3964 = vmatprep.mubr.f32.mxu0 0.0
      %v3965 = vand.u32 %v2258, 4294901760
      %3966 = vmatmul.mubr.f32.gmra.mrb[0].mxu0 %v3965
      %v3967 = vpop.f32.mrb[0].mxu0
      %v3968 = vadd.f32 %v3710, %v3967
      %v3969 = vpop.f32.mrb[0].mxu0
      %3970 = vmatprep.mubr.f32.mxu0 0.0
      %v3971 = vand.u32 %v2261, 4294901760
      %3972 = vmatmul.mubr.f32.gmra.mrb[0].mxu0 %v3971
      %v3973 = vpop.f32.mrb[0].mxu0
      %v3974 = vadd.f32 %v3716, %v3973
      %v3975 = vpop.f32.mrb[0].mxu0
      %3976 = vmatprep.mubr.f32.mxu0 0.0
      %v3977 = vand.u32 %v2264, 4294901760
      %3978 = vmatmul.mubr.f32.gmra.mrb[0].mxu0 %v3977
      %v3979 = vpop.f32.mrb[0].mxu0
      %v3980 = vadd.f32 %v3722, %v3979
      %v3981 = vpop.f32.mrb[0].mxu0
      %3982 = vmatprep.mubr.f32.mxu0 0.0
      %v3983 = vand.u32 %v2267, 4294901760
      %3984 = vmatmul.mubr.f32.gmra.mrb[0].mxu0 %v3983
      %v3985 = vpop.f32.mrb[0].mxu0
      %v3986 = vadd.f32 %v3728, %v3985
      %v3987 = vpop.f32.mrb[0].mxu0
      %3988 = vmatprep.mubr.f32.mxu0 0.0
      %v3989 = vand.u32 %v2270, 4294901760
      %3990 = vmatmul.mubr.f32.gmra.mrb[0].mxu0 %v3989
      %v3991 = vpop.f32.mrb[0].mxu0
      %v3992 = vadd.f32 %v3734, %v3991
      %v3993 = vpop.f32.mrb[0].mxu0
      %3994 = vmatprep.mubr.f32.mxu0 0.0
      %v3995 = vand.u32 %v2273, 4294901760
      %3996 = vmatmul.mubr.f32.gmra.mrb[0].mxu0 %v3995
      %v3997 = vpop.f32.mrb[0].mxu0
      %v3998 = vadd.f32 %v3740, %v3997
      %v3999 = vpop.f32.mrb[0].mxu0
      %4000 = vmatprep.mubr.f32.mxu0 0.0
      %v4001 = vand.u32 %v2276, 4294901760
      %4002 = vmatmul.mubr.f32.gmra.mrb[0].mxu0 %v4001
      %v4003 = vpop.f32.mrb[0].mxu0
      %v4004 = vadd.f32 %v3746, %v4003
      %v4005 = vpop.f32.mrb[0].mxu0
      %4006 = vmatprep.mubr.f32.mxu0 0.0
      %v4007 = vand.u32 %v2279, 4294901760
      %4008 = vmatmul.mubr.f32.gmra.mrb[0].mxu0 %v4007
      %v4009 = vpop.f32.mrb[0].mxu0
      %v4010 = vadd.f32 %v3752, %v4009
      %v4011 = vpop.f32.mrb[0].mxu0
      %4012 = vmatprep.mubr.f32.mxu0 0.0
      %v4013 = vand.u32 %v2282, 4294901760
      %4014 = vmatmul.mubr.f32.gmra.mrb[0].mxu0 %v4013
      %v4015 = vpop.f32.mrb[0].mxu0
      %v4016 = vadd.f32 %v3758, %v4015
      %v4017 = vpop.f32.mrb[0].mxu0
      %4018 = vmatprep.mubr.f32.mxu0 0.0
      %v4019 = vand.u32 %v2285, 4294901760
      %4020 = vmatmul.mubr.f32.gmra.mrb[0].mxu0 %v4019
      %v4021 = vpop.f32.mrb[0].mxu0
      %v4022 = vadd.f32 %v3764, %v4021
      %v4023 = vpop.f32.mrb[0].mxu0
      %4024 = vmatprep.mubr.f32.mxu0 0.0
      %v4025 = vand.u32 %v2288, 4294901760
      %4026 = vmatmul.mubr.f32.gmra.mrb[0].mxu0 %v4025
      %v4027 = vpop.f32.mrb[0].mxu0
      %v4028 = vadd.f32 %v3770, %v4027
      %v4029 = vpop.f32.mrb[0].mxu0
      %4030 = vmatprep.mubr.f32.mxu0 0.0
      %v4031 = vand.u32 %v2291, 4294901760
      %4032 = vmatmul.mubr.f32.gmra.mrb[0].mxu0 %v4031
      %v4033 = vpop.f32.mrb[0].mxu0
      %v4034 = vadd.f32 %v3776, %v4033
      %v4035 = vpop.f32.mrb[0].mxu0
      %4036 = vmatprep.mubr.f32.mxu0 0.0
      %v4037 = vand.u32 %v2294, 4294901760
      %4038 = vmatmul.mubr.f32.gmra.mrb[0].mxu0 %v4037
      %v4039 = vpop.f32.mrb[0].mxu0
      %v4040 = vadd.f32 %v3782, %v4039
      %v4041 = vpop.f32.mrb[0].mxu0
      %4042 = vmatprep.mubr.f32.mxu0 0.0
      %v4043 = vand.u32 %v2297, 4294901760
      %4044 = vmatmul.mubr.f32.gmra.mrb[0].mxu0 %v4043
      %v4045 = vpop.f32.mrb[0].mxu0
      %v4046 = vadd.f32 %v3788, %v4045
      %v4047 = vpop.f32.mrb[0].mxu0
      %4048 = vmatprep.mubr.f32.mxu0 0.0
      %v4049 = vand.u32 %v2300, 4294901760
      %4050 = vmatmul.mubr.f32.gmra.mrb[0].mxu0 %v4049
      %v4051 = vpop.f32.mrb[0].mxu0
      %v4052 = vadd.f32 %v3794, %v4051
      %v4053 = vpop.f32.mrb[0].mxu0
      %4054 = vmatprep.mubr.f32.mxu0 0.0
      %v4055 = vand.u32 %v2303, 4294901760
      %4056 = vmatmul.mubr.f32.gmra.mrb[0].mxu0 %v4055
      %v4057 = vpop.f32.mrb[0].mxu0
      %v4058 = vadd.f32 %v3800, %v4057
      %v4059 = vpop.f32.mrb[0].mxu0
      %4060 = vmatprep.mubr.f32.mxu0 0.0
      %v4061 = vand.u32 %v2306, 4294901760
      %4062 = vmatmul.mubr.f32.gmra.mrb[0].mxu0 %v4061
      %v4063 = vpop.f32.mrb[0].mxu0
      %v4064 = vadd.f32 %v3806, %v4063
      %v4065 = vpop.f32.mrb[0].mxu0
      %4066 = vmatprep.mubr.f32.mxu0 0.0
      %v4067 = vand.u32 %v2309, 4294901760
      %4068 = vmatmul.mubr.f32.gmra.mrb[0].mxu0 %v4067
      %v4069 = vpop.f32.mrb[0].mxu0
      %v4070 = vadd.f32 %v3812, %v4069
      %v4071 = vpop.f32.mrb[0].mxu0
      %4072 = vmatprep.mubr.f32.mxu0 0.0
      %v4073 = vand.u32 %v2312, 4294901760
      %4074 = vmatmul.mubr.f32.gmra.mrb[0].mxu0 %v4073
      %v4075 = vpop.f32.mrb[0].mxu0
      %v4076 = vadd.f32 %v3818, %v4075
      %v4077 = vpop.f32.mrb[0].mxu0
      %4078 = vmatprep.mubr.f32.mxu0 0.0
      %v4079 = vand.u32 %v2315, 4294901760
      %4080 = vmatmul.mubr.f32.gmra.mrb[0].mxu0 %v4079
      %v4081 = vpop.f32.mrb[0].mxu0
      %v4082 = vadd.f32 %v3824, %v4081
      %v4083 = vpop.f32.mrb[0].mxu0
      %4084 = vmatprep.mubr.f32.mxu0 0.0
      %v4085 = vand.u32 %v2318, 4294901760
      %4086 = vmatmul.mubr.f32.gmra.mrb[0].mxu0 %v4085
      %v4087 = vpop.f32.mrb[0].mxu0
      %v4088 = vadd.f32 %v3830, %v4087
      %v4089 = vpop.f32.mrb[0].mxu0
      %4090 = vmatprep.mubr.f32.mxu0 0.0
      %v4091 = vand.u32 %v2321, 4294901760
      %4092 = vmatmul.mubr.f32.gmra.mrb[0].mxu0 %v4091
      %v4093 = vpop.f32.mrb[0].mxu0
      %v4094 = vadd.f32 %v3836, %v4093
      %v4095 = vpop.f32.mrb[0].mxu0
      %4096 = vmatprep.mubr.f32.mxu0 0.0
      %v4097 = vand.u32 %v2324, 4294901760
      %4098 = vmatmul.mubr.f32.gmra.mrb[0].mxu0 %v4097
      %v4099 = vpop.f32.mrb[0].mxu0
      %v4100 = vadd.f32 %v3842, %v4099
      %v4101 = vpop.f32.mrb[0].mxu0
      %4102 = vmatprep.mubr.f32.mxu0 0.0
      %v4103 = vand.u32 %v2327, 4294901760
      %4104 = vmatmul.mubr.f32.gmra.mrb[0].mxu0 %v4103
      %v4105 = vpop.f32.mrb[0].mxu0
      %v4106 = vadd.f32 %v3848, %v4105
      %v4107 = vpop.f32.mrb[0].mxu0
      %4108 = vmatprep.mubr.f32.mxu0 0.0
      %v4109 = vand.u32 %v2330, 4294901760
      %4110 = vmatmul.mubr.f32.gmra.mrb[0].mxu0 %v4109
      %v4111 = vpop.f32.mrb[0].mxu0
      %v4112 = vadd.f32 %v3854, %v4111
      %v4113 = vpop.f32.mrb[0].mxu0
      %4114 = vdwg.mxu0
      %v4115 = vmul.f32 %v3926, 0.5
      %v4116 = vmul.f32 %v3932, 0.5
      %v4117 = vmul.f32 %v3938, 0.5
      %v4118 = vmul.f32 %v3944, 0.5
      %v4119 = vmul.f32 %v3950, 0.5
      %v4120 = vmul.f32 %v3956, 0.5
      %v4121 = vmul.f32 %v3962, 0.5
      %v4122 = vmul.f32 %v3968, 0.5
      %v4123 = vmul.f32 %v3974, 0.5
      %v4124 = vmul.f32 %v3980, 0.5
      %v4125 = vmul.f32 %v3986, 0.5
      %v4126 = vmul.f32 %v3992, 0.5
      %v4127 = vmul.f32 %v3998, 0.5
      %v4128 = vmul.f32 %v4004, 0.5
      %v4129 = vmul.f32 %v4010, 0.5
      %v4130 = vmul.f32 %v4016, 0.5
      %v4131 = vmul.f32 %v4022, 0.5
      %v4132 = vmul.f32 %v4028, 0.5
      %v4133 = vmul.f32 %v4034, 0.5
      %v4134 = vmul.f32 %v4040, 0.5
      %v4135 = vmul.f32 %v4046, 0.5
      %v4136 = vmul.f32 %v4052, 0.5
      %v4137 = vmul.f32 %v4058, 0.5
      %v4138 = vmul.f32 %v4064, 0.5
      %v4139 = vmul.f32 %v4070, 0.5
      %v4140 = vmul.f32 %v4076, 0.5
      %v4141 = vmul.f32 %v4082, 0.5
      %v4142 = vmul.f32 %v4088, 0.5
      %v4143 = vmul.f32 %v4094, 0.5
      %v4144 = vmul.f32 %v4100, 0.5
      %v4145 = vmul.f32 %v4106, 0.5
      %v4146 = vmul.f32 %v4112, 0.5
      %v4147 = vtanh.pop %v4115
      %v4148 = vtanh.pop %v4116
      %v4149 = vtanh.pop %v4117
      %v4150 = vtanh.pop %v4118
      %v4151 = vtanh.pop %v4119
      %v4152 = vtanh.pop %v4120
      %v4153 = vtanh.pop %v4121
      %v4154 = vtanh.pop %v4122
      %v4155 = vtanh.pop %v4123
      %v4156 = vtanh.pop %v4124
      %v4157 = vtanh.pop %v4125
      %v4158 = vtanh.pop %v4126
      %v4159 = vtanh.pop %v4127
      %v4160 = vtanh.pop %v4128
      %v4161 = vtanh.pop %v4129
      %v4162 = vtanh.pop %v4130
      %v4163 = vtanh.pop %v4131
      %v4164 = vtanh.pop %v4132
      %v4165 = vtanh.pop %v4133
      %v4166 = vtanh.pop %v4134
      %v4167 = vtanh.pop %v4135
      %v4168 = vtanh.pop %v4136
      %v4169 = vtanh.pop %v4137
      %v4170 = vtanh.pop %v4138
      %v4171 = vtanh.pop %v4139
      %v4172 = vtanh.pop %v4140
      %v4173 = vtanh.pop %v4141
      %v4174 = vtanh.pop %v4142
      %v4175 = vtanh.pop %v4143
      %v4176 = vtanh.pop %v4144
      %v4177 = vtanh.pop %v4145
      %v4178 = vtanh.pop %v4146
      %v4179 = vld [vmem:[%s271] sm:$0xff]
      %v4180 = vld [vmem:[%s271 + $0x8] sm:$0xff]
      %v4181 = vld [vmem:[%s271 + $0x10] sm:$0xff]
      %v4182 = vld [vmem:[%s271 + $0x18] sm:$0xff]
      %v4183 = vld [vmem:[%s271 + $0x20] sm:$0xff]
      %v4184 = vld [vmem:[%s271 + $0x28] sm:$0xff]
      %v4185 = vld [vmem:[%s271 + $0x30] sm:$0xff]
      %v4186 = vld [vmem:[%s271 + $0x38] sm:$0xff]
      %v4187 = vld [vmem:[%s271 + $0x40] sm:$0xff]
      %v4188 = vld [vmem:[%s271 + $0x48] sm:$0xff]
      %v4189 = vld [vmem:[%s271 + $0x50] sm:$0xff]
      %v4190 = vld [vmem:[%s271 + $0x58] sm:$0xff]
      %v4191 = vld [vmem:[%s271 + $0x60] sm:$0xff]
      %v4192 = vld [vmem:[%s271 + $0x68] sm:$0xff]
      %v4193 = vld [vmem:[%s271 + $0x70] sm:$0xff]
      %v4194 = vld [vmem:[%s271 + $0x78] sm:$0xff]
      %v4195 = vld [vmem:[%s271 + $0x80] sm:$0xff]
      %v4196 = vld [vmem:[%s271 + $0x88] sm:$0xff]
      %v4197 = vld [vmem:[%s271 + $0x90] sm:$0xff]
      %v4198 = vld [vmem:[%s271 + $0x98] sm:$0xff]
      %v4199 = vld [vmem:[%s271 + $0xa0] sm:$0xff]
      %v4200 = vld [vmem:[%s271 + $0xa8] sm:$0xff]
      %v4201 = vld [vmem:[%s271 + $0xb0] sm:$0xff]
      %v4202 = vld [vmem:[%s271 + $0xb8] sm:$0xff]
      %v4203 = vld [vmem:[%s271 + $0xc0] sm:$0xff]
      %v4204 = vld [vmem:[%s271 + $0xc8] sm:$0xff]
      %v4205 = vld [vmem:[%s271 + $0xd0] sm:$0xff]
      %v4206 = vld [vmem:[%s271 + $0xd8] sm:$0xff]
      %v4207 = vld [vmem:[%s271 + $0xe0] sm:$0xff]
      %v4208 = vld [vmem:[%s271 + $0xe8] sm:$0xff]
      %v4209 = vld [vmem:[%s271 + $0xf0] sm:$0xff]
      %v4210 = vld [vmem:[%s271 + $0xf8] sm:$0xff]
      %vm4211 = vcmp.ge.f32.partialorder %v4147, %v4179
      %vm4212 = vcmp.ge.f32.partialorder %v4148, %v4180
      %vm4213 = vcmp.ge.f32.partialorder %v4149, %v4181
      %vm4214 = vcmp.ge.f32.partialorder %v4150, %v4182
      %vm4215 = vcmp.ge.f32.partialorder %v4151, %v4183
      %vm4216 = vcmp.ge.f32.partialorder %v4152, %v4184
      %vm4217 = vcmp.ge.f32.partialorder %v4153, %v4185
      %vm4218 = vcmp.ge.f32.partialorder %v4154, %v4186
      %vm4219 = vcmp.ge.f32.partialorder %v4155, %v4187
      %vm4220 = vcmp.ge.f32.partialorder %v4156, %v4188
      %vm4221 = vcmp.ge.f32.partialorder %v4157, %v4189
      %vm4222 = vcmp.ge.f32.partialorder %v4158, %v4190
      %vm4223 = vcmp.ge.f32.partialorder %v4159, %v4191
      %vm4224 = vcmp.ge.f32.partialorder %v4160, %v4192
      %vm4225 = vcmp.ge.f32.partialorder %v4161, %v4193
      %vm4226 = vcmp.ge.f32.partialorder %v4162, %v4194
      %vm4227 = vcmp.ge.f32.partialorder %v4163, %v4195
      %vm4228 = vcmp.ge.f32.partialorder %v4164, %v4196
      %vm4229 = vcmp.ge.f32.partialorder %v4165, %v4197
      %vm4230 = vcmp.ge.f32.partialorder %v4166, %v4198
      %vm4231 = vcmp.ge.f32.partialorder %v4167, %v4199
      %vm4232 = vcmp.ge.f32.partialorder %v4168, %v4200
      %vm4233 = vcmp.ge.f32.partialorder %v4169, %v4201
      %vm4234 = vcmp.ge.f32.partialorder %v4170, %v4202
      %vm4235 = vcmp.ge.f32.partialorder %v4171, %v4203
      %vm4236 = vcmp.ge.f32.partialorder %v4172, %v4204
      %vm4237 = vcmp.ge.f32.partialorder %v4173, %v4205
      %vm4238 = vcmp.ge.f32.partialorder %v4174, %v4206
      %vm4239 = vcmp.ge.f32.partialorder %v4175, %v4207
      %vm4240 = vcmp.ge.f32.partialorder %v4176, %v4208
      %vm4241 = vcmp.ge.f32.partialorder %v4177, %v4209
      %vm4242 = vcmp.ge.f32.partialorder %v4178, %v4210
      %v4243 = vsel %vm4211, 1, 0
      %v4244 = vsel %vm4212, 1, 0
      %v4245 = vsel %vm4213, 1, 0
      %v4246 = vsel %vm4214, 1, 0
      %v4247 = vsel %vm4215, 1, 0
      %v4248 = vsel %vm4216, 1, 0
      %v4249 = vsel %vm4217, 1, 0
      %v4250 = vsel %vm4218, 1, 0
      %v4251 = vsel %vm4219, 1, 0
      %v4252 = vsel %vm4220, 1, 0
      %v4253 = vsel %vm4221, 1, 0
      %v4254 = vsel %vm4222, 1, 0
      %v4255 = vsel %vm4223, 1, 0
      %v4256 = vsel %vm4224, 1, 0
      %v4257 = vsel %vm4225, 1, 0
      %v4258 = vsel %vm4226, 1, 0
      %v4259 = vsel %vm4227, 1, 0
      %v4260 = vsel %vm4228, 1, 0
      %v4261 = vsel %vm4229, 1, 0
      %v4262 = vsel %vm4230, 1, 0
      %v4263 = vsel %vm4231, 1, 0
      %v4264 = vsel %vm4232, 1, 0
      %v4265 = vsel %vm4233, 1, 0
      %v4266 = vsel %vm4234, 1, 0
      %v4267 = vsel %vm4235, 1, 0
      %v4268 = vsel %vm4236, 1, 0
      %v4269 = vsel %vm4237, 1, 0
      %v4270 = vsel %vm4238, 1, 0
      %v4271 = vsel %vm4239, 1, 0
      %v4272 = vsel %vm4240, 1, 0
      %v4273 = vsel %vm4241, 1, 0
      %v4274 = vsel %vm4242, 1, 0
      %v4275 = vcvt.s32.f32 %v4243
      %v4276 = vcvt.s32.f32 %v4244
      %v4277 = vcvt.s32.f32 %v4245
      %v4278 = vcvt.s32.f32 %v4246
      %v4279 = vcvt.s32.f32 %v4247
      %v4280 = vcvt.s32.f32 %v4248
      %v4281 = vcvt.s32.f32 %v4249
      %v4282 = vcvt.s32.f32 %v4250
      %v4283 = vcvt.s32.f32 %v4251
      %v4284 = vcvt.s32.f32 %v4252
      %v4285 = vcvt.s32.f32 %v4253
      %v4286 = vcvt.s32.f32 %v4254
      %v4287 = vcvt.s32.f32 %v4255
      %v4288 = vcvt.s32.f32 %v4256
      %v4289 = vcvt.s32.f32 %v4257
      %v4290 = vcvt.s32.f32 %v4258
      %v4291 = vcvt.s32.f32 %v4259
      %v4292 = vcvt.s32.f32 %v4260
      %v4293 = vcvt.s32.f32 %v4261
      %v4294 = vcvt.s32.f32 %v4262
      %v4295 = vcvt.s32.f32 %v4263
      %v4296 = vcvt.s32.f32 %v4264
      %v4297 = vcvt.s32.f32 %v4265
      %v4298 = vcvt.s32.f32 %v4266
      %v4299 = vcvt.s32.f32 %v4267
      %v4300 = vcvt.s32.f32 %v4268
      %v4301 = vcvt.s32.f32 %v4269
      %v4302 = vcvt.s32.f32 %v4270
      %v4303 = vcvt.s32.f32 %v4271
      %v4304 = vcvt.s32.f32 %v4272
      %v4305 = vcvt.s32.f32 %v4273
      %v4306 = vcvt.s32.f32 %v4274
      %vm4307 = vcmask 7168
      %4308 = vst.msk [vmem:[%s277] sm:$0xff] %vm4307, %v4275
      %4309 = vst.msk [vmem:[%s277 + $0x8] sm:$0xff] %vm4307, %v4276
      %4310 = vst.msk [vmem:[%s277 + $0x10] sm:$0xff] %vm4307, %v4277
      %4311 = vst.msk [vmem:[%s277 + $0x18] sm:$0xff] %vm4307, %v4278
      %4312 = vst.msk [vmem:[%s277 + $0x20] sm:$0xff] %vm4307, %v4279
      %4313 = vst.msk [vmem:[%s277 + $0x28] sm:$0xff] %vm4307, %v4280
      %4314 = vst.msk [vmem:[%s277 + $0x30] sm:$0xff] %vm4307, %v4281
      %4315 = vst.msk [vmem:[%s277 + $0x38] sm:$0xff] %vm4307, %v4282
      %4316 = vst.msk [vmem:[%s277 + $0x40] sm:$0xff] %vm4307, %v4283
      %4317 = vst.msk [vmem:[%s277 + $0x48] sm:$0xff] %vm4307, %v4284
      %4318 = vst.msk [vmem:[%s277 + $0x50] sm:$0xff] %vm4307, %v4285
      %4319 = vst.msk [vmem:[%s277 + $0x58] sm:$0xff] %vm4307, %v4286
      %4320 = vst.msk [vmem:[%s277 + $0x60] sm:$0xff] %vm4307, %v4287
      %4321 = vst.msk [vmem:[%s277 + $0x68] sm:$0xff] %vm4307, %v4288
      %4322 = vst.msk [vmem:[%s277 + $0x70] sm:$0xff] %vm4307, %v4289
      %4323 = vst.msk [vmem:[%s277 + $0x78] sm:$0xff] %vm4307, %v4290
      %4324 = vst.msk [vmem:[%s277 + $0x80] sm:$0xff] %vm4307, %v4291
      %4325 = vst.msk [vmem:[%s277 + $0x88] sm:$0xff] %vm4307, %v4292
      %4326 = vst.msk [vmem:[%s277 + $0x90] sm:$0xff] %vm4307, %v4293
      %4327 = vst.msk [vmem:[%s277 + $0x98] sm:$0xff] %vm4307, %v4294
      %4328 = vst.msk [vmem:[%s277 + $0xa0] sm:$0xff] %vm4307, %v4295
      %4329 = vst.msk [vmem:[%s277 + $0xa8] sm:$0xff] %vm4307, %v4296
      %4330 = vst.msk [vmem:[%s277 + $0xb0] sm:$0xff] %vm4307, %v4297
      %4331 = vst.msk [vmem:[%s277 + $0xb8] sm:$0xff] %vm4307, %v4298
      %4332 = vst.msk [vmem:[%s277 + $0xc0] sm:$0xff] %vm4307, %v4299
      %4333 = vst.msk [vmem:[%s277 + $0xc8] sm:$0xff] %vm4307, %v4300
      %4334 = vst.msk [vmem:[%s277 + $0xd0] sm:$0xff] %vm4307, %v4301
      %4335 = vst.msk [vmem:[%s277 + $0xd8] sm:$0xff] %vm4307, %v4302
      %4336 = vst.msk [vmem:[%s277 + $0xe0] sm:$0xff] %vm4307, %v4303
      %4337 = vst.msk [vmem:[%s277 + $0xe8] sm:$0xff] %vm4307, %v4304
      %4338 = vst.msk [vmem:[%s277 + $0xf0] sm:$0xff] %vm4307, %v4305
      %4339 = vst.msk [vmem:[%s277 + $0xf8] sm:$0xff] %vm4307, %v4306
      %s4340 = smul.u32 32, %s19
      %p4341 = scmp.lt.s32.totalorder %s4340, 63
      %s4342 = scalar_select %p4341, %s4340, 63
      %s4343 = smul.addr %s4342, 8
      %s4344 = scalar_lea.vmem %s6, %s4343
      // Predicated region
      $region45: #{mask_forward.4} parent=43 // pred_check
        %p4345 = pneg %p173
      $region46: #{mask_forward.4} parent=43 // pred_check_branch
        %4347 = sbr.rel (%p4345) target = $region48
      $region47: #{mask_forward.4} parent=43 // pred_region
        %s4348 = smul.u32 32, %s19
      $region48: #{mask_forward.4} parent=43 // pred_fallthru
        _
    $region44: #{mask_forward.4} parent=5 // pred_fallthru
      _
    %p4349 = scmp.le.s32.totalorder 2, %s14
    // Predicated region
    $region49: #{mask_forward.4} parent=5 // pred_check
      %p4350 = pneg %p4349
    $region50: #{mask_forward.4} parent=5 // pred_check_branch
      %4352 = sbr.rel (%p4350) target = $region52
    $region51: #{mask_forward.4} parent=5 // pred_region
      %s4353 = ssub.s32 %s14, 2
      // Predicated region
      $region53: #{mask_forward.4} parent=51 // pred_check
        %p4354 = pneg %p179
      $region54: #{mask_forward.4} parent=51 // pred_check_branch
        %4356 = sbr.rel (%p4354) target = $region56
      $region55: #{mask_forward.4} parent=51 // pred_region
        %s4357 = smul.u32 32, %s20
        %p4358 = scmp.lt.s32.totalorder %s4357, 63
        %s4359 = scalar_select %p4358, %s4357, 63
        %s4360 = smul.addr %s4359, 8
        %s4361 = scalar_lea.vmem %s6, %s4360
      $region56: #{mask_forward.4} parent=51 // pred_fallthru
        _
    $region52: #{mask_forward.4} parent=5 // pred_fallthru
      _
  $region6: #{mask_forward.4} parent=0 // loop_footer
    %s18 = sadd.s32 1, %s14
  $region7: #{mask_forward.4} parent=0 // loop_footer_branch
    %13 = sbr.rel target = $region3
  $region8: #{mask_forward.4} parent=0 // loop_exit
    _

// kernel: mask_forward.5
$region0: #{mask_forward.5}
  #allocation0 [shape = 'u32[]', space=smem, size = 0x4, offset = 0x4, fixed_abs, tag = 'smem constant byte address 0x4 - core index']
  #allocation1 [shape = 'u32[144,128]{1,0:T(1,128)}', space=vmem, size = 0x12000, scoped, tag = 'internal scratch']
  %s0 = inlined_call_operand.vmem [shape: f32[2,32,256], index: 0, kind: input, shape index: {}]
  %s1 = inlined_call_operand.vmem [shape: f32[256,32], index: 1, kind: input, shape index: {}]
  %s2 = inlined_call_operand.vmem [shape: f32[8,32], index: 2, kind: input, shape index: {}]
  %s3 = inlined_call_operand.vmem [shape: f32[8,1], index: 3, kind: input, shape index: {}]
  %s4 = inlined_call_operand.vmem [shape: f32[32,8], index: 4, kind: input, shape index: {}]
  %s5 = inlined_call_operand.vmem [shape: f32[32,1], index: 5, kind: input, shape index: {}]
  %s6 = inlined_call_operand.vmem [shape: f32[32,8], index: 6, kind: input, shape index: {}]
  %s7 = inlined_call_operand.vmem [shape: f32[32,1], index: 7, kind: input, shape index: {}]
  %s8 = inlined_call_operand.vmem [shape: f32[2,32,256], index: 8, kind: output, shape index: {}]
  %s9 = sld [smem:[#allocation0]]
  $region65: #{mask_forward.5} parent=0
    _
  %s11 = ssub.s32 1, %s9
  %s12 = scalar_select 0, %s11, %s9
  loop: start=0, step=1, limit=4
  $region2: #{mask_forward.5} parent=0 // loop_pre_header
    _
  $region3: #{mask_forward.5} parent=0 // loop_header
    %s14 = sphi 0, %s18
    %p15 = scmp.ge.s32.totalorder %s14, 4
    %s24 = sphi 0, %s26
    %s27 = sphi 0, %s24
    %s28 = sphi 0, %s27
    %s44 = sphi 0, %s28
    %s48 = sphi 0, %s48
    %s50 = sphi 0, %s48
    %s51 = sphi 0, %s50
    %s65 = sphi 0, %s51
    %s69 = sphi 0, %s69
    %s71 = sphi 0, %s69
    %s72 = sphi 0, %s71
    %s86 = sphi 0, %s72
    %s90 = sphi 0, %s90
    %s92 = sphi 0, %s90
    %s93 = sphi 0, %s92
    %s107 = sphi 0, %s93
    %s111 = sphi 0, %s111
    %s113 = sphi 0, %s111
    %s114 = sphi 0, %s113
    %s128 = sphi 0, %s114
    %s132 = sphi 0, %s132
    %s134 = sphi 0, %s132
    %s135 = sphi 0, %s134
    %s149 = sphi 0, %s135
    %s153 = sphi 0, %s153
    %s155 = sphi 0, %s153
    %s156 = sphi 0, %s155
    %s170 = sphi 0, %s156
    %s174 = sphi 0, %s174
    %s176 = sphi 0, %s174
    %s177 = sphi 0, %s176
    %s191 = sphi 0, %s177
    %s197 = sphi 0, %s199
    %s200 = sphi 0, %s197
    %s201 = sphi 0, %s200
    %s217 = sphi 0, %s201
  $region4: #{mask_forward.5} parent=0 // loop_header_branch
    %17 = sbr.rel (%p15) target = $region8
  $region5: #{mask_forward.5} parent=0 // loop_body
    %s19 = ssub.s32 %s14, 1
    %s20 = ssub.s32 %s14, 2
    %s21 = sadd.s32 %s14, 1
    %s22 = ssub.s32 %s14, %s21
    %p23 = scmp.eq.s32.totalorder %s22, 0
    %s25 = sadd.s32 %s24, 1
    %s26 = scalar_select %p23, %s24, %s25
    %p29 = pneg %p23
    %p30 = scmp.eq.s32.totalorder %s14, 1
    %p31 = por %p29, %p30
    %p32 = scmp.ne.s32.totalorder %s24, %s27
    %p33 = scmp.eq.s32.totalorder %s14, 0
    %p34 = por %p32, %p33
    %p35 = scmp.ne.s32.totalorder %s24, %s27
    %p36 = scmp.eq.s32.totalorder %s19, 1
    %p37 = por %p35, %p36
    %p38 = scmp.ne.s32.totalorder %s27, %s28
    %p39 = scmp.eq.s32.totalorder %s19, 0
    %p40 = por %p38, %p39
    %p41 = scmp.ne.s32.totalorder %s27, %s28
    %p42 = scmp.eq.s32.totalorder %s20, 1
    %p43 = por %p41, %p42
    %p45 = scmp.ne.s32.totalorder %s28, %s44
    %p46 = scmp.eq.s32.totalorder %s20, 0
    %p47 = por %p45, %p46
    %s49 = sadd.s32 %s48, 1
    %p52 = scmp.eq.s32.totalorder %s14, 1
    %p53 = scmp.ne.s32.totalorder %s48, %s50
    %p54 = scmp.eq.s32.totalorder %s14, 0
    %p55 = por %p53, %p54
    %p56 = scmp.ne.s32.totalorder %s48, %s50
    %p57 = scmp.eq.s32.totalorder %s19, 1
    %p58 = por %p56, %p57
    %p59 = scmp.ne.s32.totalorder %s50, %s51
    %p60 = scmp.eq.s32.totalorder %s19, 0
    %p61 = por %p59, %p60
    %p62 = scmp.ne.s32.totalorder %s50, %s51
    %p63 = scmp.eq.s32.totalorder %s20, 1
    %p64 = por %p62, %p63
    %p66 = scmp.ne.s32.totalorder %s51, %s65
    %p67 = scmp.eq.s32.totalorder %s20, 0
    %p68 = por %p66, %p67
    %s70 = sadd.s32 %s69, 1
    %p73 = scmp.eq.s32.totalorder %s14, 1
    %p74 = scmp.ne.s32.totalorder %s69, %s71
    %p75 = scmp.eq.s32.totalorder %s14, 0
    %p76 = por %p74, %p75
    %p77 = scmp.ne.s32.totalorder %s69, %s71
    %p78 = scmp.eq.s32.totalorder %s19, 1
    %p79 = por %p77, %p78
    %p80 = scmp.ne.s32.totalorder %s71, %s72
    %p81 = scmp.eq.s32.totalorder %s19, 0
    %p82 = por %p80, %p81
    %p83 = scmp.ne.s32.totalorder %s71, %s72
    %p84 = scmp.eq.s32.totalorder %s20, 1
    %p85 = por %p83, %p84
    %p87 = scmp.ne.s32.totalorder %s72, %s86
    %p88 = scmp.eq.s32.totalorder %s20, 0
    %p89 = por %p87, %p88
    %s91 = sadd.s32 %s90, 1
    %p94 = scmp.eq.s32.totalorder %s14, 1
    %p95 = scmp.ne.s32.totalorder %s90, %s92
    %p96 = scmp.eq.s32.totalorder %s14, 0
    %p97 = por %p95, %p96
    %p98 = scmp.ne.s32.totalorder %s90, %s92
    %p99 = scmp.eq.s32.totalorder %s19, 1
    %p100 = por %p98, %p99
    %p101 = scmp.ne.s32.totalorder %s92, %s93
    %p102 = scmp.eq.s32.totalorder %s19, 0
    %p103 = por %p101, %p102
    %p104 = scmp.ne.s32.totalorder %s92, %s93
    %p105 = scmp.eq.s32.totalorder %s20, 1
    %p106 = por %p104, %p105
    %p108 = scmp.ne.s32.totalorder %s93, %s107
    %p109 = scmp.eq.s32.totalorder %s20, 0
    %p110 = por %p108, %p109
    %s112 = sadd.s32 %s111, 1
    %p115 = scmp.eq.s32.totalorder %s14, 1
    %p116 = scmp.ne.s32.totalorder %s111, %s113
    %p117 = scmp.eq.s32.totalorder %s14, 0
    %p118 = por %p116, %p117
    %p119 = scmp.ne.s32.totalorder %s111, %s113
    %p120 = scmp.eq.s32.totalorder %s19, 1
    %p121 = por %p119, %p120
    %p122 = scmp.ne.s32.totalorder %s113, %s114
    %p123 = scmp.eq.s32.totalorder %s19, 0
    %p124 = por %p122, %p123
    %p125 = scmp.ne.s32.totalorder %s113, %s114
    %p126 = scmp.eq.s32.totalorder %s20, 1
    %p127 = por %p125, %p126
    %p129 = scmp.ne.s32.totalorder %s114, %s128
    %p130 = scmp.eq.s32.totalorder %s20, 0
    %p131 = por %p129, %p130
    %s133 = sadd.s32 %s132, 1
    %p136 = scmp.eq.s32.totalorder %s14, 1
    %p137 = scmp.ne.s32.totalorder %s132, %s134
    %p138 = scmp.eq.s32.totalorder %s14, 0
    %p139 = por %p137, %p138
    %p140 = scmp.ne.s32.totalorder %s132, %s134
    %p141 = scmp.eq.s32.totalorder %s19, 1
    %p142 = por %p140, %p141
    %p143 = scmp.ne.s32.totalorder %s134, %s135
    %p144 = scmp.eq.s32.totalorder %s19, 0
    %p145 = por %p143, %p144
    %p146 = scmp.ne.s32.totalorder %s134, %s135
    %p147 = scmp.eq.s32.totalorder %s20, 1
    %p148 = por %p146, %p147
    %p150 = scmp.ne.s32.totalorder %s135, %s149
    %p151 = scmp.eq.s32.totalorder %s20, 0
    %p152 = por %p150, %p151
    %s154 = sadd.s32 %s153, 1
    %p157 = scmp.eq.s32.totalorder %s14, 1
    %p158 = scmp.ne.s32.totalorder %s153, %s155
    %p159 = scmp.eq.s32.totalorder %s14, 0
    %p160 = por %p158, %p159
    %p161 = scmp.ne.s32.totalorder %s153, %s155
    %p162 = scmp.eq.s32.totalorder %s19, 1
    %p163 = por %p161, %p162
    %p164 = scmp.ne.s32.totalorder %s155, %s156
    %p165 = scmp.eq.s32.totalorder %s19, 0
    %p166 = por %p164, %p165
    %p167 = scmp.ne.s32.totalorder %s155, %s156
    %p168 = scmp.eq.s32.totalorder %s20, 1
    %p169 = por %p167, %p168
    %p171 = scmp.ne.s32.totalorder %s156, %s170
    %p172 = scmp.eq.s32.totalorder %s20, 0
    %p173 = por %p171, %p172
    %s175 = sadd.s32 %s174, 1
    %p178 = scmp.eq.s32.totalorder %s14, 1
    %p179 = scmp.ne.s32.totalorder %s174, %s176
    %p180 = scmp.eq.s32.totalorder %s14, 0
    %p181 = por %p179, %p180
    %p182 = scmp.ne.s32.totalorder %s174, %s176
    %p183 = scmp.eq.s32.totalorder %s19, 1
    %p184 = por %p182, %p183
    %p185 = scmp.ne.s32.totalorder %s176, %s177
    %p186 = scmp.eq.s32.totalorder %s19, 0
    %p187 = por %p185, %p186
    %p188 = scmp.ne.s32.totalorder %s176, %s177
    %p189 = scmp.eq.s32.totalorder %s20, 1
    %p190 = por %p188, %p189
    %p192 = scmp.ne.s32.totalorder %s177, %s191
    %p193 = scmp.eq.s32.totalorder %s20, 0
    %p194 = por %p192, %p193
    %s195 = ssub.s32 %s14, %s21
    %p196 = scmp.eq.s32.totalorder %s195, 0
    %s198 = sadd.s32 %s197, 1
    %s199 = scalar_select %p196, %s197, %s198
    %p202 = pneg %p196
    %p203 = scmp.eq.s32.totalorder %s14, 1
    %p204 = por %p202, %p203
    %p205 = scmp.ne.s32.totalorder %s197, %s200
    %p206 = scmp.eq.s32.totalorder %s14, 0
    %p207 = por %p205, %p206
    %p208 = scmp.ne.s32.totalorder %s197, %s200
    %p209 = scmp.eq.s32.totalorder %s19, 1
    %p210 = por %p208, %p209
    %p211 = scmp.ne.s32.totalorder %s200, %s201
    %p212 = scmp.eq.s32.totalorder %s19, 0
    %p213 = por %p211, %p212
    %p214 = scmp.ne.s32.totalorder %s200, %s201
    %p215 = scmp.eq.s32.totalorder %s20, 1
    %p216 = por %p214, %p215
    %p218 = scmp.ne.s32.totalorder %s201, %s217
    %p219 = scmp.eq.s32.totalorder %s20, 0
    %p220 = por %p218, %p219
    %p221 = scmp.le.s32.totalorder 1, %s14
    %p222 = scmp.lt.s32.totalorder %s14, 3
    %p223 = pnand %p221, %p222
    %p224 = pneg %p223
    // Predicated region
    $region9: #{mask_forward.5} parent=5 // pred_check
      _
    $region10: #{mask_forward.5} parent=5 // pred_check_branch
      %226 = sbr.rel (%p223) target = $region12
    $region11: #{mask_forward.5} parent=5 // pred_region
      %s227 = ssub.s32 %s14, 1
      // Predicated region
      $region13: #{mask_forward.5} parent=11 // pred_check
        %p228 = pneg %p61
      $region14: #{mask_forward.5} parent=11 // pred_check_branch
        %230 = sbr.rel (%p228) target = $region16
      $region15: #{mask_forward.5} parent=11 // pred_region
        _
      $region16: #{mask_forward.5} parent=11 // pred_fallthru
        _
      // Predicated region
      $region17: #{mask_forward.5} parent=11 // pred_check
        %p231 = pneg %p82
      $region18: #{mask_forward.5} parent=11 // pred_check_branch
        %233 = sbr.rel (%p231) target = $region20
      $region19: #{mask_forward.5} parent=11 // pred_region
        _
      $region20: #{mask_forward.5} parent=11 // pred_fallthru
        _
      // Predicated region
      $region21: #{mask_forward.5} parent=11 // pred_check
        %p234 = pneg %p103
      $region22: #{mask_forward.5} parent=11 // pred_check_branch
        %236 = sbr.rel (%p234) target = $region24
      $region23: #{mask_forward.5} parent=11 // pred_region
        _
      $region24: #{mask_forward.5} parent=11 // pred_fallthru
        _
      // Predicated region
      $region25: #{mask_forward.5} parent=11 // pred_check
        %p237 = pneg %p124
      $region26: #{mask_forward.5} parent=11 // pred_check_branch
        %239 = sbr.rel (%p237) target = $region28
      $region27: #{mask_forward.5} parent=11 // pred_region
        _
      $region28: #{mask_forward.5} parent=11 // pred_fallthru
        _
      // Predicated region
      $region29: #{mask_forward.5} parent=11 // pred_check
        %p240 = pneg %p145
      $region30: #{mask_forward.5} parent=11 // pred_check_branch
        %242 = sbr.rel (%p240) target = $region32
      $region31: #{mask_forward.5} parent=11 // pred_region
        _
      $region32: #{mask_forward.5} parent=11 // pred_fallthru
        _
      // Predicated region
      $region33: #{mask_forward.5} parent=11 // pred_check
        %p243 = pneg %p166
      $region34: #{mask_forward.5} parent=11 // pred_check_branch
        %245 = sbr.rel (%p243) target = $region36
      $region35: #{mask_forward.5} parent=11 // pred_region
        _
      $region36: #{mask_forward.5} parent=11 // pred_fallthru
        _
      // Predicated region
      $region37: #{mask_forward.5} parent=11 // pred_check
        %p246 = pneg %p187
      $region38: #{mask_forward.5} parent=11 // pred_check_branch
        %248 = sbr.rel (%p246) target = $region40
      $region39: #{mask_forward.5} parent=11 // pred_region
        _
      $region40: #{mask_forward.5} parent=11 // pred_fallthru
        _
    $region12: #{mask_forward.5} parent=5 // pred_fallthru
      _
    %p249 = scmp.lt.s32.totalorder %s14, 2
    // Predicated region
    $region41: #{mask_forward.5} parent=5 // pred_check
      %p250 = pneg %p249
    $region42: #{mask_forward.5} parent=5 // pred_check_branch
      %252 = sbr.rel (%p250) target = $region44
    $region43: #{mask_forward.5} parent=5 // pred_region
      // Predicated region
      $region45: #{mask_forward.5} parent=43 // pred_check
        %p253 = pneg %p34
      $region46: #{mask_forward.5} parent=43 // pred_check_branch
        %255 = sbr.rel (%p253) target = $region48
      $region47: #{mask_forward.5} parent=43 // pred_region
        %p256 = scmp.lt.s32.totalorder %s14, 1
        %s257 = scalar_select %p256, %s14, 1
        %s258 = smul.addr %s257, 8
        %s259 = smul.addr %s258, 8
        %s260 = scalar_lea.vmem %s0, %s259
      $region48: #{mask_forward.5} parent=43 // pred_fallthru
        _
    $region44: #{mask_forward.5} parent=5 // pred_fallthru
      _
    %p261 = scmp.le.s32.totalorder 1, %s14
    %p262 = scmp.lt.s32.totalorder %s14, 3
    %p263 = pnand %p261, %p262
    %p264 = pneg %p263
    // Predicated region
    $region49: #{mask_forward.5} parent=5 // pred_check
      _
    $region50: #{mask_forward.5} parent=5 // pred_check_branch
      %266 = sbr.rel (%p263) target = $region52
    $region51: #{mask_forward.5} parent=5 // pred_region
      %s267 = ssub.s32 %s14, 1
      %p268 = scmp.lt.s32.totalorder %s19, 1
      %s269 = scalar_select %p268, %s19, 1
      %s270 = smul.addr %s269, 8
      %s271 = smul.addr %s270, 8
      %s272 = scalar_lea.vmem %s0, %s271
      %p273 = pneg %p40
      %p274 = pneg %p37
      %p275 = pneg %p61
      %p276 = pneg %p58
      %p277 = pneg %p82
      %p278 = pneg %p79
      %p279 = pneg %p103
      %p280 = pneg %p100
      %p281 = pneg %p124
      %p282 = pneg %p121
      %p283 = pneg %p145
      %p284 = pneg %p142
      %p285 = pneg %p166
      %p286 = pneg %p163
      %p287 = pneg %p187
      %p288 = pneg %p184
      %p289 = pneg %p213
      %p290 = pneg %p210
      %p291 = scmp.lt.s32.totalorder %s19, 1
      %s292 = scalar_select %p291, %s19, 1
      %s293 = smul.addr %s292, 8
      %s294 = smul.addr %s293, 8
      %s295 = scalar_lea.vmem %s8, %s294
      %p296 = scmp.lt.s32.totalorder %s19, 1
      %s297 = scalar_select %p296, %s19, 1
      %s298 = smul.addr %s297, 8
      %s299 = smul.addr %s298, 8
      %s300 = scalar_lea.vmem %s0, %s299
      %p301 = scmp.lt.s32.totalorder %s19, 1
      %s302 = scalar_select %p301, %s19, 1
      %s303 = smul.addr %s302, 8
      %s304 = smul.addr %s303, 8
      %s305 = scalar_lea.vmem %s8, %s304
      %v306 = vld [vmem:[%s300] sm:$0xff]
      %v307 = vld [vmem:[%s300 + $0x8] sm:$0xff]
      %v308 = vld [vmem:[%s300 + $0x10] sm:$0xff]
      %v309 = vld [vmem:[%s300 + $0x18] sm:$0xff]
      %v310 = vld [vmem:[%s300 + $0x20] sm:$0xff]
      %v311 = vld [vmem:[%s300 + $0x28] sm:$0xff]
      %v312 = vld [vmem:[%s300 + $0x30] sm:$0xff]
      %v313 = vld [vmem:[%s300 + $0x38] sm:$0xff]
      %v314 = vld [vmem:[%s1] sm:$0xff]
      %v315 = vld [vmem:[%s1 + $0x8] sm:$0xff]
      %v316 = vld [vmem:[%s1 + $0x10] sm:$0xff]
      %v317 = vld [vmem:[%s1 + $0x18] sm:$0xff]
      %v318 = vld [vmem:[%s1 + $0x20] sm:$0xff]
      %v319 = vld [vmem:[%s1 + $0x28] sm:$0xff]
      %v320 = vld [vmem:[%s1 + $0x30] sm:$0xff]
      %v321 = vld [vmem:[%s1 + $0x38] sm:$0xff]
      %v322 = vld [vmem:[%s1 + $0x40] sm:$0xff]
      %v323 = vld [vmem:[%s1 + $0x48] sm:$0xff]
      %v324 = vld [vmem:[%s1 + $0x50] sm:$0xff]
      %v325 = vld [vmem:[%s1 + $0x58] sm:$0xff]
      %v326 = vld [vmem:[%s1 + $0x60] sm:$0xff]
      %v327 = vld [vmem:[%s1 + $0x68] sm:$0xff]
      %v328 = vld [vmem:[%s1 + $0x70] sm:$0xff]
      %v329 = vld [vmem:[%s1 + $0x78] sm:$0xff]
      %v330 = vld [vmem:[%s1 + $0x80] sm:$0xff]
      %v331 = vld [vmem:[%s1 + $0x88] sm:$0xff]
      %v332 = vld [vmem:[%s1 + $0x90] sm:$0xff]
      %v333 = vld [vmem:[%s1 + $0x98] sm:$0xff]
      %v334 = vld [vmem:[%s1 + $0xa0] sm:$0xff]
      %v335 = vld [vmem:[%s1 + $0xa8] sm:$0xff]
      %v336 = vld [vmem:[%s1 + $0xb0] sm:$0xff]
      %v337 = vld [vmem:[%s1 + $0xb8] sm:$0xff]
      %v338 = vld [vmem:[%s1 + $0xc0] sm:$0xff]
      %v339 = vld [vmem:[%s1 + $0xc8] sm:$0xff]
      %v340 = vld [vmem:[%s1 + $0xd0] sm:$0xff]
      %v341 = vld [vmem:[%s1 + $0xd8] sm:$0xff]
      %v342 = vld [vmem:[%s1 + $0xe0] sm:$0xff]
      %v343 = vld [vmem:[%s1 + $0xe8] sm:$0xff]
      %v344 = vld [vmem:[%s1 + $0xf0] sm:$0xff]
      %v345 = vld [vmem:[%s1 + $0xf8] sm:$0xff]
      %346 = vmatprep.subr.mxu0 0.0
      %v347 = vand.u32 %v314, 4294901760
      %348 = vmatpush1.msra.mxu0 %v347
      %349 = vmatprep.subr.mxu0 0.0
      %v350 = vand.u32 %v315, 4294901760
      %351 = vmatpush1.msra.mxu0 %v350
      %352 = vmatprep.subr.mxu0 0.0
      %v353 = vand.u32 %v316, 4294901760
      %354 = vmatpush1.msra.mxu0 %v353
      %355 = vmatprep.subr.mxu0 0.0
      %v356 = vand.u32 %v317, 4294901760
      %357 = vmatpush1.msra.mxu0 %v356
      %358 = vmatprep.subr.mxu0 0.0
      %v359 = vand.u32 %v318, 4294901760
      %360 = vmatpush1.msra.mxu0 %v359
      %361 = vmatprep.subr.mxu0 0.0
      %v362 = vand.u32 %v319, 4294901760
      %363 = vmatpush1.msra.mxu0 %v362
      %364 = vmatprep.subr.mxu0 0.0
      %v365 = vand.u32 %v320, 4294901760
      %366 = vmatpush1.msra.mxu0 %v365
      %367 = vmatprep.subr.mxu0 0.0
      %v368 = vand.u32 %v321, 4294901760
      %369 = vmatpush1.msra.mxu0 %v368
      %370 = vmatprep.subr.mxu0 0.0
      %v371 = vand.u32 %v322, 4294901760
      %372 = vmatpush1.msra.mxu0 %v371
      %373 = vmatprep.subr.mxu0 0.0
      %v374 = vand.u32 %v323, 4294901760
      %375 = vmatpush1.msra.mxu0 %v374
      %376 = vmatprep.subr.mxu0 0.0
      %v377 = vand.u32 %v324, 4294901760
      %378 = vmatpush1.msra.mxu0 %v377
      %379 = vmatprep.subr.mxu0 0.0
      %v380 = vand.u32 %v325, 4294901760
      %381 = vmatpush1.msra.mxu0 %v380
      %382 = vmatprep.subr.mxu0 0.0
      %v383 = vand.u32 %v326, 4294901760
      %384 = vmatpush1.msra.mxu0 %v383
      %385 = vmatprep.subr.mxu0 0.0
      %v386 = vand.u32 %v327, 4294901760
      %387 = vmatpush1.msra.mxu0 %v386
      %388 = vmatprep.subr.mxu0 0.0
      %v389 = vand.u32 %v328, 4294901760
      %390 = vmatpush1.msra.mxu0 %v389
      %391 = vmatprep.subr.mxu0 0.0
      %v392 = vand.u32 %v329, 4294901760
      %393 = vmatpush1.msra.mxu0 %v392
      %394 = vmatprep.subr.mxu0 0.0
      %v395 = vand.u32 %v330, 4294901760
      %396 = vmatpush1.msra.mxu0 %v395
      %397 = vmatprep.subr.mxu0 0.0
      %v398 = vand.u32 %v331, 4294901760
      %399 = vmatpush1.msra.mxu0 %v398
      %400 = vmatprep.subr.mxu0 0.0
      %v401 = vand.u32 %v332, 4294901760
      %402 = vmatpush1.msra.mxu0 %v401
      %403 = vmatprep.subr.mxu0 0.0
      %v404 = vand.u32 %v333, 4294901760
      %405 = vmatpush1.msra.mxu0 %v404
      %406 = vmatprep.subr.mxu0 0.0
      %v407 = vand.u32 %v334, 4294901760
      %408 = vmatpush1.msra.mxu0 %v407
      %409 = vmatprep.subr.mxu0 0.0
      %v410 = vand.u32 %v335, 4294901760
      %411 = vmatpush1.msra.mxu0 %v410
      %412 = vmatprep.subr.mxu0 0.0
      %v413 = vand.u32 %v336, 4294901760
      %414 = vmatpush1.msra.mxu0 %v413
      %415 = vmatprep.subr.mxu0 0.0
      %v416 = vand.u32 %v337, 4294901760
      %417 = vmatpush1.msra.mxu0 %v416
      %418 = vmatprep.subr.mxu0 0.0
      %v419 = vand.u32 %v338, 4294901760
      %420 = vmatpush1.msra.mxu0 %v419
      %421 = vmatprep.subr.mxu0 0.0
      %v422 = vand.u32 %v339, 4294901760
      %423 = vmatpush1.msra.mxu0 %v422
      %424 = vmatprep.subr.mxu0 0.0
      %v425 = vand.u32 %v340, 4294901760
      %426 = vmatpush1.msra.mxu0 %v425
      %427 = vmatprep.subr.mxu0 0.0
      %v428 = vand.u32 %v341, 4294901760
      %429 = vmatpush1.msra.mxu0 %v428
      %430 = vmatprep.subr.mxu0 0.0
      %v431 = vand.u32 %v342, 4294901760
      %432 = vmatpush1.msra.mxu0 %v431
      %433 = vmatprep.subr.mxu0 0.0
      %v434 = vand.u32 %v343, 4294901760
      %435 = vmatpush1.msra.mxu0 %v434
      %436 = vmatprep.subr.mxu0 0.0
      %v437 = vand.u32 %v344, 4294901760
      %438 = vmatpush1.msra.mxu0 %v437
      %439 = vmatprep.subr.mxu0 0.0
      %v440 = vand.u32 %v345, 4294901760
      %441 = vmatpush1.msra.mxu0 %v440
      %v442 = vand.u32 %v307, 4294901760
      %v443 = vsub.f32 %v307, %v442
      %v444 = vand.u32 %v443, 4294901760
      %v445 = vsub.f32 %v443, %v444
      %v446 = vand.u32 %v445, 4294901760
      %447 = vmatprep.mubr.f32.mxu0 %v446
      %v448 = vand.u32 %v306, 4294901760
      %v449 = vsub.f32 %v306, %v448
      %v450 = vand.u32 %v449, 4294901760
      %v451 = vsub.f32 %v449, %v450
      %v452 = vand.u32 %v451, 4294901760
      %453 = vmatmul.mubr.f32.gmra.mrb[0].mxu0 %v452
      %v454 = vpop.f32.mrb[0].mxu0
      %v455 = vadd.f32 0.0, %v454
      %v456 = vpop.f32.mrb[0].mxu0
      %v457 = vand.u32 %v309, 4294901760
      %v458 = vsub.f32 %v309, %v457
      %v459 = vand.u32 %v458, 4294901760
      %v460 = vsub.f32 %v458, %v459
      %v461 = vand.u32 %v460, 4294901760
      %462 = vmatprep.mubr.f32.mxu0 %v461
      %v463 = vand.u32 %v308, 4294901760
      %v464 = vsub.f32 %v308, %v463
      %v465 = vand.u32 %v464, 4294901760
      %v466 = vsub.f32 %v464, %v465
      %v467 = vand.u32 %v466, 4294901760
      %468 = vmatmul.mubr.f32.gmra.mrb[0].mxu0 %v467
      %v469 = vpop.f32.mrb[0].mxu0
      %v470 = vadd.f32 0.0, %v469
      %v471 = vpop.f32.mrb[0].mxu0
      %v472 = vand.u32 %v311, 4294901760
      %v473 = vsub.f32 %v311, %v472
      %v474 = vand.u32 %v473, 4294901760
      %v475 = vsub.f32 %v473, %v474
      %v476 = vand.u32 %v475, 4294901760
      %477 = vmatprep.mubr.f32.mxu0 %v476
      %v478 = vand.u32 %v310, 4294901760
      %v479 = vsub.f32 %v310, %v478
      %v480 = vand.u32 %v479, 4294901760
      %v481 = vsub.f32 %v479, %v480
      %v482 = vand.u32 %v481, 4294901760
      %483 = vmatmul.mubr.f32.gmra.mrb[0].mxu0 %v482
      %v484 = vpop.f32.mrb[0].mxu0
      %v485 = vadd.f32 0.0, %v484
      %v486 = vpop.f32.mrb[0].mxu0
      %v487 = vand.u32 %v313, 4294901760
      %v488 = vsub.f32 %v313, %v487
      %v489 = vand.u32 %v488, 4294901760
      %v490 = vsub.f32 %v488, %v489
      %v491 = vand.u32 %v490, 4294901760
      %492 = vmatprep.mubr.f32.mxu0 %v491
      %v493 = vand.u32 %v312, 4294901760
      %v494 = vsub.f32 %v312, %v493
      %v495 = vand.u32 %v494, 4294901760
      %v496 = vsub.f32 %v494, %v495
      %v497 = vand.u32 %v496, 4294901760
      %498 = vmatmul.mubr.f32.gmra.mrb[0].mxu0 %v497
      %v499 = vpop.f32.mrb[0].mxu0
      %v500 = vadd.f32 0.0, %v499
      %v501 = vpop.f32.mrb[0].mxu0
      %502 = vdwg.mxu0
      %503 = vmatprep.subr.mxu0 0.0
      %v504 = vand.u32 %v314, 4294901760
      %v505 = vsub.f32 %v314, %v504
      %v506 = vand.u32 %v505, 4294901760
      %v507 = vsub.f32 %v505, %v506
      %v508 = vand.u32 %v507, 4294901760
      %509 = vmatpush1.msra.mxu0 %v508
      %510 = vmatprep.subr.mxu0 0.0
      %v511 = vand.u32 %v315, 4294901760
      %v512 = vsub.f32 %v315, %v511
      %v513 = vand.u32 %v512, 4294901760
      %v514 = vsub.f32 %v512, %v513
      %v515 = vand.u32 %v514, 4294901760
      %516 = vmatpush1.msra.mxu0 %v515
      %517 = vmatprep.subr.mxu0 0.0
      %v518 = vand.u32 %v316, 4294901760
      %v519 = vsub.f32 %v316, %v518
      %v520 = vand.u32 %v519, 4294901760
      %v521 = vsub.f32 %v519, %v520
      %v522 = vand.u32 %v521, 4294901760
      %523 = vmatpush1.msra.mxu0 %v522
      %524 = vmatprep.subr.mxu0 0.0
      %v525 = vand.u32 %v317, 4294901760
      %v526 = vsub.f32 %v317, %v525
      %v527 = vand.u32 %v526, 4294901760
      %v528 = vsub.f32 %v526, %v527
      %v529 = vand.u32 %v528, 4294901760
      %530 = vmatpush1.msra.mxu0 %v529
      %531 = vmatprep.subr.mxu0 0.0
      %v532 = vand.u32 %v318, 4294901760
      %v533 = vsub.f32 %v318, %v532
      %v534 = vand.u32 %v533, 4294901760
      %v535 = vsub.f32 %v533, %v534
      %v536 = vand.u32 %v535, 4294901760
      %537 = vmatpush1.msra.mxu0 %v536
      %538 = vmatprep.subr.mxu0 0.0
      %v539 = vand.u32 %v319, 4294901760
      %v540 = vsub.f32 %v319, %v539
      %v541 = vand.u32 %v540, 4294901760
      %v542 = vsub.f32 %v540, %v541
      %v543 = vand.u32 %v542, 4294901760
      %544 = vmatpush1.msra.mxu0 %v543
      %545 = vmatprep.subr.mxu0 0.0
      %v546 = vand.u32 %v320, 4294901760
      %v547 = vsub.f32 %v320, %v546
      %v548 = vand.u32 %v547, 4294901760
      %v549 = vsub.f32 %v547, %v548
      %v550 = vand.u32 %v549, 4294901760
      %551 = vmatpush1.msra.mxu0 %v550
      %552 = vmatprep.subr.mxu0 0.0
      %v553 = vand.u32 %v321, 4294901760
      %v554 = vsub.f32 %v321, %v553
      %v555 = vand.u32 %v554, 4294901760
      %v556 = vsub.f32 %v554, %v555
      %v557 = vand.u32 %v556, 4294901760
      %558 = vmatpush1.msra.mxu0 %v557
      %559 = vmatprep.subr.mxu0 0.0
      %v560 = vand.u32 %v322, 4294901760
      %v561 = vsub.f32 %v322, %v560
      %v562 = vand.u32 %v561, 4294901760
      %v563 = vsub.f32 %v561, %v562
      %v564 = vand.u32 %v563, 4294901760
      %565 = vmatpush1.msra.mxu0 %v564
      %566 = vmatprep.subr.mxu0 0.0
      %v567 = vand.u32 %v323, 4294901760
      %v568 = vsub.f32 %v323, %v567
      %v569 = vand.u32 %v568, 4294901760
      %v570 = vsub.f32 %v568, %v569
      %v571 = vand.u32 %v570, 4294901760
      %572 = vmatpush1.msra.mxu0 %v571
      %573 = vmatprep.subr.mxu0 0.0
      %v574 = vand.u32 %v324, 4294901760
      %v575 = vsub.f32 %v324, %v574
      %v576 = vand.u32 %v575, 4294901760
      %v577 = vsub.f32 %v575, %v576
      %v578 = vand.u32 %v577, 4294901760
      %579 = vmatpush1.msra.mxu0 %v578
      %580 = vmatprep.subr.mxu0 0.0
      %v581 = vand.u32 %v325, 4294901760
      %v582 = vsub.f32 %v325, %v581
      %v583 = vand.u32 %v582, 4294901760
      %v584 = vsub.f32 %v582, %v583
      %v585 = vand.u32 %v584, 4294901760
      %586 = vmatpush1.msra.mxu0 %v585
      %587 = vmatprep.subr.mxu0 0.0
      %v588 = vand.u32 %v326, 4294901760
      %v589 = vsub.f32 %v326, %v588
      %v590 = vand.u32 %v589, 4294901760
      %v591 = vsub.f32 %v589, %v590
      %v592 = vand.u32 %v591, 4294901760
      %593 = vmatpush1.msra.mxu0 %v592
      %594 = vmatprep.subr.mxu0 0.0
      %v595 = vand.u32 %v327, 4294901760
      %v596 = vsub.f32 %v327, %v595
      %v597 = vand.u32 %v596, 4294901760
      %v598 = vsub.f32 %v596, %v597
      %v599 = vand.u32 %v598, 4294901760
      %600 = vmatpush1.msra.mxu0 %v599
      %601 = vmatprep.subr.mxu0 0.0
      %v602 = vand.u32 %v328, 4294901760
      %v603 = vsub.f32 %v328, %v602
      %v604 = vand.u32 %v603, 4294901760
      %v605 = vsub.f32 %v603, %v604
      %v606 = vand.u32 %v605, 4294901760
      %607 = vmatpush1.msra.mxu0 %v606
      %608 = vmatprep.subr.mxu0 0.0
      %v609 = vand.u32 %v329, 4294901760
      %v610 = vsub.f32 %v329, %v609
      %v611 = vand.u32 %v610, 4294901760
      %v612 = vsub.f32 %v610, %v611
      %v613 = vand.u32 %v612, 4294901760
      %614 = vmatpush1.msra.mxu0 %v613
      %615 = vmatprep.subr.mxu0 0.0
      %v616 = vand.u32 %v330, 4294901760
      %v617 = vsub.f32 %v330, %v616
      %v618 = vand.u32 %v617, 4294901760
      %v619 = vsub.f32 %v617, %v618
      %v620 = vand.u32 %v619, 4294901760
      %621 = vmatpush1.msra.mxu0 %v620
      %622 = vmatprep.subr.mxu0 0.0
      %v623 = vand.u32 %v331, 4294901760
      %v624 = vsub.f32 %v331, %v623
      %v625 = vand.u32 %v624, 4294901760
      %v626 = vsub.f32 %v624, %v625
      %v627 = vand.u32 %v626, 4294901760
      %628 = vmatpush1.msra.mxu0 %v627
      %629 = vmatprep.subr.mxu0 0.0
      %v630 = vand.u32 %v332, 4294901760
      %v631 = vsub.f32 %v332, %v630
      %v632 = vand.u32 %v631, 4294901760
      %v633 = vsub.f32 %v631, %v632
      %v634 = vand.u32 %v633, 4294901760
      %635 = vmatpush1.msra.mxu0 %v634
      %636 = vmatprep.subr.mxu0 0.0
      %v637 = vand.u32 %v333, 4294901760
      %v638 = vsub.f32 %v333, %v637
      %v639 = vand.u32 %v638, 4294901760
      %v640 = vsub.f32 %v638, %v639
      %v641 = vand.u32 %v640, 4294901760
      %642 = vmatpush1.msra.mxu0 %v641
      %643 = vmatprep.subr.mxu0 0.0
      %v644 = vand.u32 %v334, 4294901760
      %v645 = vsub.f32 %v334, %v644
      %v646 = vand.u32 %v645, 4294901760
      %v647 = vsub.f32 %v645, %v646
      %v648 = vand.u32 %v647, 4294901760
      %649 = vmatpush1.msra.mxu0 %v648
      %650 = vmatprep.subr.mxu0 0.0
      %v651 = vand.u32 %v335, 4294901760
      %v652 = vsub.f32 %v335, %v651
      %v653 = vand.u32 %v652, 4294901760
      %v654 = vsub.f32 %v652, %v653
      %v655 = vand.u32 %v654, 4294901760
      %656 = vmatpush1.msra.mxu0 %v655
      %657 = vmatprep.subr.mxu0 0.0
      %v658 = vand.u32 %v336, 4294901760
      %v659 = vsub.f32 %v336, %v658
      %v660 = vand.u32 %v659, 4294901760
      %v661 = vsub.f32 %v659, %v660
      %v662 = vand.u32 %v661, 4294901760
      %663 = vmatpush1.msra.mxu0 %v662
      %664 = vmatprep.subr.mxu0 0.0
      %v665 = vand.u32 %v337, 4294901760
      %v666 = vsub.f32 %v337, %v665
      %v667 = vand.u32 %v666, 4294901760
      %v668 = vsub.f32 %v666, %v667
      %v669 = vand.u32 %v668, 4294901760
      %670 = vmatpush1.msra.mxu0 %v669
      %671 = vmatprep.subr.mxu0 0.0
      %v672 = vand.u32 %v338, 4294901760
      %v673 = vsub.f32 %v338, %v672
      %v674 = vand.u32 %v673, 4294901760
      %v675 = vsub.f32 %v673, %v674
      %v676 = vand.u32 %v675, 4294901760
      %677 = vmatpush1.msra.mxu0 %v676
      %678 = vmatprep.subr.mxu0 0.0
      %v679 = vand.u32 %v339, 4294901760
      %v680 = vsub.f32 %v339, %v679
      %v681 = vand.u32 %v680, 4294901760
      %v682 = vsub.f32 %v680, %v681
      %v683 = vand.u32 %v682, 4294901760
      %684 = vmatpush1.msra.mxu0 %v683
      %685 = vmatprep.subr.mxu0 0.0
      %v686 = vand.u32 %v340, 4294901760
      %v687 = vsub.f32 %v340, %v686
      %v688 = vand.u32 %v687, 4294901760
      %v689 = vsub.f32 %v687, %v688
      %v690 = vand.u32 %v689, 4294901760
      %691 = vmatpush1.msra.mxu0 %v690
      %692 = vmatprep.subr.mxu0 0.0
      %v693 = vand.u32 %v341, 4294901760
      %v694 = vsub.f32 %v341, %v693
      %v695 = vand.u32 %v694, 4294901760
      %v696 = vsub.f32 %v694, %v695
      %v697 = vand.u32 %v696, 4294901760
      %698 = vmatpush1.msra.mxu0 %v697
      %699 = vmatprep.subr.mxu0 0.0
      %v700 = vand.u32 %v342, 4294901760
      %v701 = vsub.f32 %v342, %v700
      %v702 = vand.u32 %v701, 4294901760
      %v703 = vsub.f32 %v701, %v702
      %v704 = vand.u32 %v703, 4294901760
      %705 = vmatpush1.msra.mxu0 %v704
      %706 = vmatprep.subr.mxu0 0.0
      %v707 = vand.u32 %v343, 4294901760
      %v708 = vsub.f32 %v343, %v707
      %v709 = vand.u32 %v708, 4294901760
      %v710 = vsub.f32 %v708, %v709
      %v711 = vand.u32 %v710, 4294901760
      %712 = vmatpush1.msra.mxu0 %v711
      %713 = vmatprep.subr.mxu0 0.0
      %v714 = vand.u32 %v344, 4294901760
      %v715 = vsub.f32 %v344, %v714
      %v716 = vand.u32 %v715, 4294901760
      %v717 = vsub.f32 %v715, %v716
      %v718 = vand.u32 %v717, 4294901760
      %719 = vmatpush1.msra.mxu0 %v718
      %720 = vmatprep.subr.mxu0 0.0
      %v721 = vand.u32 %v345, 4294901760
      %v722 = vsub.f32 %v345, %v721
      %v723 = vand.u32 %v722, 4294901760
      %v724 = vsub.f32 %v722, %v723
      %v725 = vand.u32 %v724, 4294901760
      %726 = vmatpush1.msra.mxu0 %v725
      %v727 = vand.u32 %v307, 4294901760
      %728 = vmatprep.mubr.f32.mxu0 %v727
      %v729 = vand.u32 %v306, 4294901760
      %730 = vmatmul.mubr.f32.gmra.mrb[0].mxu0 %v729
      %v731 = vpop.f32.mrb[0].mxu0
      %v732 = vadd.f32 %v455, %v731
      %v733 = vpop.f32.mrb[0].mxu0
      %v734 = vand.u32 %v309, 4294901760
      %735 = vmatprep.mubr.f32.mxu0 %v734
      %v736 = vand.u32 %v308, 4294901760
      %737 = vmatmul.mubr.f32.gmra.mrb[0].mxu0 %v736
      %v738 = vpop.f32.mrb[0].mxu0
      %v739 = vadd.f32 %v470, %v738
      %v740 = vpop.f32.mrb[0].mxu0
      %v741 = vand.u32 %v311, 4294901760
      %742 = vmatprep.mubr.f32.mxu0 %v741
      %v743 = vand.u32 %v310, 4294901760
      %744 = vmatmul.mubr.f32.gmra.mrb[0].mxu0 %v743
      %v745 = vpop.f32.mrb[0].mxu0
      %v746 = vadd.f32 %v485, %v745
      %v747 = vpop.f32.mrb[0].mxu0
      %v748 = vand.u32 %v313, 4294901760
      %749 = vmatprep.mubr.f32.mxu0 %v748
      %v750 = vand.u32 %v312, 4294901760
      %751 = vmatmul.mubr.f32.gmra.mrb[0].mxu0 %v750
      %v752 = vpop.f32.mrb[0].mxu0
      %v753 = vadd.f32 %v500, %v752
      %v754 = vpop.f32.mrb[0].mxu0
      %755 = vdwg.mxu0
      %756 = vmatprep.subr.mxu0 0.0
      %v757 = vand.u32 %v314, 4294901760
      %v758 = vsub.f32 %v314, %v757
      %759 = vmatpush1.msra.mxu0 %v758
      %760 = vmatprep.subr.mxu0 0.0
      %v761 = vand.u32 %v315, 4294901760
      %v762 = vsub.f32 %v315, %v761
      %763 = vmatpush1.msra.mxu0 %v762
      %764 = vmatprep.subr.mxu0 0.0
      %v765 = vand.u32 %v316, 4294901760
      %v766 = vsub.f32 %v316, %v765
      %767 = vmatpush1.msra.mxu0 %v766
      %768 = vmatprep.subr.mxu0 0.0
      %v769 = vand.u32 %v317, 4294901760
      %v770 = vsub.f32 %v317, %v769
      %771 = vmatpush1.msra.mxu0 %v770
      %772 = vmatprep.subr.mxu0 0.0
      %v773 = vand.u32 %v318, 4294901760
      %v774 = vsub.f32 %v318, %v773
      %775 = vmatpush1.msra.mxu0 %v774
      %776 = vmatprep.subr.mxu0 0.0
      %v777 = vand.u32 %v319, 4294901760
      %v778 = vsub.f32 %v319, %v777
      %779 = vmatpush1.msra.mxu0 %v778
      %780 = vmatprep.subr.mxu0 0.0
      %v781 = vand.u32 %v320, 4294901760
      %v782 = vsub.f32 %v320, %v781
      %783 = vmatpush1.msra.mxu0 %v782
      %784 = vmatprep.subr.mxu0 0.0
      %v785 = vand.u32 %v321, 4294901760
      %v786 = vsub.f32 %v321, %v785
      %787 = vmatpush1.msra.mxu0 %v786
      %788 = vmatprep.subr.mxu0 0.0
      %v789 = vand.u32 %v322, 4294901760
      %v790 = vsub.f32 %v322, %v789
      %791 = vmatpush1.msra.mxu0 %v790
      %792 = vmatprep.subr.mxu0 0.0
      %v793 = vand.u32 %v323, 4294901760
      %v794 = vsub.f32 %v323, %v793
      %795 = vmatpush1.msra.mxu0 %v794
      %796 = vmatprep.subr.mxu0 0.0
      %v797 = vand.u32 %v324, 4294901760
      %v798 = vsub.f32 %v324, %v797
      %799 = vmatpush1.msra.mxu0 %v798
      %800 = vmatprep.subr.mxu0 0.0
      %v801 = vand.u32 %v325, 4294901760
      %v802 = vsub.f32 %v325, %v801
      %803 = vmatpush1.msra.mxu0 %v802
      %804 = vmatprep.subr.mxu0 0.0
      %v805 = vand.u32 %v326, 4294901760
      %v806 = vsub.f32 %v326, %v805
      %807 = vmatpush1.msra.mxu0 %v806
      %808 = vmatprep.subr.mxu0 0.0
      %v809 = vand.u32 %v327, 4294901760
      %v810 = vsub.f32 %v327, %v809
      %811 = vmatpush1.msra.mxu0 %v810
      %812 = vmatprep.subr.mxu0 0.0
      %v813 = vand.u32 %v328, 4294901760
      %v814 = vsub.f32 %v328, %v813
      %815 = vmatpush1.msra.mxu0 %v814
      %816 = vmatprep.subr.mxu0 0.0
      %v817 = vand.u32 %v329, 4294901760
      %v818 = vsub.f32 %v329, %v817
      %819 = vmatpush1.msra.mxu0 %v818
      %820 = vmatprep.subr.mxu0 0.0
      %v821 = vand.u32 %v330, 4294901760
      %v822 = vsub.f32 %v330, %v821
      %823 = vmatpush1.msra.mxu0 %v822
      %824 = vmatprep.subr.mxu0 0.0
      %v825 = vand.u32 %v331, 4294901760
      %v826 = vsub.f32 %v331, %v825
      %827 = vmatpush1.msra.mxu0 %v826
      %828 = vmatprep.subr.mxu0 0.0
      %v829 = vand.u32 %v332, 4294901760
      %v830 = vsub.f32 %v332, %v829
      %831 = vmatpush1.msra.mxu0 %v830
      %832 = vmatprep.subr.mxu0 0.0
      %v833 = vand.u32 %v333, 4294901760
      %v834 = vsub.f32 %v333, %v833
      %835 = vmatpush1.msra.mxu0 %v834
      %836 = vmatprep.subr.mxu0 0.0
      %v837 = vand.u32 %v334, 4294901760
      %v838 = vsub.f32 %v334, %v837
      %839 = vmatpush1.msra.mxu0 %v838
      %840 = vmatprep.subr.mxu0 0.0
      %v841 = vand.u32 %v335, 4294901760
      %v842 = vsub.f32 %v335, %v841
      %843 = vmatpush1.msra.mxu0 %v842
      %844 = vmatprep.subr.mxu0 0.0
      %v845 = vand.u32 %v336, 4294901760
      %v846 = vsub.f32 %v336, %v845
      %847 = vmatpush1.msra.mxu0 %v846
      %848 = vmatprep.subr.mxu0 0.0
      %v849 = vand.u32 %v337, 4294901760
      %v850 = vsub.f32 %v337, %v849
      %851 = vmatpush1.msra.mxu0 %v850
      %852 = vmatprep.subr.mxu0 0.0
      %v853 = vand.u32 %v338, 4294901760
      %v854 = vsub.f32 %v338, %v853
      %855 = vmatpush1.msra.mxu0 %v854
      %856 = vmatprep.subr.mxu0 0.0
      %v857 = vand.u32 %v339, 4294901760
      %v858 = vsub.f32 %v339, %v857
      %859 = vmatpush1.msra.mxu0 %v858
      %860 = vmatprep.subr.mxu0 0.0
      %v861 = vand.u32 %v340, 4294901760
      %v862 = vsub.f32 %v340, %v861
      %863 = vmatpush1.msra.mxu0 %v862
      %864 = vmatprep.subr.mxu0 0.0
      %v865 = vand.u32 %v341, 4294901760
      %v866 = vsub.f32 %v341, %v865
      %867 = vmatpush1.msra.mxu0 %v866
      %868 = vmatprep.subr.mxu0 0.0
      %v869 = vand.u32 %v342, 4294901760
      %v870 = vsub.f32 %v342, %v869
      %871 = vmatpush1.msra.mxu0 %v870
      %872 = vmatprep.subr.mxu0 0.0
      %v873 = vand.u32 %v343, 4294901760
      %v874 = vsub.f32 %v343, %v873
      %875 = vmatpush1.msra.mxu0 %v874
      %876 = vmatprep.subr.mxu0 0.0
      %v877 = vand.u32 %v344, 4294901760
      %v878 = vsub.f32 %v344, %v877
      %879 = vmatpush1.msra.mxu0 %v878
      %880 = vmatprep.subr.mxu0 0.0
      %v881 = vand.u32 %v345, 4294901760
      %v882 = vsub.f32 %v345, %v881
      %883 = vmatpush1.msra.mxu0 %v882
      %v884 = vand.u32 %v307, 4294901760
      %v885 = vsub.f32 %v307, %v884
      %886 = vmatprep.mubr.f32.mxu0 %v885
      %v887 = vand.u32 %v306, 4294901760
      %v888 = vsub.f32 %v306, %v887
      %889 = vmatmul.mubr.f32.gmra.mrb[0].mxu0 %v888
      %v890 = vpop.f32.mrb[0].mxu0
      %v891 = vadd.f32 %v732, %v890
      %v892 = vpop.f32.mrb[0].mxu0
      %v893 = vand.u32 %v309, 4294901760
      %v894 = vsub.f32 %v309, %v893
      %895 = vmatprep.mubr.f32.mxu0 %v894
      %v896 = vand.u32 %v308, 4294901760
      %v897 = vsub.f32 %v308, %v896
      %898 = vmatmul.mubr.f32.gmra.mrb[0].mxu0 %v897
      %v899 = vpop.f32.mrb[0].mxu0
      %v900 = vadd.f32 %v739, %v899
      %v901 = vpop.f32.mrb[0].mxu0
      %v902 = vand.u32 %v311, 4294901760
      %v903 = vsub.f32 %v311, %v902
      %904 = vmatprep.mubr.f32.mxu0 %v903
      %v905 = vand.u32 %v310, 4294901760
      %v906 = vsub.f32 %v310, %v905
      %907 = vmatmul.mubr.f32.gmra.mrb[0].mxu0 %v906
      %v908 = vpop.f32.mrb[0].mxu0
      %v909 = vadd.f32 %v746, %v908
      %v910 = vpop.f32.mrb[0].mxu0
      %v911 = vand.u32 %v313, 4294901760
      %v912 = vsub.f32 %v313, %v911
      %913 = vmatprep.mubr.f32.mxu0 %v912
      %v914 = vand.u32 %v312, 4294901760
      %v915 = vsub.f32 %v312, %v914
      %916 = vmatmul.mubr.f32.gmra.mrb[0].mxu0 %v915
      %v917 = vpop.f32.mrb[0].mxu0
      %v918 = vadd.f32 %v753, %v917
      %v919 = vpop.f32.mrb[0].mxu0
      %920 = vdwg.mxu0
      %921 = vmatprep.subr.mxu0 0.0
      %v922 = vand.u32 %v314, 4294901760
      %923 = vmatpush1.msra.mxu0 %v922
      %924 = vmatprep.subr.mxu0 0.0
      %v925 = vand.u32 %v315, 4294901760
      %926 = vmatpush1.msra.mxu0 %v925
      %927 = vmatprep.subr.mxu0 0.0
      %v928 = vand.u32 %v316, 4294901760
      %929 = vmatpush1.msra.mxu0 %v928
      %930 = vmatprep.subr.mxu0 0.0
      %v931 = vand.u32 %v317, 4294901760
      %932 = vmatpush1.msra.mxu0 %v931
      %933 = vmatprep.subr.mxu0 0.0
      %v934 = vand.u32 %v318, 4294901760
      %935 = vmatpush1.msra.mxu0 %v934
      %936 = vmatprep.subr.mxu0 0.0
      %v937 = vand.u32 %v319, 4294901760
      %938 = vmatpush1.msra.mxu0 %v937
      %939 = vmatprep.subr.mxu0 0.0
      %v940 = vand.u32 %v320, 4294901760
      %941 = vmatpush1.msra.mxu0 %v940
      %942 = vmatprep.subr.mxu0 0.0
      %v943 = vand.u32 %v321, 4294901760
      %944 = vmatpush1.msra.mxu0 %v943
      %945 = vmatprep.subr.mxu0 0.0
      %v946 = vand.u32 %v322, 4294901760
      %947 = vmatpush1.msra.mxu0 %v946
      %948 = vmatprep.subr.mxu0 0.0
      %v949 = vand.u32 %v323, 4294901760
      %950 = vmatpush1.msra.mxu0 %v949
      %951 = vmatprep.subr.mxu0 0.0
      %v952 = vand.u32 %v324, 4294901760
      %953 = vmatpush1.msra.mxu0 %v952
      %954 = vmatprep.subr.mxu0 0.0
      %v955 = vand.u32 %v325, 4294901760
      %956 = vmatpush1.msra.mxu0 %v955
      %957 = vmatprep.subr.mxu0 0.0
      %v958 = vand.u32 %v326, 4294901760
      %959 = vmatpush1.msra.mxu0 %v958
      %960 = vmatprep.subr.mxu0 0.0
      %v961 = vand.u32 %v327, 4294901760
      %962 = vmatpush1.msra.mxu0 %v961
      %963 = vmatprep.subr.mxu0 0.0
      %v964 = vand.u32 %v328, 4294901760
      %965 = vmatpush1.msra.mxu0 %v964
      %966 = vmatprep.subr.mxu0 0.0
      %v967 = vand.u32 %v329, 4294901760
      %968 = vmatpush1.msra.mxu0 %v967
      %969 = vmatprep.subr.mxu0 0.0
      %v970 = vand.u32 %v330, 4294901760
      %971 = vmatpush1.msra.mxu0 %v970
      %972 = vmatprep.subr.mxu0 0.0
      %v973 = vand.u32 %v331, 4294901760
      %974 = vmatpush1.msra.mxu0 %v973
      %975 = vmatprep.subr.mxu0 0.0
      %v976 = vand.u32 %v332, 4294901760
      %977 = vmatpush1.msra.mxu0 %v976
      %978 = vmatprep.subr.mxu0 0.0
      %v979 = vand.u32 %v333, 4294901760
      %980 = vmatpush1.msra.mxu0 %v979
      %981 = vmatprep.subr.mxu0 0.0
      %v982 = vand.u32 %v334, 4294901760
      %983 = vmatpush1.msra.mxu0 %v982
      %984 = vmatprep.subr.mxu0 0.0
      %v985 = vand.u32 %v335, 4294901760
      %986 = vmatpush1.msra.mxu0 %v985
      %987 = vmatprep.subr.mxu0 0.0
      %v988 = vand.u32 %v336, 4294901760
      %989 = vmatpush1.msra.mxu0 %v988
      %990 = vmatprep.subr.mxu0 0.0
      %v991 = vand.u32 %v337, 4294901760
      %992 = vmatpush1.msra.mxu0 %v991
      %993 = vmatprep.subr.mxu0 0.0
      %v994 = vand.u32 %v338, 4294901760
      %995 = vmatpush1.msra.mxu0 %v994
      %996 = vmatprep.subr.mxu0 0.0
      %v997 = vand.u32 %v339, 4294901760
      %998 = vmatpush1.msra.mxu0 %v997
      %999 = vmatprep.subr.mxu0 0.0
      %v1000 = vand.u32 %v340, 4294901760
      %1001 = vmatpush1.msra.mxu0 %v1000
      %1002 = vmatprep.subr.mxu0 0.0
      %v1003 = vand.u32 %v341, 4294901760
      %1004 = vmatpush1.msra.mxu0 %v1003
      %1005 = vmatprep.subr.mxu0 0.0
      %v1006 = vand.u32 %v342, 4294901760
      %1007 = vmatpush1.msra.mxu0 %v1006
      %1008 = vmatprep.subr.mxu0 0.0
      %v1009 = vand.u32 %v343, 4294901760
      %1010 = vmatpush1.msra.mxu0 %v1009
      %1011 = vmatprep.subr.mxu0 0.0
      %v1012 = vand.u32 %v344, 4294901760
      %1013 = vmatpush1.msra.mxu0 %v1012
      %1014 = vmatprep.subr.mxu0 0.0
      %v1015 = vand.u32 %v345, 4294901760
      %1016 = vmatpush1.msra.mxu0 %v1015
      %v1017 = vand.u32 %v307, 4294901760
      %v1018 = vsub.f32 %v307, %v1017
      %v1019 = vand.u32 %v1018, 4294901760
      %1020 = vmatprep.mubr.f32.mxu0 %v1019
      %v1021 = vand.u32 %v306, 4294901760
      %v1022 = vsub.f32 %v306, %v1021
      %v1023 = vand.u32 %v1022, 4294901760
      %1024 = vmatmul.mubr.f32.gmra.mrb[0].mxu0 %v1023
      %v1025 = vpop.f32.mrb[0].mxu0
      %v1026 = vadd.f32 %v891, %v1025
      %v1027 = vpop.f32.mrb[0].mxu0
      %v1028 = vand.u32 %v309, 4294901760
      %v1029 = vsub.f32 %v309, %v1028
      %v1030 = vand.u32 %v1029, 4294901760
      %1031 = vmatprep.mubr.f32.mxu0 %v1030
      %v1032 = vand.u32 %v308, 4294901760
      %v1033 = vsub.f32 %v308, %v1032
      %v1034 = vand.u32 %v1033, 4294901760
      %1035 = vmatmul.mubr.f32.gmra.mrb[0].mxu0 %v1034
      %v1036 = vpop.f32.mrb[0].mxu0
      %v1037 = vadd.f32 %v900, %v1036
      %v1038 = vpop.f32.mrb[0].mxu0
      %v1039 = vand.u32 %v311, 4294901760
      %v1040 = vsub.f32 %v311, %v1039
      %v1041 = vand.u32 %v1040, 4294901760
      %1042 = vmatprep.mubr.f32.mxu0 %v1041
      %v1043 = vand.u32 %v310, 4294901760
      %v1044 = vsub.f32 %v310, %v1043
      %v1045 = vand.u32 %v1044, 4294901760
      %1046 = vmatmul.mubr.f32.gmra.mrb[0].mxu0 %v1045
      %v1047 = vpop.f32.mrb[0].mxu0
      %v1048 = vadd.f32 %v909, %v1047
      %v1049 = vpop.f32.mrb[0].mxu0
      %v1050 = vand.u32 %v313, 4294901760
      %v1051 = vsub.f32 %v313, %v1050
      %v1052 = vand.u32 %v1051, 4294901760
      %1053 = vmatprep.mubr.f32.mxu0 %v1052
      %v1054 = vand.u32 %v312, 4294901760
      %v1055 = vsub.f32 %v312, %v1054
      %v1056 = vand.u32 %v1055, 4294901760
      %1057 = vmatmul.mubr.f32.gmra.mrb[0].mxu0 %v1056
      %v1058 = vpop.f32.mrb[0].mxu0
      %v1059 = vadd.f32 %v918, %v1058
      %v1060 = vpop.f32.mrb[0].mxu0
      %1061 = vdwg.mxu0
      %1062 = vmatprep.subr.mxu0 0.0
      %v1063 = vand.u32 %v314, 4294901760
      %v1064 = vsub.f32 %v314, %v1063
      %v1065 = vand.u32 %v1064, 4294901760
      %1066 = vmatpush1.msra.mxu0 %v1065
      %1067 = vmatprep.subr.mxu0 0.0
      %v1068 = vand.u32 %v315, 4294901760
      %v1069 = vsub.f32 %v315, %v1068
      %v1070 = vand.u32 %v1069, 4294901760
      %1071 = vmatpush1.msra.mxu0 %v1070
      %1072 = vmatprep.subr.mxu0 0.0
      %v1073 = vand.u32 %v316, 4294901760
      %v1074 = vsub.f32 %v316, %v1073
      %v1075 = vand.u32 %v1074, 4294901760
      %1076 = vmatpush1.msra.mxu0 %v1075
      %1077 = vmatprep.subr.mxu0 0.0
      %v1078 = vand.u32 %v317, 4294901760
      %v1079 = vsub.f32 %v317, %v1078
      %v1080 = vand.u32 %v1079, 4294901760
      %1081 = vmatpush1.msra.mxu0 %v1080
      %1082 = vmatprep.subr.mxu0 0.0
      %v1083 = vand.u32 %v318, 4294901760
      %v1084 = vsub.f32 %v318, %v1083
      %v1085 = vand.u32 %v1084, 4294901760
      %1086 = vmatpush1.msra.mxu0 %v1085
      %1087 = vmatprep.subr.mxu0 0.0
      %v1088 = vand.u32 %v319, 4294901760
      %v1089 = vsub.f32 %v319, %v1088
      %v1090 = vand.u32 %v1089, 4294901760
      %1091 = vmatpush1.msra.mxu0 %v1090
      %1092 = vmatprep.subr.mxu0 0.0
      %v1093 = vand.u32 %v320, 4294901760
      %v1094 = vsub.f32 %v320, %v1093
      %v1095 = vand.u32 %v1094, 4294901760
      %1096 = vmatpush1.msra.mxu0 %v1095
      %1097 = vmatprep.subr.mxu0 0.0
      %v1098 = vand.u32 %v321, 4294901760
      %v1099 = vsub.f32 %v321, %v1098
      %v1100 = vand.u32 %v1099, 4294901760
      %1101 = vmatpush1.msra.mxu0 %v1100
      %1102 = vmatprep.subr.mxu0 0.0
      %v1103 = vand.u32 %v322, 4294901760
      %v1104 = vsub.f32 %v322, %v1103
      %v1105 = vand.u32 %v1104, 4294901760
      %1106 = vmatpush1.msra.mxu0 %v1105
      %1107 = vmatprep.subr.mxu0 0.0
      %v1108 = vand.u32 %v323, 4294901760
      %v1109 = vsub.f32 %v323, %v1108
      %v1110 = vand.u32 %v1109, 4294901760
      %1111 = vmatpush1.msra.mxu0 %v1110
      %1112 = vmatprep.subr.mxu0 0.0
      %v1113 = vand.u32 %v324, 4294901760
      %v1114 = vsub.f32 %v324, %v1113
      %v1115 = vand.u32 %v1114, 4294901760
      %1116 = vmatpush1.msra.mxu0 %v1115
      %1117 = vmatprep.subr.mxu0 0.0
      %v1118 = vand.u32 %v325, 4294901760
      %v1119 = vsub.f32 %v325, %v1118
      %v1120 = vand.u32 %v1119, 4294901760
      %1121 = vmatpush1.msra.mxu0 %v1120
      %1122 = vmatprep.subr.mxu0 0.0
      %v1123 = vand.u32 %v326, 4294901760
      %v1124 = vsub.f32 %v326, %v1123
      %v1125 = vand.u32 %v1124, 4294901760
      %1126 = vmatpush1.msra.mxu0 %v1125
      %1127 = vmatprep.subr.mxu0 0.0
      %v1128 = vand.u32 %v327, 4294901760
      %v1129 = vsub.f32 %v327, %v1128
      %v1130 = vand.u32 %v1129, 4294901760
      %1131 = vmatpush1.msra.mxu0 %v1130
      %1132 = vmatprep.subr.mxu0 0.0
      %v1133 = vand.u32 %v328, 4294901760
      %v1134 = vsub.f32 %v328, %v1133
      %v1135 = vand.u32 %v1134, 4294901760
      %1136 = vmatpush1.msra.mxu0 %v1135
      %1137 = vmatprep.subr.mxu0 0.0
      %v1138 = vand.u32 %v329, 4294901760
      %v1139 = vsub.f32 %v329, %v1138
      %v1140 = vand.u32 %v1139, 4294901760
      %1141 = vmatpush1.msra.mxu0 %v1140
      %1142 = vmatprep.subr.mxu0 0.0
      %v1143 = vand.u32 %v330, 4294901760
      %v1144 = vsub.f32 %v330, %v1143
      %v1145 = vand.u32 %v1144, 4294901760
      %1146 = vmatpush1.msra.mxu0 %v1145
      %1147 = vmatprep.subr.mxu0 0.0
      %v1148 = vand.u32 %v331, 4294901760
      %v1149 = vsub.f32 %v331, %v1148
      %v1150 = vand.u32 %v1149, 4294901760
      %1151 = vmatpush1.msra.mxu0 %v1150
      %1152 = vmatprep.subr.mxu0 0.0
      %v1153 = vand.u32 %v332, 4294901760
      %v1154 = vsub.f32 %v332, %v1153
      %v1155 = vand.u32 %v1154, 4294901760
      %1156 = vmatpush1.msra.mxu0 %v1155
      %1157 = vmatprep.subr.mxu0 0.0
      %v1158 = vand.u32 %v333, 4294901760
      %v1159 = vsub.f32 %v333, %v1158
      %v1160 = vand.u32 %v1159, 4294901760
      %1161 = vmatpush1.msra.mxu0 %v1160
      %1162 = vmatprep.subr.mxu0 0.0
      %v1163 = vand.u32 %v334, 4294901760
      %v1164 = vsub.f32 %v334, %v1163
      %v1165 = vand.u32 %v1164, 4294901760
      %1166 = vmatpush1.msra.mxu0 %v1165
      %1167 = vmatprep.subr.mxu0 0.0
      %v1168 = vand.u32 %v335, 4294901760
      %v1169 = vsub.f32 %v335, %v1168
      %v1170 = vand.u32 %v1169, 4294901760
      %1171 = vmatpush1.msra.mxu0 %v1170
      %1172 = vmatprep.subr.mxu0 0.0
      %v1173 = vand.u32 %v336, 4294901760
      %v1174 = vsub.f32 %v336, %v1173
      %v1175 = vand.u32 %v1174, 4294901760
      %1176 = vmatpush1.msra.mxu0 %v1175
      %1177 = vmatprep.subr.mxu0 0.0
      %v1178 = vand.u32 %v337, 4294901760
      %v1179 = vsub.f32 %v337, %v1178
      %v1180 = vand.u32 %v1179, 4294901760
      %1181 = vmatpush1.msra.mxu0 %v1180
      %1182 = vmatprep.subr.mxu0 0.0
      %v1183 = vand.u32 %v338, 4294901760
      %v1184 = vsub.f32 %v338, %v1183
      %v1185 = vand.u32 %v1184, 4294901760
      %1186 = vmatpush1.msra.mxu0 %v1185
      %1187 = vmatprep.subr.mxu0 0.0
      %v1188 = vand.u32 %v339, 4294901760
      %v1189 = vsub.f32 %v339, %v1188
      %v1190 = vand.u32 %v1189, 4294901760
      %1191 = vmatpush1.msra.mxu0 %v1190
      %1192 = vmatprep.subr.mxu0 0.0
      %v1193 = vand.u32 %v340, 4294901760
      %v1194 = vsub.f32 %v340, %v1193
      %v1195 = vand.u32 %v1194, 4294901760
      %1196 = vmatpush1.msra.mxu0 %v1195
      %1197 = vmatprep.subr.mxu0 0.0
      %v1198 = vand.u32 %v341, 4294901760
      %v1199 = vsub.f32 %v341, %v1198
      %v1200 = vand.u32 %v1199, 4294901760
      %1201 = vmatpush1.msra.mxu0 %v1200
      %1202 = vmatprep.subr.mxu0 0.0
      %v1203 = vand.u32 %v342, 4294901760
      %v1204 = vsub.f32 %v342, %v1203
      %v1205 = vand.u32 %v1204, 4294901760
      %1206 = vmatpush1.msra.mxu0 %v1205
      %1207 = vmatprep.subr.mxu0 0.0
      %v1208 = vand.u32 %v343, 4294901760
      %v1209 = vsub.f32 %v343, %v1208
      %v1210 = vand.u32 %v1209, 4294901760
      %1211 = vmatpush1.msra.mxu0 %v1210
      %1212 = vmatprep.subr.mxu0 0.0
      %v1213 = vand.u32 %v344, 4294901760
      %v1214 = vsub.f32 %v344, %v1213
      %v1215 = vand.u32 %v1214, 4294901760
      %1216 = vmatpush1.msra.mxu0 %v1215
      %1217 = vmatprep.subr.mxu0 0.0
      %v1218 = vand.u32 %v345, 4294901760
      %v1219 = vsub.f32 %v345, %v1218
      %v1220 = vand.u32 %v1219, 4294901760
      %1221 = vmatpush1.msra.mxu0 %v1220
      %v1222 = vand.u32 %v307, 4294901760
      %1223 = vmatprep.mubr.f32.mxu0 %v1222
      %v1224 = vand.u32 %v306, 4294901760
      %1225 = vmatmul.mubr.f32.gmra.mrb[0].mxu0 %v1224
      %v1226 = vpop.f32.mrb[0].mxu0
      %v1227 = vadd.f32 %v1026, %v1226
      %v1228 = vpop.f32.mrb[0].mxu0
      %v1229 = vand.u32 %v309, 4294901760
      %1230 = vmatprep.mubr.f32.mxu0 %v1229
      %v1231 = vand.u32 %v308, 4294901760
      %1232 = vmatmul.mubr.f32.gmra.mrb[0].mxu0 %v1231
      %v1233 = vpop.f32.mrb[0].mxu0
      %v1234 = vadd.f32 %v1037, %v1233
      %v1235 = vpop.f32.mrb[0].mxu0
      %v1236 = vand.u32 %v311, 4294901760
      %1237 = vmatprep.mubr.f32.mxu0 %v1236
      %v1238 = vand.u32 %v310, 4294901760
      %1239 = vmatmul.mubr.f32.gmra.mrb[0].mxu0 %v1238
      %v1240 = vpop.f32.mrb[0].mxu0
      %v1241 = vadd.f32 %v1048, %v1240
      %v1242 = vpop.f32.mrb[0].mxu0
      %v1243 = vand.u32 %v313, 4294901760
      %1244 = vmatprep.mubr.f32.mxu0 %v1243
      %v1245 = vand.u32 %v312, 4294901760
      %1246 = vmatmul.mubr.f32.gmra.mrb[0].mxu0 %v1245
      %v1247 = vpop.f32.mrb[0].mxu0
      %v1248 = vadd.f32 %v1059, %v1247
      %v1249 = vpop.f32.mrb[0].mxu0
      %1250 = vdwg.mxu0
      %1251 = vmatprep.subr.mxu0 0.0
      %v1252 = vand.u32 %v314, 4294901760
      %1253 = vmatpush1.msra.mxu0 %v1252
      %1254 = vmatprep.subr.mxu0 0.0
      %v1255 = vand.u32 %v315, 4294901760
      %1256 = vmatpush1.msra.mxu0 %v1255
      %1257 = vmatprep.subr.mxu0 0.0
      %v1258 = vand.u32 %v316, 4294901760
      %1259 = vmatpush1.msra.mxu0 %v1258
      %1260 = vmatprep.subr.mxu0 0.0
      %v1261 = vand.u32 %v317, 4294901760
      %1262 = vmatpush1.msra.mxu0 %v1261
      %1263 = vmatprep.subr.mxu0 0.0
      %v1264 = vand.u32 %v318, 4294901760
      %1265 = vmatpush1.msra.mxu0 %v1264
      %1266 = vmatprep.subr.mxu0 0.0
      %v1267 = vand.u32 %v319, 4294901760
      %1268 = vmatpush1.msra.mxu0 %v1267
      %1269 = vmatprep.subr.mxu0 0.0
      %v1270 = vand.u32 %v320, 4294901760
      %1271 = vmatpush1.msra.mxu0 %v1270
      %1272 = vmatprep.subr.mxu0 0.0
      %v1273 = vand.u32 %v321, 4294901760
      %1274 = vmatpush1.msra.mxu0 %v1273
      %1275 = vmatprep.subr.mxu0 0.0
      %v1276 = vand.u32 %v322, 4294901760
      %1277 = vmatpush1.msra.mxu0 %v1276
      %1278 = vmatprep.subr.mxu0 0.0
      %v1279 = vand.u32 %v323, 4294901760
      %1280 = vmatpush1.msra.mxu0 %v1279
      %1281 = vmatprep.subr.mxu0 0.0
      %v1282 = vand.u32 %v324, 4294901760
      %1283 = vmatpush1.msra.mxu0 %v1282
      %1284 = vmatprep.subr.mxu0 0.0
      %v1285 = vand.u32 %v325, 4294901760
      %1286 = vmatpush1.msra.mxu0 %v1285
      %1287 = vmatprep.subr.mxu0 0.0
      %v1288 = vand.u32 %v326, 4294901760
      %1289 = vmatpush1.msra.mxu0 %v1288
      %1290 = vmatprep.subr.mxu0 0.0
      %v1291 = vand.u32 %v327, 4294901760
      %1292 = vmatpush1.msra.mxu0 %v1291
      %1293 = vmatprep.subr.mxu0 0.0
      %v1294 = vand.u32 %v328, 4294901760
      %1295 = vmatpush1.msra.mxu0 %v1294
      %1296 = vmatprep.subr.mxu0 0.0
      %v1297 = vand.u32 %v329, 4294901760
      %1298 = vmatpush1.msra.mxu0 %v1297
      %1299 = vmatprep.subr.mxu0 0.0
      %v1300 = vand.u32 %v330, 4294901760
      %1301 = vmatpush1.msra.mxu0 %v1300
      %1302 = vmatprep.subr.mxu0 0.0
      %v1303 = vand.u32 %v331, 4294901760
      %1304 = vmatpush1.msra.mxu0 %v1303
      %1305 = vmatprep.subr.mxu0 0.0
      %v1306 = vand.u32 %v332, 4294901760
      %1307 = vmatpush1.msra.mxu0 %v1306
      %1308 = vmatprep.subr.mxu0 0.0
      %v1309 = vand.u32 %v333, 4294901760
      %1310 = vmatpush1.msra.mxu0 %v1309
      %1311 = vmatprep.subr.mxu0 0.0
      %v1312 = vand.u32 %v334, 4294901760
      %1313 = vmatpush1.msra.mxu0 %v1312
      %1314 = vmatprep.subr.mxu0 0.0
      %v1315 = vand.u32 %v335, 4294901760
      %1316 = vmatpush1.msra.mxu0 %v1315
      %1317 = vmatprep.subr.mxu0 0.0
      %v1318 = vand.u32 %v336, 4294901760
      %1319 = vmatpush1.msra.mxu0 %v1318
      %1320 = vmatprep.subr.mxu0 0.0
      %v1321 = vand.u32 %v337, 4294901760
      %1322 = vmatpush1.msra.mxu0 %v1321
      %1323 = vmatprep.subr.mxu0 0.0
      %v1324 = vand.u32 %v338, 4294901760
      %1325 = vmatpush1.msra.mxu0 %v1324
      %1326 = vmatprep.subr.mxu0 0.0
      %v1327 = vand.u32 %v339, 4294901760
      %1328 = vmatpush1.msra.mxu0 %v1327
      %1329 = vmatprep.subr.mxu0 0.0
      %v1330 = vand.u32 %v340, 4294901760
      %1331 = vmatpush1.msra.mxu0 %v1330
      %1332 = vmatprep.subr.mxu0 0.0
      %v1333 = vand.u32 %v341, 4294901760
      %1334 = vmatpush1.msra.mxu0 %v1333
      %1335 = vmatprep.subr.mxu0 0.0
      %v1336 = vand.u32 %v342, 4294901760
      %1337 = vmatpush1.msra.mxu0 %v1336
      %1338 = vmatprep.subr.mxu0 0.0
      %v1339 = vand.u32 %v343, 4294901760
      %1340 = vmatpush1.msra.mxu0 %v1339
      %1341 = vmatprep.subr.mxu0 0.0
      %v1342 = vand.u32 %v344, 4294901760
      %1343 = vmatpush1.msra.mxu0 %v1342
      %1344 = vmatprep.subr.mxu0 0.0
      %v1345 = vand.u32 %v345, 4294901760
      %1346 = vmatpush1.msra.mxu0 %v1345
      %v1347 = vand.u32 %v307, 4294901760
      %1348 = vmatprep.mubr.f32.mxu0 %v1347
      %v1349 = vand.u32 %v306, 4294901760
      %1350 = vmatmul.mubr.f32.gmra.mrb[0].mxu0 %v1349
      %v1351 = vpop.f32.mrb[0].mxu0
      %v1352 = vadd.f32 %v1227, %v1351
      %v1353 = vpop.f32.mrb[0].mxu0
      %v1354 = vand.u32 %v309, 4294901760
      %1355 = vmatprep.mubr.f32.mxu0 %v1354
      %v1356 = vand.u32 %v308, 4294901760
      %1357 = vmatmul.mubr.f32.gmra.mrb[0].mxu0 %v1356
      %v1358 = vpop.f32.mrb[0].mxu0
      %v1359 = vadd.f32 %v1234, %v1358
      %v1360 = vpop.f32.mrb[0].mxu0
      %v1361 = vand.u32 %v311, 4294901760
      %1362 = vmatprep.mubr.f32.mxu0 %v1361
      %v1363 = vand.u32 %v310, 4294901760
      %1364 = vmatmul.mubr.f32.gmra.mrb[0].mxu0 %v1363
      %v1365 = vpop.f32.mrb[0].mxu0
      %v1366 = vadd.f32 %v1241, %v1365
      %v1367 = vpop.f32.mrb[0].mxu0
      %v1368 = vand.u32 %v313, 4294901760
      %1369 = vmatprep.mubr.f32.mxu0 %v1368
      %v1370 = vand.u32 %v312, 4294901760
      %1371 = vmatmul.mubr.f32.gmra.mrb[0].mxu0 %v1370
      %v1372 = vpop.f32.mrb[0].mxu0
      %v1373 = vadd.f32 %v1248, %v1372
      %v1374 = vpop.f32.mrb[0].mxu0
      %1375 = vdwg.mxu0
      %v1376 = vld [vmem:[%s2] sm:$0xff]
      %v1377 = vld [vmem:[%s3] sm:$0xff]
      %1379 = vset.pattern.permute.xlu0 0
      %1380 = vperm.xlu0 %1379, %v1377
      %v1381 = vpop.permute.xlu0 %1380
      %vm1383 = vcmask 261120
      %v1385 = vsel %vm1383, %v1376, 0
      %1387 = vmatprep.subr.mxu0 0.0
      %v1388 = vand.u32 %v1352, 4294901760
      %1389 = vmatpush1.msra.mxu0 %v1388
      %1390 = vmatprep.subr.mxu0 0.0
      %v1391 = vand.u32 %v1359, 4294901760
      %1392 = vmatpush1.msra.mxu0 %v1391
      %1393 = vmatprep.subr.mxu0 0.0
      %v1394 = vand.u32 %v1366, 4294901760
      %1395 = vmatpush1.msra.mxu0 %v1394
      %1396 = vmatprep.subr.mxu0 0.0
      %v1397 = vand.u32 %v1373, 4294901760
      %1398 = vmatpush1.msra.mxu0 %v1397
      %1399 = vmatprep.subr.mxu0 0.0
      %1400 = vmatpush1.msra.mxu0 0.0
      %1401 = vmatprep.subr.mxu0 0.0
      %1402 = vmatpush1.msra.mxu0 0.0
      %1403 = vmatprep.subr.mxu0 0.0
      %1404 = vmatpush1.msra.mxu0 0.0
      %1405 = vmatprep.subr.mxu0 0.0
      %1406 = vmatpush1.msra.mxu0 0.0
      %1407 = vmatprep.subr.mxu0 0.0
      %1408 = vmatpush1.msra.mxu0 0.0
      %1409 = vmatprep.subr.mxu0 0.0
      %1410 = vmatpush1.msra.mxu0 0.0
      %1411 = vmatprep.subr.mxu0 0.0
      %1412 = vmatpush1.msra.mxu0 0.0
      %1413 = vmatprep.subr.mxu0 0.0
      %1414 = vmatpush1.msra.mxu0 0.0
      %1415 = vmatprep.subr.mxu0 0.0
      %1416 = vmatpush1.msra.mxu0 0.0
      %1417 = vmatprep.subr.mxu0 0.0
      %1418 = vmatpush1.msra.mxu0 0.0
      %1419 = vmatprep.subr.mxu0 0.0
      %1420 = vmatpush1.msra.mxu0 0.0
      %1421 = vmatprep.subr.mxu0 0.0
      %1422 = vmatpush1.msra.mxu0 0.0
      %1423 = vmatprep.subr.mxu0 0.0
      %1424 = vmatpush1.msra.mxu0 0.0
      %1425 = vmatprep.subr.mxu0 0.0
      %1426 = vmatpush1.msra.mxu0 0.0
      %1427 = vmatprep.subr.mxu0 0.0
      %1428 = vmatpush1.msra.mxu0 0.0
      %1429 = vmatprep.subr.mxu0 0.0
      %1430 = vmatpush1.msra.mxu0 0.0
      %1431 = vmatprep.subr.mxu0 0.0
      %1432 = vmatpush1.msra.mxu0 0.0
      %1433 = vmatprep.subr.mxu0 0.0
      %1434 = vmatpush1.msra.mxu0 0.0
      %1435 = vmatprep.subr.mxu0 0.0
      %1436 = vmatpush1.msra.mxu0 0.0
      %1437 = vmatprep.subr.mxu0 0.0
      %1438 = vmatpush1.msra.mxu0 0.0
      %1439 = vmatprep.subr.mxu0 0.0
      %1440 = vmatpush1.msra.mxu0 0.0
      %1441 = vmatprep.subr.mxu0 0.0
      %1442 = vmatpush1.msra.mxu0 0.0
      %1443 = vmatprep.subr.mxu0 0.0
      %1444 = vmatpush1.msra.mxu0 0.0
      %1445 = vmatprep.subr.mxu0 0.0
      %1446 = vmatpush1.msra.mxu0 0.0
      %1447 = vmatprep.subr.mxu0 0.0
      %1448 = vmatpush1.msra.mxu0 0.0
      %1449 = vmatprep.subr.mxu0 0.0
      %1450 = vmatpush1.msra.mxu0 0.0
      %1451 = vmatprep.subr.mxu0 0.0
      %1452 = vmatpush1.msra.mxu0 0.0
      %1453 = vmatprep.subr.mxu0 0.0
      %1454 = vmatpush1.msra.mxu0 0.0
      %1455 = vmatprep.mubr.f32.mxu0 0.0
      %v1456 = vand.u32 %v1385, 4294901760
      %v1457 = vsub.f32 %v1385, %v1456
      %v1458 = vand.u32 %v1457, 4294901760
      %v1459 = vsub.f32 %v1457, %v1458
      %v1460 = vand.u32 %v1459, 4294901760
      %1461 = vmatmul.mubr.f32.gmra.mrb[0].mxu0 %v1460
      %v1462 = vpop.f32.mrb[0].mxu0
      %v1463 = vadd.f32 %v1381, %v1462
      %v1464 = vpop.f32.mrb[0].mxu0
      %1465 = vdwg.mxu0
      %1466 = vmatprep.subr.mxu0 0.0
      %v1467 = vand.u32 %v1352, 4294901760
      %v1468 = vsub.f32 %v1352, %v1467
      %v1469 = vand.u32 %v1468, 4294901760
      %v1470 = vsub.f32 %v1468, %v1469
      %v1471 = vand.u32 %v1470, 4294901760
      %1472 = vmatpush1.msra.mxu0 %v1471
      %1473 = vmatprep.subr.mxu0 0.0
      %v1474 = vand.u32 %v1359, 4294901760
      %v1475 = vsub.f32 %v1359, %v1474
      %v1476 = vand.u32 %v1475, 4294901760
      %v1477 = vsub.f32 %v1475, %v1476
      %v1478 = vand.u32 %v1477, 4294901760
      %1479 = vmatpush1.msra.mxu0 %v1478
      %1480 = vmatprep.subr.mxu0 0.0
      %v1481 = vand.u32 %v1366, 4294901760
      %v1482 = vsub.f32 %v1366, %v1481
      %v1483 = vand.u32 %v1482, 4294901760
      %v1484 = vsub.f32 %v1482, %v1483
      %v1485 = vand.u32 %v1484, 4294901760
      %1486 = vmatpush1.msra.mxu0 %v1485
      %1487 = vmatprep.subr.mxu0 0.0
      %v1488 = vand.u32 %v1373, 4294901760
      %v1489 = vsub.f32 %v1373, %v1488
      %v1490 = vand.u32 %v1489, 4294901760
      %v1491 = vsub.f32 %v1489, %v1490
      %v1492 = vand.u32 %v1491, 4294901760
      %1493 = vmatpush1.msra.mxu0 %v1492
      %1494 = vmatprep.subr.mxu0 0.0
      %1495 = vmatpush1.msra.mxu0 0.0
      %1496 = vmatprep.subr.mxu0 0.0
      %1497 = vmatpush1.msra.mxu0 0.0
      %1498 = vmatprep.subr.mxu0 0.0
      %1499 = vmatpush1.msra.mxu0 0.0
      %1500 = vmatprep.subr.mxu0 0.0
      %1501 = vmatpush1.msra.mxu0 0.0
      %1502 = vmatprep.subr.mxu0 0.0
      %1503 = vmatpush1.msra.mxu0 0.0
      %1504 = vmatprep.subr.mxu0 0.0
      %1505 = vmatpush1.msra.mxu0 0.0
      %1506 = vmatprep.subr.mxu0 0.0
      %1507 = vmatpush1.msra.mxu0 0.0
      %1508 = vmatprep.subr.mxu0 0.0
      %1509 = vmatpush1.msra.mxu0 0.0
      %1510 = vmatprep.subr.mxu0 0.0
      %1511 = vmatpush1.msra.mxu0 0.0
      %1512 = vmatprep.subr.mxu0 0.0
      %1513 = vmatpush1.msra.mxu0 0.0
      %1514 = vmatprep.subr.mxu0 0.0
      %1515 = vmatpush1.msra.mxu0 0.0
      %1516 = vmatprep.subr.mxu0 0.0
      %1517 = vmatpush1.msra.mxu0 0.0
      %1518 = vmatprep.subr.mxu0 0.0
      %1519 = vmatpush1.msra.mxu0 0.0
      %1520 = vmatprep.subr.mxu0 0.0
      %1521 = vmatpush1.msra.mxu0 0.0
      %1522 = vmatprep.subr.mxu0 0.0
      %1523 = vmatpush1.msra.mxu0 0.0
      %1524 = vmatprep.subr.mxu0 0.0
      %1525 = vmatpush1.msra.mxu0 0.0
      %1526 = vmatprep.subr.mxu0 0.0
      %1527 = vmatpush1.msra.mxu0 0.0
      %1528 = vmatprep.subr.mxu0 0.0
      %1529 = vmatpush1.msra.mxu0 0.0
      %1530 = vmatprep.subr.mxu0 0.0
      %1531 = vmatpush1.msra.mxu0 0.0
      %1532 = vmatprep.subr.mxu0 0.0
      %1533 = vmatpush1.msra.mxu0 0.0
      %1534 = vmatprep.subr.mxu0 0.0
      %1535 = vmatpush1.msra.mxu0 0.0
      %1536 = vmatprep.subr.mxu0 0.0
      %1537 = vmatpush1.msra.mxu0 0.0
      %1538 = vmatprep.subr.mxu0 0.0
      %1539 = vmatpush1.msra.mxu0 0.0
      %1540 = vmatprep.subr.mxu0 0.0
      %1541 = vmatpush1.msra.mxu0 0.0
      %1542 = vmatprep.subr.mxu0 0.0
      %1543 = vmatpush1.msra.mxu0 0.0
      %1544 = vmatprep.subr.mxu0 0.0
      %1545 = vmatpush1.msra.mxu0 0.0
      %1546 = vmatprep.subr.mxu0 0.0
      %1547 = vmatpush1.msra.mxu0 0.0
      %1548 = vmatprep.subr.mxu0 0.0
      %1549 = vmatpush1.msra.mxu0 0.0
      %1550 = vmatprep.mubr.f32.mxu0 0.0
      %v1551 = vand.u32 %v1385, 4294901760
      %1552 = vmatmul.mubr.f32.gmra.mrb[0].mxu0 %v1551
      %v1553 = vpop.f32.mrb[0].mxu0
      %v1554 = vadd.f32 %v1463, %v1553
      %v1555 = vpop.f32.mrb[0].mxu0
      %1556 = vdwg.mxu0
      %1557 = vmatprep.subr.mxu0 0.0
      %v1558 = vand.u32 %v1352, 4294901760
      %v1559 = vsub.f32 %v1352, %v1558
      %1560 = vmatpush1.msra.mxu0 %v1559
      %1561 = vmatprep.subr.mxu0 0.0
      %v1562 = vand.u32 %v1359, 4294901760
      %v1563 = vsub.f32 %v1359, %v1562
      %1564 = vmatpush1.msra.mxu0 %v1563
      %1565 = vmatprep.subr.mxu0 0.0
      %v1566 = vand.u32 %v1366, 4294901760
      %v1567 = vsub.f32 %v1366, %v1566
      %1568 = vmatpush1.msra.mxu0 %v1567
      %1569 = vmatprep.subr.mxu0 0.0
      %v1570 = vand.u32 %v1373, 4294901760
      %v1571 = vsub.f32 %v1373, %v1570
      %1572 = vmatpush1.msra.mxu0 %v1571
      %1573 = vmatprep.subr.mxu0 0.0
      %1574 = vmatpush1.msra.mxu0 0.0
      %1575 = vmatprep.subr.mxu0 0.0
      %1576 = vmatpush1.msra.mxu0 0.0
      %1577 = vmatprep.subr.mxu0 0.0
      %1578 = vmatpush1.msra.mxu0 0.0
      %1579 = vmatprep.subr.mxu0 0.0
      %1580 = vmatpush1.msra.mxu0 0.0
      %1581 = vmatprep.subr.mxu0 0.0
      %1582 = vmatpush1.msra.mxu0 0.0
      %1583 = vmatprep.subr.mxu0 0.0
      %1584 = vmatpush1.msra.mxu0 0.0
      %1585 = vmatprep.subr.mxu0 0.0
      %1586 = vmatpush1.msra.mxu0 0.0
      %1587 = vmatprep.subr.mxu0 0.0
      %1588 = vmatpush1.msra.mxu0 0.0
      %1589 = vmatprep.subr.mxu0 0.0
      %1590 = vmatpush1.msra.mxu0 0.0
      %1591 = vmatprep.subr.mxu0 0.0
      %1592 = vmatpush1.msra.mxu0 0.0
      %1593 = vmatprep.subr.mxu0 0.0
      %1594 = vmatpush1.msra.mxu0 0.0
      %1595 = vmatprep.subr.mxu0 0.0
      %1596 = vmatpush1.msra.mxu0 0.0
      %1597 = vmatprep.subr.mxu0 0.0
      %1598 = vmatpush1.msra.mxu0 0.0
      %1599 = vmatprep.subr.mxu0 0.0
      %1600 = vmatpush1.msra.mxu0 0.0
      %1601 = vmatprep.subr.mxu0 0.0
      %1602 = vmatpush1.msra.mxu0 0.0
      %1603 = vmatprep.subr.mxu0 0.0
      %1604 = vmatpush1.msra.mxu0 0.0
      %1605 = vmatprep.subr.mxu0 0.0
      %1606 = vmatpush1.msra.mxu0 0.0
      %1607 = vmatprep.subr.mxu0 0.0
      %1608 = vmatpush1.msra.mxu0 0.0
      %1609 = vmatprep.subr.mxu0 0.0
      %1610 = vmatpush1.msra.mxu0 0.0
      %1611 = vmatprep.subr.mxu0 0.0
      %1612 = vmatpush1.msra.mxu0 0.0
      %1613 = vmatprep.subr.mxu0 0.0
      %1614 = vmatpush1.msra.mxu0 0.0
      %1615 = vmatprep.subr.mxu0 0.0
      %1616 = vmatpush1.msra.mxu0 0.0
      %1617 = vmatprep.subr.mxu0 0.0
      %1618 = vmatpush1.msra.mxu0 0.0
      %1619 = vmatprep.subr.mxu0 0.0
      %1620 = vmatpush1.msra.mxu0 0.0
      %1621 = vmatprep.subr.mxu0 0.0
      %1622 = vmatpush1.msra.mxu0 0.0
      %1623 = vmatprep.subr.mxu0 0.0
      %1624 = vmatpush1.msra.mxu0 0.0
      %1625 = vmatprep.subr.mxu0 0.0
      %1626 = vmatpush1.msra.mxu0 0.0
      %1627 = vmatprep.subr.mxu0 0.0
      %1628 = vmatpush1.msra.mxu0 0.0
      %1629 = vmatprep.mubr.f32.mxu0 0.0
      %v1630 = vand.u32 %v1385, 4294901760
      %v1631 = vsub.f32 %v1385, %v1630
      %1632 = vmatmul.mubr.f32.gmra.mrb[0].mxu0 %v1631
      %v1633 = vpop.f32.mrb[0].mxu0
      %v1634 = vadd.f32 %v1554, %v1633
      %v1635 = vpop.f32.mrb[0].mxu0
      %1636 = vdwg.mxu0
      %1637 = vmatprep.subr.mxu0 0.0
      %v1638 = vand.u32 %v1352, 4294901760
      %1639 = vmatpush1.msra.mxu0 %v1638
      %1640 = vmatprep.subr.mxu0 0.0
      %v1641 = vand.u32 %v1359, 4294901760
      %1642 = vmatpush1.msra.mxu0 %v1641
      %1643 = vmatprep.subr.mxu0 0.0
      %v1644 = vand.u32 %v1366, 4294901760
      %1645 = vmatpush1.msra.mxu0 %v1644
      %1646 = vmatprep.subr.mxu0 0.0
      %v1647 = vand.u32 %v1373, 4294901760
      %1648 = vmatpush1.msra.mxu0 %v1647
      %1649 = vmatprep.subr.mxu0 0.0
      %1650 = vmatpush1.msra.mxu0 0.0
      %1651 = vmatprep.subr.mxu0 0.0
      %1652 = vmatpush1.msra.mxu0 0.0
      %1653 = vmatprep.subr.mxu0 0.0
      %1654 = vmatpush1.msra.mxu0 0.0
      %1655 = vmatprep.subr.mxu0 0.0
      %1656 = vmatpush1.msra.mxu0 0.0
      %1657 = vmatprep.subr.mxu0 0.0
      %1658 = vmatpush1.msra.mxu0 0.0
      %1659 = vmatprep.subr.mxu0 0.0
      %1660 = vmatpush1.msra.mxu0 0.0
      %1661 = vmatprep.subr.mxu0 0.0
      %1662 = vmatpush1.msra.mxu0 0.0
      %1663 = vmatprep.subr.mxu0 0.0
      %1664 = vmatpush1.msra.mxu0 0.0
      %1665 = vmatprep.subr.mxu0 0.0
      %1666 = vmatpush1.msra.mxu0 0.0
      %1667 = vmatprep.subr.mxu0 0.0
      %1668 = vmatpush1.msra.mxu0 0.0
      %1669 = vmatprep.subr.mxu0 0.0
      %1670 = vmatpush1.msra.mxu0 0.0
      %1671 = vmatprep.subr.mxu0 0.0
      %1672 = vmatpush1.msra.mxu0 0.0
      %1673 = vmatprep.subr.mxu0 0.0
      %1674 = vmatpush1.msra.mxu0 0.0
      %1675 = vmatprep.subr.mxu0 0.0
      %1676 = vmatpush1.msra.mxu0 0.0
      %1677 = vmatprep.subr.mxu0 0.0
      %1678 = vmatpush1.msra.mxu0 0.0
      %1679 = vmatprep.subr.mxu0 0.0
      %1680 = vmatpush1.msra.mxu0 0.0
      %1681 = vmatprep.subr.mxu0 0.0
      %1682 = vmatpush1.msra.mxu0 0.0
      %1683 = vmatprep.subr.mxu0 0.0
      %1684 = vmatpush1.msra.mxu0 0.0
      %1685 = vmatprep.subr.mxu0 0.0
      %1686 = vmatpush1.msra.mxu0 0.0
      %1687 = vmatprep.subr.mxu0 0.0
      %1688 = vmatpush1.msra.mxu0 0.0
      %1689 = vmatprep.subr.mxu0 0.0
      %1690 = vmatpush1.msra.mxu0 0.0
      %1691 = vmatprep.subr.mxu0 0.0
      %1692 = vmatpush1.msra.mxu0 0.0
      %1693 = vmatprep.subr.mxu0 0.0
      %1694 = vmatpush1.msra.mxu0 0.0
      %1695 = vmatprep.subr.mxu0 0.0
      %1696 = vmatpush1.msra.mxu0 0.0
      %1697 = vmatprep.subr.mxu0 0.0
      %1698 = vmatpush1.msra.mxu0 0.0
      %1699 = vmatprep.subr.mxu0 0.0
      %1700 = vmatpush1.msra.mxu0 0.0
      %1701 = vmatprep.subr.mxu0 0.0
      %1702 = vmatpush1.msra.mxu0 0.0
      %1703 = vmatprep.subr.mxu0 0.0
      %1704 = vmatpush1.msra.mxu0 0.0
      %1705 = vmatprep.mubr.f32.mxu0 0.0
      %v1706 = vand.u32 %v1385, 4294901760
      %v1707 = vsub.f32 %v1385, %v1706
      %v1708 = vand.u32 %v1707, 4294901760
      %1709 = vmatmul.mubr.f32.gmra.mrb[0].mxu0 %v1708
      %v1710 = vpop.f32.mrb[0].mxu0
      %v1711 = vadd.f32 %v1634, %v1710
      %v1712 = vpop.f32.mrb[0].mxu0
      %1713 = vdwg.mxu0
      %1714 = vmatprep.subr.mxu0 0.0
      %v1715 = vand.u32 %v1352, 4294901760
      %v1716 = vsub.f32 %v1352, %v1715
      %v1717 = vand.u32 %v1716, 4294901760
      %1718 = vmatpush1.msra.mxu0 %v1717
      %1719 = vmatprep.subr.mxu0 0.0
      %v1720 = vand.u32 %v1359, 4294901760
      %v1721 = vsub.f32 %v1359, %v1720
      %v1722 = vand.u32 %v1721, 4294901760
      %1723 = vmatpush1.msra.mxu0 %v1722
      %1724 = vmatprep.subr.mxu0 0.0
      %v1725 = vand.u32 %v1366, 4294901760
      %v1726 = vsub.f32 %v1366, %v1725
      %v1727 = vand.u32 %v1726, 4294901760
      %1728 = vmatpush1.msra.mxu0 %v1727
      %1729 = vmatprep.subr.mxu0 0.0
      %v1730 = vand.u32 %v1373, 4294901760
      %v1731 = vsub.f32 %v1373, %v1730
      %v1732 = vand.u32 %v1731, 4294901760
      %1733 = vmatpush1.msra.mxu0 %v1732
      %1734 = vmatprep.subr.mxu0 0.0
      %1735 = vmatpush1.msra.mxu0 0.0
      %1736 = vmatprep.subr.mxu0 0.0
      %1737 = vmatpush1.msra.mxu0 0.0
      %1738 = vmatprep.subr.mxu0 0.0
      %1739 = vmatpush1.msra.mxu0 0.0
      %1740 = vmatprep.subr.mxu0 0.0
      %1741 = vmatpush1.msra.mxu0 0.0
      %1742 = vmatprep.subr.mxu0 0.0
      %1743 = vmatpush1.msra.mxu0 0.0
      %1744 = vmatprep.subr.mxu0 0.0
      %1745 = vmatpush1.msra.mxu0 0.0
      %1746 = vmatprep.subr.mxu0 0.0
      %1747 = vmatpush1.msra.mxu0 0.0
      %1748 = vmatprep.subr.mxu0 0.0
      %1749 = vmatpush1.msra.mxu0 0.0
      %1750 = vmatprep.subr.mxu0 0.0
      %1751 = vmatpush1.msra.mxu0 0.0
      %1752 = vmatprep.subr.mxu0 0.0
      %1753 = vmatpush1.msra.mxu0 0.0
      %1754 = vmatprep.subr.mxu0 0.0
      %1755 = vmatpush1.msra.mxu0 0.0
      %1756 = vmatprep.subr.mxu0 0.0
      %1757 = vmatpush1.msra.mxu0 0.0
      %1758 = vmatprep.subr.mxu0 0.0
      %1759 = vmatpush1.msra.mxu0 0.0
      %1760 = vmatprep.subr.mxu0 0.0
      %1761 = vmatpush1.msra.mxu0 0.0
      %1762 = vmatprep.subr.mxu0 0.0
      %1763 = vmatpush1.msra.mxu0 0.0
      %1764 = vmatprep.subr.mxu0 0.0
      %1765 = vmatpush1.msra.mxu0 0.0
      %1766 = vmatprep.subr.mxu0 0.0
      %1767 = vmatpush1.msra.mxu0 0.0
      %1768 = vmatprep.subr.mxu0 0.0
      %1769 = vmatpush1.msra.mxu0 0.0
      %1770 = vmatprep.subr.mxu0 0.0
      %1771 = vmatpush1.msra.mxu0 0.0
      %1772 = vmatprep.subr.mxu0 0.0
      %1773 = vmatpush1.msra.mxu0 0.0
      %1774 = vmatprep.subr.mxu0 0.0
      %1775 = vmatpush1.msra.mxu0 0.0
      %1776 = vmatprep.subr.mxu0 0.0
      %1777 = vmatpush1.msra.mxu0 0.0
      %1778 = vmatprep.subr.mxu0 0.0
      %1779 = vmatpush1.msra.mxu0 0.0
      %1780 = vmatprep.subr.mxu0 0.0
      %1781 = vmatpush1.msra.mxu0 0.0
      %1782 = vmatprep.subr.mxu0 0.0
      %1783 = vmatpush1.msra.mxu0 0.0
      %1784 = vmatprep.subr.mxu0 0.0
      %1785 = vmatpush1.msra.mxu0 0.0
      %1786 = vmatprep.subr.mxu0 0.0
      %1787 = vmatpush1.msra.mxu0 0.0
      %1788 = vmatprep.subr.mxu0 0.0
      %1789 = vmatpush1.msra.mxu0 0.0
      %1790 = vmatprep.mubr.f32.mxu0 0.0
      %v1791 = vand.u32 %v1385, 4294901760
      %1792 = vmatmul.mubr.f32.gmra.mrb[0].mxu0 %v1791
      %v1793 = vpop.f32.mrb[0].mxu0
      %v1794 = vadd.f32 %v1711, %v1793
      %v1795 = vpop.f32.mrb[0].mxu0
      %1796 = vdwg.mxu0
      %1797 = vmatprep.subr.mxu0 0.0
      %v1798 = vand.u32 %v1352, 4294901760
      %1799 = vmatpush1.msra.mxu0 %v1798
      %1800 = vmatprep.subr.mxu0 0.0
      %v1801 = vand.u32 %v1359, 4294901760
      %1802 = vmatpush1.msra.mxu0 %v1801
      %1803 = vmatprep.subr.mxu0 0.0
      %v1804 = vand.u32 %v1366, 4294901760
      %1805 = vmatpush1.msra.mxu0 %v1804
      %1806 = vmatprep.subr.mxu0 0.0
      %v1807 = vand.u32 %v1373, 4294901760
      %1808 = vmatpush1.msra.mxu0 %v1807
      %1809 = vmatprep.subr.mxu0 0.0
      %1810 = vmatpush1.msra.mxu0 0.0
      %1811 = vmatprep.subr.mxu0 0.0
      %1812 = vmatpush1.msra.mxu0 0.0
      %1813 = vmatprep.subr.mxu0 0.0
      %1814 = vmatpush1.msra.mxu0 0.0
      %1815 = vmatprep.subr.mxu0 0.0
      %1816 = vmatpush1.msra.mxu0 0.0
      %1817 = vmatprep.subr.mxu0 0.0
      %1818 = vmatpush1.msra.mxu0 0.0
      %1819 = vmatprep.subr.mxu0 0.0
      %1820 = vmatpush1.msra.mxu0 0.0
      %1821 = vmatprep.subr.mxu0 0.0
      %1822 = vmatpush1.msra.mxu0 0.0
      %1823 = vmatprep.subr.mxu0 0.0
      %1824 = vmatpush1.msra.mxu0 0.0
      %1825 = vmatprep.subr.mxu0 0.0
      %1826 = vmatpush1.msra.mxu0 0.0
      %1827 = vmatprep.subr.mxu0 0.0
      %1828 = vmatpush1.msra.mxu0 0.0
      %1829 = vmatprep.subr.mxu0 0.0
      %1830 = vmatpush1.msra.mxu0 0.0
      %1831 = vmatprep.subr.mxu0 0.0
      %1832 = vmatpush1.msra.mxu0 0.0
      %1833 = vmatprep.subr.mxu0 0.0
      %1834 = vmatpush1.msra.mxu0 0.0
      %1835 = vmatprep.subr.mxu0 0.0
      %1836 = vmatpush1.msra.mxu0 0.0
      %1837 = vmatprep.subr.mxu0 0.0
      %1838 = vmatpush1.msra.mxu0 0.0
      %1839 = vmatprep.subr.mxu0 0.0
      %1840 = vmatpush1.msra.mxu0 0.0
      %1841 = vmatprep.subr.mxu0 0.0
      %1842 = vmatpush1.msra.mxu0 0.0
      %1843 = vmatprep.subr.mxu0 0.0
      %1844 = vmatpush1.msra.mxu0 0.0
      %1845 = vmatprep.subr.mxu0 0.0
      %1846 = vmatpush1.msra.mxu0 0.0
      %1847 = vmatprep.subr.mxu0 0.0
      %1848 = vmatpush1.msra.mxu0 0.0
      %1849 = vmatprep.subr.mxu0 0.0
      %1850 = vmatpush1.msra.mxu0 0.0
      %1851 = vmatprep.subr.mxu0 0.0
      %1852 = vmatpush1.msra.mxu0 0.0
      %1853 = vmatprep.subr.mxu0 0.0
      %1854 = vmatpush1.msra.mxu0 0.0
      %1855 = vmatprep.subr.mxu0 0.0
      %1856 = vmatpush1.msra.mxu0 0.0
      %1857 = vmatprep.subr.mxu0 0.0
      %1858 = vmatpush1.msra.mxu0 0.0
      %1859 = vmatprep.subr.mxu0 0.0
      %1860 = vmatpush1.msra.mxu0 0.0
      %1861 = vmatprep.subr.mxu0 0.0
      %1862 = vmatpush1.msra.mxu0 0.0
      %1863 = vmatprep.subr.mxu0 0.0
      %1864 = vmatpush1.msra.mxu0 0.0
      %1865 = vmatprep.mubr.f32.mxu0 0.0
      %v1866 = vand.u32 %v1385, 4294901760
      %1867 = vmatmul.mubr.f32.gmra.mrb[0].mxu0 %v1866
      %v1868 = vpop.f32.mrb[0].mxu0
      %v1869 = vadd.f32 %v1794, %v1868
      %v1870 = vpop.f32.mrb[0].mxu0
      %1871 = vdwg.mxu0
      %v1872 = vadd.f32 %v1869, 3.0
      %v1873 = vmax.f32 %v1872, 0.0
      %v1874 = vmin.f32 %v1873, 6.0
      %v1875 = vmul.f32 %v1874, 0.16666667
      %v1876 = vmul.f32 %v1869, %v1875
      %v1877 = vld [vmem:[%s4] sm:$0xff]
      %v1878 = vld [vmem:[%s4 + $0x8] sm:$0xff]
      %v1879 = vld [vmem:[%s4 + $0x10] sm:$0xff]
      %v1880 = vld [vmem:[%s4 + $0x18] sm:$0xff]
      %v1881 = vld [vmem:[%s5] sm:$0xff]
      %v1882 = vld [vmem:[%s5 + $0x8] sm:$0xff]
      %v1883 = vld [vmem:[%s5 + $0x10] sm:$0xff]
      %v1884 = vld [vmem:[%s5 + $0x18] sm:$0xff]
      %1886 = vset.pattern.permute.xlu0 0
      %1887 = vperm.xlu0 %1886, %v1881
      %v1888 = vpop.permute.xlu0 %1887
      %1891 = vset.pattern.permute.xlu0 0
      %1892 = vperm.xlu0 %1891, %v1882
      %v1893 = vpop.permute.xlu0 %1892
      %1896 = vset.pattern.permute.xlu0 0
      %1897 = vperm.xlu0 %1896, %v1883
      %v1898 = vpop.permute.xlu0 %1897
      %1901 = vset.pattern.permute.xlu0 0
      %1902 = vperm.xlu0 %1901, %v1884
      %v1903 = vpop.permute.xlu0 %1902
      %vm1905 = vcmask 64512
      %v1907 = vsel %vm1905, %v1877, 0
      %v1910 = vsel %vm1905, %v1878, 0
      %v1913 = vsel %vm1905, %v1879, 0
      %v1916 = vsel %vm1905, %v1880, 0
      %1918 = vmatprep.subr.mxu0 0.0
      %v1919 = vand.u32 %v1876, 4294901760
      %1920 = vmatpush1.msra.mxu0 %v1919
      %1921 = vmatprep.subr.mxu0 0.0
      %1922 = vmatpush1.msra.mxu0 0.0
      %1923 = vmatprep.subr.mxu0 0.0
      %1924 = vmatpush1.msra.mxu0 0.0
      %1925 = vmatprep.subr.mxu0 0.0
      %1926 = vmatpush1.msra.mxu0 0.0
      %1927 = vmatprep.subr.mxu0 0.0
      %1928 = vmatpush1.msra.mxu0 0.0
      %1929 = vmatprep.subr.mxu0 0.0
      %1930 = vmatpush1.msra.mxu0 0.0
      %1931 = vmatprep.subr.mxu0 0.0
      %1932 = vmatpush1.msra.mxu0 0.0
      %1933 = vmatprep.subr.mxu0 0.0
      %1934 = vmatpush1.msra.mxu0 0.0
      %1935 = vmatprep.subr.mxu0 0.0
      %1936 = vmatpush1.msra.mxu0 0.0
      %1937 = vmatprep.subr.mxu0 0.0
      %1938 = vmatpush1.msra.mxu0 0.0
      %1939 = vmatprep.subr.mxu0 0.0
      %1940 = vmatpush1.msra.mxu0 0.0
      %1941 = vmatprep.subr.mxu0 0.0
      %1942 = vmatpush1.msra.mxu0 0.0
      %1943 = vmatprep.subr.mxu0 0.0
      %1944 = vmatpush1.msra.mxu0 0.0
      %1945 = vmatprep.subr.mxu0 0.0
      %1946 = vmatpush1.msra.mxu0 0.0
      %1947 = vmatprep.subr.mxu0 0.0
      %1948 = vmatpush1.msra.mxu0 0.0
      %1949 = vmatprep.subr.mxu0 0.0
      %1950 = vmatpush1.msra.mxu0 0.0
      %1951 = vmatprep.subr.mxu0 0.0
      %1952 = vmatpush1.msra.mxu0 0.0
      %1953 = vmatprep.subr.mxu0 0.0
      %1954 = vmatpush1.msra.mxu0 0.0
      %1955 = vmatprep.subr.mxu0 0.0
      %1956 = vmatpush1.msra.mxu0 0.0
      %1957 = vmatprep.subr.mxu0 0.0
      %1958 = vmatpush1.msra.mxu0 0.0
      %1959 = vmatprep.subr.mxu0 0.0
      %1960 = vmatpush1.msra.mxu0 0.0
      %1961 = vmatprep.subr.mxu0 0.0
      %1962 = vmatpush1.msra.mxu0 0.0
      %1963 = vmatprep.subr.mxu0 0.0
      %1964 = vmatpush1.msra.mxu0 0.0
      %1965 = vmatprep.subr.mxu0 0.0
      %1966 = vmatpush1.msra.mxu0 0.0
      %1967 = vmatprep.subr.mxu0 0.0
      %1968 = vmatpush1.msra.mxu0 0.0
      %1969 = vmatprep.subr.mxu0 0.0
      %1970 = vmatpush1.msra.mxu0 0.0
      %1971 = vmatprep.subr.mxu0 0.0
      %1972 = vmatpush1.msra.mxu0 0.0
      %1973 = vmatprep.subr.mxu0 0.0
      %1974 = vmatpush1.msra.mxu0 0.0
      %1975 = vmatprep.subr.mxu0 0.0
      %1976 = vmatpush1.msra.mxu0 0.0
      %1977 = vmatprep.subr.mxu0 0.0
      %1978 = vmatpush1.msra.mxu0 0.0
      %1979 = vmatprep.subr.mxu0 0.0
      %1980 = vmatpush1.msra.mxu0 0.0
      %1981 = vmatprep.subr.mxu0 0.0
      %1982 = vmatpush1.msra.mxu0 0.0
      %1983 = vmatprep.mubr.f32.mxu0 0.0
      %v1984 = vand.u32 %v1907, 4294901760
      %v1985 = vsub.f32 %v1907, %v1984
      %v1986 = vand.u32 %v1985, 4294901760
      %v1987 = vsub.f32 %v1985, %v1986
      %v1988 = vand.u32 %v1987, 4294901760
      %1989 = vmatmul.mubr.f32.gmra.mrb[0].mxu0 %v1988
      %v1990 = vpop.f32.mrb[0].mxu0
      %v1991 = vadd.f32 %v1888, %v1990
      %v1992 = vpop.f32.mrb[0].mxu0
      %1993 = vmatprep.mubr.f32.mxu0 0.0
      %v1994 = vand.u32 %v1910, 4294901760
      %v1995 = vsub.f32 %v1910, %v1994
      %v1996 = vand.u32 %v1995, 4294901760
      %v1997 = vsub.f32 %v1995, %v1996
      %v1998 = vand.u32 %v1997, 4294901760
      %1999 = vmatmul.mubr.f32.gmra.mrb[0].mxu0 %v1998
      %v2000 = vpop.f32.mrb[0].mxu0
      %v2001 = vadd.f32 %v1893, %v2000
      %v2002 = vpop.f32.mrb[0].mxu0
      %2003 = vmatprep.mubr.f32.mxu0 0.0
      %v2004 = vand.u32 %v1913, 4294901760
      %v2005 = vsub.f32 %v1913, %v2004
      %v2006 = vand.u32 %v2005, 4294901760
      %v2007 = vsub.f32 %v2005, %v2006
      %v2008 = vand.u32 %v2007, 4294901760
      %2009 = vmatmul.mubr.f32.gmra.mrb[0].mxu0 %v2008
      %v2010 = vpop.f32.mrb[0].mxu0
      %v2011 = vadd.f32 %v1898, %v2010
      %v2012 = vpop.f32.mrb[0].mxu0
      %2013 = vmatprep.mubr.f32.mxu0 0.0
      %v2014 = vand.u32 %v1916, 4294901760
      %v2015 = vsub.f32 %v1916, %v2014
      %v2016 = vand.u32 %v2015, 4294901760
      %v2017 = vsub.f32 %v2015, %v2016
      %v2018 = vand.u32 %v2017, 4294901760
      %2019 = vmatmul.mubr.f32.gmra.mrb[0].mxu0 %v2018
      %v2020 = vpop.f32.mrb[0].mxu0
      %v2021 = vadd.f32 %v1903, %v2020
      %v2022 = vpop.f32.mrb[0].mxu0
      %2023 = vdwg.mxu0
      %2024 = vmatprep.subr.mxu0 0.0
      %v2025 = vand.u32 %v1876, 4294901760
      %v2026 = vsub.f32 %v1876, %v2025
      %v2027 = vand.u32 %v2026, 4294901760
      %v2028 = vsub.f32 %v2026, %v2027
      %v2029 = vand.u32 %v2028, 4294901760
      %2030 = vmatpush1.msra.mxu0 %v2029
      %2031 = vmatprep.subr.mxu0 0.0
      %2032 = vmatpush1.msra.mxu0 0.0
      %2033 = vmatprep.subr.mxu0 0.0
      %2034 = vmatpush1.msra.mxu0 0.0
      %2035 = vmatprep.subr.mxu0 0.0
      %2036 = vmatpush1.msra.mxu0 0.0
      %2037 = vmatprep.subr.mxu0 0.0
      %2038 = vmatpush1.msra.mxu0 0.0
      %2039 = vmatprep.subr.mxu0 0.0
      %2040 = vmatpush1.msra.mxu0 0.0
      %2041 = vmatprep.subr.mxu0 0.0
      %2042 = vmatpush1.msra.mxu0 0.0
      %2043 = vmatprep.subr.mxu0 0.0
      %2044 = vmatpush1.msra.mxu0 0.0
      %2045 = vmatprep.subr.mxu0 0.0
      %2046 = vmatpush1.msra.mxu0 0.0
      %2047 = vmatprep.subr.mxu0 0.0
      %2048 = vmatpush1.msra.mxu0 0.0
      %2049 = vmatprep.subr.mxu0 0.0
      %2050 = vmatpush1.msra.mxu0 0.0
      %2051 = vmatprep.subr.mxu0 0.0
      %2052 = vmatpush1.msra.mxu0 0.0
      %2053 = vmatprep.subr.mxu0 0.0
      %2054 = vmatpush1.msra.mxu0 0.0
      %2055 = vmatprep.subr.mxu0 0.0
      %2056 = vmatpush1.msra.mxu0 0.0
      %2057 = vmatprep.subr.mxu0 0.0
      %2058 = vmatpush1.msra.mxu0 0.0
      %2059 = vmatprep.subr.mxu0 0.0
      %2060 = vmatpush1.msra.mxu0 0.0
      %2061 = vmatprep.subr.mxu0 0.0
      %2062 = vmatpush1.msra.mxu0 0.0
      %2063 = vmatprep.subr.mxu0 0.0
      %2064 = vmatpush1.msra.mxu0 0.0
      %2065 = vmatprep.subr.mxu0 0.0
      %2066 = vmatpush1.msra.mxu0 0.0
      %2067 = vmatprep.subr.mxu0 0.0
      %2068 = vmatpush1.msra.mxu0 0.0
      %2069 = vmatprep.subr.mxu0 0.0
      %2070 = vmatpush1.msra.mxu0 0.0
      %2071 = vmatprep.subr.mxu0 0.0
      %2072 = vmatpush1.msra.mxu0 0.0
      %2073 = vmatprep.subr.mxu0 0.0
      %2074 = vmatpush1.msra.mxu0 0.0
      %2075 = vmatprep.subr.mxu0 0.0
      %2076 = vmatpush1.msra.mxu0 0.0
      %2077 = vmatprep.subr.mxu0 0.0
      %2078 = vmatpush1.msra.mxu0 0.0
      %2079 = vmatprep.subr.mxu0 0.0
      %2080 = vmatpush1.msra.mxu0 0.0
      %2081 = vmatprep.subr.mxu0 0.0
      %2082 = vmatpush1.msra.mxu0 0.0
      %2083 = vmatprep.subr.mxu0 0.0
      %2084 = vmatpush1.msra.mxu0 0.0
      %2085 = vmatprep.subr.mxu0 0.0
      %2086 = vmatpush1.msra.mxu0 0.0
      %2087 = vmatprep.subr.mxu0 0.0
      %2088 = vmatpush1.msra.mxu0 0.0
      %2089 = vmatprep.subr.mxu0 0.0
      %2090 = vmatpush1.msra.mxu0 0.0
      %2091 = vmatprep.subr.mxu0 0.0
      %2092 = vmatpush1.msra.mxu0 0.0
      %2093 = vmatprep.mubr.f32.mxu0 0.0
      %v2094 = vand.u32 %v1907, 4294901760
      %2095 = vmatmul.mubr.f32.gmra.mrb[0].mxu0 %v2094
      %v2096 = vpop.f32.mrb[0].mxu0
      %v2097 = vadd.f32 %v1991, %v2096
      %v2098 = vpop.f32.mrb[0].mxu0
      %2099 = vmatprep.mubr.f32.mxu0 0.0
      %v2100 = vand.u32 %v1910, 4294901760
      %2101 = vmatmul.mubr.f32.gmra.mrb[0].mxu0 %v2100
      %v2102 = vpop.f32.mrb[0].mxu0
      %v2103 = vadd.f32 %v2001, %v2102
      %v2104 = vpop.f32.mrb[0].mxu0
      %2105 = vmatprep.mubr.f32.mxu0 0.0
      %v2106 = vand.u32 %v1913, 4294901760
      %2107 = vmatmul.mubr.f32.gmra.mrb[0].mxu0 %v2106
      %v2108 = vpop.f32.mrb[0].mxu0
      %v2109 = vadd.f32 %v2011, %v2108
      %v2110 = vpop.f32.mrb[0].mxu0
      %2111 = vmatprep.mubr.f32.mxu0 0.0
      %v2112 = vand.u32 %v1916, 4294901760
      %2113 = vmatmul.mubr.f32.gmra.mrb[0].mxu0 %v2112
      %v2114 = vpop.f32.mrb[0].mxu0
      %v2115 = vadd.f32 %v2021, %v2114
      %v2116 = vpop.f32.mrb[0].mxu0
      %2117 = vdwg.mxu0
      %2118 = vmatprep.subr.mxu0 0.0
      %v2119 = vand.u32 %v1876, 4294901760
      %v2120 = vsub.f32 %v1876, %v2119
      %2121 = vmatpush1.msra.mxu0 %v2120
      %2122 = vmatprep.subr.mxu0 0.0
      %2123 = vmatpush1.msra.mxu0 0.0
      %2124 = vmatprep.subr.mxu0 0.0
      %2125 = vmatpush1.msra.mxu0 0.0
      %2126 = vmatprep.subr.mxu0 0.0
      %2127 = vmatpush1.msra.mxu0 0.0
      %2128 = vmatprep.subr.mxu0 0.0
      %2129 = vmatpush1.msra.mxu0 0.0
      %2130 = vmatprep.subr.mxu0 0.0
      %2131 = vmatpush1.msra.mxu0 0.0
      %2132 = vmatprep.subr.mxu0 0.0
      %2133 = vmatpush1.msra.mxu0 0.0
      %2134 = vmatprep.subr.mxu0 0.0
      %2135 = vmatpush1.msra.mxu0 0.0
      %2136 = vmatprep.subr.mxu0 0.0
      %2137 = vmatpush1.msra.mxu0 0.0
      %2138 = vmatprep.subr.mxu0 0.0
      %2139 = vmatpush1.msra.mxu0 0.0
      %2140 = vmatprep.subr.mxu0 0.0
      %2141 = vmatpush1.msra.mxu0 0.0
      %2142 = vmatprep.subr.mxu0 0.0
      %2143 = vmatpush1.msra.mxu0 0.0
      %2144 = vmatprep.subr.mxu0 0.0
      %2145 = vmatpush1.msra.mxu0 0.0
      %2146 = vmatprep.subr.mxu0 0.0
      %2147 = vmatpush1.msra.mxu0 0.0
      %2148 = vmatprep.subr.mxu0 0.0
      %2149 = vmatpush1.msra.mxu0 0.0
      %2150 = vmatprep.subr.mxu0 0.0
      %2151 = vmatpush1.msra.mxu0 0.0
      %2152 = vmatprep.subr.mxu0 0.0
      %2153 = vmatpush1.msra.mxu0 0.0
      %2154 = vmatprep.subr.mxu0 0.0
      %2155 = vmatpush1.msra.mxu0 0.0
      %2156 = vmatprep.subr.mxu0 0.0
      %2157 = vmatpush1.msra.mxu0 0.0
      %2158 = vmatprep.subr.mxu0 0.0
      %2159 = vmatpush1.msra.mxu0 0.0
      %2160 = vmatprep.subr.mxu0 0.0
      %2161 = vmatpush1.msra.mxu0 0.0
      %2162 = vmatprep.subr.mxu0 0.0
      %2163 = vmatpush1.msra.mxu0 0.0
      %2164 = vmatprep.subr.mxu0 0.0
      %2165 = vmatpush1.msra.mxu0 0.0
      %2166 = vmatprep.subr.mxu0 0.0
      %2167 = vmatpush1.msra.mxu0 0.0
      %2168 = vmatprep.subr.mxu0 0.0
      %2169 = vmatpush1.msra.mxu0 0.0
      %2170 = vmatprep.subr.mxu0 0.0
      %2171 = vmatpush1.msra.mxu0 0.0
      %2172 = vmatprep.subr.mxu0 0.0
      %2173 = vmatpush1.msra.mxu0 0.0
      %2174 = vmatprep.subr.mxu0 0.0
      %2175 = vmatpush1.msra.mxu0 0.0
      %2176 = vmatprep.subr.mxu0 0.0
      %2177 = vmatpush1.msra.mxu0 0.0
      %2178 = vmatprep.subr.mxu0 0.0
      %2179 = vmatpush1.msra.mxu0 0.0
      %2180 = vmatprep.subr.mxu0 0.0
      %2181 = vmatpush1.msra.mxu0 0.0
      %2182 = vmatprep.subr.mxu0 0.0
      %2183 = vmatpush1.msra.mxu0 0.0
      %2184 = vmatprep.mubr.f32.mxu0 0.0
      %v2185 = vand.u32 %v1907, 4294901760
      %v2186 = vsub.f32 %v1907, %v2185
      %2187 = vmatmul.mubr.f32.gmra.mrb[0].mxu0 %v2186
      %v2188 = vpop.f32.mrb[0].mxu0
      %v2189 = vadd.f32 %v2097, %v2188
      %v2190 = vpop.f32.mrb[0].mxu0
      %2191 = vmatprep.mubr.f32.mxu0 0.0
      %v2192 = vand.u32 %v1910, 4294901760
      %v2193 = vsub.f32 %v1910, %v2192
      %2194 = vmatmul.mubr.f32.gmra.mrb[0].mxu0 %v2193
      %v2195 = vpop.f32.mrb[0].mxu0
      %v2196 = vadd.f32 %v2103, %v2195
      %v2197 = vpop.f32.mrb[0].mxu0
      %2198 = vmatprep.mubr.f32.mxu0 0.0
      %v2199 = vand.u32 %v1913, 4294901760
      %v2200 = vsub.f32 %v1913, %v2199
      %2201 = vmatmul.mubr.f32.gmra.mrb[0].mxu0 %v2200
      %v2202 = vpop.f32.mrb[0].mxu0
      %v2203 = vadd.f32 %v2109, %v2202
      %v2204 = vpop.f32.mrb[0].mxu0
      %2205 = vmatprep.mubr.f32.mxu0 0.0
      %v2206 = vand.u32 %v1916, 4294901760
      %v2207 = vsub.f32 %v1916, %v2206
      %2208 = vmatmul.mubr.f32.gmra.mrb[0].mxu0 %v2207
      %v2209 = vpop.f32.mrb[0].mxu0
      %v2210 = vadd.f32 %v2115, %v2209
      %v2211 = vpop.f32.mrb[0].mxu0
      %2212 = vdwg.mxu0
      %2213 = vmatprep.subr.mxu0 0.0
      %v2214 = vand.u32 %v1876, 4294901760
      %2215 = vmatpush1.msra.mxu0 %v2214
      %2216 = vmatprep.subr.mxu0 0.0
      %2217 = vmatpush1.msra.mxu0 0.0
      %2218 = vmatprep.subr.mxu0 0.0
      %2219 = vmatpush1.msra.mxu0 0.0
      %2220 = vmatprep.subr.mxu0 0.0
      %2221 = vmatpush1.msra.mxu0 0.0
      %2222 = vmatprep.subr.mxu0 0.0
      %2223 = vmatpush1.msra.mxu0 0.0
      %2224 = vmatprep.subr.mxu0 0.0
      %2225 = vmatpush1.msra.mxu0 0.0
      %2226 = vmatprep.subr.mxu0 0.0
      %2227 = vmatpush1.msra.mxu0 0.0
      %2228 = vmatprep.subr.mxu0 0.0
      %2229 = vmatpush1.msra.mxu0 0.0
      %2230 = vmatprep.subr.mxu0 0.0
      %2231 = vmatpush1.msra.mxu0 0.0
      %2232 = vmatprep.subr.mxu0 0.0
      %2233 = vmatpush1.msra.mxu0 0.0
      %2234 = vmatprep.subr.mxu0 0.0
      %2235 = vmatpush1.msra.mxu0 0.0
      %2236 = vmatprep.subr.mxu0 0.0
      %2237 = vmatpush1.msra.mxu0 0.0
      %2238 = vmatprep.subr.mxu0 0.0
      %2239 = vmatpush1.msra.mxu0 0.0
      %2240 = vmatprep.subr.mxu0 0.0
      %2241 = vmatpush1.msra.mxu0 0.0
      %2242 = vmatprep.subr.mxu0 0.0
      %2243 = vmatpush1.msra.mxu0 0.0
      %2244 = vmatprep.subr.mxu0 0.0
      %2245 = vmatpush1.msra.mxu0 0.0
      %2246 = vmatprep.subr.mxu0 0.0
      %2247 = vmatpush1.msra.mxu0 0.0
      %2248 = vmatprep.subr.mxu0 0.0
      %2249 = vmatpush1.msra.mxu0 0.0
      %2250 = vmatprep.subr.mxu0 0.0
      %2251 = vmatpush1.msra.mxu0 0.0
      %2252 = vmatprep.subr.mxu0 0.0
      %2253 = vmatpush1.msra.mxu0 0.0
      %2254 = vmatprep.subr.mxu0 0.0
      %2255 = vmatpush1.msra.mxu0 0.0
      %2256 = vmatprep.subr.mxu0 0.0
      %2257 = vmatpush1.msra.mxu0 0.0
      %2258 = vmatprep.subr.mxu0 0.0
      %2259 = vmatpush1.msra.mxu0 0.0
      %2260 = vmatprep.subr.mxu0 0.0
      %2261 = vmatpush1.msra.mxu0 0.0
      %2262 = vmatprep.subr.mxu0 0.0
      %2263 = vmatpush1.msra.mxu0 0.0
      %2264 = vmatprep.subr.mxu0 0.0
      %2265 = vmatpush1.msra.mxu0 0.0
      %2266 = vmatprep.subr.mxu0 0.0
      %2267 = vmatpush1.msra.mxu0 0.0
      %2268 = vmatprep.subr.mxu0 0.0
      %2269 = vmatpush1.msra.mxu0 0.0
      %2270 = vmatprep.subr.mxu0 0.0
      %2271 = vmatpush1.msra.mxu0 0.0
      %2272 = vmatprep.subr.mxu0 0.0
      %2273 = vmatpush1.msra.mxu0 0.0
      %2274 = vmatprep.subr.mxu0 0.0
      %2275 = vmatpush1.msra.mxu0 0.0
      %2276 = vmatprep.subr.mxu0 0.0
      %2277 = vmatpush1.msra.mxu0 0.0
      %2278 = vmatprep.mubr.f32.mxu0 0.0
      %v2279 = vand.u32 %v1907, 4294901760
      %v2280 = vsub.f32 %v1907, %v2279
      %v2281 = vand.u32 %v2280, 4294901760
      %2282 = vmatmul.mubr.f32.gmra.mrb[0].mxu0 %v2281
      %v2283 = vpop.f32.mrb[0].mxu0
      %v2284 = vadd.f32 %v2189, %v2283
      %v2285 = vpop.f32.mrb[0].mxu0
      %2286 = vmatprep.mubr.f32.mxu0 0.0
      %v2287 = vand.u32 %v1910, 4294901760
      %v2288 = vsub.f32 %v1910, %v2287
      %v2289 = vand.u32 %v2288, 4294901760
      %2290 = vmatmul.mubr.f32.gmra.mrb[0].mxu0 %v2289
      %v2291 = vpop.f32.mrb[0].mxu0
      %v2292 = vadd.f32 %v2196, %v2291
      %v2293 = vpop.f32.mrb[0].mxu0
      %2294 = vmatprep.mubr.f32.mxu0 0.0
      %v2295 = vand.u32 %v1913, 4294901760
      %v2296 = vsub.f32 %v1913, %v2295
      %v2297 = vand.u32 %v2296, 4294901760
      %2298 = vmatmul.mubr.f32.gmra.mrb[0].mxu0 %v2297
      %v2299 = vpop.f32.mrb[0].mxu0
      %v2300 = vadd.f32 %v2203, %v2299
      %v2301 = vpop.f32.mrb[0].mxu0
      %2302 = vmatprep.mubr.f32.mxu0 0.0
      %v2303 = vand.u32 %v1916, 4294901760
      %v2304 = vsub.f32 %v1916, %v2303
      %v2305 = vand.u32 %v2304, 4294901760
      %2306 = vmatmul.mubr.f32.gmra.mrb[0].mxu0 %v2305
      %v2307 = vpop.f32.mrb[0].mxu0
      %v2308 = vadd.f32 %v2210, %v2307
      %v2309 = vpop.f32.mrb[0].mxu0
      %2310 = vdwg.mxu0
      %2311 = vmatprep.subr.mxu0 0.0
      %v2312 = vand.u32 %v1876, 4294901760
      %v2313 = vsub.f32 %v1876, %v2312
      %v2314 = vand.u32 %v2313, 4294901760
      %2315 = vmatpush1.msra.mxu0 %v2314
      %2316 = vmatprep.subr.mxu0 0.0
      %2317 = vmatpush1.msra.mxu0 0.0
      %2318 = vmatprep.subr.mxu0 0.0
      %2319 = vmatpush1.msra.mxu0 0.0
      %2320 = vmatprep.subr.mxu0 0.0
      %2321 = vmatpush1.msra.mxu0 0.0
      %2322 = vmatprep.subr.mxu0 0.0
      %2323 = vmatpush1.msra.mxu0 0.0
      %2324 = vmatprep.subr.mxu0 0.0
      %2325 = vmatpush1.msra.mxu0 0.0
      %2326 = vmatprep.subr.mxu0 0.0
      %2327 = vmatpush1.msra.mxu0 0.0
      %2328 = vmatprep.subr.mxu0 0.0
      %2329 = vmatpush1.msra.mxu0 0.0
      %2330 = vmatprep.subr.mxu0 0.0
      %2331 = vmatpush1.msra.mxu0 0.0
      %2332 = vmatprep.subr.mxu0 0.0
      %2333 = vmatpush1.msra.mxu0 0.0
      %2334 = vmatprep.subr.mxu0 0.0
      %2335 = vmatpush1.msra.mxu0 0.0
      %2336 = vmatprep.subr.mxu0 0.0
      %2337 = vmatpush1.msra.mxu0 0.0
      %2338 = vmatprep.subr.mxu0 0.0
      %2339 = vmatpush1.msra.mxu0 0.0
      %2340 = vmatprep.subr.mxu0 0.0
      %2341 = vmatpush1.msra.mxu0 0.0
      %2342 = vmatprep.subr.mxu0 0.0
      %2343 = vmatpush1.msra.mxu0 0.0
      %2344 = vmatprep.subr.mxu0 0.0
      %2345 = vmatpush1.msra.mxu0 0.0
      %2346 = vmatprep.subr.mxu0 0.0
      %2347 = vmatpush1.msra.mxu0 0.0
      %2348 = vmatprep.subr.mxu0 0.0
      %2349 = vmatpush1.msra.mxu0 0.0
      %2350 = vmatprep.subr.mxu0 0.0
      %2351 = vmatpush1.msra.mxu0 0.0
      %2352 = vmatprep.subr.mxu0 0.0
      %2353 = vmatpush1.msra.mxu0 0.0
      %2354 = vmatprep.subr.mxu0 0.0
      %2355 = vmatpush1.msra.mxu0 0.0
      %2356 = vmatprep.subr.mxu0 0.0
      %2357 = vmatpush1.msra.mxu0 0.0
      %2358 = vmatprep.subr.mxu0 0.0
      %2359 = vmatpush1.msra.mxu0 0.0
      %2360 = vmatprep.subr.mxu0 0.0
      %2361 = vmatpush1.msra.mxu0 0.0
      %2362 = vmatprep.subr.mxu0 0.0
      %2363 = vmatpush1.msra.mxu0 0.0
      %2364 = vmatprep.subr.mxu0 0.0
      %2365 = vmatpush1.msra.mxu0 0.0
      %2366 = vmatprep.subr.mxu0 0.0
      %2367 = vmatpush1.msra.mxu0 0.0
      %2368 = vmatprep.subr.mxu0 0.0
      %2369 = vmatpush1.msra.mxu0 0.0
      %2370 = vmatprep.subr.mxu0 0.0
      %2371 = vmatpush1.msra.mxu0 0.0
      %2372 = vmatprep.subr.mxu0 0.0
      %2373 = vmatpush1.msra.mxu0 0.0
      %2374 = vmatprep.subr.mxu0 0.0
      %2375 = vmatpush1.msra.mxu0 0.0
      %2376 = vmatprep.subr.mxu0 0.0
      %2377 = vmatpush1.msra.mxu0 0.0
      %2378 = vmatprep.mubr.f32.mxu0 0.0
      %v2379 = vand.u32 %v1907, 4294901760
      %2380 = vmatmul.mubr.f32.gmra.mrb[0].mxu0 %v2379
      %v2381 = vpop.f32.mrb[0].mxu0
      %v2382 = vadd.f32 %v2284, %v2381
      %v2383 = vpop.f32.mrb[0].mxu0
      %2384 = vmatprep.mubr.f32.mxu0 0.0
      %v2385 = vand.u32 %v1910, 4294901760
      %2386 = vmatmul.mubr.f32.gmra.mrb[0].mxu0 %v2385
      %v2387 = vpop.f32.mrb[0].mxu0
      %v2388 = vadd.f32 %v2292, %v2387
      %v2389 = vpop.f32.mrb[0].mxu0
      %2390 = vmatprep.mubr.f32.mxu0 0.0
      %v2391 = vand.u32 %v1913, 4294901760
      %2392 = vmatmul.mubr.f32.gmra.mrb[0].mxu0 %v2391
      %v2393 = vpop.f32.mrb[0].mxu0
      %v2394 = vadd.f32 %v2300, %v2393
      %v2395 = vpop.f32.mrb[0].mxu0
      %2396 = vmatprep.mubr.f32.mxu0 0.0
      %v2397 = vand.u32 %v1916, 4294901760
      %2398 = vmatmul.mubr.f32.gmra.mrb[0].mxu0 %v2397
      %v2399 = vpop.f32.mrb[0].mxu0
      %v2400 = vadd.f32 %v2308, %v2399
      %v2401 = vpop.f32.mrb[0].mxu0
      %2402 = vdwg.mxu0
      %2403 = vmatprep.subr.mxu0 0.0
      %v2404 = vand.u32 %v1876, 4294901760
      %2405 = vmatpush1.msra.mxu0 %v2404
      %2406 = vmatprep.subr.mxu0 0.0
      %2407 = vmatpush1.msra.mxu0 0.0
      %2408 = vmatprep.subr.mxu0 0.0
      %2409 = vmatpush1.msra.mxu0 0.0
      %2410 = vmatprep.subr.mxu0 0.0
      %2411 = vmatpush1.msra.mxu0 0.0
      %2412 = vmatprep.subr.mxu0 0.0
      %2413 = vmatpush1.msra.mxu0 0.0
      %2414 = vmatprep.subr.mxu0 0.0
      %2415 = vmatpush1.msra.mxu0 0.0
      %2416 = vmatprep.subr.mxu0 0.0
      %2417 = vmatpush1.msra.mxu0 0.0
      %2418 = vmatprep.subr.mxu0 0.0
      %2419 = vmatpush1.msra.mxu0 0.0
      %2420 = vmatprep.subr.mxu0 0.0
      %2421 = vmatpush1.msra.mxu0 0.0
      %2422 = vmatprep.subr.mxu0 0.0
      %2423 = vmatpush1.msra.mxu0 0.0
      %2424 = vmatprep.subr.mxu0 0.0
      %2425 = vmatpush1.msra.mxu0 0.0
      %2426 = vmatprep.subr.mxu0 0.0
      %2427 = vmatpush1.msra.mxu0 0.0
      %2428 = vmatprep.subr.mxu0 0.0
      %2429 = vmatpush1.msra.mxu0 0.0
      %2430 = vmatprep.subr.mxu0 0.0
      %2431 = vmatpush1.msra.mxu0 0.0
      %2432 = vmatprep.subr.mxu0 0.0
      %2433 = vmatpush1.msra.mxu0 0.0
      %2434 = vmatprep.subr.mxu0 0.0
      %2435 = vmatpush1.msra.mxu0 0.0
      %2436 = vmatprep.subr.mxu0 0.0
      %2437 = vmatpush1.msra.mxu0 0.0
      %2438 = vmatprep.subr.mxu0 0.0
      %2439 = vmatpush1.msra.mxu0 0.0
      %2440 = vmatprep.subr.mxu0 0.0
      %2441 = vmatpush1.msra.mxu0 0.0
      %2442 = vmatprep.subr.mxu0 0.0
      %2443 = vmatpush1.msra.mxu0 0.0
      %2444 = vmatprep.subr.mxu0 0.0
      %2445 = vmatpush1.msra.mxu0 0.0
      %2446 = vmatprep.subr.mxu0 0.0
      %2447 = vmatpush1.msra.mxu0 0.0
      %2448 = vmatprep.subr.mxu0 0.0
      %2449 = vmatpush1.msra.mxu0 0.0
      %2450 = vmatprep.subr.mxu0 0.0
      %2451 = vmatpush1.msra.mxu0 0.0
      %2452 = vmatprep.subr.mxu0 0.0
      %2453 = vmatpush1.msra.mxu0 0.0
      %2454 = vmatprep.subr.mxu0 0.0
      %2455 = vmatpush1.msra.mxu0 0.0
      %2456 = vmatprep.subr.mxu0 0.0
      %2457 = vmatpush1.msra.mxu0 0.0
      %2458 = vmatprep.subr.mxu0 0.0
      %2459 = vmatpush1.msra.mxu0 0.0
      %2460 = vmatprep.subr.mxu0 0.0
      %2461 = vmatpush1.msra.mxu0 0.0
      %2462 = vmatprep.subr.mxu0 0.0
      %2463 = vmatpush1.msra.mxu0 0.0
      %2464 = vmatprep.subr.mxu0 0.0
      %2465 = vmatpush1.msra.mxu0 0.0
      %2466 = vmatprep.subr.mxu0 0.0
      %2467 = vmatpush1.msra.mxu0 0.0
      %2468 = vmatprep.mubr.f32.mxu0 0.0
      %v2469 = vand.u32 %v1907, 4294901760
      %2470 = vmatmul.mubr.f32.gmra.mrb[0].mxu0 %v2469
      %v2471 = vpop.f32.mrb[0].mxu0
      %v2472 = vadd.f32 %v2382, %v2471
      %v2473 = vpop.f32.mrb[0].mxu0
      %2474 = vmatprep.mubr.f32.mxu0 0.0
      %v2475 = vand.u32 %v1910, 4294901760
      %2476 = vmatmul.mubr.f32.gmra.mrb[0].mxu0 %v2475
      %v2477 = vpop.f32.mrb[0].mxu0
      %v2478 = vadd.f32 %v2388, %v2477
      %v2479 = vpop.f32.mrb[0].mxu0
      %2480 = vmatprep.mubr.f32.mxu0 0.0
      %v2481 = vand.u32 %v1913, 4294901760
      %2482 = vmatmul.mubr.f32.gmra.mrb[0].mxu0 %v2481
      %v2483 = vpop.f32.mrb[0].mxu0
      %v2484 = vadd.f32 %v2394, %v2483
      %v2485 = vpop.f32.mrb[0].mxu0
      %2486 = vmatprep.mubr.f32.mxu0 0.0
      %v2487 = vand.u32 %v1916, 4294901760
      %2488 = vmatmul.mubr.f32.gmra.mrb[0].mxu0 %v2487
      %v2489 = vpop.f32.mrb[0].mxu0
      %v2490 = vadd.f32 %v2400, %v2489
      %v2491 = vpop.f32.mrb[0].mxu0
      %2492 = vdwg.mxu0
      %v2493 = vxor.u32 %v2472, 2147483648
      %v2494 = vxor.u32 %v2478, 2147483648
      %v2495 = vxor.u32 %v2484, 2147483648
      %v2496 = vxor.u32 %v2490, 2147483648
      %v2497 = vmul.f32 %v2493, 1.442695
      %v2498 = vpow.pop %v2497
      %v2499 = vmul.f32 %v2494, 1.442695
      %v2500 = vpow.pop %v2499
      %v2501 = vmul.f32 %v2495, 1.442695
      %v2502 = vpow.pop %v2501
      %v2503 = vmul.f32 %v2496, 1.442695
      %v2504 = vpow.pop %v2503
      %v2505 = vadd.f32 %v2498, 1.0
      %v2506 = vadd.f32 %v2500, 1.0
      %v2507 = vadd.f32 %v2502, 1.0
      %v2508 = vadd.f32 %v2504, 1.0
      %v2509 = vrcp.pop %v2505
      %v2510 = vmul.f32 1.0, %v2509
      %v2511 = vrcp.pop %v2506
      %v2512 = vmul.f32 1.0, %v2511
      %v2513 = vrcp.pop %v2507
      %v2514 = vmul.f32 1.0, %v2513
      %v2515 = vrcp.pop %v2508
      %v2516 = vmul.f32 1.0, %v2515
      %v2517 = vld [vmem:[%s6] sm:$0xff]
      %v2518 = vld [vmem:[%s6 + $0x8] sm:$0xff]
      %v2519 = vld [vmem:[%s6 + $0x10] sm:$0xff]
      %v2520 = vld [vmem:[%s6 + $0x18] sm:$0xff]
      %v2521 = vld [vmem:[%s7] sm:$0xff]
      %v2522 = vld [vmem:[%s7 + $0x8] sm:$0xff]
      %v2523 = vld [vmem:[%s7 + $0x10] sm:$0xff]
      %v2524 = vld [vmem:[%s7 + $0x18] sm:$0xff]
      %2526 = vset.pattern.permute.xlu0 0
      %2527 = vperm.xlu0 %2526, %v2521
      %v2528 = vpop.permute.xlu0 %2527
      %2531 = vset.pattern.permute.xlu0 0
      %2532 = vperm.xlu0 %2531, %v2522
      %v2533 = vpop.permute.xlu0 %2532
      %2536 = vset.pattern.permute.xlu0 0
      %2537 = vperm.xlu0 %2536, %v2523
      %v2538 = vpop.permute.xlu0 %2537
      %2541 = vset.pattern.permute.xlu0 0
      %2542 = vperm.xlu0 %2541, %v2524
      %v2543 = vpop.permute.xlu0 %2542
      %2546 = vrot.lane.b32.xlu0 %v1876, 112
      %v2547 = vpop.permute.xlu0 %2546
      %v2550 = vsel %vm1905, %v2517, 0
      %v2553 = vsel %vm1905, %v2518, 0
      %v2556 = vsel %vm1905, %v2519, 0
      %v2559 = vsel %vm1905, %v2520, 0
      %2561 = vmatprep.subr.mxu0 0.0
      %v2562 = vand.u32 %v2547, 4294901760
      %2563 = vmatpush1.msra.mxu0 %v2562
      %2564 = vmatprep.subr.mxu0 0.0
      %2565 = vmatpush1.msra.mxu0 0.0
      %2566 = vmatprep.subr.mxu0 0.0
      %2567 = vmatpush1.msra.mxu0 0.0
      %2568 = vmatprep.subr.mxu0 0.0
      %2569 = vmatpush1.msra.mxu0 0.0
      %2570 = vmatprep.subr.mxu0 0.0
      %2571 = vmatpush1.msra.mxu0 0.0
      %2572 = vmatprep.subr.mxu0 0.0
      %2573 = vmatpush1.msra.mxu0 0.0
      %2574 = vmatprep.subr.mxu0 0.0
      %2575 = vmatpush1.msra.mxu0 0.0
      %2576 = vmatprep.subr.mxu0 0.0
      %2577 = vmatpush1.msra.mxu0 0.0
      %2578 = vmatprep.subr.mxu0 0.0
      %2579 = vmatpush1.msra.mxu0 0.0
      %2580 = vmatprep.subr.mxu0 0.0
      %2581 = vmatpush1.msra.mxu0 0.0
      %2582 = vmatprep.subr.mxu0 0.0
      %2583 = vmatpush1.msra.mxu0 0.0
      %2584 = vmatprep.subr.mxu0 0.0
      %2585 = vmatpush1.msra.mxu0 0.0
      %2586 = vmatprep.subr.mxu0 0.0
      %2587 = vmatpush1.msra.mxu0 0.0
      %2588 = vmatprep.subr.mxu0 0.0
      %2589 = vmatpush1.msra.mxu0 0.0
      %2590 = vmatprep.subr.mxu0 0.0
      %2591 = vmatpush1.msra.mxu0 0.0
      %2592 = vmatprep.subr.mxu0 0.0
      %2593 = vmatpush1.msra.mxu0 0.0
      %2594 = vmatprep.subr.mxu0 0.0
      %2595 = vmatpush1.msra.mxu0 0.0
      %2596 = vmatprep.subr.mxu0 0.0
      %2597 = vmatpush1.msra.mxu0 0.0
      %2598 = vmatprep.subr.mxu0 0.0
      %2599 = vmatpush1.msra.mxu0 0.0
      %2600 = vmatprep.subr.mxu0 0.0
      %2601 = vmatpush1.msra.mxu0 0.0
      %2602 = vmatprep.subr.mxu0 0.0
      %2603 = vmatpush1.msra.mxu0 0.0
      %2604 = vmatprep.subr.mxu0 0.0
      %2605 = vmatpush1.msra.mxu0 0.0
      %2606 = vmatprep.subr.mxu0 0.0
      %2607 = vmatpush1.msra.mxu0 0.0
      %2608 = vmatprep.subr.mxu0 0.0
      %2609 = vmatpush1.msra.mxu0 0.0
      %2610 = vmatprep.subr.mxu0 0.0
      %2611 = vmatpush1.msra.mxu0 0.0
      %2612 = vmatprep.subr.mxu0 0.0
      %2613 = vmatpush1.msra.mxu0 0.0
      %2614 = vmatprep.subr.mxu0 0.0
      %2615 = vmatpush1.msra.mxu0 0.0
      %2616 = vmatprep.subr.mxu0 0.0
      %2617 = vmatpush1.msra.mxu0 0.0
      %2618 = vmatprep.subr.mxu0 0.0
      %2619 = vmatpush1.msra.mxu0 0.0
      %2620 = vmatprep.subr.mxu0 0.0
      %2621 = vmatpush1.msra.mxu0 0.0
      %2622 = vmatprep.subr.mxu0 0.0
      %2623 = vmatpush1.msra.mxu0 0.0
      %2624 = vmatprep.subr.mxu0 0.0
      %2625 = vmatpush1.msra.mxu0 0.0
      %2626 = vmatprep.mubr.f32.mxu0 0.0
      %v2627 = vand.u32 %v2550, 4294901760
      %v2628 = vsub.f32 %v2550, %v2627
      %v2629 = vand.u32 %v2628, 4294901760
      %v2630 = vsub.f32 %v2628, %v2629
      %v2631 = vand.u32 %v2630, 4294901760
      %2632 = vmatmul.mubr.f32.gmra.mrb[0].mxu0 %v2631
      %v2633 = vpop.f32.mrb[0].mxu0
      %v2634 = vadd.f32 %v2528, %v2633
      %v2635 = vpop.f32.mrb[0].mxu0
      %2636 = vmatprep.mubr.f32.mxu0 0.0
      %v2637 = vand.u32 %v2553, 4294901760
      %v2638 = vsub.f32 %v2553, %v2637
      %v2639 = vand.u32 %v2638, 4294901760
      %v2640 = vsub.f32 %v2638, %v2639
      %v2641 = vand.u32 %v2640, 4294901760
      %2642 = vmatmul.mubr.f32.gmra.mrb[0].mxu0 %v2641
      %v2643 = vpop.f32.mrb[0].mxu0
      %v2644 = vadd.f32 %v2533, %v2643
      %v2645 = vpop.f32.mrb[0].mxu0
      %2646 = vmatprep.mubr.f32.mxu0 0.0
      %v2647 = vand.u32 %v2556, 4294901760
      %v2648 = vsub.f32 %v2556, %v2647
      %v2649 = vand.u32 %v2648, 4294901760
      %v2650 = vsub.f32 %v2648, %v2649
      %v2651 = vand.u32 %v2650, 4294901760
      %2652 = vmatmul.mubr.f32.gmra.mrb[0].mxu0 %v2651
      %v2653 = vpop.f32.mrb[0].mxu0
      %v2654 = vadd.f32 %v2538, %v2653
      %v2655 = vpop.f32.mrb[0].mxu0
      %2656 = vmatprep.mubr.f32.mxu0 0.0
      %v2657 = vand.u32 %v2559, 4294901760
      %v2658 = vsub.f32 %v2559, %v2657
      %v2659 = vand.u32 %v2658, 4294901760
      %v2660 = vsub.f32 %v2658, %v2659
      %v2661 = vand.u32 %v2660, 4294901760
      %2662 = vmatmul.mubr.f32.gmra.mrb[0].mxu0 %v2661
      %v2663 = vpop.f32.mrb[0].mxu0
      %v2664 = vadd.f32 %v2543, %v2663
      %v2665 = vpop.f32.mrb[0].mxu0
      %2666 = vdwg.mxu0
      %2667 = vmatprep.subr.mxu0 0.0
      %v2668 = vand.u32 %v2547, 4294901760
      %v2669 = vsub.f32 %v2547, %v2668
      %v2670 = vand.u32 %v2669, 4294901760
      %v2671 = vsub.f32 %v2669, %v2670
      %v2672 = vand.u32 %v2671, 4294901760
      %2673 = vmatpush1.msra.mxu0 %v2672
      %2674 = vmatprep.subr.mxu0 0.0
      %2675 = vmatpush1.msra.mxu0 0.0
      %2676 = vmatprep.subr.mxu0 0.0
      %2677 = vmatpush1.msra.mxu0 0.0
      %2678 = vmatprep.subr.mxu0 0.0
      %2679 = vmatpush1.msra.mxu0 0.0
      %2680 = vmatprep.subr.mxu0 0.0
      %2681 = vmatpush1.msra.mxu0 0.0
      %2682 = vmatprep.subr.mxu0 0.0
      %2683 = vmatpush1.msra.mxu0 0.0
      %2684 = vmatprep.subr.mxu0 0.0
      %2685 = vmatpush1.msra.mxu0 0.0
      %2686 = vmatprep.subr.mxu0 0.0
      %2687 = vmatpush1.msra.mxu0 0.0
      %2688 = vmatprep.subr.mxu0 0.0
      %2689 = vmatpush1.msra.mxu0 0.0
      %2690 = vmatprep.subr.mxu0 0.0
      %2691 = vmatpush1.msra.mxu0 0.0
      %2692 = vmatprep.subr.mxu0 0.0
      %2693 = vmatpush1.msra.mxu0 0.0
      %2694 = vmatprep.subr.mxu0 0.0
      %2695 = vmatpush1.msra.mxu0 0.0
      %2696 = vmatprep.subr.mxu0 0.0
      %2697 = vmatpush1.msra.mxu0 0.0
      %2698 = vmatprep.subr.mxu0 0.0
      %2699 = vmatpush1.msra.mxu0 0.0
      %2700 = vmatprep.subr.mxu0 0.0
      %2701 = vmatpush1.msra.mxu0 0.0
      %2702 = vmatprep.subr.mxu0 0.0
      %2703 = vmatpush1.msra.mxu0 0.0
      %2704 = vmatprep.subr.mxu0 0.0
      %2705 = vmatpush1.msra.mxu0 0.0
      %2706 = vmatprep.subr.mxu0 0.0
      %2707 = vmatpush1.msra.mxu0 0.0
      %2708 = vmatprep.subr.mxu0 0.0
      %2709 = vmatpush1.msra.mxu0 0.0
      %2710 = vmatprep.subr.mxu0 0.0
      %2711 = vmatpush1.msra.mxu0 0.0
      %2712 = vmatprep.subr.mxu0 0.0
      %2713 = vmatpush1.msra.mxu0 0.0
      %2714 = vmatprep.subr.mxu0 0.0
      %2715 = vmatpush1.msra.mxu0 0.0
      %2716 = vmatprep.subr.mxu0 0.0
      %2717 = vmatpush1.msra.mxu0 0.0
      %2718 = vmatprep.subr.mxu0 0.0
      %2719 = vmatpush1.msra.mxu0 0.0
      %2720 = vmatprep.subr.mxu0 0.0
      %2721 = vmatpush1.msra.mxu0 0.0
      %2722 = vmatprep.subr.mxu0 0.0
      %2723 = vmatpush1.msra.mxu0 0.0
      %2724 = vmatprep.subr.mxu0 0.0
      %2725 = vmatpush1.msra.mxu0 0.0
      %2726 = vmatprep.subr.mxu0 0.0
      %2727 = vmatpush1.msra.mxu0 0.0
      %2728 = vmatprep.subr.mxu0 0.0
      %2729 = vmatpush1.msra.mxu0 0.0
      %2730 = vmatprep.subr.mxu0 0.0
      %2731 = vmatpush1.msra.mxu0 0.0
      %2732 = vmatprep.subr.mxu0 0.0
      %2733 = vmatpush1.msra.mxu0 0.0
      %2734 = vmatprep.subr.mxu0 0.0
      %2735 = vmatpush1.msra.mxu0 0.0
      %2736 = vmatprep.mubr.f32.mxu0 0.0
      %v2737 = vand.u32 %v2550, 4294901760
      %2738 = vmatmul.mubr.f32.gmra.mrb[0].mxu0 %v2737
      %v2739 = vpop.f32.mrb[0].mxu0
      %v2740 = vadd.f32 %v2634, %v2739
      %v2741 = vpop.f32.mrb[0].mxu0
      %2742 = vmatprep.mubr.f32.mxu0 0.0
      %v2743 = vand.u32 %v2553, 4294901760
      %2744 = vmatmul.mubr.f32.gmra.mrb[0].mxu0 %v2743
      %v2745 = vpop.f32.mrb[0].mxu0
      %v2746 = vadd.f32 %v2644, %v2745
      %v2747 = vpop.f32.mrb[0].mxu0
      %2748 = vmatprep.mubr.f32.mxu0 0.0
      %v2749 = vand.u32 %v2556, 4294901760
      %2750 = vmatmul.mubr.f32.gmra.mrb[0].mxu0 %v2749
      %v2751 = vpop.f32.mrb[0].mxu0
      %v2752 = vadd.f32 %v2654, %v2751
      %v2753 = vpop.f32.mrb[0].mxu0
      %2754 = vmatprep.mubr.f32.mxu0 0.0
      %v2755 = vand.u32 %v2559, 4294901760
      %2756 = vmatmul.mubr.f32.gmra.mrb[0].mxu0 %v2755
      %v2757 = vpop.f32.mrb[0].mxu0
      %v2758 = vadd.f32 %v2664, %v2757
      %v2759 = vpop.f32.mrb[0].mxu0
      %2760 = vdwg.mxu0
      %2761 = vmatprep.subr.mxu0 0.0
      %v2762 = vand.u32 %v2547, 4294901760
      %v2763 = vsub.f32 %v2547, %v2762
      %2764 = vmatpush1.msra.mxu0 %v2763
      %2765 = vmatprep.subr.mxu0 0.0
      %2766 = vmatpush1.msra.mxu0 0.0
      %2767 = vmatprep.subr.mxu0 0.0
      %2768 = vmatpush1.msra.mxu0 0.0
      %2769 = vmatprep.subr.mxu0 0.0
      %2770 = vmatpush1.msra.mxu0 0.0
      %2771 = vmatprep.subr.mxu0 0.0
      %2772 = vmatpush1.msra.mxu0 0.0
      %2773 = vmatprep.subr.mxu0 0.0
      %2774 = vmatpush1.msra.mxu0 0.0
      %2775 = vmatprep.subr.mxu0 0.0
      %2776 = vmatpush1.msra.mxu0 0.0
      %2777 = vmatprep.subr.mxu0 0.0
      %2778 = vmatpush1.msra.mxu0 0.0
      %2779 = vmatprep.subr.mxu0 0.0
      %2780 = vmatpush1.msra.mxu0 0.0
      %2781 = vmatprep.subr.mxu0 0.0
      %2782 = vmatpush1.msra.mxu0 0.0
      %2783 = vmatprep.subr.mxu0 0.0
      %2784 = vmatpush1.msra.mxu0 0.0
      %2785 = vmatprep.subr.mxu0 0.0
      %2786 = vmatpush1.msra.mxu0 0.0
      %2787 = vmatprep.subr.mxu0 0.0
      %2788 = vmatpush1.msra.mxu0 0.0
      %2789 = vmatprep.subr.mxu0 0.0
      %2790 = vmatpush1.msra.mxu0 0.0
      %2791 = vmatprep.subr.mxu0 0.0
      %2792 = vmatpush1.msra.mxu0 0.0
      %2793 = vmatprep.subr.mxu0 0.0
      %2794 = vmatpush1.msra.mxu0 0.0
      %2795 = vmatprep.subr.mxu0 0.0
      %2796 = vmatpush1.msra.mxu0 0.0
      %2797 = vmatprep.subr.mxu0 0.0
      %2798 = vmatpush1.msra.mxu0 0.0
      %2799 = vmatprep.subr.mxu0 0.0
      %2800 = vmatpush1.msra.mxu0 0.0
      %2801 = vmatprep.subr.mxu0 0.0
      %2802 = vmatpush1.msra.mxu0 0.0
      %2803 = vmatprep.subr.mxu0 0.0
      %2804 = vmatpush1.msra.mxu0 0.0
      %2805 = vmatprep.subr.mxu0 0.0
      %2806 = vmatpush1.msra.mxu0 0.0
      %2807 = vmatprep.subr.mxu0 0.0
      %2808 = vmatpush1.msra.mxu0 0.0
      %2809 = vmatprep.subr.mxu0 0.0
      %2810 = vmatpush1.msra.mxu0 0.0
      %2811 = vmatprep.subr.mxu0 0.0
      %2812 = vmatpush1.msra.mxu0 0.0
      %2813 = vmatprep.subr.mxu0 0.0
      %2814 = vmatpush1.msra.mxu0 0.0
      %2815 = vmatprep.subr.mxu0 0.0
      %2816 = vmatpush1.msra.mxu0 0.0
      %2817 = vmatprep.subr.mxu0 0.0
      %2818 = vmatpush1.msra.mxu0 0.0
      %2819 = vmatprep.subr.mxu0 0.0
      %2820 = vmatpush1.msra.mxu0 0.0
      %2821 = vmatprep.subr.mxu0 0.0
      %2822 = vmatpush1.msra.mxu0 0.0
      %2823 = vmatprep.subr.mxu0 0.0
      %2824 = vmatpush1.msra.mxu0 0.0
      %2825 = vmatprep.subr.mxu0 0.0
      %2826 = vmatpush1.msra.mxu0 0.0
      %2827 = vmatprep.mubr.f32.mxu0 0.0
      %v2828 = vand.u32 %v2550, 4294901760
      %v2829 = vsub.f32 %v2550, %v2828
      %2830 = vmatmul.mubr.f32.gmra.mrb[0].mxu0 %v2829
      %v2831 = vpop.f32.mrb[0].mxu0
      %v2832 = vadd.f32 %v2740, %v2831
      %v2833 = vpop.f32.mrb[0].mxu0
      %2834 = vmatprep.mubr.f32.mxu0 0.0
      %v2835 = vand.u32 %v2553, 4294901760
      %v2836 = vsub.f32 %v2553, %v2835
      %2837 = vmatmul.mubr.f32.gmra.mrb[0].mxu0 %v2836
      %v2838 = vpop.f32.mrb[0].mxu0
      %v2839 = vadd.f32 %v2746, %v2838
      %v2840 = vpop.f32.mrb[0].mxu0
      %2841 = vmatprep.mubr.f32.mxu0 0.0
      %v2842 = vand.u32 %v2556, 4294901760
      %v2843 = vsub.f32 %v2556, %v2842
      %2844 = vmatmul.mubr.f32.gmra.mrb[0].mxu0 %v2843
      %v2845 = vpop.f32.mrb[0].mxu0
      %v2846 = vadd.f32 %v2752, %v2845
      %v2847 = vpop.f32.mrb[0].mxu0
      %2848 = vmatprep.mubr.f32.mxu0 0.0
      %v2849 = vand.u32 %v2559, 4294901760
      %v2850 = vsub.f32 %v2559, %v2849
      %2851 = vmatmul.mubr.f32.gmra.mrb[0].mxu0 %v2850
      %v2852 = vpop.f32.mrb[0].mxu0
      %v2853 = vadd.f32 %v2758, %v2852
      %v2854 = vpop.f32.mrb[0].mxu0
      %2855 = vdwg.mxu0
      %2856 = vmatprep.subr.mxu0 0.0
      %v2857 = vand.u32 %v2547, 4294901760
      %2858 = vmatpush1.msra.mxu0 %v2857
      %2859 = vmatprep.subr.mxu0 0.0
      %2860 = vmatpush1.msra.mxu0 0.0
      %2861 = vmatprep.subr.mxu0 0.0
      %2862 = vmatpush1.msra.mxu0 0.0
      %2863 = vmatprep.subr.mxu0 0.0
      %2864 = vmatpush1.msra.mxu0 0.0
      %2865 = vmatprep.subr.mxu0 0.0
      %2866 = vmatpush1.msra.mxu0 0.0
      %2867 = vmatprep.subr.mxu0 0.0
      %2868 = vmatpush1.msra.mxu0 0.0
      %2869 = vmatprep.subr.mxu0 0.0
      %2870 = vmatpush1.msra.mxu0 0.0
      %2871 = vmatprep.subr.mxu0 0.0
      %2872 = vmatpush1.msra.mxu0 0.0
      %2873 = vmatprep.subr.mxu0 0.0
      %2874 = vmatpush1.msra.mxu0 0.0
      %2875 = vmatprep.subr.mxu0 0.0
      %2876 = vmatpush1.msra.mxu0 0.0
      %2877 = vmatprep.subr.mxu0 0.0
      %2878 = vmatpush1.msra.mxu0 0.0
      %2879 = vmatprep.subr.mxu0 0.0
      %2880 = vmatpush1.msra.mxu0 0.0
      %2881 = vmatprep.subr.mxu0 0.0
      %2882 = vmatpush1.msra.mxu0 0.0
      %2883 = vmatprep.subr.mxu0 0.0
      %2884 = vmatpush1.msra.mxu0 0.0
      %2885 = vmatprep.subr.mxu0 0.0
      %2886 = vmatpush1.msra.mxu0 0.0
      %2887 = vmatprep.subr.mxu0 0.0
      %2888 = vmatpush1.msra.mxu0 0.0
      %2889 = vmatprep.subr.mxu0 0.0
      %2890 = vmatpush1.msra.mxu0 0.0
      %2891 = vmatprep.subr.mxu0 0.0
      %2892 = vmatpush1.msra.mxu0 0.0
      %2893 = vmatprep.subr.mxu0 0.0
      %2894 = vmatpush1.msra.mxu0 0.0
      %2895 = vmatprep.subr.mxu0 0.0
      %2896 = vmatpush1.msra.mxu0 0.0
      %2897 = vmatprep.subr.mxu0 0.0
      %2898 = vmatpush1.msra.mxu0 0.0
      %2899 = vmatprep.subr.mxu0 0.0
      %2900 = vmatpush1.msra.mxu0 0.0
      %2901 = vmatprep.subr.mxu0 0.0
      %2902 = vmatpush1.msra.mxu0 0.0
      %2903 = vmatprep.subr.mxu0 0.0
      %2904 = vmatpush1.msra.mxu0 0.0
      %2905 = vmatprep.subr.mxu0 0.0
      %2906 = vmatpush1.msra.mxu0 0.0
      %2907 = vmatprep.subr.mxu0 0.0
      %2908 = vmatpush1.msra.mxu0 0.0
      %2909 = vmatprep.subr.mxu0 0.0
      %2910 = vmatpush1.msra.mxu0 0.0
      %2911 = vmatprep.subr.mxu0 0.0
      %2912 = vmatpush1.msra.mxu0 0.0
      %2913 = vmatprep.subr.mxu0 0.0
      %2914 = vmatpush1.msra.mxu0 0.0
      %2915 = vmatprep.subr.mxu0 0.0
      %2916 = vmatpush1.msra.mxu0 0.0
      %2917 = vmatprep.subr.mxu0 0.0
      %2918 = vmatpush1.msra.mxu0 0.0
      %2919 = vmatprep.subr.mxu0 0.0
      %2920 = vmatpush1.msra.mxu0 0.0
      %2921 = vmatprep.mubr.f32.mxu0 0.0
      %v2922 = vand.u32 %v2550, 4294901760
      %v2923 = vsub.f32 %v2550, %v2922
      %v2924 = vand.u32 %v2923, 4294901760
      %2925 = vmatmul.mubr.f32.gmra.mrb[0].mxu0 %v2924
      %v2926 = vpop.f32.mrb[0].mxu0
      %v2927 = vadd.f32 %v2832, %v2926
      %v2928 = vpop.f32.mrb[0].mxu0
      %2929 = vmatprep.mubr.f32.mxu0 0.0
      %v2930 = vand.u32 %v2553, 4294901760
      %v2931 = vsub.f32 %v2553, %v2930
      %v2932 = vand.u32 %v2931, 4294901760
      %2933 = vmatmul.mubr.f32.gmra.mrb[0].mxu0 %v2932
      %v2934 = vpop.f32.mrb[0].mxu0
      %v2935 = vadd.f32 %v2839, %v2934
      %v2936 = vpop.f32.mrb[0].mxu0
      %2937 = vmatprep.mubr.f32.mxu0 0.0
      %v2938 = vand.u32 %v2556, 4294901760
      %v2939 = vsub.f32 %v2556, %v2938
      %v2940 = vand.u32 %v2939, 4294901760
      %2941 = vmatmul.mubr.f32.gmra.mrb[0].mxu0 %v2940
      %v2942 = vpop.f32.mrb[0].mxu0
      %v2943 = vadd.f32 %v2846, %v2942
      %v2944 = vpop.f32.mrb[0].mxu0
      %2945 = vmatprep.mubr.f32.mxu0 0.0
      %v2946 = vand.u32 %v2559, 4294901760
      %v2947 = vsub.f32 %v2559, %v2946
      %v2948 = vand.u32 %v2947, 4294901760
      %2949 = vmatmul.mubr.f32.gmra.mrb[0].mxu0 %v2948
      %v2950 = vpop.f32.mrb[0].mxu0
      %v2951 = vadd.f32 %v2853, %v2950
      %v2952 = vpop.f32.mrb[0].mxu0
      %2953 = vdwg.mxu0
      %2954 = vmatprep.subr.mxu0 0.0
      %v2955 = vand.u32 %v2547, 4294901760
      %v2956 = vsub.f32 %v2547, %v2955
      %v2957 = vand.u32 %v2956, 4294901760
      %2958 = vmatpush1.msra.mxu0 %v2957
      %2959 = vmatprep.subr.mxu0 0.0
      %2960 = vmatpush1.msra.mxu0 0.0
      %2961 = vmatprep.subr.mxu0 0.0
      %2962 = vmatpush1.msra.mxu0 0.0
      %2963 = vmatprep.subr.mxu0 0.0
      %2964 = vmatpush1.msra.mxu0 0.0
      %2965 = vmatprep.subr.mxu0 0.0
      %2966 = vmatpush1.msra.mxu0 0.0
      %2967 = vmatprep.subr.mxu0 0.0
      %2968 = vmatpush1.msra.mxu0 0.0
      %2969 = vmatprep.subr.mxu0 0.0
      %2970 = vmatpush1.msra.mxu0 0.0
      %2971 = vmatprep.subr.mxu0 0.0
      %2972 = vmatpush1.msra.mxu0 0.0
      %2973 = vmatprep.subr.mxu0 0.0
      %2974 = vmatpush1.msra.mxu0 0.0
      %2975 = vmatprep.subr.mxu0 0.0
      %2976 = vmatpush1.msra.mxu0 0.0
      %2977 = vmatprep.subr.mxu0 0.0
      %2978 = vmatpush1.msra.mxu0 0.0
      %2979 = vmatprep.subr.mxu0 0.0
      %2980 = vmatpush1.msra.mxu0 0.0
      %2981 = vmatprep.subr.mxu0 0.0
      %2982 = vmatpush1.msra.mxu0 0.0
      %2983 = vmatprep.subr.mxu0 0.0
      %2984 = vmatpush1.msra.mxu0 0.0
      %2985 = vmatprep.subr.mxu0 0.0
      %2986 = vmatpush1.msra.mxu0 0.0
      %2987 = vmatprep.subr.mxu0 0.0
      %2988 = vmatpush1.msra.mxu0 0.0
      %2989 = vmatprep.subr.mxu0 0.0
      %2990 = vmatpush1.msra.mxu0 0.0
      %2991 = vmatprep.subr.mxu0 0.0
      %2992 = vmatpush1.msra.mxu0 0.0
      %2993 = vmatprep.subr.mxu0 0.0
      %2994 = vmatpush1.msra.mxu0 0.0
      %2995 = vmatprep.subr.mxu0 0.0
      %2996 = vmatpush1.msra.mxu0 0.0
      %2997 = vmatprep.subr.mxu0 0.0
      %2998 = vmatpush1.msra.mxu0 0.0
      %2999 = vmatprep.subr.mxu0 0.0
      %3000 = vmatpush1.msra.mxu0 0.0
      %3001 = vmatprep.subr.mxu0 0.0
      %3002 = vmatpush1.msra.mxu0 0.0
      %3003 = vmatprep.subr.mxu0 0.0
      %3004 = vmatpush1.msra.mxu0 0.0
      %3005 = vmatprep.subr.mxu0 0.0
      %3006 = vmatpush1.msra.mxu0 0.0
      %3007 = vmatprep.subr.mxu0 0.0
      %3008 = vmatpush1.msra.mxu0 0.0
      %3009 = vmatprep.subr.mxu0 0.0
      %3010 = vmatpush1.msra.mxu0 0.0
      %3011 = vmatprep.subr.mxu0 0.0
      %3012 = vmatpush1.msra.mxu0 0.0
      %3013 = vmatprep.subr.mxu0 0.0
      %3014 = vmatpush1.msra.mxu0 0.0
      %3015 = vmatprep.subr.mxu0 0.0
      %3016 = vmatpush1.msra.mxu0 0.0
      %3017 = vmatprep.subr.mxu0 0.0
      %3018 = vmatpush1.msra.mxu0 0.0
      %3019 = vmatprep.subr.mxu0 0.0
      %3020 = vmatpush1.msra.mxu0 0.0
      %3021 = vmatprep.mubr.f32.mxu0 0.0
      %v3022 = vand.u32 %v2550, 4294901760
      %3023 = vmatmul.mubr.f32.gmra.mrb[0].mxu0 %v3022
      %v3024 = vpop.f32.mrb[0].mxu0
      %v3025 = vadd.f32 %v2927, %v3024
      %v3026 = vpop.f32.mrb[0].mxu0
      %3027 = vmatprep.mubr.f32.mxu0 0.0
      %v3028 = vand.u32 %v2553, 4294901760
      %3029 = vmatmul.mubr.f32.gmra.mrb[0].mxu0 %v3028
      %v3030 = vpop.f32.mrb[0].mxu0
      %v3031 = vadd.f32 %v2935, %v3030
      %v3032 = vpop.f32.mrb[0].mxu0
      %3033 = vmatprep.mubr.f32.mxu0 0.0
      %v3034 = vand.u32 %v2556, 4294901760
      %3035 = vmatmul.mubr.f32.gmra.mrb[0].mxu0 %v3034
      %v3036 = vpop.f32.mrb[0].mxu0
      %v3037 = vadd.f32 %v2943, %v3036
      %v3038 = vpop.f32.mrb[0].mxu0
      %3039 = vmatprep.mubr.f32.mxu0 0.0
      %v3040 = vand.u32 %v2559, 4294901760
      %3041 = vmatmul.mubr.f32.gmra.mrb[0].mxu0 %v3040
      %v3042 = vpop.f32.mrb[0].mxu0
      %v3043 = vadd.f32 %v2951, %v3042
      %v3044 = vpop.f32.mrb[0].mxu0
      %3045 = vdwg.mxu0
      %3046 = vmatprep.subr.mxu0 0.0
      %v3047 = vand.u32 %v2547, 4294901760
      %3048 = vmatpush1.msra.mxu0 %v3047
      %3049 = vmatprep.subr.mxu0 0.0
      %3050 = vmatpush1.msra.mxu0 0.0
      %3051 = vmatprep.subr.mxu0 0.0
      %3052 = vmatpush1.msra.mxu0 0.0
      %3053 = vmatprep.subr.mxu0 0.0
      %3054 = vmatpush1.msra.mxu0 0.0
      %3055 = vmatprep.subr.mxu0 0.0
      %3056 = vmatpush1.msra.mxu0 0.0
      %3057 = vmatprep.subr.mxu0 0.0
      %3058 = vmatpush1.msra.mxu0 0.0
      %3059 = vmatprep.subr.mxu0 0.0
      %3060 = vmatpush1.msra.mxu0 0.0
      %3061 = vmatprep.subr.mxu0 0.0
      %3062 = vmatpush1.msra.mxu0 0.0
      %3063 = vmatprep.subr.mxu0 0.0
      %3064 = vmatpush1.msra.mxu0 0.0
      %3065 = vmatprep.subr.mxu0 0.0
      %3066 = vmatpush1.msra.mxu0 0.0
      %3067 = vmatprep.subr.mxu0 0.0
      %3068 = vmatpush1.msra.mxu0 0.0
      %3069 = vmatprep.subr.mxu0 0.0
      %3070 = vmatpush1.msra.mxu0 0.0
      %3071 = vmatprep.subr.mxu0 0.0
      %3072 = vmatpush1.msra.mxu0 0.0
      %3073 = vmatprep.subr.mxu0 0.0
      %3074 = vmatpush1.msra.mxu0 0.0
      %3075 = vmatprep.subr.mxu0 0.0
      %3076 = vmatpush1.msra.mxu0 0.0
      %3077 = vmatprep.subr.mxu0 0.0
      %3078 = vmatpush1.msra.mxu0 0.0
      %3079 = vmatprep.subr.mxu0 0.0
      %3080 = vmatpush1.msra.mxu0 0.0
      %3081 = vmatprep.subr.mxu0 0.0
      %3082 = vmatpush1.msra.mxu0 0.0
      %3083 = vmatprep.subr.mxu0 0.0
      %3084 = vmatpush1.msra.mxu0 0.0
      %3085 = vmatprep.subr.mxu0 0.0
      %3086 = vmatpush1.msra.mxu0 0.0
      %3087 = vmatprep.subr.mxu0 0.0
      %3088 = vmatpush1.msra.mxu0 0.0
      %3089 = vmatprep.subr.mxu0 0.0
      %3090 = vmatpush1.msra.mxu0 0.0
      %3091 = vmatprep.subr.mxu0 0.0
      %3092 = vmatpush1.msra.mxu0 0.0
      %3093 = vmatprep.subr.mxu0 0.0
      %3094 = vmatpush1.msra.mxu0 0.0
      %3095 = vmatprep.subr.mxu0 0.0
      %3096 = vmatpush1.msra.mxu0 0.0
      %3097 = vmatprep.subr.mxu0 0.0
      %3098 = vmatpush1.msra.mxu0 0.0
      %3099 = vmatprep.subr.mxu0 0.0
      %3100 = vmatpush1.msra.mxu0 0.0
      %3101 = vmatprep.subr.mxu0 0.0
      %3102 = vmatpush1.msra.mxu0 0.0
      %3103 = vmatprep.subr.mxu0 0.0
      %3104 = vmatpush1.msra.mxu0 0.0
      %3105 = vmatprep.subr.mxu0 0.0
      %3106 = vmatpush1.msra.mxu0 0.0
      %3107 = vmatprep.subr.mxu0 0.0
      %3108 = vmatpush1.msra.mxu0 0.0
      %3109 = vmatprep.subr.mxu0 0.0
      %3110 = vmatpush1.msra.mxu0 0.0
      %3111 = vmatprep.mubr.f32.mxu0 0.0
      %v3112 = vand.u32 %v2550, 4294901760
      %3113 = vmatmul.mubr.f32.gmra.mrb[0].mxu0 %v3112
      %v3114 = vpop.f32.mrb[0].mxu0
      %v3115 = vadd.f32 %v3025, %v3114
      %v3116 = vpop.f32.mrb[0].mxu0
      %3117 = vmatprep.mubr.f32.mxu0 0.0
      %v3118 = vand.u32 %v2553, 4294901760
      %3119 = vmatmul.mubr.f32.gmra.mrb[0].mxu0 %v3118
      %v3120 = vpop.f32.mrb[0].mxu0
      %v3121 = vadd.f32 %v3031, %v3120
      %v3122 = vpop.f32.mrb[0].mxu0
      %3123 = vmatprep.mubr.f32.mxu0 0.0
      %v3124 = vand.u32 %v2556, 4294901760
      %3125 = vmatmul.mubr.f32.gmra.mrb[0].mxu0 %v3124
      %v3126 = vpop.f32.mrb[0].mxu0
      %v3127 = vadd.f32 %v3037, %v3126
      %v3128 = vpop.f32.mrb[0].mxu0
      %3129 = vmatprep.mubr.f32.mxu0 0.0
      %v3130 = vand.u32 %v2559, 4294901760
      %3131 = vmatmul.mubr.f32.gmra.mrb[0].mxu0 %v3130
      %v3132 = vpop.f32.mrb[0].mxu0
      %v3133 = vadd.f32 %v3043, %v3132
      %v3134 = vpop.f32.mrb[0].mxu0
      %3135 = vdwg.mxu0
      %v3136 = vxor.u32 %v3115, 2147483648
      %v3137 = vxor.u32 %v3121, 2147483648
      %v3138 = vxor.u32 %v3127, 2147483648
      %v3139 = vxor.u32 %v3133, 2147483648
      %v3140 = vmul.f32 %v3136, 1.442695
      %v3141 = vpow.pop %v3140
      %v3142 = vmul.f32 %v3137, 1.442695
      %v3143 = vpow.pop %v3142
      %v3144 = vmul.f32 %v3138, 1.442695
      %v3145 = vpow.pop %v3144
      %v3146 = vmul.f32 %v3139, 1.442695
      %v3147 = vpow.pop %v3146
      %v3148 = vadd.f32 %v3141, 1.0
      %v3149 = vadd.f32 %v3143, 1.0
      %v3150 = vadd.f32 %v3145, 1.0
      %v3151 = vadd.f32 %v3147, 1.0
      %v3152 = vrcp.pop %v3148
      %v3153 = vmul.f32 1.0, %v3152
      %v3154 = vrcp.pop %v3149
      %v3155 = vmul.f32 1.0, %v3154
      %v3156 = vrcp.pop %v3150
      %v3157 = vmul.f32 1.0, %v3156
      %v3158 = vrcp.pop %v3151
      %v3159 = vmul.f32 1.0, %v3158
      %3161 = vset.pattern.permute.xlu0 0
      %3162 = vperm.xlu0 %3161, %v2510
      %v3163 = vpop.permute.xlu0 %3162
      %3166 = vset.pattern.permute.xlu0 0
      %3167 = vperm.xlu0 %3166, %v2512
      %v3168 = vpop.permute.xlu0 %3167
      %3171 = vset.pattern.permute.xlu0 0
      %3172 = vperm.xlu0 %3171, %v2514
      %v3173 = vpop.permute.xlu0 %3172
      %3176 = vset.pattern.permute.xlu0 0
      %3177 = vperm.xlu0 %3176, %v2516
      %v3178 = vpop.permute.xlu0 %3177
      %v3180 = vmul.f32 %v3163, %v3153
      %v3181 = vmul.f32 %v3168, %v3155
      %v3182 = vmul.f32 %v3173, %v3157
      %v3183 = vmul.f32 %v3178, %v3159
      %3184 = vset.pattern.permute.xlu0 1
      %3185 = vperm.xlu0 %3184, %v2510
      %v3186 = vpop.permute.xlu0 %3185
      %3188 = vset.pattern.permute.xlu0 1
      %3189 = vperm.xlu0 %3188, %v2512
      %v3190 = vpop.permute.xlu0 %3189
      %3192 = vset.pattern.permute.xlu0 1
      %3193 = vperm.xlu0 %3192, %v2514
      %v3194 = vpop.permute.xlu0 %3193
      %3196 = vset.pattern.permute.xlu0 1
      %3197 = vperm.xlu0 %3196, %v2516
      %v3198 = vpop.permute.xlu0 %3197
      %v3200 = vmul.f32 %v3186, %v3153
      %v3201 = vmul.f32 %v3190, %v3155
      %v3202 = vmul.f32 %v3194, %v3157
      %v3203 = vmul.f32 %v3198, %v3159
      %3204 = vset.pattern.permute.xlu0 2
      %3205 = vperm.xlu0 %3204, %v2510
      %v3206 = vpop.permute.xlu0 %3205
      %3208 = vset.pattern.permute.xlu0 2
      %3209 = vperm.xlu0 %3208, %v2512
      %v3210 = vpop.permute.xlu0 %3209
      %3212 = vset.pattern.permute.xlu0 2
      %3213 = vperm.xlu0 %3212, %v2514
      %v3214 = vpop.permute.xlu0 %3213
      %3216 = vset.pattern.permute.xlu0 2
      %3217 = vperm.xlu0 %3216, %v2516
      %v3218 = vpop.permute.xlu0 %3217
      %v3220 = vmul.f32 %v3206, %v3153
      %v3221 = vmul.f32 %v3210, %v3155
      %v3222 = vmul.f32 %v3214, %v3157
      %v3223 = vmul.f32 %v3218, %v3159
      %3224 = vset.pattern.permute.xlu0 3
      %3225 = vperm.xlu0 %3224, %v2510
      %v3226 = vpop.permute.xlu0 %3225
      %3228 = vset.pattern.permute.xlu0 3
      %3229 = vperm.xlu0 %3228, %v2512
      %v3230 = vpop.permute.xlu0 %3229
      %3232 = vset.pattern.permute.xlu0 3
      %3233 = vperm.xlu0 %3232, %v2514
      %v3234 = vpop.permute.xlu0 %3233
      %3236 = vset.pattern.permute.xlu0 3
      %3237 = vperm.xlu0 %3236, %v2516
      %v3238 = vpop.permute.xlu0 %3237
      %v3240 = vmul.f32 %v3226, %v3153
      %v3241 = vmul.f32 %v3230, %v3155
      %v3242 = vmul.f32 %v3234, %v3157
      %v3243 = vmul.f32 %v3238, %v3159
      %3244 = vset.pattern.permute.xlu0 4
      %3245 = vperm.xlu0 %3244, %v2510
      %v3246 = vpop.permute.xlu0 %3245
      %3248 = vset.pattern.permute.xlu0 4
      %3249 = vperm.xlu0 %3248, %v2512
      %v3250 = vpop.permute.xlu0 %3249
      %3252 = vset.pattern.permute.xlu0 4
      %3253 = vperm.xlu0 %3252, %v2514
      %v3254 = vpop.permute.xlu0 %3253
      %3256 = vset.pattern.permute.xlu0 4
      %3257 = vperm.xlu0 %3256, %v2516
      %v3258 = vpop.permute.xlu0 %3257
      %v3260 = vmul.f32 %v3246, %v3153
      %v3261 = vmul.f32 %v3250, %v3155
      %v3262 = vmul.f32 %v3254, %v3157
      %v3263 = vmul.f32 %v3258, %v3159
      %3264 = vset.pattern.permute.xlu0 5
      %3265 = vperm.xlu0 %3264, %v2510
      %v3266 = vpop.permute.xlu0 %3265
      %3268 = vset.pattern.permute.xlu0 5
      %3269 = vperm.xlu0 %3268, %v2512
      %v3270 = vpop.permute.xlu0 %3269
      %3272 = vset.pattern.permute.xlu0 5
      %3273 = vperm.xlu0 %3272, %v2514
      %v3274 = vpop.permute.xlu0 %3273
      %3276 = vset.pattern.permute.xlu0 5
      %3277 = vperm.xlu0 %3276, %v2516
      %v3278 = vpop.permute.xlu0 %3277
      %v3280 = vmul.f32 %v3266, %v3153
      %v3281 = vmul.f32 %v3270, %v3155
      %v3282 = vmul.f32 %v3274, %v3157
      %v3283 = vmul.f32 %v3278, %v3159
      %3284 = vset.pattern.permute.xlu0 6
      %3285 = vperm.xlu0 %3284, %v2510
      %v3286 = vpop.permute.xlu0 %3285
      %3288 = vset.pattern.permute.xlu0 6
      %3289 = vperm.xlu0 %3288, %v2512
      %v3290 = vpop.permute.xlu0 %3289
      %3292 = vset.pattern.permute.xlu0 6
      %3293 = vperm.xlu0 %3292, %v2514
      %v3294 = vpop.permute.xlu0 %3293
      %3296 = vset.pattern.permute.xlu0 6
      %3297 = vperm.xlu0 %3296, %v2516
      %v3298 = vpop.permute.xlu0 %3297
      %v3300 = vmul.f32 %v3286, %v3153
      %v3301 = vmul.f32 %v3290, %v3155
      %v3302 = vmul.f32 %v3294, %v3157
      %v3303 = vmul.f32 %v3298, %v3159
      %3304 = vset.pattern.permute.xlu0 7
      %3305 = vperm.xlu0 %3304, %v2510
      %v3306 = vpop.permute.xlu0 %3305
      %3308 = vset.pattern.permute.xlu0 7
      %3309 = vperm.xlu0 %3308, %v2512
      %v3310 = vpop.permute.xlu0 %3309
      %3312 = vset.pattern.permute.xlu0 7
      %3313 = vperm.xlu0 %3312, %v2514
      %v3314 = vpop.permute.xlu0 %3313
      %3316 = vset.pattern.permute.xlu0 7
      %3317 = vperm.xlu0 %3316, %v2516
      %v3318 = vpop.permute.xlu0 %3317
      %v3320 = vmul.f32 %v3306, %v3153
      %v3321 = vmul.f32 %v3310, %v3155
      %v3322 = vmul.f32 %v3314, %v3157
      %v3323 = vmul.f32 %v3318, %v3159
      %3324 = vset.pattern.permute.xlu0 8
      %3325 = vperm.xlu0 %3324, %v2510
      %v3326 = vpop.permute.xlu0 %3325
      %3328 = vset.pattern.permute.xlu0 8
      %3329 = vperm.xlu0 %3328, %v2512
      %v3330 = vpop.permute.xlu0 %3329
      %3332 = vset.pattern.permute.xlu0 8
      %3333 = vperm.xlu0 %3332, %v2514
      %v3334 = vpop.permute.xlu0 %3333
      %3336 = vset.pattern.permute.xlu0 8
      %3337 = vperm.xlu0 %3336, %v2516
      %v3338 = vpop.permute.xlu0 %3337
      %v3340 = vmul.f32 %v3326, %v3153
      %v3341 = vmul.f32 %v3330, %v3155
      %v3342 = vmul.f32 %v3334, %v3157
      %v3343 = vmul.f32 %v3338, %v3159
      %3344 = vset.pattern.permute.xlu0 9
      %3345 = vperm.xlu0 %3344, %v2510
      %v3346 = vpop.permute.xlu0 %3345
      %3348 = vset.pattern.permute.xlu0 9
      %3349 = vperm.xlu0 %3348, %v2512
      %v3350 = vpop.permute.xlu0 %3349
      %3352 = vset.pattern.permute.xlu0 9
      %3353 = vperm.xlu0 %3352, %v2514
      %v3354 = vpop.permute.xlu0 %3353
      %3356 = vset.pattern.permute.xlu0 9
      %3357 = vperm.xlu0 %3356, %v2516
      %v3358 = vpop.permute.xlu0 %3357
      %v3360 = vmul.f32 %v3346, %v3153
      %v3361 = vmul.f32 %v3350, %v3155
      %v3362 = vmul.f32 %v3354, %v3157
      %v3363 = vmul.f32 %v3358, %v3159
      %3364 = vset.pattern.permute.xlu0 10
      %3365 = vperm.xlu0 %3364, %v2510
      %v3366 = vpop.permute.xlu0 %3365
      %3368 = vset.pattern.permute.xlu0 10
      %3369 = vperm.xlu0 %3368, %v2512
      %v3370 = vpop.permute.xlu0 %3369
      %3372 = vset.pattern.permute.xlu0 10
      %3373 = vperm.xlu0 %3372, %v2514
      %v3374 = vpop.permute.xlu0 %3373
      %3376 = vset.pattern.permute.xlu0 10
      %3377 = vperm.xlu0 %3376, %v2516
      %v3378 = vpop.permute.xlu0 %3377
      %v3380 = vmul.f32 %v3366, %v3153
      %v3381 = vmul.f32 %v3370, %v3155
      %v3382 = vmul.f32 %v3374, %v3157
      %v3383 = vmul.f32 %v3378, %v3159
      %3384 = vset.pattern.permute.xlu0 11
      %3385 = vperm.xlu0 %3384, %v2510
      %v3386 = vpop.permute.xlu0 %3385
      %3388 = vset.pattern.permute.xlu0 11
      %3389 = vperm.xlu0 %3388, %v2512
      %v3390 = vpop.permute.xlu0 %3389
      %3392 = vset.pattern.permute.xlu0 11
      %3393 = vperm.xlu0 %3392, %v2514
      %v3394 = vpop.permute.xlu0 %3393
      %3396 = vset.pattern.permute.xlu0 11
      %3397 = vperm.xlu0 %3396, %v2516
      %v3398 = vpop.permute.xlu0 %3397
      %v3400 = vmul.f32 %v3386, %v3153
      %v3401 = vmul.f32 %v3390, %v3155
      %v3402 = vmul.f32 %v3394, %v3157
      %v3403 = vmul.f32 %v3398, %v3159
      %3404 = vset.pattern.permute.xlu0 12
      %3405 = vperm.xlu0 %3404, %v2510
      %v3406 = vpop.permute.xlu0 %3405
      %3408 = vset.pattern.permute.xlu0 12
      %3409 = vperm.xlu0 %3408, %v2512
      %v3410 = vpop.permute.xlu0 %3409
      %3412 = vset.pattern.permute.xlu0 12
      %3413 = vperm.xlu0 %3412, %v2514
      %v3414 = vpop.permute.xlu0 %3413
      %3416 = vset.pattern.permute.xlu0 12
      %3417 = vperm.xlu0 %3416, %v2516
      %v3418 = vpop.permute.xlu0 %3417
      %v3420 = vmul.f32 %v3406, %v3153
      %v3421 = vmul.f32 %v3410, %v3155
      %v3422 = vmul.f32 %v3414, %v3157
      %v3423 = vmul.f32 %v3418, %v3159
      %3424 = vset.pattern.permute.xlu0 13
      %3425 = vperm.xlu0 %3424, %v2510
      %v3426 = vpop.permute.xlu0 %3425
      %3428 = vset.pattern.permute.xlu0 13
      %3429 = vperm.xlu0 %3428, %v2512
      %v3430 = vpop.permute.xlu0 %3429
      %3432 = vset.pattern.permute.xlu0 13
      %3433 = vperm.xlu0 %3432, %v2514
      %v3434 = vpop.permute.xlu0 %3433
      %3436 = vset.pattern.permute.xlu0 13
      %3437 = vperm.xlu0 %3436, %v2516
      %v3438 = vpop.permute.xlu0 %3437
      %v3440 = vmul.f32 %v3426, %v3153
      %v3441 = vmul.f32 %v3430, %v3155
      %v3442 = vmul.f32 %v3434, %v3157
      %v3443 = vmul.f32 %v3438, %v3159
      %3444 = vset.pattern.permute.xlu0 14
      %3445 = vperm.xlu0 %3444, %v2510
      %v3446 = vpop.permute.xlu0 %3445
      %3448 = vset.pattern.permute.xlu0 14
      %3449 = vperm.xlu0 %3448, %v2512
      %v3450 = vpop.permute.xlu0 %3449
      %3452 = vset.pattern.permute.xlu0 14
      %3453 = vperm.xlu0 %3452, %v2514
      %v3454 = vpop.permute.xlu0 %3453
      %3456 = vset.pattern.permute.xlu0 14
      %3457 = vperm.xlu0 %3456, %v2516
      %v3458 = vpop.permute.xlu0 %3457
      %v3460 = vmul.f32 %v3446, %v3153
      %v3461 = vmul.f32 %v3450, %v3155
      %v3462 = vmul.f32 %v3454, %v3157
      %v3463 = vmul.f32 %v3458, %v3159
      %3464 = vset.pattern.permute.xlu0 15
      %3465 = vperm.xlu0 %3464, %v2510
      %v3466 = vpop.permute.xlu0 %3465
      %3468 = vset.pattern.permute.xlu0 15
      %3469 = vperm.xlu0 %3468, %v2512
      %v3470 = vpop.permute.xlu0 %3469
      %3472 = vset.pattern.permute.xlu0 15
      %3473 = vperm.xlu0 %3472, %v2514
      %v3474 = vpop.permute.xlu0 %3473
      %3476 = vset.pattern.permute.xlu0 15
      %3477 = vperm.xlu0 %3476, %v2516
      %v3478 = vpop.permute.xlu0 %3477
      %v3480 = vmul.f32 %v3466, %v3153
      %v3481 = vmul.f32 %v3470, %v3155
      %v3482 = vmul.f32 %v3474, %v3157
      %v3483 = vmul.f32 %v3478, %v3159
      %3488 = vrot.lane.b32.xlu0 %v3200, 16
      %v3489 = vpop.permute.xlu0 %3488
      %3490 = vrot.lane.b32.xlu0 %v3201, 16
      %v3491 = vpop.permute.xlu0 %3490
      %3492 = vrot.lane.b32.xlu0 %v3202, 16
      %v3493 = vpop.permute.xlu0 %3492
      %3494 = vrot.lane.b32.xlu0 %v3203, 16
      %v3495 = vpop.permute.xlu0 %3494
      %3504 = vrot.lane.b32.xlu0 %v3220, 32
      %v3505 = vpop.permute.xlu0 %3504
      %3506 = vrot.lane.b32.xlu0 %v3221, 32
      %v3507 = vpop.permute.xlu0 %3506
      %3508 = vrot.lane.b32.xlu0 %v3222, 32
      %v3509 = vpop.permute.xlu0 %3508
      %3510 = vrot.lane.b32.xlu0 %v3223, 32
      %v3511 = vpop.permute.xlu0 %3510
      %3520 = vrot.lane.b32.xlu0 %v3240, 48
      %v3521 = vpop.permute.xlu0 %3520
      %3522 = vrot.lane.b32.xlu0 %v3241, 48
      %v3523 = vpop.permute.xlu0 %3522
      %3524 = vrot.lane.b32.xlu0 %v3242, 48
      %v3525 = vpop.permute.xlu0 %3524
      %3526 = vrot.lane.b32.xlu0 %v3243, 48
      %v3527 = vpop.permute.xlu0 %3526
      %3536 = vrot.lane.b32.xlu0 %v3260, 64
      %v3537 = vpop.permute.xlu0 %3536
      %3538 = vrot.lane.b32.xlu0 %v3261, 64
      %v3539 = vpop.permute.xlu0 %3538
      %3540 = vrot.lane.b32.xlu0 %v3262, 64
      %v3541 = vpop.permute.xlu0 %3540
      %3542 = vrot.lane.b32.xlu0 %v3263, 64
      %v3543 = vpop.permute.xlu0 %3542
      %3552 = vrot.lane.b32.xlu0 %v3280, 80
      %v3553 = vpop.permute.xlu0 %3552
      %3554 = vrot.lane.b32.xlu0 %v3281, 80
      %v3555 = vpop.permute.xlu0 %3554
      %3556 = vrot.lane.b32.xlu0 %v3282, 80
      %v3557 = vpop.permute.xlu0 %3556
      %3558 = vrot.lane.b32.xlu0 %v3283, 80
      %v3559 = vpop.permute.xlu0 %3558
      %3568 = vrot.lane.b32.xlu0 %v3300, 96
      %v3569 = vpop.permute.xlu0 %3568
      %3570 = vrot.lane.b32.xlu0 %v3301, 96
      %v3571 = vpop.permute.xlu0 %3570
      %3572 = vrot.lane.b32.xlu0 %v3302, 96
      %v3573 = vpop.permute.xlu0 %3572
      %3574 = vrot.lane.b32.xlu0 %v3303, 96
      %v3575 = vpop.permute.xlu0 %3574
      %3584 = vrot.lane.b32.xlu0 %v3320, 112
      %v3585 = vpop.permute.xlu0 %3584
      %3586 = vrot.lane.b32.xlu0 %v3321, 112
      %v3587 = vpop.permute.xlu0 %3586
      %3588 = vrot.lane.b32.xlu0 %v3322, 112
      %v3589 = vpop.permute.xlu0 %3588
      %3590 = vrot.lane.b32.xlu0 %v3323, 112
      %v3591 = vpop.permute.xlu0 %3590
      %3600 = vrot.lane.b32.xlu0 %v3360, 16
      %v3601 = vpop.permute.xlu0 %3600
      %3602 = vrot.lane.b32.xlu0 %v3361, 16
      %v3603 = vpop.permute.xlu0 %3602
      %3604 = vrot.lane.b32.xlu0 %v3362, 16
      %v3605 = vpop.permute.xlu0 %3604
      %3606 = vrot.lane.b32.xlu0 %v3363, 16
      %v3607 = vpop.permute.xlu0 %3606
      %3616 = vrot.lane.b32.xlu0 %v3380, 32
      %v3617 = vpop.permute.xlu0 %3616
      %3618 = vrot.lane.b32.xlu0 %v3381, 32
      %v3619 = vpop.permute.xlu0 %3618
      %3620 = vrot.lane.b32.xlu0 %v3382, 32
      %v3621 = vpop.permute.xlu0 %3620
      %3622 = vrot.lane.b32.xlu0 %v3383, 32
      %v3623 = vpop.permute.xlu0 %3622
      %3632 = vrot.lane.b32.xlu0 %v3400, 48
      %v3633 = vpop.permute.xlu0 %3632
      %3634 = vrot.lane.b32.xlu0 %v3401, 48
      %v3635 = vpop.permute.xlu0 %3634
      %3636 = vrot.lane.b32.xlu0 %v3402, 48
      %v3637 = vpop.permute.xlu0 %3636
      %3638 = vrot.lane.b32.xlu0 %v3403, 48
      %v3639 = vpop.permute.xlu0 %3638
      %3648 = vrot.lane.b32.xlu0 %v3420, 64
      %v3649 = vpop.permute.xlu0 %3648
      %3650 = vrot.lane.b32.xlu0 %v3421, 64
      %v3651 = vpop.permute.xlu0 %3650
      %3652 = vrot.lane.b32.xlu0 %v3422, 64
      %v3653 = vpop.permute.xlu0 %3652
      %3654 = vrot.lane.b32.xlu0 %v3423, 64
      %v3655 = vpop.permute.xlu0 %3654
      %3664 = vrot.lane.b32.xlu0 %v3440, 80
      %v3665 = vpop.permute.xlu0 %3664
      %3666 = vrot.lane.b32.xlu0 %v3441, 80
      %v3667 = vpop.permute.xlu0 %3666
      %3668 = vrot.lane.b32.xlu0 %v3442, 80
      %v3669 = vpop.permute.xlu0 %3668
      %3670 = vrot.lane.b32.xlu0 %v3443, 80
      %v3671 = vpop.permute.xlu0 %3670
      %3680 = vrot.lane.b32.xlu0 %v3460, 96
      %v3681 = vpop.permute.xlu0 %3680
      %3682 = vrot.lane.b32.xlu0 %v3461, 96
      %v3683 = vpop.permute.xlu0 %3682
      %3684 = vrot.lane.b32.xlu0 %v3462, 96
      %v3685 = vpop.permute.xlu0 %3684
      %3686 = vrot.lane.b32.xlu0 %v3463, 96
      %v3687 = vpop.permute.xlu0 %3686
      %3696 = vrot.lane.b32.xlu0 %v3480, 112
      %v3697 = vpop.permute.xlu0 %3696
      %3698 = vrot.lane.b32.xlu0 %v3481, 112
      %v3699 = vpop.permute.xlu0 %3698
      %3700 = vrot.lane.b32.xlu0 %v3482, 112
      %v3701 = vpop.permute.xlu0 %3700
      %3702 = vrot.lane.b32.xlu0 %v3483, 112
      %v3703 = vpop.permute.xlu0 %3702
      %vm3708 = vcmask 130048
      %v3709 = vsel %vm3708, %v3180, %v3489
      %v3710 = vsel %vm3708, %v3181, %v3491
      %v3711 = vsel %vm3708, %v3182, %v3493
      %v3712 = vsel %vm3708, %v3183, %v3495
      %v3713 = vsel %vm1383, %v3709, %v3505
      %v3714 = vsel %vm1383, %v3710, %v3507
      %v3715 = vsel %vm1383, %v3711, %v3509
      %v3716 = vsel %vm1383, %v3712, %v3511
      %vm3717 = vcmask 392192
      %v3718 = vsel %vm3717, %v3713, %v3521
      %v3719 = vsel %vm3717, %v3714, %v3523
      %v3720 = vsel %vm3717, %v3715, %v3525
      %v3721 = vsel %vm3717, %v3716, %v3527
      %vm3722 = vcmask 523264
      %v3723 = vsel %vm3722, %v3718, %v3537
      %v3724 = vsel %vm3722, %v3719, %v3539
      %v3725 = vsel %vm3722, %v3720, %v3541
      %v3726 = vsel %vm3722, %v3721, %v3543
      %vm3727 = vcmask 654336
      %v3728 = vsel %vm3727, %v3723, %v3553
      %v3729 = vsel %vm3727, %v3724, %v3555
      %v3730 = vsel %vm3727, %v3725, %v3557
      %v3731 = vsel %vm3727, %v3726, %v3559
      %vm3732 = vcmask 785408
      %v3733 = vsel %vm3732, %v3728, %v3569
      %v3734 = vsel %vm3732, %v3729, %v3571
      %v3735 = vsel %vm3732, %v3730, %v3573
      %v3736 = vsel %vm3732, %v3731, %v3575
      %vm3737 = vcmask 916480
      %v3738 = vsel %vm3737, %v3733, %v3585
      %v3739 = vsel %vm3737, %v3734, %v3587
      %v3740 = vsel %vm3737, %v3735, %v3589
      %v3741 = vsel %vm3737, %v3736, %v3591
      %v3742 = vsel %vm3708, %v3340, %v3601
      %v3743 = vsel %vm3708, %v3341, %v3603
      %v3744 = vsel %vm3708, %v3342, %v3605
      %v3745 = vsel %vm3708, %v3343, %v3607
      %v3746 = vsel %vm1383, %v3742, %v3617
      %v3747 = vsel %vm1383, %v3743, %v3619
      %v3748 = vsel %vm1383, %v3744, %v3621
      %v3749 = vsel %vm1383, %v3745, %v3623
      %v3750 = vsel %vm3717, %v3746, %v3633
      %v3751 = vsel %vm3717, %v3747, %v3635
      %v3752 = vsel %vm3717, %v3748, %v3637
      %v3753 = vsel %vm3717, %v3749, %v3639
      %v3754 = vsel %vm3722, %v3750, %v3649
      %v3755 = vsel %vm3722, %v3751, %v3651
      %v3756 = vsel %vm3722, %v3752, %v3653
      %v3757 = vsel %vm3722, %v3753, %v3655
      %v3758 = vsel %vm3727, %v3754, %v3665
      %v3759 = vsel %vm3727, %v3755, %v3667
      %v3760 = vsel %vm3727, %v3756, %v3669
      %v3761 = vsel %vm3727, %v3757, %v3671
      %v3762 = vsel %vm3732, %v3758, %v3681
      %v3763 = vsel %vm3732, %v3759, %v3683
      %v3764 = vsel %vm3732, %v3760, %v3685
      %v3765 = vsel %vm3732, %v3761, %v3687
      %v3766 = vsel %vm3737, %v3762, %v3697
      %v3767 = vsel %vm3737, %v3763, %v3699
      %v3768 = vsel %vm3737, %v3764, %v3701
      %v3769 = vsel %vm3737, %v3765, %v3703
      %3770 = vst [vmem:[%s305] sm:$0xff] %v3738
      %3771 = vst [vmem:[%s305 + $0x8] sm:$0xff] %v3766
      %3772 = vst [vmem:[%s305 + $0x10] sm:$0xff] %v3739
      %3773 = vst [vmem:[%s305 + $0x18] sm:$0xff] %v3767
      %3774 = vst [vmem:[%s305 + $0x20] sm:$0xff] %v3740
      %3775 = vst [vmem:[%s305 + $0x28] sm:$0xff] %v3768
      %3776 = vst [vmem:[%s305 + $0x30] sm:$0xff] %v3741
      %3777 = vst [vmem:[%s305 + $0x38] sm:$0xff] %v3769
      %p3778 = scmp.lt.s32.totalorder %s19, 1
      %s3779 = scalar_select %p3778, %s19, 1
      %s3780 = smul.addr %s3779, 8
      %s3781 = smul.addr %s3780, 8
      %s3782 = scalar_lea.vmem %s8, %s3781
      // Predicated region
      $region53: #{mask_forward.5} parent=51 // pred_check
        %p3783 = pneg %p210
      $region54: #{mask_forward.5} parent=51 // pred_check_branch
        %3785 = sbr.rel (%p3783) target = $region56
      $region55: #{mask_forward.5} parent=51 // pred_region
        _
      $region56: #{mask_forward.5} parent=51 // pred_fallthru
        _
    $region52: #{mask_forward.5} parent=5 // pred_fallthru
      _
    %p3786 = scmp.le.s32.totalorder 2, %s14
    // Predicated region
    $region57: #{mask_forward.5} parent=5 // pred_check
      %p3787 = pneg %p3786
    $region58: #{mask_forward.5} parent=5 // pred_check_branch
      %3789 = sbr.rel (%p3787) target = $region60
    $region59: #{mask_forward.5} parent=5 // pred_region
      %s3790 = ssub.s32 %s14, 2
      // Predicated region
      $region61: #{mask_forward.5} parent=59 // pred_check
        %p3791 = pneg %p216
      $region62: #{mask_forward.5} parent=59 // pred_check_branch
        %3793 = sbr.rel (%p3791) target = $region64
      $region63: #{mask_forward.5} parent=59 // pred_region
        %p3794 = scmp.lt.s32.totalorder %s20, 1
        %s3795 = scalar_select %p3794, %s20, 1
        %s3796 = smul.addr %s3795, 8
        %s3797 = smul.addr %s3796, 8
        %s3798 = scalar_lea.vmem %s8, %s3797
      $region64: #{mask_forward.5} parent=59 // pred_fallthru
        _
    $region60: #{mask_forward.5} parent=5 // pred_fallthru
      _
  $region6: #{mask_forward.5} parent=0 // loop_footer
    %s18 = sadd.s32 1, %s14
  $region7: #{mask_forward.5} parent=0 // loop_footer_branch
    %13 = sbr.rel target = $region3
  $region8: #{mask_forward.5} parent=0 // loop_exit
    _

</llo_original>
